<compile_context>
chip_gen: v6e
topology: v6e:2x2x1
jax: 0.10.0
libtpu: 0.0.40
codegen_flags: <defaults>
</compile_context>

<pallas_src>
import functools

import jax
import jax.numpy as jnp
import numpy as np
from jax.experimental import pallas as pl
from jax.experimental.pallas import tpu as pltpu

# bf16 matmul inputs halve HBM/VMEM traffic; accumulation stays f32.
MATMUL_DTYPE = jnp.bfloat16


def _round_up(x, m):
    return (x + m - 1) // m * m


def _pick_batch_tile(n, max_tb=64):
    """Batch tile (multiple of 16 for clean bf16 sublane tiling); >=2 grid
    steps whenever the batch allows it so both v7x TensorCores get work."""
    g = 16
    npad = _round_up(max(n, 1), g)
    if npad <= g:
        tb = npad
    else:
        tb = min(max_tb, _round_up(npad // 2, g))
    return _round_up(npad, tb), tb


# ---------------------------------------------------------------------------
# Fused kernel: conv1/pool1/relu1 -> conv2/pool2/relu2 -> features/GAP
# ---------------------------------------------------------------------------
def _cnn_fused_kernel(x_ref, t1_ref, t2_ref, t3_ref, b1_ref, b2_ref, b3_ref,
                      o_ref, *, tb, h, w, dt):
    hp1, wp1 = h // 4, w // 4          # spatial after pool1
    hp2, wp2 = h // 8, w // 8          # spatial after pool2
    c1 = 5 * (wp1 + 4)                 # conv1 activation lanes (width-padded)
    c2 = 10 * (wp2 + 2)                # conv2 activation lanes (width-padded)

    # ---- conv1 (5x5, pad 2): contract padded width on the MXU; the four
    #      pool1 width taps are separate Toeplitz column groups. ----
    rows1 = [x_ref[kh:kh + h, :, :].reshape(h * tb, w + 4) for kh in range(5)]
    wmax = None
    for pj in range(4):
        acc = None
        for kh in range(5):
            d = jnp.dot(rows1[kh], t1_ref[kh, pj],
                        preferred_element_type=jnp.float32)
            acc = d if acc is None else acc + d
        wmax = acc if wmax is None else jnp.maximum(wmax, acc)

    # pool1 over rows (4x) + bias + ReLU; rows are (ho, tap, n)-ordered.
    w4 = wmax.reshape(hp1, 4, tb, c1)
    p1 = jnp.maximum(jnp.maximum(w4[:, 0], w4[:, 1]),
                     jnp.maximum(w4[:, 2], w4[:, 3]))
    a1 = jnp.maximum(p1 + b1_ref[...], 0.0)                   # (hp1, tb, c1)

    # ---- conv2 (5x5, pad 2): zero rows give the height padding for free. ----
    zrow = jnp.zeros((2, tb, c1), jnp.float32)
    a1p = jnp.concatenate([zrow, a1, zrow], axis=0)           # (hp1+4, tb, c1)
    rows2 = [a1p[kh:kh + hp1].reshape(hp1 * tb, c1).astype(dt)
             for kh in range(5)]
    wmax2 = None
    for pj in range(2):
        acc = None
        for kh in range(5):
            d = jnp.dot(rows2[kh], t2_ref[kh, pj],
                        preferred_element_type=jnp.float32)
            acc = d if acc is None else acc + d
        wmax2 = acc if wmax2 is None else jnp.maximum(wmax2, acc)

    # pool2 over rows (2x) + bias + ReLU.
    w2t = wmax2.reshape(hp2, 2, tb, c2)
    a2 = jnp.maximum(jnp.maximum(w2t[:, 0], w2t[:, 1]) + b2_ref[...], 0.0)

    # ---- features conv (3x3, pad 1) + global average pool, fully folded:
    #      the width sum lives in t3's columns; for the height, kernel row 0
    #      never sees the last activation row and kernel row 2 never sees the
    #      first one (the remaining rows each contribute exactly once). ----
    rsum = a2[0]
    for j in range(1, hp2):
        rsum = rsum + a2[j]
    r0 = (rsum - a2[hp2 - 1]).astype(dt)
    r1 = rsum.astype(dt)
    r2 = (rsum - a2[0]).astype(dt)
    acc3 = (jnp.dot(r0, t3_ref[0], preferred_element_type=jnp.float32)
            + jnp.dot(r1, t3_ref[1], preferred_element_type=jnp.float32)
            + jnp.dot(r2, t3_ref[2], preferred_element_type=jnp.float32))
    o_ref[...] = acc3 * (1.0 / (hp2 * wp2)) + b3_ref[...]


# ---------------------------------------------------------------------------
# Weight transforms (tiny, done once in the wrapper)
# ---------------------------------------------------------------------------
def _conv1_toeplitz(w1, wp1):
    """(5,5,1,5) HWIO -> (5 kh, 4 pool-taps, W+4, 5*(wp1+4)); output columns
    are co*(wp1+4) + (wo+2), with zero columns where conv2 expects padding."""
    kh, kw, _, co = w1.shape
    w_in = 4 * wp1 + 4
    sel = np.zeros((kw, w_in, wp1, 4), np.float32)
    for dw in range(kw):
        for wo in range(wp1):
            for pj in range(4):
                sel[dw, 4 * wo + pj + dw, wo, pj] = 1.0
    t = jnp.einsum('dwop,kdc->kpwco', sel, w1[:, :, 0, :])
    t = jnp.pad(t, ((0, 0), (0, 0), (0, 0), (0, 0), (2, 2)))
    return t.reshape(kh, 4, w_in, co * (wp1 + 4))


def _conv2_toeplitz(w2, wp1, wp2):
    """(5,5,5,10) HWIO -> (5 kh, 2 pool-taps, 5*(wp1+4), 10*(wp2+2))."""
    kh, kw, ci, co = w2.shape
    w_in = wp1 + 4
    sel = np.zeros((kw, w_in, wp2, 2), np.float32)
    for dw in range(kw):
        for v in range(wp2):
            for pj in range(2):
                sel[dw, 2 * v + pj + dw, v, pj] = 1.0
    t = jnp.einsum('dwvp,kdio->kpiwov', sel, w2)
    t = jnp.pad(t, ((0, 0),) * 5 + ((1, 1),))
    return t.reshape(kh, 2, ci * w_in, co * (wp2 + 2))


def _conv3_toeplitz(w3, wp2):
    """(3,3,10,nc) HWIO -> (3 kh, 10*(wp2+2), nc) with the GAP width-sum
    folded into the columns."""
    kh, kw, ci, nc = w3.shape
    w_in = wp2 + 2
    sel = np.zeros((kw, w_in), np.float32)
    for dw in range(kw):
        for wq in range(w_in):
            if 0 <= wq - dw < wp2:
                sel[dw, wq] = 1.0
    t = jnp.einsum('dw,kdio->kiwo', sel, w3)
    return t.reshape(kh, ci * w_in, nc)


def _bias_rows(b, width, pad):
    mask = np.zeros((width + 2 * pad,), np.float32)
    mask[pad:pad + width] = 1.0
    return jnp.kron(b.astype(jnp.float32), jnp.asarray(mask))[None, :]


# ---------------------------------------------------------------------------
# Forward pass
# ---------------------------------------------------------------------------
def cnn_forward(x_nchw, params, *, block_n=64, dtype=MATMUL_DTYPE):
    n, cin, h, w = x_nchw.shape
    assert cin == 1 and h % 8 == 0 and w % 8 == 0, "kernel expects 1xHxW, H,W % 8 == 0"
    nc = params["bf"].shape[0]
    hp1, wp1 = h // 4, w // 4
    hp2, wp2 = h // 8, w // 8
    c1 = 5 * (wp1 + 4)
    c2 = 10 * (wp2 + 2)

    npad, tb = _pick_batch_tile(n, block_n)

    # Zero-pad (spatial 'same' halo + batch tail), height-major layout so all
    # conv windows / pool taps are contiguous slices on the untiled leading axis.
    xr = x_nchw.reshape(n, h, w)
    xp = jnp.pad(xr, ((0, npad - n), (2, 2), (2, 2)))
    xt = jnp.transpose(xp, (1, 0, 2)).astype(dtype)            # (H+4, Npad, W+4)

    t1 = _conv1_toeplitz(params["w1"], wp1).astype(dtype)
    t2 = _conv2_toeplitz(params["w2"], wp1, wp2).astype(dtype)
    t3 = _conv3_toeplitz(params["wf"], wp2).astype(dtype)
    b1r = _bias_rows(params["b1"], wp1, 2)
    b2r = _bias_rows(params["b2"], wp2, 1)
    b3r = params["bf"].astype(jnp.float32).reshape(1, nc)

    kernel = functools.partial(_cnn_fused_kernel, tb=tb, h=h, w=w, dt=dtype)

    out = pl.pallas_call(
        kernel,
        out_shape=jax.ShapeDtypeStruct((npad, nc), jnp.float32),
        grid=(npad // tb,),
        in_specs=[
            pl.BlockSpec((h + 4, tb, w + 4), lambda i: (0, i, 0)),
            pl.BlockSpec(t1.shape, lambda i: (0, 0, 0, 0)),
            pl.BlockSpec(t2.shape, lambda i: (0, 0, 0, 0)),
            pl.BlockSpec(t3.shape, lambda i: (0, 0, 0)),
            pl.BlockSpec(b1r.shape, lambda i: (0, 0)),
            pl.BlockSpec(b2r.shape, lambda i: (0, 0)),
            pl.BlockSpec(b3r.shape, lambda i: (0, 0)),
        ],
        out_specs=pl.BlockSpec((tb, nc), lambda i: (i, 0)),
        compiler_params=pltpu.CompilerParams(
            dimension_semantics=("parallel",),
            vmem_limit_bytes=32 << 20),
    )(xt, t1, t2, t3, b1r, b2r, b3r)

    return out[:n]


# ---------------------------------------------------------------------------
# Params + pure-JAX reference (correctness check only)
# ---------------------------------------------------------------------------
def init_params(key, n_classes=12):
    """PyTorch-style conv init (uniform +/- 1/sqrt(fan_in)); weights HWIO."""
    ks = jax.random.split(key, 6)

    def conv_init(kw_key, kb_key, kh, kw, cin, cout):
        bound = 1.0 / float(cin * kh * kw) ** 0.5
        wgt = jax.random.uniform(kw_key, (kh, kw, cin, cout), jnp.float32, -bound, bound)
        b = jax.random.uniform(kb_key, (cout,), jnp.float32, -bound, bound)
        return wgt, b

    w1, b1 = conv_init(ks[0], ks[1], 5, 5, 1, 5)
    w2, b2 = conv_init(ks[2], ks[3], 5, 5, 5, 10)
    wf, bf = conv_init(ks[4], ks[5], 3, 3, 10, n_classes)
    return dict(w1=w1, b1=b1, w2=w2, b2=b2, wf=wf, bf=bf)


def ref_forward(x_nchw, p):
    x = jnp.transpose(x_nchw, (0, 2, 3, 1))

    def conv(x, wgt, b):
        y = jax.lax.conv_general_dilated(
            x, wgt, (1, 1), "SAME",
            dimension_numbers=("NHWC", "HWIO", "NHWC"),
            precision=jax.lax.Precision.HIGHEST)
        return y + b

    def pool(x, k):
        return jax.lax.reduce_window(
            x, -jnp.inf, jax.lax.max, (1, k, k, 1), (1, k, k, 1), "VALID")

    x = jnp.maximum(pool(conv(x, p["w1"], p["b1"]), 4), 0.0)
    x = jnp.maximum(pool(conv(x, p["w2"], p["b2"]), 2), 0.0)
    x = conv(x, p["wf"], p["bf"])
    return jnp.mean(x, axis=(1, 2))


if __name__ == "__main__":
    key = jax.random.PRNGKey(0)
    kx, kp = jax.random.split(key)

    # NCHW, 1 channel, 32x32 spatial (divisible by the 4x and 2x pools).
    x = jax.random.normal(kx, (2, 1, 32, 32), jnp.float32)
    params = init_params(kp, n_classes=12)

    out = jax.jit(cnn_forward)(x, params)
    out = jax.block_until_ready(out)
    assert out.shape == (2, 12), out.shape

    ref = ref_forward(x, params)
    # bf16 matmul inputs -> looser tolerance than the old fp32 path.
    if not jnp.allclose(out, ref, atol=5e-2, rtol=5e-2):
        err = float(jnp.max(jnp.abs(out - ref)))
        raise SystemExit(f"Pallas output mismatch vs JAX reference (max abs err {err})")

    print("KERNEL_OK")
</pallas_src>

<mosaic_0001>
module attributes {stable_mosaic.version = 11 : i64} {
  func.func @_cnn_fused_kernel(%arg0: i32, %arg1: memref<36x16x36xbf16, #tpu.memory_space<vmem>>, %arg2: memref<5x4x36x60xbf16, #tpu.memory_space<vmem>>, %arg3: memref<5x2x60x60xbf16, #tpu.memory_space<vmem>>, %arg4: memref<3x60x12xbf16, #tpu.memory_space<vmem>>, %arg5: memref<1x60xf32, #tpu.memory_space<vmem>>, %arg6: memref<1x60xf32, #tpu.memory_space<vmem>>, %arg7: memref<1x12xf32, #tpu.memory_space<vmem>>, %arg8: memref<16x12xf32, #tpu.memory_space<vmem>>) attributes {dimension_semantics = [#tpu.dimension_semantics<parallel>], iteration_bounds = array<i64: 1>, scalar_prefetch = 0 : i64, scratch_operands = 0 : i64, tpu.core_type = #tpu.core_type<tc>, window_params = [{transform_indices = @transform_0, window_bounds = array<i64: 36, 16, 36>}, {pipeline_mode = #tpu.pipeline_mode<synchronous>, transform_indices = @transform_1, window_bounds = array<i64: 5, 4, 36, 60>}, {pipeline_mode = #tpu.pipeline_mode<synchronous>, transform_indices = @transform_2, window_bounds = array<i64: 5, 2, 60, 60>}, {pipeline_mode = #tpu.pipeline_mode<synchronous>, transform_indices = @transform_3, window_bounds = array<i64: 3, 60, 12>}, {pipeline_mode = #tpu.pipeline_mode<synchronous>, transform_indices = @transform_4, window_bounds = array<i64: 1, 60>}, {pipeline_mode = #tpu.pipeline_mode<synchronous>, transform_indices = @transform_5, window_bounds = array<i64: 1, 60>}, {pipeline_mode = #tpu.pipeline_mode<synchronous>, transform_indices = @transform_6, window_bounds = array<i64: 1, 12>}, {transform_indices = @transform_7, window_bounds = array<i64: 16, 12>}]} {
    %c0 = arith.constant 0 : index
    %c0_0 = arith.constant 0 : index
    %c0_1 = arith.constant 0 : index
    %0 = vector.load %arg1[%c0, %c0_0, %c0_1] : memref<36x16x36xbf16, #tpu.memory_space<vmem>>, vector<32x16x36xbf16>
    %1 = vector.shape_cast %0 : vector<32x16x36xbf16> to vector<512x36xbf16>
    %c1 = arith.constant 1 : index
    %c0_2 = arith.constant 0 : index
    %c0_3 = arith.constant 0 : index
    %2 = vector.load %arg1[%c1, %c0_2, %c0_3] : memref<36x16x36xbf16, #tpu.memory_space<vmem>>, vector<32x16x36xbf16>
    %3 = vector.shape_cast %2 : vector<32x16x36xbf16> to vector<512x36xbf16>
    %c2 = arith.constant 2 : index
    %c0_4 = arith.constant 0 : index
    %c0_5 = arith.constant 0 : index
    %4 = vector.load %arg1[%c2, %c0_4, %c0_5] : memref<36x16x36xbf16, #tpu.memory_space<vmem>>, vector<32x16x36xbf16>
    %5 = vector.shape_cast %4 : vector<32x16x36xbf16> to vector<512x36xbf16>
    %c3 = arith.constant 3 : index
    %c0_6 = arith.constant 0 : index
    %c0_7 = arith.constant 0 : index
    %6 = vector.load %arg1[%c3, %c0_6, %c0_7] : memref<36x16x36xbf16, #tpu.memory_space<vmem>>, vector<32x16x36xbf16>
    %7 = vector.shape_cast %6 : vector<32x16x36xbf16> to vector<512x36xbf16>
    %c4 = arith.constant 4 : index
    %c0_8 = arith.constant 0 : index
    %c0_9 = arith.constant 0 : index
    %8 = vector.load %arg1[%c4, %c0_8, %c0_9] : memref<36x16x36xbf16, #tpu.memory_space<vmem>>, vector<32x16x36xbf16>
    %9 = vector.shape_cast %8 : vector<32x16x36xbf16> to vector<512x36xbf16>
    %c0_10 = arith.constant 0 : index
    %c0_11 = arith.constant 0 : index
    %c0_12 = arith.constant 0 : index
    %c0_13 = arith.constant 0 : index
    %10 = vector.load %arg2[%c0_10, %c0_11, %c0_12, %c0_13] : memref<5x4x36x60xbf16, #tpu.memory_space<vmem>>, vector<1x1x36x60xbf16>
    %11 = vector.shape_cast %10 : vector<1x1x36x60xbf16> to vector<36x60xbf16>
    %cst = arith.constant dense<0.000000e+00> : vector<512x60xf32>
    %12 = tpu.matmul %1, %11, %cst {dimension_numbers = #tpu.dot_dimension_numbers<[1], [0], [0], [1], [0, 0, 1, 1], [], []>} : vector<512x36xbf16>, vector<36x60xbf16>, vector<512x60xf32> -> vector<512x60xf32>
    %c1_14 = arith.constant 1 : index
    %c0_15 = arith.constant 0 : index
    %c0_16 = arith.constant 0 : index
    %c0_17 = arith.constant 0 : index
    %13 = vector.load %arg2[%c1_14, %c0_15, %c0_16, %c0_17] : memref<5x4x36x60xbf16, #tpu.memory_space<vmem>>, vector<1x1x36x60xbf16>
    %14 = vector.shape_cast %13 : vector<1x1x36x60xbf16> to vector<36x60xbf16>
    %cst_18 = arith.constant dense<0.000000e+00> : vector<512x60xf32>
    %15 = tpu.matmul %3, %14, %cst_18 {dimension_numbers = #tpu.dot_dimension_numbers<[1], [0], [0], [1], [0, 0, 1, 1], [], []>} : vector<512x36xbf16>, vector<36x60xbf16>, vector<512x60xf32> -> vector<512x60xf32>
    %16 = arith.addf %12, %15 : vector<512x60xf32>
    %c2_19 = arith.constant 2 : index
    %c0_20 = arith.constant 0 : index
    %c0_21 = arith.constant 0 : index
    %c0_22 = arith.constant 0 : index
    %17 = vector.load %arg2[%c2_19, %c0_20, %c0_21, %c0_22] : memref<5x4x36x60xbf16, #tpu.memory_space<vmem>>, vector<1x1x36x60xbf16>
    %18 = vector.shape_cast %17 : vector<1x1x36x60xbf16> to vector<36x60xbf16>
    %cst_23 = arith.constant dense<0.000000e+00> : vector<512x60xf32>
    %19 = tpu.matmul %5, %18, %cst_23 {dimension_numbers = #tpu.dot_dimension_numbers<[1], [0], [0], [1], [0, 0, 1, 1], [], []>} : vector<512x36xbf16>, vector<36x60xbf16>, vector<512x60xf32> -> vector<512x60xf32>
    %20 = arith.addf %16, %19 : vector<512x60xf32>
    %c3_24 = arith.constant 3 : index
    %c0_25 = arith.constant 0 : index
    %c0_26 = arith.constant 0 : index
    %c0_27 = arith.constant 0 : index
    %21 = vector.load %arg2[%c3_24, %c0_25, %c0_26, %c0_27] : memref<5x4x36x60xbf16, #tpu.memory_space<vmem>>, vector<1x1x36x60xbf16>
    %22 = vector.shape_cast %21 : vector<1x1x36x60xbf16> to vector<36x60xbf16>
    %cst_28 = arith.constant dense<0.000000e+00> : vector<512x60xf32>
    %23 = tpu.matmul %7, %22, %cst_28 {dimension_numbers = #tpu.dot_dimension_numbers<[1], [0], [0], [1], [0, 0, 1, 1], [], []>} : vector<512x36xbf16>, vector<36x60xbf16>, vector<512x60xf32> -> vector<512x60xf32>
    %24 = arith.addf %20, %23 : vector<512x60xf32>
    %c4_29 = arith.constant 4 : index
    %c0_30 = arith.constant 0 : index
    %c0_31 = arith.constant 0 : index
    %c0_32 = arith.constant 0 : index
    %25 = vector.load %arg2[%c4_29, %c0_30, %c0_31, %c0_32] : memref<5x4x36x60xbf16, #tpu.memory_space<vmem>>, vector<1x1x36x60xbf16>
    %26 = vector.shape_cast %25 : vector<1x1x36x60xbf16> to vector<36x60xbf16>
    %cst_33 = arith.constant dense<0.000000e+00> : vector<512x60xf32>
    %27 = tpu.matmul %9, %26, %cst_33 {dimension_numbers = #tpu.dot_dimension_numbers<[1], [0], [0], [1], [0, 0, 1, 1], [], []>} : vector<512x36xbf16>, vector<36x60xbf16>, vector<512x60xf32> -> vector<512x60xf32>
    %28 = arith.addf %24, %27 : vector<512x60xf32>
    %c0_34 = arith.constant 0 : index
    %c1_35 = arith.constant 1 : index
    %c0_36 = arith.constant 0 : index
    %c0_37 = arith.constant 0 : index
    %29 = vector.load %arg2[%c0_34, %c1_35, %c0_36, %c0_37] : memref<5x4x36x60xbf16, #tpu.memory_space<vmem>>, vector<1x1x36x60xbf16>
    %30 = vector.shape_cast %29 : vector<1x1x36x60xbf16> to vector<36x60xbf16>
    %cst_38 = arith.constant dense<0.000000e+00> : vector<512x60xf32>
    %31 = tpu.matmul %1, %30, %cst_38 {dimension_numbers = #tpu.dot_dimension_numbers<[1], [0], [0], [1], [0, 0, 1, 1], [], []>} : vector<512x36xbf16>, vector<36x60xbf16>, vector<512x60xf32> -> vector<512x60xf32>
    %c1_39 = arith.constant 1 : index
    %c1_40 = arith.constant 1 : index
    %c0_41 = arith.constant 0 : index
    %c0_42 = arith.constant 0 : index
    %32 = vector.load %arg2[%c1_39, %c1_40, %c0_41, %c0_42] : memref<5x4x36x60xbf16, #tpu.memory_space<vmem>>, vector<1x1x36x60xbf16>
    %33 = vector.shape_cast %32 : vector<1x1x36x60xbf16> to vector<36x60xbf16>
    %cst_43 = arith.constant dense<0.000000e+00> : vector<512x60xf32>
    %34 = tpu.matmul %3, %33, %cst_43 {dimension_numbers = #tpu.dot_dimension_numbers<[1], [0], [0], [1], [0, 0, 1, 1], [], []>} : vector<512x36xbf16>, vector<36x60xbf16>, vector<512x60xf32> -> vector<512x60xf32>
    %35 = arith.addf %31, %34 : vector<512x60xf32>
    %c2_44 = arith.constant 2 : index
    %c1_45 = arith.constant 1 : index
    %c0_46 = arith.constant 0 : index
    %c0_47 = arith.constant 0 : index
    %36 = vector.load %arg2[%c2_44, %c1_45, %c0_46, %c0_47] : memref<5x4x36x60xbf16, #tpu.memory_space<vmem>>, vector<1x1x36x60xbf16>
    %37 = vector.shape_cast %36 : vector<1x1x36x60xbf16> to vector<36x60xbf16>
    %cst_48 = arith.constant dense<0.000000e+00> : vector<512x60xf32>
    %38 = tpu.matmul %5, %37, %cst_48 {dimension_numbers = #tpu.dot_dimension_numbers<[1], [0], [0], [1], [0, 0, 1, 1], [], []>} : vector<512x36xbf16>, vector<36x60xbf16>, vector<512x60xf32> -> vector<512x60xf32>
    %39 = arith.addf %35, %38 : vector<512x60xf32>
    %c3_49 = arith.constant 3 : index
    %c1_50 = arith.constant 1 : index
    %c0_51 = arith.constant 0 : index
    %c0_52 = arith.constant 0 : index
    %40 = vector.load %arg2[%c3_49, %c1_50, %c0_51, %c0_52] : memref<5x4x36x60xbf16, #tpu.memory_space<vmem>>, vector<1x1x36x60xbf16>
    %41 = vector.shape_cast %40 : vector<1x1x36x60xbf16> to vector<36x60xbf16>
    %cst_53 = arith.constant dense<0.000000e+00> : vector<512x60xf32>
    %42 = tpu.matmul %7, %41, %cst_53 {dimension_numbers = #tpu.dot_dimension_numbers<[1], [0], [0], [1], [0, 0, 1, 1], [], []>} : vector<512x36xbf16>, vector<36x60xbf16>, vector<512x60xf32> -> vector<512x60xf32>
    %43 = arith.addf %39, %42 : vector<512x60xf32>
    %c4_54 = arith.constant 4 : index
    %c1_55 = arith.constant 1 : index
    %c0_56 = arith.constant 0 : index
    %c0_57 = arith.constant 0 : index
    %44 = vector.load %arg2[%c4_54, %c1_55, %c0_56, %c0_57] : memref<5x4x36x60xbf16, #tpu.memory_space<vmem>>, vector<1x1x36x60xbf16>
    %45 = vector.shape_cast %44 : vector<1x1x36x60xbf16> to vector<36x60xbf16>
    %cst_58 = arith.constant dense<0.000000e+00> : vector<512x60xf32>
    %46 = tpu.matmul %9, %45, %cst_58 {dimension_numbers = #tpu.dot_dimension_numbers<[1], [0], [0], [1], [0, 0, 1, 1], [], []>} : vector<512x36xbf16>, vector<36x60xbf16>, vector<512x60xf32> -> vector<512x60xf32>
    %47 = arith.addf %43, %46 : vector<512x60xf32>
    %48 = arith.maximumf %28, %47 : vector<512x60xf32>
    %c0_59 = arith.constant 0 : index
    %c2_60 = arith.constant 2 : index
    %c0_61 = arith.constant 0 : index
    %c0_62 = arith.constant 0 : index
    %49 = vector.load %arg2[%c0_59, %c2_60, %c0_61, %c0_62] : memref<5x4x36x60xbf16, #tpu.memory_space<vmem>>, vector<1x1x36x60xbf16>
    %50 = vector.shape_cast %49 : vector<1x1x36x60xbf16> to vector<36x60xbf16>
    %cst_63 = arith.constant dense<0.000000e+00> : vector<512x60xf32>
    %51 = tpu.matmul %1, %50, %cst_63 {dimension_numbers = #tpu.dot_dimension_numbers<[1], [0], [0], [1], [0, 0, 1, 1], [], []>} : vector<512x36xbf16>, vector<36x60xbf16>, vector<512x60xf32> -> vector<512x60xf32>
    %c1_64 = arith.constant 1 : index
    %c2_65 = arith.constant 2 : index
    %c0_66 = arith.constant 0 : index
    %c0_67 = arith.constant 0 : index
    %52 = vector.load %arg2[%c1_64, %c2_65, %c0_66, %c0_67] : memref<5x4x36x60xbf16, #tpu.memory_space<vmem>>, vector<1x1x36x60xbf16>
    %53 = vector.shape_cast %52 : vector<1x1x36x60xbf16> to vector<36x60xbf16>
    %cst_68 = arith.constant dense<0.000000e+00> : vector<512x60xf32>
    %54 = tpu.matmul %3, %53, %cst_68 {dimension_numbers = #tpu.dot_dimension_numbers<[1], [0], [0], [1], [0, 0, 1, 1], [], []>} : vector<512x36xbf16>, vector<36x60xbf16>, vector<512x60xf32> -> vector<512x60xf32>
    %55 = arith.addf %51, %54 : vector<512x60xf32>
    %c2_69 = arith.constant 2 : index
    %c2_70 = arith.constant 2 : index
    %c0_71 = arith.constant 0 : index
    %c0_72 = arith.constant 0 : index
    %56 = vector.load %arg2[%c2_69, %c2_70, %c0_71, %c0_72] : memref<5x4x36x60xbf16, #tpu.memory_space<vmem>>, vector<1x1x36x60xbf16>
    %57 = vector.shape_cast %56 : vector<1x1x36x60xbf16> to vector<36x60xbf16>
    %cst_73 = arith.constant dense<0.000000e+00> : vector<512x60xf32>
    %58 = tpu.matmul %5, %57, %cst_73 {dimension_numbers = #tpu.dot_dimension_numbers<[1], [0], [0], [1], [0, 0, 1, 1], [], []>} : vector<512x36xbf16>, vector<36x60xbf16>, vector<512x60xf32> -> vector<512x60xf32>
    %59 = arith.addf %55, %58 : vector<512x60xf32>
    %c3_74 = arith.constant 3 : index
    %c2_75 = arith.constant 2 : index
    %c0_76 = arith.constant 0 : index
    %c0_77 = arith.constant 0 : index
    %60 = vector.load %arg2[%c3_74, %c2_75, %c0_76, %c0_77] : memref<5x4x36x60xbf16, #tpu.memory_space<vmem>>, vector<1x1x36x60xbf16>
    %61 = vector.shape_cast %60 : vector<1x1x36x60xbf16> to vector<36x60xbf16>
    %cst_78 = arith.constant dense<0.000000e+00> : vector<512x60xf32>
    %62 = tpu.matmul %7, %61, %cst_78 {dimension_numbers = #tpu.dot_dimension_numbers<[1], [0], [0], [1], [0, 0, 1, 1], [], []>} : vector<512x36xbf16>, vector<36x60xbf16>, vector<512x60xf32> -> vector<512x60xf32>
    %63 = arith.addf %59, %62 : vector<512x60xf32>
    %c4_79 = arith.constant 4 : index
    %c2_80 = arith.constant 2 : index
    %c0_81 = arith.constant 0 : index
    %c0_82 = arith.constant 0 : index
    %64 = vector.load %arg2[%c4_79, %c2_80, %c0_81, %c0_82] : memref<5x4x36x60xbf16, #tpu.memory_space<vmem>>, vector<1x1x36x60xbf16>
    %65 = vector.shape_cast %64 : vector<1x1x36x60xbf16> to vector<36x60xbf16>
    %cst_83 = arith.constant dense<0.000000e+00> : vector<512x60xf32>
    %66 = tpu.matmul %9, %65, %cst_83 {dimension_numbers = #tpu.dot_dimension_numbers<[1], [0], [0], [1], [0, 0, 1, 1], [], []>} : vector<512x36xbf16>, vector<36x60xbf16>, vector<512x60xf32> -> vector<512x60xf32>
    %67 = arith.addf %63, %66 : vector<512x60xf32>
    %68 = arith.maximumf %48, %67 : vector<512x60xf32>
    %c0_84 = arith.constant 0 : index
    %c3_85 = arith.constant 3 : index
    %c0_86 = arith.constant 0 : index
    %c0_87 = arith.constant 0 : index
    %69 = vector.load %arg2[%c0_84, %c3_85, %c0_86, %c0_87] : memref<5x4x36x60xbf16, #tpu.memory_space<vmem>>, vector<1x1x36x60xbf16>
    %70 = vector.shape_cast %69 : vector<1x1x36x60xbf16> to vector<36x60xbf16>
    %cst_88 = arith.constant dense<0.000000e+00> : vector<512x60xf32>
    %71 = tpu.matmul %1, %70, %cst_88 {dimension_numbers = #tpu.dot_dimension_numbers<[1], [0], [0], [1], [0, 0, 1, 1], [], []>} : vector<512x36xbf16>, vector<36x60xbf16>, vector<512x60xf32> -> vector<512x60xf32>
    %c1_89 = arith.constant 1 : index
    %c3_90 = arith.constant 3 : index
    %c0_91 = arith.constant 0 : index
    %c0_92 = arith.constant 0 : index
    %72 = vector.load %arg2[%c1_89, %c3_90, %c0_91, %c0_92] : memref<5x4x36x60xbf16, #tpu.memory_space<vmem>>, vector<1x1x36x60xbf16>
    %73 = vector.shape_cast %72 : vector<1x1x36x60xbf16> to vector<36x60xbf16>
    %cst_93 = arith.constant dense<0.000000e+00> : vector<512x60xf32>
    %74 = tpu.matmul %3, %73, %cst_93 {dimension_numbers = #tpu.dot_dimension_numbers<[1], [0], [0], [1], [0, 0, 1, 1], [], []>} : vector<512x36xbf16>, vector<36x60xbf16>, vector<512x60xf32> -> vector<512x60xf32>
    %75 = arith.addf %71, %74 : vector<512x60xf32>
    %c2_94 = arith.constant 2 : index
    %c3_95 = arith.constant 3 : index
    %c0_96 = arith.constant 0 : index
    %c0_97 = arith.constant 0 : index
    %76 = vector.load %arg2[%c2_94, %c3_95, %c0_96, %c0_97] : memref<5x4x36x60xbf16, #tpu.memory_space<vmem>>, vector<1x1x36x60xbf16>
    %77 = vector.shape_cast %76 : vector<1x1x36x60xbf16> to vector<36x60xbf16>
    %cst_98 = arith.constant dense<0.000000e+00> : vector<512x60xf32>
    %78 = tpu.matmul %5, %77, %cst_98 {dimension_numbers = #tpu.dot_dimension_numbers<[1], [0], [0], [1], [0, 0, 1, 1], [], []>} : vector<512x36xbf16>, vector<36x60xbf16>, vector<512x60xf32> -> vector<512x60xf32>
    %79 = arith.addf %75, %78 : vector<512x60xf32>
    %c3_99 = arith.constant 3 : index
    %c3_100 = arith.constant 3 : index
    %c0_101 = arith.constant 0 : index
    %c0_102 = arith.constant 0 : index
    %80 = vector.load %arg2[%c3_99, %c3_100, %c0_101, %c0_102] : memref<5x4x36x60xbf16, #tpu.memory_space<vmem>>, vector<1x1x36x60xbf16>
    %81 = vector.shape_cast %80 : vector<1x1x36x60xbf16> to vector<36x60xbf16>
    %cst_103 = arith.constant dense<0.000000e+00> : vector<512x60xf32>
    %82 = tpu.matmul %7, %81, %cst_103 {dimension_numbers = #tpu.dot_dimension_numbers<[1], [0], [0], [1], [0, 0, 1, 1], [], []>} : vector<512x36xbf16>, vector<36x60xbf16>, vector<512x60xf32> -> vector<512x60xf32>
    %83 = arith.addf %79, %82 : vector<512x60xf32>
    %c4_104 = arith.constant 4 : index
    %c3_105 = arith.constant 3 : index
    %c0_106 = arith.constant 0 : index
    %c0_107 = arith.constant 0 : index
    %84 = vector.load %arg2[%c4_104, %c3_105, %c0_106, %c0_107] : memref<5x4x36x60xbf16, #tpu.memory_space<vmem>>, vector<1x1x36x60xbf16>
    %85 = vector.shape_cast %84 : vector<1x1x36x60xbf16> to vector<36x60xbf16>
    %cst_108 = arith.constant dense<0.000000e+00> : vector<512x60xf32>
    %86 = tpu.matmul %9, %85, %cst_108 {dimension_numbers = #tpu.dot_dimension_numbers<[1], [0], [0], [1], [0, 0, 1, 1], [], []>} : vector<512x36xbf16>, vector<36x60xbf16>, vector<512x60xf32> -> vector<512x60xf32>
    %87 = arith.addf %83, %86 : vector<512x60xf32>
    %88 = arith.maximumf %68, %87 : vector<512x60xf32>
    %89 = vector.shape_cast %88 : vector<512x60xf32> to vector<8x4x16x60xf32>
    %90 = vector.extract_strided_slice %89 {offsets = [0, 0, 0, 0], sizes = [8, 1, 16, 60], strides = [1, 1, 1, 1]} : vector<8x4x16x60xf32> to vector<8x1x16x60xf32>
    %91 = vector.shape_cast %90 : vector<8x1x16x60xf32> to vector<8x16x60xf32>
    %92 = vector.extract_strided_slice %89 {offsets = [0, 1, 0, 0], sizes = [8, 1, 16, 60], strides = [1, 1, 1, 1]} : vector<8x4x16x60xf32> to vector<8x1x16x60xf32>
    %93 = vector.shape_cast %92 : vector<8x1x16x60xf32> to vector<8x16x60xf32>
    %94 = arith.maximumf %91, %93 : vector<8x16x60xf32>
    %95 = vector.extract_strided_slice %89 {offsets = [0, 2, 0, 0], sizes = [8, 1, 16, 60], strides = [1, 1, 1, 1]} : vector<8x4x16x60xf32> to vector<8x1x16x60xf32>
    %96 = vector.shape_cast %95 : vector<8x1x16x60xf32> to vector<8x16x60xf32>
    %97 = vector.extract_strided_slice %89 {offsets = [0, 3, 0, 0], sizes = [8, 1, 16, 60], strides = [1, 1, 1, 1]} : vector<8x4x16x60xf32> to vector<8x1x16x60xf32>
    %98 = vector.shape_cast %97 : vector<8x1x16x60xf32> to vector<8x16x60xf32>
    %99 = arith.maximumf %96, %98 : vector<8x16x60xf32>
    %100 = arith.maximumf %94, %99 : vector<8x16x60xf32>
    %c0_109 = arith.constant 0 : index
    %c0_110 = arith.constant 0 : index
    %101 = vector.load %arg5[%c0_109, %c0_110] : memref<1x60xf32, #tpu.memory_space<vmem>>, vector<1x60xf32>
    %102 = vector.shape_cast %101 : vector<1x60xf32> to vector<1x1x60xf32>
    %103 = vector.broadcast %102 : vector<1x1x60xf32> to vector<8x16x60xf32>
    %104 = arith.addf %100, %103 : vector<8x16x60xf32>
    %cst_111 = arith.constant 0.000000e+00 : f32
    %105 = vector.broadcast %cst_111 : f32 to vector<8x16x60xf32>
    %106 = arith.maximumf %104, %105 : vector<8x16x60xf32>
    %cst_112 = arith.constant 0.000000e+00 : f32
    %107 = vector.broadcast %cst_112 : f32 to vector<2x16x60xf32>
    %108 = tpu.concatenate %107, %106, %107 in 0 : vector<2x16x60xf32>, vector<8x16x60xf32>, vector<2x16x60xf32> -> vector<12x16x60xf32>
    %109 = vector.extract_strided_slice %108 {offsets = [0, 0, 0], sizes = [8, 16, 60], strides = [1, 1, 1]} : vector<12x16x60xf32> to vector<8x16x60xf32>
    %110 = vector.shape_cast %109 : vector<8x16x60xf32> to vector<128x60xf32>
    %111 = arith.truncf %110 : vector<128x60xf32> to vector<128x60xbf16>
    %112 = vector.extract_strided_slice %108 {offsets = [1, 0, 0], sizes = [8, 16, 60], strides = [1, 1, 1]} : vector<12x16x60xf32> to vector<8x16x60xf32>
    %113 = vector.shape_cast %112 : vector<8x16x60xf32> to vector<128x60xf32>
    %114 = arith.truncf %113 : vector<128x60xf32> to vector<128x60xbf16>
    %115 = vector.extract_strided_slice %108 {offsets = [2, 0, 0], sizes = [8, 16, 60], strides = [1, 1, 1]} : vector<12x16x60xf32> to vector<8x16x60xf32>
    %116 = vector.shape_cast %115 : vector<8x16x60xf32> to vector<128x60xf32>
    %117 = arith.truncf %116 : vector<128x60xf32> to vector<128x60xbf16>
    %118 = vector.extract_strided_slice %108 {offsets = [3, 0, 0], sizes = [8, 16, 60], strides = [1, 1, 1]} : vector<12x16x60xf32> to vector<8x16x60xf32>
    %119 = vector.shape_cast %118 : vector<8x16x60xf32> to vector<128x60xf32>
    %120 = arith.truncf %119 : vector<128x60xf32> to vector<128x60xbf16>
    %121 = vector.extract_strided_slice %108 {offsets = [4, 0, 0], sizes = [8, 16, 60], strides = [1, 1, 1]} : vector<12x16x60xf32> to vector<8x16x60xf32>
    %122 = vector.shape_cast %121 : vector<8x16x60xf32> to vector<128x60xf32>
    %123 = arith.truncf %122 : vector<128x60xf32> to vector<128x60xbf16>
    %c0_113 = arith.constant 0 : index
    %c0_114 = arith.constant 0 : index
    %c0_115 = arith.constant 0 : index
    %c0_116 = arith.constant 0 : index
    %124 = vector.load %arg3[%c0_113, %c0_114, %c0_115, %c0_116] : memref<5x2x60x60xbf16, #tpu.memory_space<vmem>>, vector<1x1x60x60xbf16>
    %125 = vector.shape_cast %124 : vector<1x1x60x60xbf16> to vector<60x60xbf16>
    %cst_117 = arith.constant dense<0.000000e+00> : vector<128x60xf32>
    %126 = tpu.matmul %111, %125, %cst_117 {dimension_numbers = #tpu.dot_dimension_numbers<[1], [0], [0], [1], [0, 0, 1, 1], [], []>} : vector<128x60xbf16>, vector<60x60xbf16>, vector<128x60xf32> -> vector<128x60xf32>
    %c1_118 = arith.constant 1 : index
    %c0_119 = arith.constant 0 : index
    %c0_120 = arith.constant 0 : index
    %c0_121 = arith.constant 0 : index
    %127 = vector.load %arg3[%c1_118, %c0_119, %c0_120, %c0_121] : memref<5x2x60x60xbf16, #tpu.memory_space<vmem>>, vector<1x1x60x60xbf16>
    %128 = vector.shape_cast %127 : vector<1x1x60x60xbf16> to vector<60x60xbf16>
    %cst_122 = arith.constant dense<0.000000e+00> : vector<128x60xf32>
    %129 = tpu.matmul %114, %128, %cst_122 {dimension_numbers = #tpu.dot_dimension_numbers<[1], [0], [0], [1], [0, 0, 1, 1], [], []>} : vector<128x60xbf16>, vector<60x60xbf16>, vector<128x60xf32> -> vector<128x60xf32>
    %130 = arith.addf %126, %129 : vector<128x60xf32>
    %c2_123 = arith.constant 2 : index
    %c0_124 = arith.constant 0 : index
    %c0_125 = arith.constant 0 : index
    %c0_126 = arith.constant 0 : index
    %131 = vector.load %arg3[%c2_123, %c0_124, %c0_125, %c0_126] : memref<5x2x60x60xbf16, #tpu.memory_space<vmem>>, vector<1x1x60x60xbf16>
    %132 = vector.shape_cast %131 : vector<1x1x60x60xbf16> to vector<60x60xbf16>
    %cst_127 = arith.constant dense<0.000000e+00> : vector<128x60xf32>
    %133 = tpu.matmul %117, %132, %cst_127 {dimension_numbers = #tpu.dot_dimension_numbers<[1], [0], [0], [1], [0, 0, 1, 1], [], []>} : vector<128x60xbf16>, vector<60x60xbf16>, vector<128x60xf32> -> vector<128x60xf32>
    %134 = arith.addf %130, %133 : vector<128x60xf32>
    %c3_128 = arith.constant 3 : index
    %c0_129 = arith.constant 0 : index
    %c0_130 = arith.constant 0 : index
    %c0_131 = arith.constant 0 : index
    %135 = vector.load %arg3[%c3_128, %c0_129, %c0_130, %c0_131] : memref<5x2x60x60xbf16, #tpu.memory_space<vmem>>, vector<1x1x60x60xbf16>
    %136 = vector.shape_cast %135 : vector<1x1x60x60xbf16> to vector<60x60xbf16>
    %cst_132 = arith.constant dense<0.000000e+00> : vector<128x60xf32>
    %137 = tpu.matmul %120, %136, %cst_132 {dimension_numbers = #tpu.dot_dimension_numbers<[1], [0], [0], [1], [0, 0, 1, 1], [], []>} : vector<128x60xbf16>, vector<60x60xbf16>, vector<128x60xf32> -> vector<128x60xf32>
    %138 = arith.addf %134, %137 : vector<128x60xf32>
    %c4_133 = arith.constant 4 : index
    %c0_134 = arith.constant 0 : index
    %c0_135 = arith.constant 0 : index
    %c0_136 = arith.constant 0 : index
    %139 = vector.load %arg3[%c4_133, %c0_134, %c0_135, %c0_136] : memref<5x2x60x60xbf16, #tpu.memory_space<vmem>>, vector<1x1x60x60xbf16>
    %140 = vector.shape_cast %139 : vector<1x1x60x60xbf16> to vector<60x60xbf16>
    %cst_137 = arith.constant dense<0.000000e+00> : vector<128x60xf32>
    %141 = tpu.matmul %123, %140, %cst_137 {dimension_numbers = #tpu.dot_dimension_numbers<[1], [0], [0], [1], [0, 0, 1, 1], [], []>} : vector<128x60xbf16>, vector<60x60xbf16>, vector<128x60xf32> -> vector<128x60xf32>
    %142 = arith.addf %138, %141 : vector<128x60xf32>
    %c0_138 = arith.constant 0 : index
    %c1_139 = arith.constant 1 : index
    %c0_140 = arith.constant 0 : index
    %c0_141 = arith.constant 0 : index
    %143 = vector.load %arg3[%c0_138, %c1_139, %c0_140, %c0_141] : memref<5x2x60x60xbf16, #tpu.memory_space<vmem>>, vector<1x1x60x60xbf16>
    %144 = vector.shape_cast %143 : vector<1x1x60x60xbf16> to vector<60x60xbf16>
    %cst_142 = arith.constant dense<0.000000e+00> : vector<128x60xf32>
    %145 = tpu.matmul %111, %144, %cst_142 {dimension_numbers = #tpu.dot_dimension_numbers<[1], [0], [0], [1], [0, 0, 1, 1], [], []>} : vector<128x60xbf16>, vector<60x60xbf16>, vector<128x60xf32> -> vector<128x60xf32>
    %c1_143 = arith.constant 1 : index
    %c1_144 = arith.constant 1 : index
    %c0_145 = arith.constant 0 : index
    %c0_146 = arith.constant 0 : index
    %146 = vector.load %arg3[%c1_143, %c1_144, %c0_145, %c0_146] : memref<5x2x60x60xbf16, #tpu.memory_space<vmem>>, vector<1x1x60x60xbf16>
    %147 = vector.shape_cast %146 : vector<1x1x60x60xbf16> to vector<60x60xbf16>
    %cst_147 = arith.constant dense<0.000000e+00> : vector<128x60xf32>
    %148 = tpu.matmul %114, %147, %cst_147 {dimension_numbers = #tpu.dot_dimension_numbers<[1], [0], [0], [1], [0, 0, 1, 1], [], []>} : vector<128x60xbf16>, vector<60x60xbf16>, vector<128x60xf32> -> vector<128x60xf32>
    %149 = arith.addf %145, %148 : vector<128x60xf32>
    %c2_148 = arith.constant 2 : index
    %c1_149 = arith.constant 1 : index
    %c0_150 = arith.constant 0 : index
    %c0_151 = arith.constant 0 : index
    %150 = vector.load %arg3[%c2_148, %c1_149, %c0_150, %c0_151] : memref<5x2x60x60xbf16, #tpu.memory_space<vmem>>, vector<1x1x60x60xbf16>
    %151 = vector.shape_cast %150 : vector<1x1x60x60xbf16> to vector<60x60xbf16>
    %cst_152 = arith.constant dense<0.000000e+00> : vector<128x60xf32>
    %152 = tpu.matmul %117, %151, %cst_152 {dimension_numbers = #tpu.dot_dimension_numbers<[1], [0], [0], [1], [0, 0, 1, 1], [], []>} : vector<128x60xbf16>, vector<60x60xbf16>, vector<128x60xf32> -> vector<128x60xf32>
    %153 = arith.addf %149, %152 : vector<128x60xf32>
    %c3_153 = arith.constant 3 : index
    %c1_154 = arith.constant 1 : index
    %c0_155 = arith.constant 0 : index
    %c0_156 = arith.constant 0 : index
    %154 = vector.load %arg3[%c3_153, %c1_154, %c0_155, %c0_156] : memref<5x2x60x60xbf16, #tpu.memory_space<vmem>>, vector<1x1x60x60xbf16>
    %155 = vector.shape_cast %154 : vector<1x1x60x60xbf16> to vector<60x60xbf16>
    %cst_157 = arith.constant dense<0.000000e+00> : vector<128x60xf32>
    %156 = tpu.matmul %120, %155, %cst_157 {dimension_numbers = #tpu.dot_dimension_numbers<[1], [0], [0], [1], [0, 0, 1, 1], [], []>} : vector<128x60xbf16>, vector<60x60xbf16>, vector<128x60xf32> -> vector<128x60xf32>
    %157 = arith.addf %153, %156 : vector<128x60xf32>
    %c4_158 = arith.constant 4 : index
    %c1_159 = arith.constant 1 : index
    %c0_160 = arith.constant 0 : index
    %c0_161 = arith.constant 0 : index
    %158 = vector.load %arg3[%c4_158, %c1_159, %c0_160, %c0_161] : memref<5x2x60x60xbf16, #tpu.memory_space<vmem>>, vector<1x1x60x60xbf16>
    %159 = vector.shape_cast %158 : vector<1x1x60x60xbf16> to vector<60x60xbf16>
    %cst_162 = arith.constant dense<0.000000e+00> : vector<128x60xf32>
    %160 = tpu.matmul %123, %159, %cst_162 {dimension_numbers = #tpu.dot_dimension_numbers<[1], [0], [0], [1], [0, 0, 1, 1], [], []>} : vector<128x60xbf16>, vector<60x60xbf16>, vector<128x60xf32> -> vector<128x60xf32>
    %161 = arith.addf %157, %160 : vector<128x60xf32>
    %162 = arith.maximumf %142, %161 : vector<128x60xf32>
    %163 = vector.shape_cast %162 : vector<128x60xf32> to vector<4x2x16x60xf32>
    %164 = vector.extract_strided_slice %163 {offsets = [0, 0, 0, 0], sizes = [4, 1, 16, 60], strides = [1, 1, 1, 1]} : vector<4x2x16x60xf32> to vector<4x1x16x60xf32>
    %165 = vector.shape_cast %164 : vector<4x1x16x60xf32> to vector<4x16x60xf32>
    %166 = vector.extract_strided_slice %163 {offsets = [0, 1, 0, 0], sizes = [4, 1, 16, 60], strides = [1, 1, 1, 1]} : vector<4x2x16x60xf32> to vector<4x1x16x60xf32>
    %167 = vector.shape_cast %166 : vector<4x1x16x60xf32> to vector<4x16x60xf32>
    %168 = arith.maximumf %165, %167 : vector<4x16x60xf32>
    %c0_163 = arith.constant 0 : index
    %c0_164 = arith.constant 0 : index
    %169 = vector.load %arg6[%c0_163, %c0_164] : memref<1x60xf32, #tpu.memory_space<vmem>>, vector<1x60xf32>
    %170 = vector.shape_cast %169 : vector<1x60xf32> to vector<1x1x60xf32>
    %171 = vector.broadcast %170 : vector<1x1x60xf32> to vector<4x16x60xf32>
    %172 = arith.addf %168, %171 : vector<4x16x60xf32>
    %cst_165 = arith.constant 0.000000e+00 : f32
    %173 = vector.broadcast %cst_165 : f32 to vector<4x16x60xf32>
    %174 = arith.maximumf %172, %173 : vector<4x16x60xf32>
    %175 = vector.extract_strided_slice %174 {offsets = [0, 0, 0], sizes = [1, 16, 60], strides = [1, 1, 1]} : vector<4x16x60xf32> to vector<1x16x60xf32>
    %176 = vector.shape_cast %175 : vector<1x16x60xf32> to vector<16x60xf32>
    %177 = vector.extract_strided_slice %174 {offsets = [1, 0, 0], sizes = [1, 16, 60], strides = [1, 1, 1]} : vector<4x16x60xf32> to vector<1x16x60xf32>
    %178 = vector.shape_cast %177 : vector<1x16x60xf32> to vector<16x60xf32>
    %179 = arith.addf %176, %178 : vector<16x60xf32>
    %180 = vector.extract_strided_slice %174 {offsets = [2, 0, 0], sizes = [1, 16, 60], strides = [1, 1, 1]} : vector<4x16x60xf32> to vector<1x16x60xf32>
    %181 = vector.shape_cast %180 : vector<1x16x60xf32> to vector<16x60xf32>
    %182 = arith.addf %179, %181 : vector<16x60xf32>
    %183 = vector.extract_strided_slice %174 {offsets = [3, 0, 0], sizes = [1, 16, 60], strides = [1, 1, 1]} : vector<4x16x60xf32> to vector<1x16x60xf32>
    %184 = vector.shape_cast %183 : vector<1x16x60xf32> to vector<16x60xf32>
    %185 = arith.addf %182, %184 : vector<16x60xf32>
    %186 = vector.extract_strided_slice %174 {offsets = [3, 0, 0], sizes = [1, 16, 60], strides = [1, 1, 1]} : vector<4x16x60xf32> to vector<1x16x60xf32>
    %187 = vector.shape_cast %186 : vector<1x16x60xf32> to vector<16x60xf32>
    %188 = arith.subf %185, %187 : vector<16x60xf32>
    %189 = arith.truncf %188 : vector<16x60xf32> to vector<16x60xbf16>
    %190 = arith.truncf %185 : vector<16x60xf32> to vector<16x60xbf16>
    %191 = vector.extract_strided_slice %174 {offsets = [0, 0, 0], sizes = [1, 16, 60], strides = [1, 1, 1]} : vector<4x16x60xf32> to vector<1x16x60xf32>
    %192 = vector.shape_cast %191 : vector<1x16x60xf32> to vector<16x60xf32>
    %193 = arith.subf %185, %192 : vector<16x60xf32>
    %194 = arith.truncf %193 : vector<16x60xf32> to vector<16x60xbf16>
    %c0_166 = arith.constant 0 : index
    %c0_167 = arith.constant 0 : index
    %c0_168 = arith.constant 0 : index
    %195 = vector.load %arg4[%c0_166, %c0_167, %c0_168] : memref<3x60x12xbf16, #tpu.memory_space<vmem>>, vector<1x60x12xbf16>
    %196 = vector.shape_cast %195 : vector<1x60x12xbf16> to vector<60x12xbf16>
    %cst_169 = arith.constant dense<0.000000e+00> : vector<16x12xf32>
    %197 = tpu.matmul %189, %196, %cst_169 {dimension_numbers = #tpu.dot_dimension_numbers<[1], [0], [0], [1], [0, 0, 1, 1], [], []>} : vector<16x60xbf16>, vector<60x12xbf16>, vector<16x12xf32> -> vector<16x12xf32>
    %c1_170 = arith.constant 1 : index
    %c0_171 = arith.constant 0 : index
    %c0_172 = arith.constant 0 : index
    %198 = vector.load %arg4[%c1_170, %c0_171, %c0_172] : memref<3x60x12xbf16, #tpu.memory_space<vmem>>, vector<1x60x12xbf16>
    %199 = vector.shape_cast %198 : vector<1x60x12xbf16> to vector<60x12xbf16>
    %cst_173 = arith.constant dense<0.000000e+00> : vector<16x12xf32>
    %200 = tpu.matmul %190, %199, %cst_173 {dimension_numbers = #tpu.dot_dimension_numbers<[1], [0], [0], [1], [0, 0, 1, 1], [], []>} : vector<16x60xbf16>, vector<60x12xbf16>, vector<16x12xf32> -> vector<16x12xf32>
    %201 = arith.addf %197, %200 : vector<16x12xf32>
    %c2_174 = arith.constant 2 : index
    %c0_175 = arith.constant 0 : index
    %c0_176 = arith.constant 0 : index
    %202 = vector.load %arg4[%c2_174, %c0_175, %c0_176] : memref<3x60x12xbf16, #tpu.memory_space<vmem>>, vector<1x60x12xbf16>
    %203 = vector.shape_cast %202 : vector<1x60x12xbf16> to vector<60x12xbf16>
    %cst_177 = arith.constant dense<0.000000e+00> : vector<16x12xf32>
    %204 = tpu.matmul %194, %203, %cst_177 {dimension_numbers = #tpu.dot_dimension_numbers<[1], [0], [0], [1], [0, 0, 1, 1], [], []>} : vector<16x60xbf16>, vector<60x12xbf16>, vector<16x12xf32> -> vector<16x12xf32>
    %205 = arith.addf %201, %204 : vector<16x12xf32>
    %cst_178 = arith.constant 6.250000e-02 : f32
    %206 = vector.broadcast %cst_178 : f32 to vector<16x12xf32>
    %207 = arith.mulf %205, %206 : vector<16x12xf32>
    %c0_179 = arith.constant 0 : index
    %c0_180 = arith.constant 0 : index
    %208 = vector.load %arg7[%c0_179, %c0_180] : memref<1x12xf32, #tpu.memory_space<vmem>>, vector<1x12xf32>
    %209 = vector.broadcast %208 : vector<1x12xf32> to vector<16x12xf32>
    %210 = arith.addf %207, %209 : vector<16x12xf32>
    %c0_181 = arith.constant 0 : index
    %c0_182 = arith.constant 0 : index
    %211 = vector.load %arg8[%c0_181, %c0_182] : memref<16x12xf32, #tpu.memory_space<vmem>>, vector<16x12xf32>
    tpu.vector_store %arg8[%c0_181, %c0_182], %210 {strides = array<i32>} : memref<16x12xf32, #tpu.memory_space<vmem>>, vector<16x12xf32>,
    return
  }
  func.func @transform_0(%arg0: i32) -> (i32, i32, i32) {
    %c0_i32 = arith.constant 0 : i32
    %c0_i32_0 = arith.constant 0 : i32
    %c0_i32_1 = arith.constant 0 : i32
    return %c0_i32, %arg0, %c0_i32_0 : i32, i32, i32
  }
  func.func @transform_1(%arg0: i32) -> (i32, i32, i32, i32) {
    %c0_i32 = arith.constant 0 : i32
    %c0_i32_0 = arith.constant 0 : i32
    %c0_i32_1 = arith.constant 0 : i32
    %c0_i32_2 = arith.constant 0 : i32
    %c0_i32_3 = arith.constant 0 : i32
    return %c0_i32, %c0_i32_0, %c0_i32_1, %c0_i32_2 : i32, i32, i32, i32
  }
  func.func @transform_2(%arg0: i32) -> (i32, i32, i32, i32) {
    %c0_i32 = arith.constant 0 : i32
    %c0_i32_0 = arith.constant 0 : i32
    %c0_i32_1 = arith.constant 0 : i32
    %c0_i32_2 = arith.constant 0 : i32
    %c0_i32_3 = arith.constant 0 : i32
    return %c0_i32, %c0_i32_0, %c0_i32_1, %c0_i32_2 : i32, i32, i32, i32
  }
  func.func @transform_3(%arg0: i32) -> (i32, i32, i32) {
    %c0_i32 = arith.constant 0 : i32
    %c0_i32_0 = arith.constant 0 : i32
    %c0_i32_1 = arith.constant 0 : i32
    %c0_i32_2 = arith.constant 0 : i32
    return %c0_i32, %c0_i32_0, %c0_i32_1 : i32, i32, i32
  }
  func.func @transform_4(%arg0: i32) -> (i32, i32) {
    %c0_i32 = arith.constant 0 : i32
    %c0_i32_0 = arith.constant 0 : i32
    %c0_i32_1 = arith.constant 0 : i32
    return %c0_i32, %c0_i32_0 : i32, i32
  }
  func.func @transform_5(%arg0: i32) -> (i32, i32) {
    %c0_i32 = arith.constant 0 : i32
    %c0_i32_0 = arith.constant 0 : i32
    %c0_i32_1 = arith.constant 0 : i32
    return %c0_i32, %c0_i32_0 : i32, i32
  }
  func.func @transform_6(%arg0: i32) -> (i32, i32) {
    %c0_i32 = arith.constant 0 : i32
    %c0_i32_0 = arith.constant 0 : i32
    %c0_i32_1 = arith.constant 0 : i32
    return %c0_i32, %c0_i32_0 : i32, i32
  }
  func.func @transform_7(%arg0: i32) -> (i32, i32) {
    %c0_i32 = arith.constant 0 : i32
    %c0_i32_0 = arith.constant 0 : i32
    return %arg0, %c0_i32 : i32, i32
  }
}

</mosaic_0001>

<llo_original>
// kernel: cnn_forward.1
$region0: #{cnn_forward.1}
  #allocation0 [shape = 'u32[]', space=smem, size = 0x4, offset = 0x4, fixed_abs, tag = 'smem constant byte address 0x4 - core index']
  #allocation1 [shape = 'u32[144,128]{1,0:T(1,128)}', space=vmem, size = 0x12000, scoped, tag = 'internal scratch']
  %s0 = inlined_call_operand.vmem [shape: bf16[36,16,36], index: 0, kind: input, shape index: {}]
  %s1 = inlined_call_operand.vmem [shape: bf16[5,4,36,60], index: 1, kind: input, shape index: {}]
  %s2 = inlined_call_operand.vmem [shape: bf16[5,2,60,60], index: 2, kind: input, shape index: {}]
  %s3 = inlined_call_operand.vmem [shape: bf16[3,60,12], index: 3, kind: input, shape index: {}]
  %s4 = inlined_call_operand.vmem [shape: f32[1,60], index: 4, kind: input, shape index: {}]
  %s5 = inlined_call_operand.vmem [shape: f32[1,60], index: 5, kind: input, shape index: {}]
  %s6 = inlined_call_operand.vmem [shape: f32[1,12], index: 6, kind: input, shape index: {}]
  %s7 = inlined_call_operand.vmem [shape: f32[16,12], index: 7, kind: output, shape index: {}]
  %s8 = sld [smem:[#allocation0]]
  $region38: #{cnn_forward.1} parent=0
    _
  %s10 = ssub.s32 1, %s8
  %s11 = scalar_select 0, %s10, %s8
  // Predicated region
  $region2: #{cnn_forward.1} parent=0 // pred_check
    _
  $region3: #{cnn_forward.1} parent=0 // pred_check_branch
    %13 = sbr.rel (0) target = $region5
  $region4: #{cnn_forward.1} parent=0 // pred_region
    _
  $region5: #{cnn_forward.1} parent=0 // pred_fallthru
    _
  // Predicated region
  $region6: #{cnn_forward.1} parent=0 // pred_check
    _
  $region7: #{cnn_forward.1} parent=0 // pred_check_branch
    %15 = sbr.rel (0) target = $region9
  $region8: #{cnn_forward.1} parent=0 // pred_region
    _
  $region9: #{cnn_forward.1} parent=0 // pred_fallthru
    _
  // Predicated region
  $region10: #{cnn_forward.1} parent=0 // pred_check
    _
  $region11: #{cnn_forward.1} parent=0 // pred_check_branch
    %17 = sbr.rel (0) target = $region13
  $region12: #{cnn_forward.1} parent=0 // pred_region
    _
  $region13: #{cnn_forward.1} parent=0 // pred_fallthru
    _
  // Predicated region
  $region14: #{cnn_forward.1} parent=0 // pred_check
    _
  $region15: #{cnn_forward.1} parent=0 // pred_check_branch
    %19 = sbr.rel (0) target = $region17
  $region16: #{cnn_forward.1} parent=0 // pred_region
    _
  $region17: #{cnn_forward.1} parent=0 // pred_fallthru
    _
  // Predicated region
  $region18: #{cnn_forward.1} parent=0 // pred_check
    _
  $region19: #{cnn_forward.1} parent=0 // pred_check_branch
    %21 = sbr.rel (0) target = $region21
  $region20: #{cnn_forward.1} parent=0 // pred_region
    _
  $region21: #{cnn_forward.1} parent=0 // pred_fallthru
    _
  // Predicated region
  $region22: #{cnn_forward.1} parent=0 // pred_check
    _
  $region23: #{cnn_forward.1} parent=0 // pred_check_branch
    %23 = sbr.rel (0) target = $region25
  $region24: #{cnn_forward.1} parent=0 // pred_region
    _
  $region25: #{cnn_forward.1} parent=0 // pred_fallthru
    _
  // Predicated region
  $region26: #{cnn_forward.1} parent=0 // pred_check
    _
  $region27: #{cnn_forward.1} parent=0 // pred_check_branch
    %25 = sbr.rel (0) target = $region29
  $region28: #{cnn_forward.1} parent=0 // pred_region
    _
  $region29: #{cnn_forward.1} parent=0 // pred_fallthru
    _
  %v27 = vld [vmem:[%s0] sm:$0xf]
  %v28 = vld [vmem:[%s0 + $0x4] sm:$0xf]
  %v29 = vld [vmem:[%s0 + $0x8] sm:$0xf]
  %v30 = vld [vmem:[%s0 + $0xc] sm:$0xf]
  %v31 = vld [vmem:[%s0 + $0x10] sm:$0xf]
  %v32 = vld [vmem:[%s0 + $0x14] sm:$0xf]
  %v33 = vld [vmem:[%s0 + $0x18] sm:$0xf]
  %v34 = vld [vmem:[%s0 + $0x1c] sm:$0xf]
  %v35 = vld [vmem:[%s0 + $0x20] sm:$0xf]
  %v36 = vld [vmem:[%s0 + $0x24] sm:$0xf]
  %v37 = vld [vmem:[%s0 + $0x28] sm:$0xf]
  %v38 = vld [vmem:[%s0 + $0x2c] sm:$0xf]
  %v39 = vld [vmem:[%s0 + $0x30] sm:$0xf]
  %v40 = vld [vmem:[%s0 + $0x34] sm:$0xf]
  %v41 = vld [vmem:[%s0 + $0x38] sm:$0xf]
  %v42 = vld [vmem:[%s0 + $0x3c] sm:$0xf]
  %v43 = vld [vmem:[%s0 + $0x40] sm:$0xf]
  %v44 = vld [vmem:[%s0 + $0x44] sm:$0xf]
  %v45 = vld [vmem:[%s0 + $0x48] sm:$0xf]
  %v46 = vld [vmem:[%s0 + $0x4c] sm:$0xf]
  %v47 = vld [vmem:[%s0 + $0x50] sm:$0xf]
  %v48 = vld [vmem:[%s0 + $0x54] sm:$0xf]
  %v49 = vld [vmem:[%s0 + $0x58] sm:$0xf]
  %v50 = vld [vmem:[%s0 + $0x5c] sm:$0xf]
  %v51 = vld [vmem:[%s0 + $0x60] sm:$0xf]
  %v52 = vld [vmem:[%s0 + $0x64] sm:$0xf]
  %v53 = vld [vmem:[%s0 + $0x68] sm:$0xf]
  %v54 = vld [vmem:[%s0 + $0x6c] sm:$0xf]
  %v55 = vld [vmem:[%s0 + $0x70] sm:$0xf]
  %v56 = vld [vmem:[%s0 + $0x74] sm:$0xf]
  %v57 = vld [vmem:[%s0 + $0x78] sm:$0xf]
  %v58 = vld [vmem:[%s0 + $0x7c] sm:$0xf]
  %v59 = vld [vmem:[%s0 + $0x80] sm:$0xf]
  %v60 = vld [vmem:[%s0 + $0x84] sm:$0xf]
  %v61 = vld [vmem:[%s0 + $0x88] sm:$0xf]
  %v62 = vld [vmem:[%s0 + $0x8c] sm:$0xf]
  %v63 = vld [vmem:[%s0 + $0x90] sm:$0xf]
  %v64 = vld [vmem:[%s0 + $0x94] sm:$0xf]
  %v65 = vld [vmem:[%s0 + $0x98] sm:$0xf]
  %v66 = vld [vmem:[%s0 + $0x9c] sm:$0xf]
  %v67 = vld [vmem:[%s0 + $0xa0] sm:$0xf]
  %v68 = vld [vmem:[%s0 + $0xa4] sm:$0xf]
  %v69 = vld [vmem:[%s0 + $0xa8] sm:$0xf]
  %v70 = vld [vmem:[%s0 + $0xac] sm:$0xf]
  %v71 = vld [vmem:[%s0 + $0xb0] sm:$0xf]
  %v72 = vld [vmem:[%s0 + $0xb4] sm:$0xf]
  %v73 = vld [vmem:[%s0 + $0xb8] sm:$0xf]
  %v74 = vld [vmem:[%s0 + $0xbc] sm:$0xf]
  %v75 = vld [vmem:[%s0 + $0xc0] sm:$0xf]
  %v76 = vld [vmem:[%s0 + $0xc4] sm:$0xf]
  %v77 = vld [vmem:[%s0 + $0xc8] sm:$0xf]
  %v78 = vld [vmem:[%s0 + $0xcc] sm:$0xf]
  %v79 = vld [vmem:[%s0 + $0xd0] sm:$0xf]
  %v80 = vld [vmem:[%s0 + $0xd4] sm:$0xf]
  %v81 = vld [vmem:[%s0 + $0xd8] sm:$0xf]
  %v82 = vld [vmem:[%s0 + $0xdc] sm:$0xf]
  %v83 = vld [vmem:[%s0 + $0xe0] sm:$0xf]
  %v84 = vld [vmem:[%s0 + $0xe4] sm:$0xf]
  %v85 = vld [vmem:[%s0 + $0xe8] sm:$0xf]
  %v86 = vld [vmem:[%s0 + $0xec] sm:$0xf]
  %v87 = vld [vmem:[%s0 + $0xf0] sm:$0xf]
  %v88 = vld [vmem:[%s0 + $0xf4] sm:$0xf]
  %v89 = vld [vmem:[%s0 + $0xf8] sm:$0xf]
  %v90 = vld [vmem:[%s0 + $0xfc] sm:$0xf]
  %s91 = scalar_lea.vmem %s0, 8
  %v92 = vld [vmem:[%s91] sm:$0xf]
  %v93 = vld [vmem:[%s91 + $0x4] sm:$0xf]
  %v94 = vld [vmem:[%s91 + $0x8] sm:$0xf]
  %v95 = vld [vmem:[%s91 + $0xc] sm:$0xf]
  %v96 = vld [vmem:[%s91 + $0x10] sm:$0xf]
  %v97 = vld [vmem:[%s91 + $0x14] sm:$0xf]
  %v98 = vld [vmem:[%s91 + $0x18] sm:$0xf]
  %v99 = vld [vmem:[%s91 + $0x1c] sm:$0xf]
  %v100 = vld [vmem:[%s91 + $0x20] sm:$0xf]
  %v101 = vld [vmem:[%s91 + $0x24] sm:$0xf]
  %v102 = vld [vmem:[%s91 + $0x28] sm:$0xf]
  %v103 = vld [vmem:[%s91 + $0x2c] sm:$0xf]
  %v104 = vld [vmem:[%s91 + $0x30] sm:$0xf]
  %v105 = vld [vmem:[%s91 + $0x34] sm:$0xf]
  %v106 = vld [vmem:[%s91 + $0x38] sm:$0xf]
  %v107 = vld [vmem:[%s91 + $0x3c] sm:$0xf]
  %v108 = vld [vmem:[%s91 + $0x40] sm:$0xf]
  %v109 = vld [vmem:[%s91 + $0x44] sm:$0xf]
  %v110 = vld [vmem:[%s91 + $0x48] sm:$0xf]
  %v111 = vld [vmem:[%s91 + $0x4c] sm:$0xf]
  %v112 = vld [vmem:[%s91 + $0x50] sm:$0xf]
  %v113 = vld [vmem:[%s91 + $0x54] sm:$0xf]
  %v114 = vld [vmem:[%s91 + $0x58] sm:$0xf]
  %v115 = vld [vmem:[%s91 + $0x5c] sm:$0xf]
  %v116 = vld [vmem:[%s91 + $0x60] sm:$0xf]
  %v117 = vld [vmem:[%s91 + $0x64] sm:$0xf]
  %v118 = vld [vmem:[%s91 + $0x68] sm:$0xf]
  %v119 = vld [vmem:[%s91 + $0x6c] sm:$0xf]
  %v120 = vld [vmem:[%s91 + $0x70] sm:$0xf]
  %v121 = vld [vmem:[%s91 + $0x74] sm:$0xf]
  %v122 = vld [vmem:[%s91 + $0x78] sm:$0xf]
  %v123 = vld [vmem:[%s91 + $0x7c] sm:$0xf]
  %v124 = vld [vmem:[%s91 + $0x80] sm:$0xf]
  %v125 = vld [vmem:[%s91 + $0x84] sm:$0xf]
  %v126 = vld [vmem:[%s91 + $0x88] sm:$0xf]
  %v127 = vld [vmem:[%s91 + $0x8c] sm:$0xf]
  %v128 = vld [vmem:[%s91 + $0x90] sm:$0xf]
  %v129 = vld [vmem:[%s91 + $0x94] sm:$0xf]
  %v130 = vld [vmem:[%s91 + $0x98] sm:$0xf]
  %v131 = vld [vmem:[%s91 + $0x9c] sm:$0xf]
  %v132 = vld [vmem:[%s91 + $0xa0] sm:$0xf]
  %v133 = vld [vmem:[%s91 + $0xa4] sm:$0xf]
  %v134 = vld [vmem:[%s91 + $0xa8] sm:$0xf]
  %v135 = vld [vmem:[%s91 + $0xac] sm:$0xf]
  %v136 = vld [vmem:[%s91 + $0xb0] sm:$0xf]
  %v137 = vld [vmem:[%s91 + $0xb4] sm:$0xf]
  %v138 = vld [vmem:[%s91 + $0xb8] sm:$0xf]
  %v139 = vld [vmem:[%s91 + $0xbc] sm:$0xf]
  %v140 = vld [vmem:[%s91 + $0xc0] sm:$0xf]
  %v141 = vld [vmem:[%s91 + $0xc4] sm:$0xf]
  %v142 = vld [vmem:[%s91 + $0xc8] sm:$0xf]
  %v143 = vld [vmem:[%s91 + $0xcc] sm:$0xf]
  %v144 = vld [vmem:[%s91 + $0xd0] sm:$0xf]
  %v145 = vld [vmem:[%s91 + $0xd4] sm:$0xf]
  %v146 = vld [vmem:[%s91 + $0xd8] sm:$0xf]
  %v147 = vld [vmem:[%s91 + $0xdc] sm:$0xf]
  %v148 = vld [vmem:[%s91 + $0xe0] sm:$0xf]
  %v149 = vld [vmem:[%s91 + $0xe4] sm:$0xf]
  %v150 = vld [vmem:[%s91 + $0xe8] sm:$0xf]
  %v151 = vld [vmem:[%s91 + $0xec] sm:$0xf]
  %v152 = vld [vmem:[%s91 + $0xf0] sm:$0xf]
  %v153 = vld [vmem:[%s91 + $0xf4] sm:$0xf]
  %v154 = vld [vmem:[%s91 + $0xf8] sm:$0xf]
  %v155 = vld [vmem:[%s91 + $0xfc] sm:$0xf]
  %s156 = scalar_lea.vmem %s0, 16
  %v157 = vld [vmem:[%s156] sm:$0xf]
  %v158 = vld [vmem:[%s156 + $0x4] sm:$0xf]
  %v159 = vld [vmem:[%s156 + $0x8] sm:$0xf]
  %v160 = vld [vmem:[%s156 + $0xc] sm:$0xf]
  %v161 = vld [vmem:[%s156 + $0x10] sm:$0xf]
  %v162 = vld [vmem:[%s156 + $0x14] sm:$0xf]
  %v163 = vld [vmem:[%s156 + $0x18] sm:$0xf]
  %v164 = vld [vmem:[%s156 + $0x1c] sm:$0xf]
  %v165 = vld [vmem:[%s156 + $0x20] sm:$0xf]
  %v166 = vld [vmem:[%s156 + $0x24] sm:$0xf]
  %v167 = vld [vmem:[%s156 + $0x28] sm:$0xf]
  %v168 = vld [vmem:[%s156 + $0x2c] sm:$0xf]
  %v169 = vld [vmem:[%s156 + $0x30] sm:$0xf]
  %v170 = vld [vmem:[%s156 + $0x34] sm:$0xf]
  %v171 = vld [vmem:[%s156 + $0x38] sm:$0xf]
  %v172 = vld [vmem:[%s156 + $0x3c] sm:$0xf]
  %v173 = vld [vmem:[%s156 + $0x40] sm:$0xf]
  %v174 = vld [vmem:[%s156 + $0x44] sm:$0xf]
  %v175 = vld [vmem:[%s156 + $0x48] sm:$0xf]
  %v176 = vld [vmem:[%s156 + $0x4c] sm:$0xf]
  %v177 = vld [vmem:[%s156 + $0x50] sm:$0xf]
  %v178 = vld [vmem:[%s156 + $0x54] sm:$0xf]
  %v179 = vld [vmem:[%s156 + $0x58] sm:$0xf]
  %v180 = vld [vmem:[%s156 + $0x5c] sm:$0xf]
  %v181 = vld [vmem:[%s156 + $0x60] sm:$0xf]
  %v182 = vld [vmem:[%s156 + $0x64] sm:$0xf]
  %v183 = vld [vmem:[%s156 + $0x68] sm:$0xf]
  %v184 = vld [vmem:[%s156 + $0x6c] sm:$0xf]
  %v185 = vld [vmem:[%s156 + $0x70] sm:$0xf]
  %v186 = vld [vmem:[%s156 + $0x74] sm:$0xf]
  %v187 = vld [vmem:[%s156 + $0x78] sm:$0xf]
  %v188 = vld [vmem:[%s156 + $0x7c] sm:$0xf]
  %v189 = vld [vmem:[%s156 + $0x80] sm:$0xf]
  %v190 = vld [vmem:[%s156 + $0x84] sm:$0xf]
  %v191 = vld [vmem:[%s156 + $0x88] sm:$0xf]
  %v192 = vld [vmem:[%s156 + $0x8c] sm:$0xf]
  %v193 = vld [vmem:[%s156 + $0x90] sm:$0xf]
  %v194 = vld [vmem:[%s156 + $0x94] sm:$0xf]
  %v195 = vld [vmem:[%s156 + $0x98] sm:$0xf]
  %v196 = vld [vmem:[%s156 + $0x9c] sm:$0xf]
  %v197 = vld [vmem:[%s156 + $0xa0] sm:$0xf]
  %v198 = vld [vmem:[%s156 + $0xa4] sm:$0xf]
  %v199 = vld [vmem:[%s156 + $0xa8] sm:$0xf]
  %v200 = vld [vmem:[%s156 + $0xac] sm:$0xf]
  %v201 = vld [vmem:[%s156 + $0xb0] sm:$0xf]
  %v202 = vld [vmem:[%s156 + $0xb4] sm:$0xf]
  %v203 = vld [vmem:[%s156 + $0xb8] sm:$0xf]
  %v204 = vld [vmem:[%s156 + $0xbc] sm:$0xf]
  %v205 = vld [vmem:[%s156 + $0xc0] sm:$0xf]
  %v206 = vld [vmem:[%s156 + $0xc4] sm:$0xf]
  %v207 = vld [vmem:[%s156 + $0xc8] sm:$0xf]
  %v208 = vld [vmem:[%s156 + $0xcc] sm:$0xf]
  %v209 = vld [vmem:[%s156 + $0xd0] sm:$0xf]
  %v210 = vld [vmem:[%s156 + $0xd4] sm:$0xf]
  %v211 = vld [vmem:[%s156 + $0xd8] sm:$0xf]
  %v212 = vld [vmem:[%s156 + $0xdc] sm:$0xf]
  %v213 = vld [vmem:[%s156 + $0xe0] sm:$0xf]
  %v214 = vld [vmem:[%s156 + $0xe4] sm:$0xf]
  %v215 = vld [vmem:[%s156 + $0xe8] sm:$0xf]
  %v216 = vld [vmem:[%s156 + $0xec] sm:$0xf]
  %v217 = vld [vmem:[%s156 + $0xf0] sm:$0xf]
  %v218 = vld [vmem:[%s156 + $0xf4] sm:$0xf]
  %v219 = vld [vmem:[%s156 + $0xf8] sm:$0xf]
  %v220 = vld [vmem:[%s156 + $0xfc] sm:$0xf]
  %s221 = scalar_lea.vmem %s0, 24
  %v222 = vld [vmem:[%s221] sm:$0xf]
  %v223 = vld [vmem:[%s221 + $0x4] sm:$0xf]
  %v224 = vld [vmem:[%s221 + $0x8] sm:$0xf]
  %v225 = vld [vmem:[%s221 + $0xc] sm:$0xf]
  %v226 = vld [vmem:[%s221 + $0x10] sm:$0xf]
  %v227 = vld [vmem:[%s221 + $0x14] sm:$0xf]
  %v228 = vld [vmem:[%s221 + $0x18] sm:$0xf]
  %v229 = vld [vmem:[%s221 + $0x1c] sm:$0xf]
  %v230 = vld [vmem:[%s221 + $0x20] sm:$0xf]
  %v231 = vld [vmem:[%s221 + $0x24] sm:$0xf]
  %v232 = vld [vmem:[%s221 + $0x28] sm:$0xf]
  %v233 = vld [vmem:[%s221 + $0x2c] sm:$0xf]
  %v234 = vld [vmem:[%s221 + $0x30] sm:$0xf]
  %v235 = vld [vmem:[%s221 + $0x34] sm:$0xf]
  %v236 = vld [vmem:[%s221 + $0x38] sm:$0xf]
  %v237 = vld [vmem:[%s221 + $0x3c] sm:$0xf]
  %v238 = vld [vmem:[%s221 + $0x40] sm:$0xf]
  %v239 = vld [vmem:[%s221 + $0x44] sm:$0xf]
  %v240 = vld [vmem:[%s221 + $0x48] sm:$0xf]
  %v241 = vld [vmem:[%s221 + $0x4c] sm:$0xf]
  %v242 = vld [vmem:[%s221 + $0x50] sm:$0xf]
  %v243 = vld [vmem:[%s221 + $0x54] sm:$0xf]
  %v244 = vld [vmem:[%s221 + $0x58] sm:$0xf]
  %v245 = vld [vmem:[%s221 + $0x5c] sm:$0xf]
  %v246 = vld [vmem:[%s221 + $0x60] sm:$0xf]
  %v247 = vld [vmem:[%s221 + $0x64] sm:$0xf]
  %v248 = vld [vmem:[%s221 + $0x68] sm:$0xf]
  %v249 = vld [vmem:[%s221 + $0x6c] sm:$0xf]
  %v250 = vld [vmem:[%s221 + $0x70] sm:$0xf]
  %v251 = vld [vmem:[%s221 + $0x74] sm:$0xf]
  %v252 = vld [vmem:[%s221 + $0x78] sm:$0xf]
  %v253 = vld [vmem:[%s221 + $0x7c] sm:$0xf]
  %v254 = vld [vmem:[%s221 + $0x80] sm:$0xf]
  %v255 = vld [vmem:[%s221 + $0x84] sm:$0xf]
  %v256 = vld [vmem:[%s221 + $0x88] sm:$0xf]
  %v257 = vld [vmem:[%s221 + $0x8c] sm:$0xf]
  %v258 = vld [vmem:[%s221 + $0x90] sm:$0xf]
  %v259 = vld [vmem:[%s221 + $0x94] sm:$0xf]
  %v260 = vld [vmem:[%s221 + $0x98] sm:$0xf]
  %v261 = vld [vmem:[%s221 + $0x9c] sm:$0xf]
  %v262 = vld [vmem:[%s221 + $0xa0] sm:$0xf]
  %v263 = vld [vmem:[%s221 + $0xa4] sm:$0xf]
  %v264 = vld [vmem:[%s221 + $0xa8] sm:$0xf]
  %v265 = vld [vmem:[%s221 + $0xac] sm:$0xf]
  %v266 = vld [vmem:[%s221 + $0xb0] sm:$0xf]
  %v267 = vld [vmem:[%s221 + $0xb4] sm:$0xf]
  %v268 = vld [vmem:[%s221 + $0xb8] sm:$0xf]
  %v269 = vld [vmem:[%s221 + $0xbc] sm:$0xf]
  %v270 = vld [vmem:[%s221 + $0xc0] sm:$0xf]
  %v271 = vld [vmem:[%s221 + $0xc4] sm:$0xf]
  %v272 = vld [vmem:[%s221 + $0xc8] sm:$0xf]
  %v273 = vld [vmem:[%s221 + $0xcc] sm:$0xf]
  %v274 = vld [vmem:[%s221 + $0xd0] sm:$0xf]
  %v275 = vld [vmem:[%s221 + $0xd4] sm:$0xf]
  %v276 = vld [vmem:[%s221 + $0xd8] sm:$0xf]
  %v277 = vld [vmem:[%s221 + $0xdc] sm:$0xf]
  %v278 = vld [vmem:[%s221 + $0xe0] sm:$0xf]
  %v279 = vld [vmem:[%s221 + $0xe4] sm:$0xf]
  %v280 = vld [vmem:[%s221 + $0xe8] sm:$0xf]
  %v281 = vld [vmem:[%s221 + $0xec] sm:$0xf]
  %v282 = vld [vmem:[%s221 + $0xf0] sm:$0xf]
  %v283 = vld [vmem:[%s221 + $0xf4] sm:$0xf]
  %v284 = vld [vmem:[%s221 + $0xf8] sm:$0xf]
  %v285 = vld [vmem:[%s221 + $0xfc] sm:$0xf]
  %s286 = scalar_lea.vmem %s0, 32
  %v287 = vld [vmem:[%s286] sm:$0xf]
  %v288 = vld [vmem:[%s286 + $0x4] sm:$0xf]
  %v289 = vld [vmem:[%s286 + $0x8] sm:$0xf]
  %v290 = vld [vmem:[%s286 + $0xc] sm:$0xf]
  %v291 = vld [vmem:[%s286 + $0x10] sm:$0xf]
  %v292 = vld [vmem:[%s286 + $0x14] sm:$0xf]
  %v293 = vld [vmem:[%s286 + $0x18] sm:$0xf]
  %v294 = vld [vmem:[%s286 + $0x1c] sm:$0xf]
  %v295 = vld [vmem:[%s286 + $0x20] sm:$0xf]
  %v296 = vld [vmem:[%s286 + $0x24] sm:$0xf]
  %v297 = vld [vmem:[%s286 + $0x28] sm:$0xf]
  %v298 = vld [vmem:[%s286 + $0x2c] sm:$0xf]
  %v299 = vld [vmem:[%s286 + $0x30] sm:$0xf]
  %v300 = vld [vmem:[%s286 + $0x34] sm:$0xf]
  %v301 = vld [vmem:[%s286 + $0x38] sm:$0xf]
  %v302 = vld [vmem:[%s286 + $0x3c] sm:$0xf]
  %v303 = vld [vmem:[%s286 + $0x40] sm:$0xf]
  %v304 = vld [vmem:[%s286 + $0x44] sm:$0xf]
  %v305 = vld [vmem:[%s286 + $0x48] sm:$0xf]
  %v306 = vld [vmem:[%s286 + $0x4c] sm:$0xf]
  %v307 = vld [vmem:[%s286 + $0x50] sm:$0xf]
  %v308 = vld [vmem:[%s286 + $0x54] sm:$0xf]
  %v309 = vld [vmem:[%s286 + $0x58] sm:$0xf]
  %v310 = vld [vmem:[%s286 + $0x5c] sm:$0xf]
  %v311 = vld [vmem:[%s286 + $0x60] sm:$0xf]
  %v312 = vld [vmem:[%s286 + $0x64] sm:$0xf]
  %v313 = vld [vmem:[%s286 + $0x68] sm:$0xf]
  %v314 = vld [vmem:[%s286 + $0x6c] sm:$0xf]
  %v315 = vld [vmem:[%s286 + $0x70] sm:$0xf]
  %v316 = vld [vmem:[%s286 + $0x74] sm:$0xf]
  %v317 = vld [vmem:[%s286 + $0x78] sm:$0xf]
  %v318 = vld [vmem:[%s286 + $0x7c] sm:$0xf]
  %v319 = vld [vmem:[%s286 + $0x80] sm:$0xf]
  %v320 = vld [vmem:[%s286 + $0x84] sm:$0xf]
  %v321 = vld [vmem:[%s286 + $0x88] sm:$0xf]
  %v322 = vld [vmem:[%s286 + $0x8c] sm:$0xf]
  %v323 = vld [vmem:[%s286 + $0x90] sm:$0xf]
  %v324 = vld [vmem:[%s286 + $0x94] sm:$0xf]
  %v325 = vld [vmem:[%s286 + $0x98] sm:$0xf]
  %v326 = vld [vmem:[%s286 + $0x9c] sm:$0xf]
  %v327 = vld [vmem:[%s286 + $0xa0] sm:$0xf]
  %v328 = vld [vmem:[%s286 + $0xa4] sm:$0xf]
  %v329 = vld [vmem:[%s286 + $0xa8] sm:$0xf]
  %v330 = vld [vmem:[%s286 + $0xac] sm:$0xf]
  %v331 = vld [vmem:[%s286 + $0xb0] sm:$0xf]
  %v332 = vld [vmem:[%s286 + $0xb4] sm:$0xf]
  %v333 = vld [vmem:[%s286 + $0xb8] sm:$0xf]
  %v334 = vld [vmem:[%s286 + $0xbc] sm:$0xf]
  %v335 = vld [vmem:[%s286 + $0xc0] sm:$0xf]
  %v336 = vld [vmem:[%s286 + $0xc4] sm:$0xf]
  %v337 = vld [vmem:[%s286 + $0xc8] sm:$0xf]
  %v338 = vld [vmem:[%s286 + $0xcc] sm:$0xf]
  %v339 = vld [vmem:[%s286 + $0xd0] sm:$0xf]
  %v340 = vld [vmem:[%s286 + $0xd4] sm:$0xf]
  %v341 = vld [vmem:[%s286 + $0xd8] sm:$0xf]
  %v342 = vld [vmem:[%s286 + $0xdc] sm:$0xf]
  %v343 = vld [vmem:[%s286 + $0xe0] sm:$0xf]
  %v344 = vld [vmem:[%s286 + $0xe4] sm:$0xf]
  %v345 = vld [vmem:[%s286 + $0xe8] sm:$0xf]
  %v346 = vld [vmem:[%s286 + $0xec] sm:$0xf]
  %v347 = vld [vmem:[%s286 + $0xf0] sm:$0xf]
  %v348 = vld [vmem:[%s286 + $0xf4] sm:$0xf]
  %v349 = vld [vmem:[%s286 + $0xf8] sm:$0xf]
  %v350 = vld [vmem:[%s286 + $0xfc] sm:$0xf]
  %v351 = vld [vmem:[%s1] sm:$0xf]
  %v352 = vld [vmem:[%s1 + $0x4] sm:$0xf]
  %v353 = vld [vmem:[%s1 + $0x8] sm:$0xf]
  %v354 = vld [vmem:[%s1 + $0xc] sm:$0xf]
  %v355 = vld [vmem:[%s1 + $0x10] sm:$0x3]
  %s356 = scalar_lea.vmem %s1, 80
  %v357 = vld [vmem:[%s356] sm:$0xf]
  %v358 = vld [vmem:[%s356 + $0x4] sm:$0xf]
  %v359 = vld [vmem:[%s356 + $0x8] sm:$0xf]
  %v360 = vld [vmem:[%s356 + $0xc] sm:$0xf]
  %v361 = vld [vmem:[%s356 + $0x10] sm:$0x3]
  %v426 = vunpack.c.l.b16 %v92
  %v427 = vunpack.c.l.b16 %v93
  %v428 = vunpack.c.l.b16 %v94
  %v429 = vunpack.c.l.b16 %v95
  %v430 = vunpack.c.l.b16 %v96
  %v431 = vunpack.c.l.b16 %v97
  %v432 = vunpack.c.l.b16 %v98
  %v433 = vunpack.c.l.b16 %v99
  %v434 = vunpack.c.l.b16 %v100
  %v435 = vunpack.c.l.b16 %v101
  %v436 = vunpack.c.l.b16 %v102
  %v437 = vunpack.c.l.b16 %v103
  %v438 = vunpack.c.l.b16 %v104
  %v439 = vunpack.c.l.b16 %v105
  %v440 = vunpack.c.l.b16 %v106
  %v441 = vunpack.c.l.b16 %v107
  %v442 = vunpack.c.l.b16 %v108
  %v443 = vunpack.c.l.b16 %v109
  %v444 = vunpack.c.l.b16 %v110
  %v445 = vunpack.c.l.b16 %v111
  %v446 = vunpack.c.l.b16 %v112
  %v447 = vunpack.c.l.b16 %v113
  %v448 = vunpack.c.l.b16 %v114
  %v449 = vunpack.c.l.b16 %v115
  %v450 = vunpack.c.l.b16 %v116
  %v451 = vunpack.c.l.b16 %v117
  %v452 = vunpack.c.l.b16 %v118
  %v453 = vunpack.c.l.b16 %v119
  %v454 = vunpack.c.l.b16 %v120
  %v455 = vunpack.c.l.b16 %v121
  %v456 = vunpack.c.l.b16 %v122
  %v457 = vunpack.c.l.b16 %v123
  %v458 = vunpack.c.l.b16 %v124
  %v459 = vunpack.c.l.b16 %v125
  %v460 = vunpack.c.l.b16 %v126
  %v461 = vunpack.c.l.b16 %v127
  %v462 = vunpack.c.l.b16 %v128
  %v463 = vunpack.c.l.b16 %v129
  %v464 = vunpack.c.l.b16 %v130
  %v465 = vunpack.c.l.b16 %v131
  %v466 = vunpack.c.l.b16 %v132
  %v467 = vunpack.c.l.b16 %v133
  %v468 = vunpack.c.l.b16 %v134
  %v469 = vunpack.c.l.b16 %v135
  %v470 = vunpack.c.l.b16 %v136
  %v471 = vunpack.c.l.b16 %v137
  %v472 = vunpack.c.l.b16 %v138
  %v473 = vunpack.c.l.b16 %v139
  %v474 = vunpack.c.l.b16 %v140
  %v475 = vunpack.c.l.b16 %v141
  %v476 = vunpack.c.l.b16 %v142
  %v477 = vunpack.c.l.b16 %v143
  %v478 = vunpack.c.l.b16 %v144
  %v479 = vunpack.c.l.b16 %v145
  %v480 = vunpack.c.l.b16 %v146
  %v481 = vunpack.c.l.b16 %v147
  %v482 = vunpack.c.l.b16 %v148
  %v483 = vunpack.c.l.b16 %v149
  %v484 = vunpack.c.l.b16 %v150
  %v485 = vunpack.c.l.b16 %v151
  %v486 = vunpack.c.l.b16 %v152
  %v487 = vunpack.c.l.b16 %v153
  %v488 = vunpack.c.l.b16 %v154
  %v489 = vunpack.c.l.b16 %v155
  %v490 = vpack.c.b16 %v427, %v426
  %v491 = vpack.c.b16 %v429, %v428
  %v492 = vpack.c.b16 %v431, %v430
  %v493 = vpack.c.b16 %v433, %v432
  %v494 = vpack.c.b16 %v435, %v434
  %v495 = vpack.c.b16 %v437, %v436
  %v496 = vpack.c.b16 %v439, %v438
  %v497 = vpack.c.b16 %v441, %v440
  %v498 = vpack.c.b16 %v443, %v442
  %v499 = vpack.c.b16 %v445, %v444
  %v500 = vpack.c.b16 %v447, %v446
  %v501 = vpack.c.b16 %v449, %v448
  %v502 = vpack.c.b16 %v451, %v450
  %v503 = vpack.c.b16 %v453, %v452
  %v504 = vpack.c.b16 %v455, %v454
  %v505 = vpack.c.b16 %v457, %v456
  %v506 = vpack.c.b16 %v459, %v458
  %v507 = vpack.c.b16 %v461, %v460
  %v508 = vpack.c.b16 %v463, %v462
  %v509 = vpack.c.b16 %v465, %v464
  %v510 = vpack.c.b16 %v467, %v466
  %v511 = vpack.c.b16 %v469, %v468
  %v512 = vpack.c.b16 %v471, %v470
  %v513 = vpack.c.b16 %v473, %v472
  %v514 = vpack.c.b16 %v475, %v474
  %v515 = vpack.c.b16 %v477, %v476
  %v516 = vpack.c.b16 %v479, %v478
  %v517 = vpack.c.b16 %v481, %v480
  %v518 = vpack.c.b16 %v483, %v482
  %v519 = vpack.c.b16 %v485, %v484
  %v520 = vpack.c.b16 %v487, %v486
  %v521 = vpack.c.b16 %v489, %v488
  %v527 = vunpack.c.l.b16 %v357
  %v528 = vunpack.c.l.b16 %v358
  %v529 = vunpack.c.l.b16 %v359
  %v530 = vunpack.c.l.b16 %v360
  %v531 = vunpack.c.l.b16 %v361
  %v532 = vpack.c.b16 %v528, %v527
  %v533 = vpack.c.b16 %v530, %v529
  %v534 = vpack.c.b16 %v531, %v531
  %vm537 = vcmask 293888
  %v539 = vsel %vm537, %v490, 0
  %v542 = vsel %vm537, %v491, 0
  %v545 = vsel %vm537, %v492, 0
  %v548 = vsel %vm537, %v493, 0
  %v551 = vsel %vm537, %v494, 0
  %v554 = vsel %vm537, %v495, 0
  %v557 = vsel %vm537, %v496, 0
  %v560 = vsel %vm537, %v497, 0
  %v563 = vsel %vm537, %v498, 0
  %v566 = vsel %vm537, %v499, 0
  %v569 = vsel %vm537, %v500, 0
  %v572 = vsel %vm537, %v501, 0
  %v575 = vsel %vm537, %v502, 0
  %v578 = vsel %vm537, %v503, 0
  %v581 = vsel %vm537, %v504, 0
  %v584 = vsel %vm537, %v505, 0
  %v587 = vsel %vm537, %v506, 0
  %v590 = vsel %vm537, %v507, 0
  %v593 = vsel %vm537, %v508, 0
  %v596 = vsel %vm537, %v509, 0
  %v599 = vsel %vm537, %v510, 0
  %v602 = vsel %vm537, %v511, 0
  %v605 = vsel %vm537, %v512, 0
  %v608 = vsel %vm537, %v513, 0
  %v611 = vsel %vm537, %v514, 0
  %v614 = vsel %vm537, %v515, 0
  %v617 = vsel %vm537, %v516, 0
  %v620 = vsel %vm537, %v517, 0
  %v623 = vsel %vm537, %v518, 0
  %v626 = vsel %vm537, %v519, 0
  %v629 = vsel %vm537, %v520, 0
  %v632 = vsel %vm537, %v521, 0
  %vm634 = vcmask 1041408
  %v636 = vsel %vm634, %v534, 0
  %638 = vmatprep.subr.bf16.mxu0 0
  %639 = vmatpush1.bf16.msra.mxu0 0
  %640 = vmatprep.subr.bf16.mxu0 0
  %641 = vmatpush1.bf16.msra.mxu0 0
  %642 = vmatprep.subr.bf16.mxu0 0
  %643 = vmatpush1.bf16.msra.mxu0 0
  %644 = vmatprep.subr.bf16.mxu0 0
  %645 = vmatpush1.bf16.msra.mxu0 0
  %646 = vmatprep.subr.bf16.mxu0 0
  %647 = vmatpush1.bf16.msra.mxu0 0
  %648 = vmatprep.subr.bf16.mxu0 0
  %649 = vmatpush1.bf16.msra.mxu0 %v636
  %650 = vmatprep.subr.bf16.mxu0 0
  %651 = vmatpush1.bf16.msra.mxu0 %v533
  %652 = vmatprep.subr.bf16.mxu0 0
  %653 = vmatpush1.bf16.msra.mxu0 %v532
  %654 = vmatprep.subr.bf16.mxu0 0
  %655 = vmatpush2.bf16.msra.mxu0 0
  %656 = vmatprep.subr.bf16.mxu0 0
  %657 = vmatpush2.bf16.msra.mxu0 0
  %658 = vmatprep.subr.bf16.mxu0 0
  %659 = vmatpush2.bf16.msra.mxu0 0
  %660 = vmatprep.subr.bf16.mxu0 0
  %661 = vmatpush2.bf16.msra.mxu0 0
  %662 = vmatprep.subr.bf16.mxu0 0
  %663 = vmatpush2.bf16.msra.mxu0 0
  %664 = vmatprep.subr.bf16.mxu0 0
  %665 = vmatpush2.bf16.msra.mxu0 0
  %666 = vmatprep.subr.bf16.mxu0 0
  %667 = vmatpush2.bf16.msra.mxu0 0
  %668 = vmatprep.subr.bf16.mxu0 0
  %669 = vmatpush2.bf16.msra.mxu0 0
  %670 = vmatprep.mubr.bf16.mxu0 0
  %671 = vmatmul.mubr.bf16.gmra.mxu0 %v539
  %v672 = vpop.f32.mrf.mxu0
  %v673 = vadd.f32 0.0, %v672
  %v674 = vpop.f32.mrf.mxu0
  %v675 = vpop.f32.mrf.mxu0
  %v676 = vadd.f32 0.0, %v675
  %v677 = vpop.f32.mrf.mxu0
  %678 = vmatprep.mubr.bf16.mxu0 0
  %679 = vmatmul.mubr.bf16.gmra.mxu0 %v542
  %v680 = vpop.f32.mrf.mxu0
  %v681 = vadd.f32 0.0, %v680
  %v682 = vpop.f32.mrf.mxu0
  %v683 = vpop.f32.mrf.mxu0
  %v684 = vadd.f32 0.0, %v683
  %v685 = vpop.f32.mrf.mxu0
  %686 = vmatprep.mubr.bf16.mxu0 0
  %687 = vmatmul.mubr.bf16.gmra.mxu0 %v545
  %v688 = vpop.f32.mrf.mxu0
  %v689 = vadd.f32 0.0, %v688
  %v690 = vpop.f32.mrf.mxu0
  %v691 = vpop.f32.mrf.mxu0
  %v692 = vadd.f32 0.0, %v691
  %v693 = vpop.f32.mrf.mxu0
  %694 = vmatprep.mubr.bf16.mxu0 0
  %695 = vmatmul.mubr.bf16.gmra.mxu0 %v548
  %v696 = vpop.f32.mrf.mxu0
  %v697 = vadd.f32 0.0, %v696
  %v698 = vpop.f32.mrf.mxu0
  %v699 = vpop.f32.mrf.mxu0
  %v700 = vadd.f32 0.0, %v699
  %v701 = vpop.f32.mrf.mxu0
  %702 = vmatprep.mubr.bf16.mxu0 0
  %703 = vmatmul.mubr.bf16.gmra.mxu0 %v551
  %v704 = vpop.f32.mrf.mxu0
  %v705 = vadd.f32 0.0, %v704
  %v706 = vpop.f32.mrf.mxu0
  %v707 = vpop.f32.mrf.mxu0
  %v708 = vadd.f32 0.0, %v707
  %v709 = vpop.f32.mrf.mxu0
  %710 = vmatprep.mubr.bf16.mxu0 0
  %711 = vmatmul.mubr.bf16.gmra.mxu0 %v554
  %v712 = vpop.f32.mrf.mxu0
  %v713 = vadd.f32 0.0, %v712
  %v714 = vpop.f32.mrf.mxu0
  %v715 = vpop.f32.mrf.mxu0
  %v716 = vadd.f32 0.0, %v715
  %v717 = vpop.f32.mrf.mxu0
  %718 = vmatprep.mubr.bf16.mxu0 0
  %719 = vmatmul.mubr.bf16.gmra.mxu0 %v557
  %v720 = vpop.f32.mrf.mxu0
  %v721 = vadd.f32 0.0, %v720
  %v722 = vpop.f32.mrf.mxu0
  %v723 = vpop.f32.mrf.mxu0
  %v724 = vadd.f32 0.0, %v723
  %v725 = vpop.f32.mrf.mxu0
  %726 = vmatprep.mubr.bf16.mxu0 0
  %727 = vmatmul.mubr.bf16.gmra.mxu0 %v560
  %v728 = vpop.f32.mrf.mxu0
  %v729 = vadd.f32 0.0, %v728
  %v730 = vpop.f32.mrf.mxu0
  %v731 = vpop.f32.mrf.mxu0
  %v732 = vadd.f32 0.0, %v731
  %v733 = vpop.f32.mrf.mxu0
  %734 = vmatprep.mubr.bf16.mxu0 0
  %735 = vmatmul.mubr.bf16.gmra.mxu0 %v563
  %v736 = vpop.f32.mrf.mxu0
  %v737 = vadd.f32 0.0, %v736
  %v738 = vpop.f32.mrf.mxu0
  %v739 = vpop.f32.mrf.mxu0
  %v740 = vadd.f32 0.0, %v739
  %v741 = vpop.f32.mrf.mxu0
  %742 = vmatprep.mubr.bf16.mxu0 0
  %743 = vmatmul.mubr.bf16.gmra.mxu0 %v566
  %v744 = vpop.f32.mrf.mxu0
  %v745 = vadd.f32 0.0, %v744
  %v746 = vpop.f32.mrf.mxu0
  %v747 = vpop.f32.mrf.mxu0
  %v748 = vadd.f32 0.0, %v747
  %v749 = vpop.f32.mrf.mxu0
  %750 = vmatprep.mubr.bf16.mxu0 0
  %751 = vmatmul.mubr.bf16.gmra.mxu0 %v569
  %v752 = vpop.f32.mrf.mxu0
  %v753 = vadd.f32 0.0, %v752
  %v754 = vpop.f32.mrf.mxu0
  %v755 = vpop.f32.mrf.mxu0
  %v756 = vadd.f32 0.0, %v755
  %v757 = vpop.f32.mrf.mxu0
  %758 = vmatprep.mubr.bf16.mxu0 0
  %759 = vmatmul.mubr.bf16.gmra.mxu0 %v572
  %v760 = vpop.f32.mrf.mxu0
  %v761 = vadd.f32 0.0, %v760
  %v762 = vpop.f32.mrf.mxu0
  %v763 = vpop.f32.mrf.mxu0
  %v764 = vadd.f32 0.0, %v763
  %v765 = vpop.f32.mrf.mxu0
  %766 = vmatprep.mubr.bf16.mxu0 0
  %767 = vmatmul.mubr.bf16.gmra.mxu0 %v575
  %v768 = vpop.f32.mrf.mxu0
  %v769 = vadd.f32 0.0, %v768
  %v770 = vpop.f32.mrf.mxu0
  %v771 = vpop.f32.mrf.mxu0
  %v772 = vadd.f32 0.0, %v771
  %v773 = vpop.f32.mrf.mxu0
  %774 = vmatprep.mubr.bf16.mxu0 0
  %775 = vmatmul.mubr.bf16.gmra.mxu0 %v578
  %v776 = vpop.f32.mrf.mxu0
  %v777 = vadd.f32 0.0, %v776
  %v778 = vpop.f32.mrf.mxu0
  %v779 = vpop.f32.mrf.mxu0
  %v780 = vadd.f32 0.0, %v779
  %v781 = vpop.f32.mrf.mxu0
  %782 = vmatprep.mubr.bf16.mxu0 0
  %783 = vmatmul.mubr.bf16.gmra.mxu0 %v581
  %v784 = vpop.f32.mrf.mxu0
  %v785 = vadd.f32 0.0, %v784
  %v786 = vpop.f32.mrf.mxu0
  %v787 = vpop.f32.mrf.mxu0
  %v788 = vadd.f32 0.0, %v787
  %v789 = vpop.f32.mrf.mxu0
  %790 = vmatprep.mubr.bf16.mxu0 0
  %791 = vmatmul.mubr.bf16.gmra.mxu0 %v584
  %v792 = vpop.f32.mrf.mxu0
  %v793 = vadd.f32 0.0, %v792
  %v794 = vpop.f32.mrf.mxu0
  %v795 = vpop.f32.mrf.mxu0
  %v796 = vadd.f32 0.0, %v795
  %v797 = vpop.f32.mrf.mxu0
  %798 = vmatprep.mubr.bf16.mxu0 0
  %799 = vmatmul.mubr.bf16.gmra.mxu0 %v587
  %v800 = vpop.f32.mrf.mxu0
  %v801 = vadd.f32 0.0, %v800
  %v802 = vpop.f32.mrf.mxu0
  %v803 = vpop.f32.mrf.mxu0
  %v804 = vadd.f32 0.0, %v803
  %v805 = vpop.f32.mrf.mxu0
  %806 = vmatprep.mubr.bf16.mxu0 0
  %807 = vmatmul.mubr.bf16.gmra.mxu0 %v590
  %v808 = vpop.f32.mrf.mxu0
  %v809 = vadd.f32 0.0, %v808
  %v810 = vpop.f32.mrf.mxu0
  %v811 = vpop.f32.mrf.mxu0
  %v812 = vadd.f32 0.0, %v811
  %v813 = vpop.f32.mrf.mxu0
  %814 = vmatprep.mubr.bf16.mxu0 0
  %815 = vmatmul.mubr.bf16.gmra.mxu0 %v593
  %v816 = vpop.f32.mrf.mxu0
  %v817 = vadd.f32 0.0, %v816
  %v818 = vpop.f32.mrf.mxu0
  %v819 = vpop.f32.mrf.mxu0
  %v820 = vadd.f32 0.0, %v819
  %v821 = vpop.f32.mrf.mxu0
  %822 = vmatprep.mubr.bf16.mxu0 0
  %823 = vmatmul.mubr.bf16.gmra.mxu0 %v596
  %v824 = vpop.f32.mrf.mxu0
  %v825 = vadd.f32 0.0, %v824
  %v826 = vpop.f32.mrf.mxu0
  %v827 = vpop.f32.mrf.mxu0
  %v828 = vadd.f32 0.0, %v827
  %v829 = vpop.f32.mrf.mxu0
  %830 = vmatprep.mubr.bf16.mxu0 0
  %831 = vmatmul.mubr.bf16.gmra.mxu0 %v599
  %v832 = vpop.f32.mrf.mxu0
  %v833 = vadd.f32 0.0, %v832
  %v834 = vpop.f32.mrf.mxu0
  %v835 = vpop.f32.mrf.mxu0
  %v836 = vadd.f32 0.0, %v835
  %v837 = vpop.f32.mrf.mxu0
  %838 = vmatprep.mubr.bf16.mxu0 0
  %839 = vmatmul.mubr.bf16.gmra.mxu0 %v602
  %v840 = vpop.f32.mrf.mxu0
  %v841 = vadd.f32 0.0, %v840
  %v842 = vpop.f32.mrf.mxu0
  %v843 = vpop.f32.mrf.mxu0
  %v844 = vadd.f32 0.0, %v843
  %v845 = vpop.f32.mrf.mxu0
  %846 = vmatprep.mubr.bf16.mxu0 0
  %847 = vmatmul.mubr.bf16.gmra.mxu0 %v605
  %v848 = vpop.f32.mrf.mxu0
  %v849 = vadd.f32 0.0, %v848
  %v850 = vpop.f32.mrf.mxu0
  %v851 = vpop.f32.mrf.mxu0
  %v852 = vadd.f32 0.0, %v851
  %v853 = vpop.f32.mrf.mxu0
  %854 = vmatprep.mubr.bf16.mxu0 0
  %855 = vmatmul.mubr.bf16.gmra.mxu0 %v608
  %v856 = vpop.f32.mrf.mxu0
  %v857 = vadd.f32 0.0, %v856
  %v858 = vpop.f32.mrf.mxu0
  %v859 = vpop.f32.mrf.mxu0
  %v860 = vadd.f32 0.0, %v859
  %v861 = vpop.f32.mrf.mxu0
  %862 = vmatprep.mubr.bf16.mxu0 0
  %863 = vmatmul.mubr.bf16.gmra.mxu0 %v611
  %v864 = vpop.f32.mrf.mxu0
  %v865 = vadd.f32 0.0, %v864
  %v866 = vpop.f32.mrf.mxu0
  %v867 = vpop.f32.mrf.mxu0
  %v868 = vadd.f32 0.0, %v867
  %v869 = vpop.f32.mrf.mxu0
  %870 = vmatprep.mubr.bf16.mxu0 0
  %871 = vmatmul.mubr.bf16.gmra.mxu0 %v614
  %v872 = vpop.f32.mrf.mxu0
  %v873 = vadd.f32 0.0, %v872
  %v874 = vpop.f32.mrf.mxu0
  %v875 = vpop.f32.mrf.mxu0
  %v876 = vadd.f32 0.0, %v875
  %v877 = vpop.f32.mrf.mxu0
  %878 = vmatprep.mubr.bf16.mxu0 0
  %879 = vmatmul.mubr.bf16.gmra.mxu0 %v617
  %v880 = vpop.f32.mrf.mxu0
  %v881 = vadd.f32 0.0, %v880
  %v882 = vpop.f32.mrf.mxu0
  %v883 = vpop.f32.mrf.mxu0
  %v884 = vadd.f32 0.0, %v883
  %v885 = vpop.f32.mrf.mxu0
  %886 = vmatprep.mubr.bf16.mxu0 0
  %887 = vmatmul.mubr.bf16.gmra.mxu0 %v620
  %v888 = vpop.f32.mrf.mxu0
  %v889 = vadd.f32 0.0, %v888
  %v890 = vpop.f32.mrf.mxu0
  %v891 = vpop.f32.mrf.mxu0
  %v892 = vadd.f32 0.0, %v891
  %v893 = vpop.f32.mrf.mxu0
  %894 = vmatprep.mubr.bf16.mxu0 0
  %895 = vmatmul.mubr.bf16.gmra.mxu0 %v623
  %v896 = vpop.f32.mrf.mxu0
  %v897 = vadd.f32 0.0, %v896
  %v898 = vpop.f32.mrf.mxu0
  %v899 = vpop.f32.mrf.mxu0
  %v900 = vadd.f32 0.0, %v899
  %v901 = vpop.f32.mrf.mxu0
  %902 = vmatprep.mubr.bf16.mxu0 0
  %903 = vmatmul.mubr.bf16.gmra.mxu0 %v626
  %v904 = vpop.f32.mrf.mxu0
  %v905 = vadd.f32 0.0, %v904
  %v906 = vpop.f32.mrf.mxu0
  %v907 = vpop.f32.mrf.mxu0
  %v908 = vadd.f32 0.0, %v907
  %v909 = vpop.f32.mrf.mxu0
  %910 = vmatprep.mubr.bf16.mxu0 0
  %911 = vmatmul.mubr.bf16.gmra.mxu0 %v629
  %v912 = vpop.f32.mrf.mxu0
  %v913 = vadd.f32 0.0, %v912
  %v914 = vpop.f32.mrf.mxu0
  %v915 = vpop.f32.mrf.mxu0
  %v916 = vadd.f32 0.0, %v915
  %v917 = vpop.f32.mrf.mxu0
  %918 = vmatprep.mubr.bf16.mxu0 0
  %919 = vmatmul.mubr.bf16.gmra.mxu0 %v632
  %v920 = vpop.f32.mrf.mxu0
  %v921 = vadd.f32 0.0, %v920
  %v922 = vpop.f32.mrf.mxu0
  %v923 = vpop.f32.mrf.mxu0
  %v924 = vadd.f32 0.0, %v923
  %v925 = vpop.f32.mrf.mxu0
  %926 = vdwg.mxu0
  %v991 = vunpack.c.l.b16 %v27
  %v992 = vunpack.c.l.b16 %v28
  %v993 = vunpack.c.l.b16 %v29
  %v994 = vunpack.c.l.b16 %v30
  %v995 = vunpack.c.l.b16 %v31
  %v996 = vunpack.c.l.b16 %v32
  %v997 = vunpack.c.l.b16 %v33
  %v998 = vunpack.c.l.b16 %v34
  %v999 = vunpack.c.l.b16 %v35
  %v1000 = vunpack.c.l.b16 %v36
  %v1001 = vunpack.c.l.b16 %v37
  %v1002 = vunpack.c.l.b16 %v38
  %v1003 = vunpack.c.l.b16 %v39
  %v1004 = vunpack.c.l.b16 %v40
  %v1005 = vunpack.c.l.b16 %v41
  %v1006 = vunpack.c.l.b16 %v42
  %v1007 = vunpack.c.l.b16 %v43
  %v1008 = vunpack.c.l.b16 %v44
  %v1009 = vunpack.c.l.b16 %v45
  %v1010 = vunpack.c.l.b16 %v46
  %v1011 = vunpack.c.l.b16 %v47
  %v1012 = vunpack.c.l.b16 %v48
  %v1013 = vunpack.c.l.b16 %v49
  %v1014 = vunpack.c.l.b16 %v50
  %v1015 = vunpack.c.l.b16 %v51
  %v1016 = vunpack.c.l.b16 %v52
  %v1017 = vunpack.c.l.b16 %v53
  %v1018 = vunpack.c.l.b16 %v54
  %v1019 = vunpack.c.l.b16 %v55
  %v1020 = vunpack.c.l.b16 %v56
  %v1021 = vunpack.c.l.b16 %v57
  %v1022 = vunpack.c.l.b16 %v58
  %v1023 = vunpack.c.l.b16 %v59
  %v1024 = vunpack.c.l.b16 %v60
  %v1025 = vunpack.c.l.b16 %v61
  %v1026 = vunpack.c.l.b16 %v62
  %v1027 = vunpack.c.l.b16 %v63
  %v1028 = vunpack.c.l.b16 %v64
  %v1029 = vunpack.c.l.b16 %v65
  %v1030 = vunpack.c.l.b16 %v66
  %v1031 = vunpack.c.l.b16 %v67
  %v1032 = vunpack.c.l.b16 %v68
  %v1033 = vunpack.c.l.b16 %v69
  %v1034 = vunpack.c.l.b16 %v70
  %v1035 = vunpack.c.l.b16 %v71
  %v1036 = vunpack.c.l.b16 %v72
  %v1037 = vunpack.c.l.b16 %v73
  %v1038 = vunpack.c.l.b16 %v74
  %v1039 = vunpack.c.l.b16 %v75
  %v1040 = vunpack.c.l.b16 %v76
  %v1041 = vunpack.c.l.b16 %v77
  %v1042 = vunpack.c.l.b16 %v78
  %v1043 = vunpack.c.l.b16 %v79
  %v1044 = vunpack.c.l.b16 %v80
  %v1045 = vunpack.c.l.b16 %v81
  %v1046 = vunpack.c.l.b16 %v82
  %v1047 = vunpack.c.l.b16 %v83
  %v1048 = vunpack.c.l.b16 %v84
  %v1049 = vunpack.c.l.b16 %v85
  %v1050 = vunpack.c.l.b16 %v86
  %v1051 = vunpack.c.l.b16 %v87
  %v1052 = vunpack.c.l.b16 %v88
  %v1053 = vunpack.c.l.b16 %v89
  %v1054 = vunpack.c.l.b16 %v90
  %v1055 = vpack.c.b16 %v992, %v991
  %v1056 = vpack.c.b16 %v994, %v993
  %v1057 = vpack.c.b16 %v996, %v995
  %v1058 = vpack.c.b16 %v998, %v997
  %v1059 = vpack.c.b16 %v1000, %v999
  %v1060 = vpack.c.b16 %v1002, %v1001
  %v1061 = vpack.c.b16 %v1004, %v1003
  %v1062 = vpack.c.b16 %v1006, %v1005
  %v1063 = vpack.c.b16 %v1008, %v1007
  %v1064 = vpack.c.b16 %v1010, %v1009
  %v1065 = vpack.c.b16 %v1012, %v1011
  %v1066 = vpack.c.b16 %v1014, %v1013
  %v1067 = vpack.c.b16 %v1016, %v1015
  %v1068 = vpack.c.b16 %v1018, %v1017
  %v1069 = vpack.c.b16 %v1020, %v1019
  %v1070 = vpack.c.b16 %v1022, %v1021
  %v1071 = vpack.c.b16 %v1024, %v1023
  %v1072 = vpack.c.b16 %v1026, %v1025
  %v1073 = vpack.c.b16 %v1028, %v1027
  %v1074 = vpack.c.b16 %v1030, %v1029
  %v1075 = vpack.c.b16 %v1032, %v1031
  %v1076 = vpack.c.b16 %v1034, %v1033
  %v1077 = vpack.c.b16 %v1036, %v1035
  %v1078 = vpack.c.b16 %v1038, %v1037
  %v1079 = vpack.c.b16 %v1040, %v1039
  %v1080 = vpack.c.b16 %v1042, %v1041
  %v1081 = vpack.c.b16 %v1044, %v1043
  %v1082 = vpack.c.b16 %v1046, %v1045
  %v1083 = vpack.c.b16 %v1048, %v1047
  %v1084 = vpack.c.b16 %v1050, %v1049
  %v1085 = vpack.c.b16 %v1052, %v1051
  %v1086 = vpack.c.b16 %v1054, %v1053
  %v1092 = vunpack.c.l.b16 %v351
  %v1093 = vunpack.c.l.b16 %v352
  %v1094 = vunpack.c.l.b16 %v353
  %v1095 = vunpack.c.l.b16 %v354
  %v1096 = vunpack.c.l.b16 %v355
  %v1097 = vpack.c.b16 %v1093, %v1092
  %v1098 = vpack.c.b16 %v1095, %v1094
  %v1099 = vpack.c.b16 %v1096, %v1096
  %v1103 = vsel %vm537, %v1055, 0
  %v1106 = vsel %vm537, %v1056, 0
  %v1109 = vsel %vm537, %v1057, 0
  %v1112 = vsel %vm537, %v1058, 0
  %v1115 = vsel %vm537, %v1059, 0
  %v1118 = vsel %vm537, %v1060, 0
  %v1121 = vsel %vm537, %v1061, 0
  %v1124 = vsel %vm537, %v1062, 0
  %v1127 = vsel %vm537, %v1063, 0
  %v1130 = vsel %vm537, %v1064, 0
  %v1133 = vsel %vm537, %v1065, 0
  %v1136 = vsel %vm537, %v1066, 0
  %v1139 = vsel %vm537, %v1067, 0
  %v1142 = vsel %vm537, %v1068, 0
  %v1145 = vsel %vm537, %v1069, 0
  %v1148 = vsel %vm537, %v1070, 0
  %v1151 = vsel %vm537, %v1071, 0
  %v1154 = vsel %vm537, %v1072, 0
  %v1157 = vsel %vm537, %v1073, 0
  %v1160 = vsel %vm537, %v1074, 0
  %v1163 = vsel %vm537, %v1075, 0
  %v1166 = vsel %vm537, %v1076, 0
  %v1169 = vsel %vm537, %v1077, 0
  %v1172 = vsel %vm537, %v1078, 0
  %v1175 = vsel %vm537, %v1079, 0
  %v1178 = vsel %vm537, %v1080, 0
  %v1181 = vsel %vm537, %v1081, 0
  %v1184 = vsel %vm537, %v1082, 0
  %v1187 = vsel %vm537, %v1083, 0
  %v1190 = vsel %vm537, %v1084, 0
  %v1193 = vsel %vm537, %v1085, 0
  %v1196 = vsel %vm537, %v1086, 0
  %v1199 = vsel %vm634, %v1099, 0
  %1201 = vmatprep.subr.bf16.mxu0 0
  %1202 = vmatpush1.bf16.msra.mxu0 0
  %1203 = vmatprep.subr.bf16.mxu0 0
  %1204 = vmatpush1.bf16.msra.mxu0 0
  %1205 = vmatprep.subr.bf16.mxu0 0
  %1206 = vmatpush1.bf16.msra.mxu0 0
  %1207 = vmatprep.subr.bf16.mxu0 0
  %1208 = vmatpush1.bf16.msra.mxu0 0
  %1209 = vmatprep.subr.bf16.mxu0 0
  %1210 = vmatpush1.bf16.msra.mxu0 0
  %1211 = vmatprep.subr.bf16.mxu0 0
  %1212 = vmatpush1.bf16.msra.mxu0 %v1199
  %1213 = vmatprep.subr.bf16.mxu0 0
  %1214 = vmatpush1.bf16.msra.mxu0 %v1098
  %1215 = vmatprep.subr.bf16.mxu0 0
  %1216 = vmatpush1.bf16.msra.mxu0 %v1097
  %1217 = vmatprep.subr.bf16.mxu0 0
  %1218 = vmatpush2.bf16.msra.mxu0 0
  %1219 = vmatprep.subr.bf16.mxu0 0
  %1220 = vmatpush2.bf16.msra.mxu0 0
  %1221 = vmatprep.subr.bf16.mxu0 0
  %1222 = vmatpush2.bf16.msra.mxu0 0
  %1223 = vmatprep.subr.bf16.mxu0 0
  %1224 = vmatpush2.bf16.msra.mxu0 0
  %1225 = vmatprep.subr.bf16.mxu0 0
  %1226 = vmatpush2.bf16.msra.mxu0 0
  %1227 = vmatprep.subr.bf16.mxu0 0
  %1228 = vmatpush2.bf16.msra.mxu0 0
  %1229 = vmatprep.subr.bf16.mxu0 0
  %1230 = vmatpush2.bf16.msra.mxu0 0
  %1231 = vmatprep.subr.bf16.mxu0 0
  %1232 = vmatpush2.bf16.msra.mxu0 0
  %1233 = vmatprep.mubr.bf16.mxu0 0
  %1234 = vmatmul.mubr.bf16.gmra.mxu0 %v1103
  %v1235 = vpop.f32.mrf.mxu0
  %v1236 = vadd.f32 %v673, %v1235
  %v1237 = vpop.f32.mrf.mxu0
  %v1238 = vpop.f32.mrf.mxu0
  %v1239 = vadd.f32 %v676, %v1238
  %v1240 = vpop.f32.mrf.mxu0
  %1241 = vmatprep.mubr.bf16.mxu0 0
  %1242 = vmatmul.mubr.bf16.gmra.mxu0 %v1106
  %v1243 = vpop.f32.mrf.mxu0
  %v1244 = vadd.f32 %v681, %v1243
  %v1245 = vpop.f32.mrf.mxu0
  %v1246 = vpop.f32.mrf.mxu0
  %v1247 = vadd.f32 %v684, %v1246
  %v1248 = vpop.f32.mrf.mxu0
  %1249 = vmatprep.mubr.bf16.mxu0 0
  %1250 = vmatmul.mubr.bf16.gmra.mxu0 %v1109
  %v1251 = vpop.f32.mrf.mxu0
  %v1252 = vadd.f32 %v689, %v1251
  %v1253 = vpop.f32.mrf.mxu0
  %v1254 = vpop.f32.mrf.mxu0
  %v1255 = vadd.f32 %v692, %v1254
  %v1256 = vpop.f32.mrf.mxu0
  %1257 = vmatprep.mubr.bf16.mxu0 0
  %1258 = vmatmul.mubr.bf16.gmra.mxu0 %v1112
  %v1259 = vpop.f32.mrf.mxu0
  %v1260 = vadd.f32 %v697, %v1259
  %v1261 = vpop.f32.mrf.mxu0
  %v1262 = vpop.f32.mrf.mxu0
  %v1263 = vadd.f32 %v700, %v1262
  %v1264 = vpop.f32.mrf.mxu0
  %1265 = vmatprep.mubr.bf16.mxu0 0
  %1266 = vmatmul.mubr.bf16.gmra.mxu0 %v1115
  %v1267 = vpop.f32.mrf.mxu0
  %v1268 = vadd.f32 %v705, %v1267
  %v1269 = vpop.f32.mrf.mxu0
  %v1270 = vpop.f32.mrf.mxu0
  %v1271 = vadd.f32 %v708, %v1270
  %v1272 = vpop.f32.mrf.mxu0
  %1273 = vmatprep.mubr.bf16.mxu0 0
  %1274 = vmatmul.mubr.bf16.gmra.mxu0 %v1118
  %v1275 = vpop.f32.mrf.mxu0
  %v1276 = vadd.f32 %v713, %v1275
  %v1277 = vpop.f32.mrf.mxu0
  %v1278 = vpop.f32.mrf.mxu0
  %v1279 = vadd.f32 %v716, %v1278
  %v1280 = vpop.f32.mrf.mxu0
  %1281 = vmatprep.mubr.bf16.mxu0 0
  %1282 = vmatmul.mubr.bf16.gmra.mxu0 %v1121
  %v1283 = vpop.f32.mrf.mxu0
  %v1284 = vadd.f32 %v721, %v1283
  %v1285 = vpop.f32.mrf.mxu0
  %v1286 = vpop.f32.mrf.mxu0
  %v1287 = vadd.f32 %v724, %v1286
  %v1288 = vpop.f32.mrf.mxu0
  %1289 = vmatprep.mubr.bf16.mxu0 0
  %1290 = vmatmul.mubr.bf16.gmra.mxu0 %v1124
  %v1291 = vpop.f32.mrf.mxu0
  %v1292 = vadd.f32 %v729, %v1291
  %v1293 = vpop.f32.mrf.mxu0
  %v1294 = vpop.f32.mrf.mxu0
  %v1295 = vadd.f32 %v732, %v1294
  %v1296 = vpop.f32.mrf.mxu0
  %1297 = vmatprep.mubr.bf16.mxu0 0
  %1298 = vmatmul.mubr.bf16.gmra.mxu0 %v1127
  %v1299 = vpop.f32.mrf.mxu0
  %v1300 = vadd.f32 %v737, %v1299
  %v1301 = vpop.f32.mrf.mxu0
  %v1302 = vpop.f32.mrf.mxu0
  %v1303 = vadd.f32 %v740, %v1302
  %v1304 = vpop.f32.mrf.mxu0
  %1305 = vmatprep.mubr.bf16.mxu0 0
  %1306 = vmatmul.mubr.bf16.gmra.mxu0 %v1130
  %v1307 = vpop.f32.mrf.mxu0
  %v1308 = vadd.f32 %v745, %v1307
  %v1309 = vpop.f32.mrf.mxu0
  %v1310 = vpop.f32.mrf.mxu0
  %v1311 = vadd.f32 %v748, %v1310
  %v1312 = vpop.f32.mrf.mxu0
  %1313 = vmatprep.mubr.bf16.mxu0 0
  %1314 = vmatmul.mubr.bf16.gmra.mxu0 %v1133
  %v1315 = vpop.f32.mrf.mxu0
  %v1316 = vadd.f32 %v753, %v1315
  %v1317 = vpop.f32.mrf.mxu0
  %v1318 = vpop.f32.mrf.mxu0
  %v1319 = vadd.f32 %v756, %v1318
  %v1320 = vpop.f32.mrf.mxu0
  %1321 = vmatprep.mubr.bf16.mxu0 0
  %1322 = vmatmul.mubr.bf16.gmra.mxu0 %v1136
  %v1323 = vpop.f32.mrf.mxu0
  %v1324 = vadd.f32 %v761, %v1323
  %v1325 = vpop.f32.mrf.mxu0
  %v1326 = vpop.f32.mrf.mxu0
  %v1327 = vadd.f32 %v764, %v1326
  %v1328 = vpop.f32.mrf.mxu0
  %1329 = vmatprep.mubr.bf16.mxu0 0
  %1330 = vmatmul.mubr.bf16.gmra.mxu0 %v1139
  %v1331 = vpop.f32.mrf.mxu0
  %v1332 = vadd.f32 %v769, %v1331
  %v1333 = vpop.f32.mrf.mxu0
  %v1334 = vpop.f32.mrf.mxu0
  %v1335 = vadd.f32 %v772, %v1334
  %v1336 = vpop.f32.mrf.mxu0
  %1337 = vmatprep.mubr.bf16.mxu0 0
  %1338 = vmatmul.mubr.bf16.gmra.mxu0 %v1142
  %v1339 = vpop.f32.mrf.mxu0
  %v1340 = vadd.f32 %v777, %v1339
  %v1341 = vpop.f32.mrf.mxu0
  %v1342 = vpop.f32.mrf.mxu0
  %v1343 = vadd.f32 %v780, %v1342
  %v1344 = vpop.f32.mrf.mxu0
  %1345 = vmatprep.mubr.bf16.mxu0 0
  %1346 = vmatmul.mubr.bf16.gmra.mxu0 %v1145
  %v1347 = vpop.f32.mrf.mxu0
  %v1348 = vadd.f32 %v785, %v1347
  %v1349 = vpop.f32.mrf.mxu0
  %v1350 = vpop.f32.mrf.mxu0
  %v1351 = vadd.f32 %v788, %v1350
  %v1352 = vpop.f32.mrf.mxu0
  %1353 = vmatprep.mubr.bf16.mxu0 0
  %1354 = vmatmul.mubr.bf16.gmra.mxu0 %v1148
  %v1355 = vpop.f32.mrf.mxu0
  %v1356 = vadd.f32 %v793, %v1355
  %v1357 = vpop.f32.mrf.mxu0
  %v1358 = vpop.f32.mrf.mxu0
  %v1359 = vadd.f32 %v796, %v1358
  %v1360 = vpop.f32.mrf.mxu0
  %1361 = vmatprep.mubr.bf16.mxu0 0
  %1362 = vmatmul.mubr.bf16.gmra.mxu0 %v1151
  %v1363 = vpop.f32.mrf.mxu0
  %v1364 = vadd.f32 %v801, %v1363
  %v1365 = vpop.f32.mrf.mxu0
  %v1366 = vpop.f32.mrf.mxu0
  %v1367 = vadd.f32 %v804, %v1366
  %v1368 = vpop.f32.mrf.mxu0
  %1369 = vmatprep.mubr.bf16.mxu0 0
  %1370 = vmatmul.mubr.bf16.gmra.mxu0 %v1154
  %v1371 = vpop.f32.mrf.mxu0
  %v1372 = vadd.f32 %v809, %v1371
  %v1373 = vpop.f32.mrf.mxu0
  %v1374 = vpop.f32.mrf.mxu0
  %v1375 = vadd.f32 %v812, %v1374
  %v1376 = vpop.f32.mrf.mxu0
  %1377 = vmatprep.mubr.bf16.mxu0 0
  %1378 = vmatmul.mubr.bf16.gmra.mxu0 %v1157
  %v1379 = vpop.f32.mrf.mxu0
  %v1380 = vadd.f32 %v817, %v1379
  %v1381 = vpop.f32.mrf.mxu0
  %v1382 = vpop.f32.mrf.mxu0
  %v1383 = vadd.f32 %v820, %v1382
  %v1384 = vpop.f32.mrf.mxu0
  %1385 = vmatprep.mubr.bf16.mxu0 0
  %1386 = vmatmul.mubr.bf16.gmra.mxu0 %v1160
  %v1387 = vpop.f32.mrf.mxu0
  %v1388 = vadd.f32 %v825, %v1387
  %v1389 = vpop.f32.mrf.mxu0
  %v1390 = vpop.f32.mrf.mxu0
  %v1391 = vadd.f32 %v828, %v1390
  %v1392 = vpop.f32.mrf.mxu0
  %1393 = vmatprep.mubr.bf16.mxu0 0
  %1394 = vmatmul.mubr.bf16.gmra.mxu0 %v1163
  %v1395 = vpop.f32.mrf.mxu0
  %v1396 = vadd.f32 %v833, %v1395
  %v1397 = vpop.f32.mrf.mxu0
  %v1398 = vpop.f32.mrf.mxu0
  %v1399 = vadd.f32 %v836, %v1398
  %v1400 = vpop.f32.mrf.mxu0
  %1401 = vmatprep.mubr.bf16.mxu0 0
  %1402 = vmatmul.mubr.bf16.gmra.mxu0 %v1166
  %v1403 = vpop.f32.mrf.mxu0
  %v1404 = vadd.f32 %v841, %v1403
  %v1405 = vpop.f32.mrf.mxu0
  %v1406 = vpop.f32.mrf.mxu0
  %v1407 = vadd.f32 %v844, %v1406
  %v1408 = vpop.f32.mrf.mxu0
  %1409 = vmatprep.mubr.bf16.mxu0 0
  %1410 = vmatmul.mubr.bf16.gmra.mxu0 %v1169
  %v1411 = vpop.f32.mrf.mxu0
  %v1412 = vadd.f32 %v849, %v1411
  %v1413 = vpop.f32.mrf.mxu0
  %v1414 = vpop.f32.mrf.mxu0
  %v1415 = vadd.f32 %v852, %v1414
  %v1416 = vpop.f32.mrf.mxu0
  %1417 = vmatprep.mubr.bf16.mxu0 0
  %1418 = vmatmul.mubr.bf16.gmra.mxu0 %v1172
  %v1419 = vpop.f32.mrf.mxu0
  %v1420 = vadd.f32 %v857, %v1419
  %v1421 = vpop.f32.mrf.mxu0
  %v1422 = vpop.f32.mrf.mxu0
  %v1423 = vadd.f32 %v860, %v1422
  %v1424 = vpop.f32.mrf.mxu0
  %1425 = vmatprep.mubr.bf16.mxu0 0
  %1426 = vmatmul.mubr.bf16.gmra.mxu0 %v1175
  %v1427 = vpop.f32.mrf.mxu0
  %v1428 = vadd.f32 %v865, %v1427
  %v1429 = vpop.f32.mrf.mxu0
  %v1430 = vpop.f32.mrf.mxu0
  %v1431 = vadd.f32 %v868, %v1430
  %v1432 = vpop.f32.mrf.mxu0
  %1433 = vmatprep.mubr.bf16.mxu0 0
  %1434 = vmatmul.mubr.bf16.gmra.mxu0 %v1178
  %v1435 = vpop.f32.mrf.mxu0
  %v1436 = vadd.f32 %v873, %v1435
  %v1437 = vpop.f32.mrf.mxu0
  %v1438 = vpop.f32.mrf.mxu0
  %v1439 = vadd.f32 %v876, %v1438
  %v1440 = vpop.f32.mrf.mxu0
  %1441 = vmatprep.mubr.bf16.mxu0 0
  %1442 = vmatmul.mubr.bf16.gmra.mxu0 %v1181
  %v1443 = vpop.f32.mrf.mxu0
  %v1444 = vadd.f32 %v881, %v1443
  %v1445 = vpop.f32.mrf.mxu0
  %v1446 = vpop.f32.mrf.mxu0
  %v1447 = vadd.f32 %v884, %v1446
  %v1448 = vpop.f32.mrf.mxu0
  %1449 = vmatprep.mubr.bf16.mxu0 0
  %1450 = vmatmul.mubr.bf16.gmra.mxu0 %v1184
  %v1451 = vpop.f32.mrf.mxu0
  %v1452 = vadd.f32 %v889, %v1451
  %v1453 = vpop.f32.mrf.mxu0
  %v1454 = vpop.f32.mrf.mxu0
  %v1455 = vadd.f32 %v892, %v1454
  %v1456 = vpop.f32.mrf.mxu0
  %1457 = vmatprep.mubr.bf16.mxu0 0
  %1458 = vmatmul.mubr.bf16.gmra.mxu0 %v1187
  %v1459 = vpop.f32.mrf.mxu0
  %v1460 = vadd.f32 %v897, %v1459
  %v1461 = vpop.f32.mrf.mxu0
  %v1462 = vpop.f32.mrf.mxu0
  %v1463 = vadd.f32 %v900, %v1462
  %v1464 = vpop.f32.mrf.mxu0
  %1465 = vmatprep.mubr.bf16.mxu0 0
  %1466 = vmatmul.mubr.bf16.gmra.mxu0 %v1190
  %v1467 = vpop.f32.mrf.mxu0
  %v1468 = vadd.f32 %v905, %v1467
  %v1469 = vpop.f32.mrf.mxu0
  %v1470 = vpop.f32.mrf.mxu0
  %v1471 = vadd.f32 %v908, %v1470
  %v1472 = vpop.f32.mrf.mxu0
  %1473 = vmatprep.mubr.bf16.mxu0 0
  %1474 = vmatmul.mubr.bf16.gmra.mxu0 %v1193
  %v1475 = vpop.f32.mrf.mxu0
  %v1476 = vadd.f32 %v913, %v1475
  %v1477 = vpop.f32.mrf.mxu0
  %v1478 = vpop.f32.mrf.mxu0
  %v1479 = vadd.f32 %v916, %v1478
  %v1480 = vpop.f32.mrf.mxu0
  %1481 = vmatprep.mubr.bf16.mxu0 0
  %1482 = vmatmul.mubr.bf16.gmra.mxu0 %v1196
  %v1483 = vpop.f32.mrf.mxu0
  %v1484 = vadd.f32 %v921, %v1483
  %v1485 = vpop.f32.mrf.mxu0
  %v1486 = vpop.f32.mrf.mxu0
  %v1487 = vadd.f32 %v924, %v1486
  %v1488 = vpop.f32.mrf.mxu0
  %1489 = vdwg.mxu0
  %s1490 = scalar_lea.vmem %s1, 160
  %v1491 = vld [vmem:[%s1490] sm:$0xf]
  %v1492 = vld [vmem:[%s1490 + $0x4] sm:$0xf]
  %v1493 = vld [vmem:[%s1490 + $0x8] sm:$0xf]
  %v1494 = vld [vmem:[%s1490 + $0xc] sm:$0xf]
  %v1495 = vld [vmem:[%s1490 + $0x10] sm:$0x3]
  %v1560 = vunpack.c.l.b16 %v157
  %v1561 = vunpack.c.l.b16 %v158
  %v1562 = vunpack.c.l.b16 %v159
  %v1563 = vunpack.c.l.b16 %v160
  %v1564 = vunpack.c.l.b16 %v161
  %v1565 = vunpack.c.l.b16 %v162
  %v1566 = vunpack.c.l.b16 %v163
  %v1567 = vunpack.c.l.b16 %v164
  %v1568 = vunpack.c.l.b16 %v165
  %v1569 = vunpack.c.l.b16 %v166
  %v1570 = vunpack.c.l.b16 %v167
  %v1571 = vunpack.c.l.b16 %v168
  %v1572 = vunpack.c.l.b16 %v169
  %v1573 = vunpack.c.l.b16 %v170
  %v1574 = vunpack.c.l.b16 %v171
  %v1575 = vunpack.c.l.b16 %v172
  %v1576 = vunpack.c.l.b16 %v173
  %v1577 = vunpack.c.l.b16 %v174
  %v1578 = vunpack.c.l.b16 %v175
  %v1579 = vunpack.c.l.b16 %v176
  %v1580 = vunpack.c.l.b16 %v177
  %v1581 = vunpack.c.l.b16 %v178
  %v1582 = vunpack.c.l.b16 %v179
  %v1583 = vunpack.c.l.b16 %v180
  %v1584 = vunpack.c.l.b16 %v181
  %v1585 = vunpack.c.l.b16 %v182
  %v1586 = vunpack.c.l.b16 %v183
  %v1587 = vunpack.c.l.b16 %v184
  %v1588 = vunpack.c.l.b16 %v185
  %v1589 = vunpack.c.l.b16 %v186
  %v1590 = vunpack.c.l.b16 %v187
  %v1591 = vunpack.c.l.b16 %v188
  %v1592 = vunpack.c.l.b16 %v189
  %v1593 = vunpack.c.l.b16 %v190
  %v1594 = vunpack.c.l.b16 %v191
  %v1595 = vunpack.c.l.b16 %v192
  %v1596 = vunpack.c.l.b16 %v193
  %v1597 = vunpack.c.l.b16 %v194
  %v1598 = vunpack.c.l.b16 %v195
  %v1599 = vunpack.c.l.b16 %v196
  %v1600 = vunpack.c.l.b16 %v197
  %v1601 = vunpack.c.l.b16 %v198
  %v1602 = vunpack.c.l.b16 %v199
  %v1603 = vunpack.c.l.b16 %v200
  %v1604 = vunpack.c.l.b16 %v201
  %v1605 = vunpack.c.l.b16 %v202
  %v1606 = vunpack.c.l.b16 %v203
  %v1607 = vunpack.c.l.b16 %v204
  %v1608 = vunpack.c.l.b16 %v205
  %v1609 = vunpack.c.l.b16 %v206
  %v1610 = vunpack.c.l.b16 %v207
  %v1611 = vunpack.c.l.b16 %v208
  %v1612 = vunpack.c.l.b16 %v209
  %v1613 = vunpack.c.l.b16 %v210
  %v1614 = vunpack.c.l.b16 %v211
  %v1615 = vunpack.c.l.b16 %v212
  %v1616 = vunpack.c.l.b16 %v213
  %v1617 = vunpack.c.l.b16 %v214
  %v1618 = vunpack.c.l.b16 %v215
  %v1619 = vunpack.c.l.b16 %v216
  %v1620 = vunpack.c.l.b16 %v217
  %v1621 = vunpack.c.l.b16 %v218
  %v1622 = vunpack.c.l.b16 %v219
  %v1623 = vunpack.c.l.b16 %v220
  %v1624 = vpack.c.b16 %v1561, %v1560
  %v1625 = vpack.c.b16 %v1563, %v1562
  %v1626 = vpack.c.b16 %v1565, %v1564
  %v1627 = vpack.c.b16 %v1567, %v1566
  %v1628 = vpack.c.b16 %v1569, %v1568
  %v1629 = vpack.c.b16 %v1571, %v1570
  %v1630 = vpack.c.b16 %v1573, %v1572
  %v1631 = vpack.c.b16 %v1575, %v1574
  %v1632 = vpack.c.b16 %v1577, %v1576
  %v1633 = vpack.c.b16 %v1579, %v1578
  %v1634 = vpack.c.b16 %v1581, %v1580
  %v1635 = vpack.c.b16 %v1583, %v1582
  %v1636 = vpack.c.b16 %v1585, %v1584
  %v1637 = vpack.c.b16 %v1587, %v1586
  %v1638 = vpack.c.b16 %v1589, %v1588
  %v1639 = vpack.c.b16 %v1591, %v1590
  %v1640 = vpack.c.b16 %v1593, %v1592
  %v1641 = vpack.c.b16 %v1595, %v1594
  %v1642 = vpack.c.b16 %v1597, %v1596
  %v1643 = vpack.c.b16 %v1599, %v1598
  %v1644 = vpack.c.b16 %v1601, %v1600
  %v1645 = vpack.c.b16 %v1603, %v1602
  %v1646 = vpack.c.b16 %v1605, %v1604
  %v1647 = vpack.c.b16 %v1607, %v1606
  %v1648 = vpack.c.b16 %v1609, %v1608
  %v1649 = vpack.c.b16 %v1611, %v1610
  %v1650 = vpack.c.b16 %v1613, %v1612
  %v1651 = vpack.c.b16 %v1615, %v1614
  %v1652 = vpack.c.b16 %v1617, %v1616
  %v1653 = vpack.c.b16 %v1619, %v1618
  %v1654 = vpack.c.b16 %v1621, %v1620
  %v1655 = vpack.c.b16 %v1623, %v1622
  %v1661 = vunpack.c.l.b16 %v1491
  %v1662 = vunpack.c.l.b16 %v1492
  %v1663 = vunpack.c.l.b16 %v1493
  %v1664 = vunpack.c.l.b16 %v1494
  %v1665 = vunpack.c.l.b16 %v1495
  %v1666 = vpack.c.b16 %v1662, %v1661
  %v1667 = vpack.c.b16 %v1664, %v1663
  %v1668 = vpack.c.b16 %v1665, %v1665
  %v1672 = vsel %vm537, %v1624, 0
  %v1675 = vsel %vm537, %v1625, 0
  %v1678 = vsel %vm537, %v1626, 0
  %v1681 = vsel %vm537, %v1627, 0
  %v1684 = vsel %vm537, %v1628, 0
  %v1687 = vsel %vm537, %v1629, 0
  %v1690 = vsel %vm537, %v1630, 0
  %v1693 = vsel %vm537, %v1631, 0
  %v1696 = vsel %vm537, %v1632, 0
  %v1699 = vsel %vm537, %v1633, 0
  %v1702 = vsel %vm537, %v1634, 0
  %v1705 = vsel %vm537, %v1635, 0
  %v1708 = vsel %vm537, %v1636, 0
  %v1711 = vsel %vm537, %v1637, 0
  %v1714 = vsel %vm537, %v1638, 0
  %v1717 = vsel %vm537, %v1639, 0
  %v1720 = vsel %vm537, %v1640, 0
  %v1723 = vsel %vm537, %v1641, 0
  %v1726 = vsel %vm537, %v1642, 0
  %v1729 = vsel %vm537, %v1643, 0
  %v1732 = vsel %vm537, %v1644, 0
  %v1735 = vsel %vm537, %v1645, 0
  %v1738 = vsel %vm537, %v1646, 0
  %v1741 = vsel %vm537, %v1647, 0
  %v1744 = vsel %vm537, %v1648, 0
  %v1747 = vsel %vm537, %v1649, 0
  %v1750 = vsel %vm537, %v1650, 0
  %v1753 = vsel %vm537, %v1651, 0
  %v1756 = vsel %vm537, %v1652, 0
  %v1759 = vsel %vm537, %v1653, 0
  %v1762 = vsel %vm537, %v1654, 0
  %v1765 = vsel %vm537, %v1655, 0
  %v1768 = vsel %vm634, %v1668, 0
  %1770 = vmatprep.subr.bf16.mxu0 0
  %1771 = vmatpush1.bf16.msra.mxu0 0
  %1772 = vmatprep.subr.bf16.mxu0 0
  %1773 = vmatpush1.bf16.msra.mxu0 0
  %1774 = vmatprep.subr.bf16.mxu0 0
  %1775 = vmatpush1.bf16.msra.mxu0 0
  %1776 = vmatprep.subr.bf16.mxu0 0
  %1777 = vmatpush1.bf16.msra.mxu0 0
  %1778 = vmatprep.subr.bf16.mxu0 0
  %1779 = vmatpush1.bf16.msra.mxu0 0
  %1780 = vmatprep.subr.bf16.mxu0 0
  %1781 = vmatpush1.bf16.msra.mxu0 %v1768
  %1782 = vmatprep.subr.bf16.mxu0 0
  %1783 = vmatpush1.bf16.msra.mxu0 %v1667
  %1784 = vmatprep.subr.bf16.mxu0 0
  %1785 = vmatpush1.bf16.msra.mxu0 %v1666
  %1786 = vmatprep.subr.bf16.mxu0 0
  %1787 = vmatpush2.bf16.msra.mxu0 0
  %1788 = vmatprep.subr.bf16.mxu0 0
  %1789 = vmatpush2.bf16.msra.mxu0 0
  %1790 = vmatprep.subr.bf16.mxu0 0
  %1791 = vmatpush2.bf16.msra.mxu0 0
  %1792 = vmatprep.subr.bf16.mxu0 0
  %1793 = vmatpush2.bf16.msra.mxu0 0
  %1794 = vmatprep.subr.bf16.mxu0 0
  %1795 = vmatpush2.bf16.msra.mxu0 0
  %1796 = vmatprep.subr.bf16.mxu0 0
  %1797 = vmatpush2.bf16.msra.mxu0 0
  %1798 = vmatprep.subr.bf16.mxu0 0
  %1799 = vmatpush2.bf16.msra.mxu0 0
  %1800 = vmatprep.subr.bf16.mxu0 0
  %1801 = vmatpush2.bf16.msra.mxu0 0
  %1802 = vmatprep.mubr.bf16.mxu0 0
  %1803 = vmatmul.mubr.bf16.gmra.mxu0 %v1672
  %v1804 = vpop.f32.mrf.mxu0
  %v1805 = vadd.f32 0.0, %v1804
  %v1806 = vpop.f32.mrf.mxu0
  %v1807 = vpop.f32.mrf.mxu0
  %v1808 = vadd.f32 0.0, %v1807
  %v1809 = vpop.f32.mrf.mxu0
  %1810 = vmatprep.mubr.bf16.mxu0 0
  %1811 = vmatmul.mubr.bf16.gmra.mxu0 %v1675
  %v1812 = vpop.f32.mrf.mxu0
  %v1813 = vadd.f32 0.0, %v1812
  %v1814 = vpop.f32.mrf.mxu0
  %v1815 = vpop.f32.mrf.mxu0
  %v1816 = vadd.f32 0.0, %v1815
  %v1817 = vpop.f32.mrf.mxu0
  %1818 = vmatprep.mubr.bf16.mxu0 0
  %1819 = vmatmul.mubr.bf16.gmra.mxu0 %v1678
  %v1820 = vpop.f32.mrf.mxu0
  %v1821 = vadd.f32 0.0, %v1820
  %v1822 = vpop.f32.mrf.mxu0
  %v1823 = vpop.f32.mrf.mxu0
  %v1824 = vadd.f32 0.0, %v1823
  %v1825 = vpop.f32.mrf.mxu0
  %1826 = vmatprep.mubr.bf16.mxu0 0
  %1827 = vmatmul.mubr.bf16.gmra.mxu0 %v1681
  %v1828 = vpop.f32.mrf.mxu0
  %v1829 = vadd.f32 0.0, %v1828
  %v1830 = vpop.f32.mrf.mxu0
  %v1831 = vpop.f32.mrf.mxu0
  %v1832 = vadd.f32 0.0, %v1831
  %v1833 = vpop.f32.mrf.mxu0
  %1834 = vmatprep.mubr.bf16.mxu0 0
  %1835 = vmatmul.mubr.bf16.gmra.mxu0 %v1684
  %v1836 = vpop.f32.mrf.mxu0
  %v1837 = vadd.f32 0.0, %v1836
  %v1838 = vpop.f32.mrf.mxu0
  %v1839 = vpop.f32.mrf.mxu0
  %v1840 = vadd.f32 0.0, %v1839
  %v1841 = vpop.f32.mrf.mxu0
  %1842 = vmatprep.mubr.bf16.mxu0 0
  %1843 = vmatmul.mubr.bf16.gmra.mxu0 %v1687
  %v1844 = vpop.f32.mrf.mxu0
  %v1845 = vadd.f32 0.0, %v1844
  %v1846 = vpop.f32.mrf.mxu0
  %v1847 = vpop.f32.mrf.mxu0
  %v1848 = vadd.f32 0.0, %v1847
  %v1849 = vpop.f32.mrf.mxu0
  %1850 = vmatprep.mubr.bf16.mxu0 0
  %1851 = vmatmul.mubr.bf16.gmra.mxu0 %v1690
  %v1852 = vpop.f32.mrf.mxu0
  %v1853 = vadd.f32 0.0, %v1852
  %v1854 = vpop.f32.mrf.mxu0
  %v1855 = vpop.f32.mrf.mxu0
  %v1856 = vadd.f32 0.0, %v1855
  %v1857 = vpop.f32.mrf.mxu0
  %1858 = vmatprep.mubr.bf16.mxu0 0
  %1859 = vmatmul.mubr.bf16.gmra.mxu0 %v1693
  %v1860 = vpop.f32.mrf.mxu0
  %v1861 = vadd.f32 0.0, %v1860
  %v1862 = vpop.f32.mrf.mxu0
  %v1863 = vpop.f32.mrf.mxu0
  %v1864 = vadd.f32 0.0, %v1863
  %v1865 = vpop.f32.mrf.mxu0
  %1866 = vmatprep.mubr.bf16.mxu0 0
  %1867 = vmatmul.mubr.bf16.gmra.mxu0 %v1696
  %v1868 = vpop.f32.mrf.mxu0
  %v1869 = vadd.f32 0.0, %v1868
  %v1870 = vpop.f32.mrf.mxu0
  %v1871 = vpop.f32.mrf.mxu0
  %v1872 = vadd.f32 0.0, %v1871
  %v1873 = vpop.f32.mrf.mxu0
  %1874 = vmatprep.mubr.bf16.mxu0 0
  %1875 = vmatmul.mubr.bf16.gmra.mxu0 %v1699
  %v1876 = vpop.f32.mrf.mxu0
  %v1877 = vadd.f32 0.0, %v1876
  %v1878 = vpop.f32.mrf.mxu0
  %v1879 = vpop.f32.mrf.mxu0
  %v1880 = vadd.f32 0.0, %v1879
  %v1881 = vpop.f32.mrf.mxu0
  %1882 = vmatprep.mubr.bf16.mxu0 0
  %1883 = vmatmul.mubr.bf16.gmra.mxu0 %v1702
  %v1884 = vpop.f32.mrf.mxu0
  %v1885 = vadd.f32 0.0, %v1884
  %v1886 = vpop.f32.mrf.mxu0
  %v1887 = vpop.f32.mrf.mxu0
  %v1888 = vadd.f32 0.0, %v1887
  %v1889 = vpop.f32.mrf.mxu0
  %1890 = vmatprep.mubr.bf16.mxu0 0
  %1891 = vmatmul.mubr.bf16.gmra.mxu0 %v1705
  %v1892 = vpop.f32.mrf.mxu0
  %v1893 = vadd.f32 0.0, %v1892
  %v1894 = vpop.f32.mrf.mxu0
  %v1895 = vpop.f32.mrf.mxu0
  %v1896 = vadd.f32 0.0, %v1895
  %v1897 = vpop.f32.mrf.mxu0
  %1898 = vmatprep.mubr.bf16.mxu0 0
  %1899 = vmatmul.mubr.bf16.gmra.mxu0 %v1708
  %v1900 = vpop.f32.mrf.mxu0
  %v1901 = vadd.f32 0.0, %v1900
  %v1902 = vpop.f32.mrf.mxu0
  %v1903 = vpop.f32.mrf.mxu0
  %v1904 = vadd.f32 0.0, %v1903
  %v1905 = vpop.f32.mrf.mxu0
  %1906 = vmatprep.mubr.bf16.mxu0 0
  %1907 = vmatmul.mubr.bf16.gmra.mxu0 %v1711
  %v1908 = vpop.f32.mrf.mxu0
  %v1909 = vadd.f32 0.0, %v1908
  %v1910 = vpop.f32.mrf.mxu0
  %v1911 = vpop.f32.mrf.mxu0
  %v1912 = vadd.f32 0.0, %v1911
  %v1913 = vpop.f32.mrf.mxu0
  %1914 = vmatprep.mubr.bf16.mxu0 0
  %1915 = vmatmul.mubr.bf16.gmra.mxu0 %v1714
  %v1916 = vpop.f32.mrf.mxu0
  %v1917 = vadd.f32 0.0, %v1916
  %v1918 = vpop.f32.mrf.mxu0
  %v1919 = vpop.f32.mrf.mxu0
  %v1920 = vadd.f32 0.0, %v1919
  %v1921 = vpop.f32.mrf.mxu0
  %1922 = vmatprep.mubr.bf16.mxu0 0
  %1923 = vmatmul.mubr.bf16.gmra.mxu0 %v1717
  %v1924 = vpop.f32.mrf.mxu0
  %v1925 = vadd.f32 0.0, %v1924
  %v1926 = vpop.f32.mrf.mxu0
  %v1927 = vpop.f32.mrf.mxu0
  %v1928 = vadd.f32 0.0, %v1927
  %v1929 = vpop.f32.mrf.mxu0
  %1930 = vmatprep.mubr.bf16.mxu0 0
  %1931 = vmatmul.mubr.bf16.gmra.mxu0 %v1720
  %v1932 = vpop.f32.mrf.mxu0
  %v1933 = vadd.f32 0.0, %v1932
  %v1934 = vpop.f32.mrf.mxu0
  %v1935 = vpop.f32.mrf.mxu0
  %v1936 = vadd.f32 0.0, %v1935
  %v1937 = vpop.f32.mrf.mxu0
  %1938 = vmatprep.mubr.bf16.mxu0 0
  %1939 = vmatmul.mubr.bf16.gmra.mxu0 %v1723
  %v1940 = vpop.f32.mrf.mxu0
  %v1941 = vadd.f32 0.0, %v1940
  %v1942 = vpop.f32.mrf.mxu0
  %v1943 = vpop.f32.mrf.mxu0
  %v1944 = vadd.f32 0.0, %v1943
  %v1945 = vpop.f32.mrf.mxu0
  %1946 = vmatprep.mubr.bf16.mxu0 0
  %1947 = vmatmul.mubr.bf16.gmra.mxu0 %v1726
  %v1948 = vpop.f32.mrf.mxu0
  %v1949 = vadd.f32 0.0, %v1948
  %v1950 = vpop.f32.mrf.mxu0
  %v1951 = vpop.f32.mrf.mxu0
  %v1952 = vadd.f32 0.0, %v1951
  %v1953 = vpop.f32.mrf.mxu0
  %1954 = vmatprep.mubr.bf16.mxu0 0
  %1955 = vmatmul.mubr.bf16.gmra.mxu0 %v1729
  %v1956 = vpop.f32.mrf.mxu0
  %v1957 = vadd.f32 0.0, %v1956
  %v1958 = vpop.f32.mrf.mxu0
  %v1959 = vpop.f32.mrf.mxu0
  %v1960 = vadd.f32 0.0, %v1959
  %v1961 = vpop.f32.mrf.mxu0
  %1962 = vmatprep.mubr.bf16.mxu0 0
  %1963 = vmatmul.mubr.bf16.gmra.mxu0 %v1732
  %v1964 = vpop.f32.mrf.mxu0
  %v1965 = vadd.f32 0.0, %v1964
  %v1966 = vpop.f32.mrf.mxu0
  %v1967 = vpop.f32.mrf.mxu0
  %v1968 = vadd.f32 0.0, %v1967
  %v1969 = vpop.f32.mrf.mxu0
  %1970 = vmatprep.mubr.bf16.mxu0 0
  %1971 = vmatmul.mubr.bf16.gmra.mxu0 %v1735
  %v1972 = vpop.f32.mrf.mxu0
  %v1973 = vadd.f32 0.0, %v1972
  %v1974 = vpop.f32.mrf.mxu0
  %v1975 = vpop.f32.mrf.mxu0
  %v1976 = vadd.f32 0.0, %v1975
  %v1977 = vpop.f32.mrf.mxu0
  %1978 = vmatprep.mubr.bf16.mxu0 0
  %1979 = vmatmul.mubr.bf16.gmra.mxu0 %v1738
  %v1980 = vpop.f32.mrf.mxu0
  %v1981 = vadd.f32 0.0, %v1980
  %v1982 = vpop.f32.mrf.mxu0
  %v1983 = vpop.f32.mrf.mxu0
  %v1984 = vadd.f32 0.0, %v1983
  %v1985 = vpop.f32.mrf.mxu0
  %1986 = vmatprep.mubr.bf16.mxu0 0
  %1987 = vmatmul.mubr.bf16.gmra.mxu0 %v1741
  %v1988 = vpop.f32.mrf.mxu0
  %v1989 = vadd.f32 0.0, %v1988
  %v1990 = vpop.f32.mrf.mxu0
  %v1991 = vpop.f32.mrf.mxu0
  %v1992 = vadd.f32 0.0, %v1991
  %v1993 = vpop.f32.mrf.mxu0
  %1994 = vmatprep.mubr.bf16.mxu0 0
  %1995 = vmatmul.mubr.bf16.gmra.mxu0 %v1744
  %v1996 = vpop.f32.mrf.mxu0
  %v1997 = vadd.f32 0.0, %v1996
  %v1998 = vpop.f32.mrf.mxu0
  %v1999 = vpop.f32.mrf.mxu0
  %v2000 = vadd.f32 0.0, %v1999
  %v2001 = vpop.f32.mrf.mxu0
  %2002 = vmatprep.mubr.bf16.mxu0 0
  %2003 = vmatmul.mubr.bf16.gmra.mxu0 %v1747
  %v2004 = vpop.f32.mrf.mxu0
  %v2005 = vadd.f32 0.0, %v2004
  %v2006 = vpop.f32.mrf.mxu0
  %v2007 = vpop.f32.mrf.mxu0
  %v2008 = vadd.f32 0.0, %v2007
  %v2009 = vpop.f32.mrf.mxu0
  %2010 = vmatprep.mubr.bf16.mxu0 0
  %2011 = vmatmul.mubr.bf16.gmra.mxu0 %v1750
  %v2012 = vpop.f32.mrf.mxu0
  %v2013 = vadd.f32 0.0, %v2012
  %v2014 = vpop.f32.mrf.mxu0
  %v2015 = vpop.f32.mrf.mxu0
  %v2016 = vadd.f32 0.0, %v2015
  %v2017 = vpop.f32.mrf.mxu0
  %2018 = vmatprep.mubr.bf16.mxu0 0
  %2019 = vmatmul.mubr.bf16.gmra.mxu0 %v1753
  %v2020 = vpop.f32.mrf.mxu0
  %v2021 = vadd.f32 0.0, %v2020
  %v2022 = vpop.f32.mrf.mxu0
  %v2023 = vpop.f32.mrf.mxu0
  %v2024 = vadd.f32 0.0, %v2023
  %v2025 = vpop.f32.mrf.mxu0
  %2026 = vmatprep.mubr.bf16.mxu0 0
  %2027 = vmatmul.mubr.bf16.gmra.mxu0 %v1756
  %v2028 = vpop.f32.mrf.mxu0
  %v2029 = vadd.f32 0.0, %v2028
  %v2030 = vpop.f32.mrf.mxu0
  %v2031 = vpop.f32.mrf.mxu0
  %v2032 = vadd.f32 0.0, %v2031
  %v2033 = vpop.f32.mrf.mxu0
  %2034 = vmatprep.mubr.bf16.mxu0 0
  %2035 = vmatmul.mubr.bf16.gmra.mxu0 %v1759
  %v2036 = vpop.f32.mrf.mxu0
  %v2037 = vadd.f32 0.0, %v2036
  %v2038 = vpop.f32.mrf.mxu0
  %v2039 = vpop.f32.mrf.mxu0
  %v2040 = vadd.f32 0.0, %v2039
  %v2041 = vpop.f32.mrf.mxu0
  %2042 = vmatprep.mubr.bf16.mxu0 0
  %2043 = vmatmul.mubr.bf16.gmra.mxu0 %v1762
  %v2044 = vpop.f32.mrf.mxu0
  %v2045 = vadd.f32 0.0, %v2044
  %v2046 = vpop.f32.mrf.mxu0
  %v2047 = vpop.f32.mrf.mxu0
  %v2048 = vadd.f32 0.0, %v2047
  %v2049 = vpop.f32.mrf.mxu0
  %2050 = vmatprep.mubr.bf16.mxu0 0
  %2051 = vmatmul.mubr.bf16.gmra.mxu0 %v1765
  %v2052 = vpop.f32.mrf.mxu0
  %v2053 = vadd.f32 0.0, %v2052
  %v2054 = vpop.f32.mrf.mxu0
  %v2055 = vpop.f32.mrf.mxu0
  %v2056 = vadd.f32 0.0, %v2055
  %v2057 = vpop.f32.mrf.mxu0
  %2058 = vdwg.mxu0
  %v2059 = vadd.f32 %v1236, %v1805
  %v2060 = vadd.f32 %v1239, %v1808
  %v2061 = vadd.f32 %v1244, %v1813
  %v2062 = vadd.f32 %v1247, %v1816
  %v2063 = vadd.f32 %v1252, %v1821
  %v2064 = vadd.f32 %v1255, %v1824
  %v2065 = vadd.f32 %v1260, %v1829
  %v2066 = vadd.f32 %v1263, %v1832
  %v2067 = vadd.f32 %v1268, %v1837
  %v2068 = vadd.f32 %v1271, %v1840
  %v2069 = vadd.f32 %v1276, %v1845
  %v2070 = vadd.f32 %v1279, %v1848
  %v2071 = vadd.f32 %v1284, %v1853
  %v2072 = vadd.f32 %v1287, %v1856
  %v2073 = vadd.f32 %v1292, %v1861
  %v2074 = vadd.f32 %v1295, %v1864
  %v2075 = vadd.f32 %v1300, %v1869
  %v2076 = vadd.f32 %v1303, %v1872
  %v2077 = vadd.f32 %v1308, %v1877
  %v2078 = vadd.f32 %v1311, %v1880
  %v2079 = vadd.f32 %v1316, %v1885
  %v2080 = vadd.f32 %v1319, %v1888
  %v2081 = vadd.f32 %v1324, %v1893
  %v2082 = vadd.f32 %v1327, %v1896
  %v2083 = vadd.f32 %v1332, %v1901
  %v2084 = vadd.f32 %v1335, %v1904
  %v2085 = vadd.f32 %v1340, %v1909
  %v2086 = vadd.f32 %v1343, %v1912
  %v2087 = vadd.f32 %v1348, %v1917
  %v2088 = vadd.f32 %v1351, %v1920
  %v2089 = vadd.f32 %v1356, %v1925
  %v2090 = vadd.f32 %v1359, %v1928
  %v2091 = vadd.f32 %v1364, %v1933
  %v2092 = vadd.f32 %v1367, %v1936
  %v2093 = vadd.f32 %v1372, %v1941
  %v2094 = vadd.f32 %v1375, %v1944
  %v2095 = vadd.f32 %v1380, %v1949
  %v2096 = vadd.f32 %v1383, %v1952
  %v2097 = vadd.f32 %v1388, %v1957
  %v2098 = vadd.f32 %v1391, %v1960
  %v2099 = vadd.f32 %v1396, %v1965
  %v2100 = vadd.f32 %v1399, %v1968
  %v2101 = vadd.f32 %v1404, %v1973
  %v2102 = vadd.f32 %v1407, %v1976
  %v2103 = vadd.f32 %v1412, %v1981
  %v2104 = vadd.f32 %v1415, %v1984
  %v2105 = vadd.f32 %v1420, %v1989
  %v2106 = vadd.f32 %v1423, %v1992
  %v2107 = vadd.f32 %v1428, %v1997
  %v2108 = vadd.f32 %v1431, %v2000
  %v2109 = vadd.f32 %v1436, %v2005
  %v2110 = vadd.f32 %v1439, %v2008
  %v2111 = vadd.f32 %v1444, %v2013
  %v2112 = vadd.f32 %v1447, %v2016
  %v2113 = vadd.f32 %v1452, %v2021
  %v2114 = vadd.f32 %v1455, %v2024
  %v2115 = vadd.f32 %v1460, %v2029
  %v2116 = vadd.f32 %v1463, %v2032
  %v2117 = vadd.f32 %v1468, %v2037
  %v2118 = vadd.f32 %v1471, %v2040
  %v2119 = vadd.f32 %v1476, %v2045
  %v2120 = vadd.f32 %v1479, %v2048
  %v2121 = vadd.f32 %v1484, %v2053
  %v2122 = vadd.f32 %v1487, %v2056
  %s2123 = scalar_lea.vmem %s1, 240
  %v2124 = vld [vmem:[%s2123] sm:$0xf]
  %v2125 = vld [vmem:[%s2123 + $0x4] sm:$0xf]
  %v2126 = vld [vmem:[%s2123 + $0x8] sm:$0xf]
  %v2127 = vld [vmem:[%s2123 + $0xc] sm:$0xf]
  %v2128 = vld [vmem:[%s2123 + $0x10] sm:$0x3]
  %v2193 = vunpack.c.l.b16 %v222
  %v2194 = vunpack.c.l.b16 %v223
  %v2195 = vunpack.c.l.b16 %v224
  %v2196 = vunpack.c.l.b16 %v225
  %v2197 = vunpack.c.l.b16 %v226
  %v2198 = vunpack.c.l.b16 %v227
  %v2199 = vunpack.c.l.b16 %v228
  %v2200 = vunpack.c.l.b16 %v229
  %v2201 = vunpack.c.l.b16 %v230
  %v2202 = vunpack.c.l.b16 %v231
  %v2203 = vunpack.c.l.b16 %v232
  %v2204 = vunpack.c.l.b16 %v233
  %v2205 = vunpack.c.l.b16 %v234
  %v2206 = vunpack.c.l.b16 %v235
  %v2207 = vunpack.c.l.b16 %v236
  %v2208 = vunpack.c.l.b16 %v237
  %v2209 = vunpack.c.l.b16 %v238
  %v2210 = vunpack.c.l.b16 %v239
  %v2211 = vunpack.c.l.b16 %v240
  %v2212 = vunpack.c.l.b16 %v241
  %v2213 = vunpack.c.l.b16 %v242
  %v2214 = vunpack.c.l.b16 %v243
  %v2215 = vunpack.c.l.b16 %v244
  %v2216 = vunpack.c.l.b16 %v245
  %v2217 = vunpack.c.l.b16 %v246
  %v2218 = vunpack.c.l.b16 %v247
  %v2219 = vunpack.c.l.b16 %v248
  %v2220 = vunpack.c.l.b16 %v249
  %v2221 = vunpack.c.l.b16 %v250
  %v2222 = vunpack.c.l.b16 %v251
  %v2223 = vunpack.c.l.b16 %v252
  %v2224 = vunpack.c.l.b16 %v253
  %v2225 = vunpack.c.l.b16 %v254
  %v2226 = vunpack.c.l.b16 %v255
  %v2227 = vunpack.c.l.b16 %v256
  %v2228 = vunpack.c.l.b16 %v257
  %v2229 = vunpack.c.l.b16 %v258
  %v2230 = vunpack.c.l.b16 %v259
  %v2231 = vunpack.c.l.b16 %v260
  %v2232 = vunpack.c.l.b16 %v261
  %v2233 = vunpack.c.l.b16 %v262
  %v2234 = vunpack.c.l.b16 %v263
  %v2235 = vunpack.c.l.b16 %v264
  %v2236 = vunpack.c.l.b16 %v265
  %v2237 = vunpack.c.l.b16 %v266
  %v2238 = vunpack.c.l.b16 %v267
  %v2239 = vunpack.c.l.b16 %v268
  %v2240 = vunpack.c.l.b16 %v269
  %v2241 = vunpack.c.l.b16 %v270
  %v2242 = vunpack.c.l.b16 %v271
  %v2243 = vunpack.c.l.b16 %v272
  %v2244 = vunpack.c.l.b16 %v273
  %v2245 = vunpack.c.l.b16 %v274
  %v2246 = vunpack.c.l.b16 %v275
  %v2247 = vunpack.c.l.b16 %v276
  %v2248 = vunpack.c.l.b16 %v277
  %v2249 = vunpack.c.l.b16 %v278
  %v2250 = vunpack.c.l.b16 %v279
  %v2251 = vunpack.c.l.b16 %v280
  %v2252 = vunpack.c.l.b16 %v281
  %v2253 = vunpack.c.l.b16 %v282
  %v2254 = vunpack.c.l.b16 %v283
  %v2255 = vunpack.c.l.b16 %v284
  %v2256 = vunpack.c.l.b16 %v285
  %v2257 = vpack.c.b16 %v2194, %v2193
  %v2258 = vpack.c.b16 %v2196, %v2195
  %v2259 = vpack.c.b16 %v2198, %v2197
  %v2260 = vpack.c.b16 %v2200, %v2199
  %v2261 = vpack.c.b16 %v2202, %v2201
  %v2262 = vpack.c.b16 %v2204, %v2203
  %v2263 = vpack.c.b16 %v2206, %v2205
  %v2264 = vpack.c.b16 %v2208, %v2207
  %v2265 = vpack.c.b16 %v2210, %v2209
  %v2266 = vpack.c.b16 %v2212, %v2211
  %v2267 = vpack.c.b16 %v2214, %v2213
  %v2268 = vpack.c.b16 %v2216, %v2215
  %v2269 = vpack.c.b16 %v2218, %v2217
  %v2270 = vpack.c.b16 %v2220, %v2219
  %v2271 = vpack.c.b16 %v2222, %v2221
  %v2272 = vpack.c.b16 %v2224, %v2223
  %v2273 = vpack.c.b16 %v2226, %v2225
  %v2274 = vpack.c.b16 %v2228, %v2227
  %v2275 = vpack.c.b16 %v2230, %v2229
  %v2276 = vpack.c.b16 %v2232, %v2231
  %v2277 = vpack.c.b16 %v2234, %v2233
  %v2278 = vpack.c.b16 %v2236, %v2235
  %v2279 = vpack.c.b16 %v2238, %v2237
  %v2280 = vpack.c.b16 %v2240, %v2239
  %v2281 = vpack.c.b16 %v2242, %v2241
  %v2282 = vpack.c.b16 %v2244, %v2243
  %v2283 = vpack.c.b16 %v2246, %v2245
  %v2284 = vpack.c.b16 %v2248, %v2247
  %v2285 = vpack.c.b16 %v2250, %v2249
  %v2286 = vpack.c.b16 %v2252, %v2251
  %v2287 = vpack.c.b16 %v2254, %v2253
  %v2288 = vpack.c.b16 %v2256, %v2255
  %v2294 = vunpack.c.l.b16 %v2124
  %v2295 = vunpack.c.l.b16 %v2125
  %v2296 = vunpack.c.l.b16 %v2126
  %v2297 = vunpack.c.l.b16 %v2127
  %v2298 = vunpack.c.l.b16 %v2128
  %v2299 = vpack.c.b16 %v2295, %v2294
  %v2300 = vpack.c.b16 %v2297, %v2296
  %v2301 = vpack.c.b16 %v2298, %v2298
  %v2305 = vsel %vm537, %v2257, 0
  %v2308 = vsel %vm537, %v2258, 0
  %v2311 = vsel %vm537, %v2259, 0
  %v2314 = vsel %vm537, %v2260, 0
  %v2317 = vsel %vm537, %v2261, 0
  %v2320 = vsel %vm537, %v2262, 0
  %v2323 = vsel %vm537, %v2263, 0
  %v2326 = vsel %vm537, %v2264, 0
  %v2329 = vsel %vm537, %v2265, 0
  %v2332 = vsel %vm537, %v2266, 0
  %v2335 = vsel %vm537, %v2267, 0
  %v2338 = vsel %vm537, %v2268, 0
  %v2341 = vsel %vm537, %v2269, 0
  %v2344 = vsel %vm537, %v2270, 0
  %v2347 = vsel %vm537, %v2271, 0
  %v2350 = vsel %vm537, %v2272, 0
  %v2353 = vsel %vm537, %v2273, 0
  %v2356 = vsel %vm537, %v2274, 0
  %v2359 = vsel %vm537, %v2275, 0
  %v2362 = vsel %vm537, %v2276, 0
  %v2365 = vsel %vm537, %v2277, 0
  %v2368 = vsel %vm537, %v2278, 0
  %v2371 = vsel %vm537, %v2279, 0
  %v2374 = vsel %vm537, %v2280, 0
  %v2377 = vsel %vm537, %v2281, 0
  %v2380 = vsel %vm537, %v2282, 0
  %v2383 = vsel %vm537, %v2283, 0
  %v2386 = vsel %vm537, %v2284, 0
  %v2389 = vsel %vm537, %v2285, 0
  %v2392 = vsel %vm537, %v2286, 0
  %v2395 = vsel %vm537, %v2287, 0
  %v2398 = vsel %vm537, %v2288, 0
  %v2401 = vsel %vm634, %v2301, 0
  %2403 = vmatprep.subr.bf16.mxu0 0
  %2404 = vmatpush1.bf16.msra.mxu0 0
  %2405 = vmatprep.subr.bf16.mxu0 0
  %2406 = vmatpush1.bf16.msra.mxu0 0
  %2407 = vmatprep.subr.bf16.mxu0 0
  %2408 = vmatpush1.bf16.msra.mxu0 0
  %2409 = vmatprep.subr.bf16.mxu0 0
  %2410 = vmatpush1.bf16.msra.mxu0 0
  %2411 = vmatprep.subr.bf16.mxu0 0
  %2412 = vmatpush1.bf16.msra.mxu0 0
  %2413 = vmatprep.subr.bf16.mxu0 0
  %2414 = vmatpush1.bf16.msra.mxu0 %v2401
  %2415 = vmatprep.subr.bf16.mxu0 0
  %2416 = vmatpush1.bf16.msra.mxu0 %v2300
  %2417 = vmatprep.subr.bf16.mxu0 0
  %2418 = vmatpush1.bf16.msra.mxu0 %v2299
  %2419 = vmatprep.subr.bf16.mxu0 0
  %2420 = vmatpush2.bf16.msra.mxu0 0
  %2421 = vmatprep.subr.bf16.mxu0 0
  %2422 = vmatpush2.bf16.msra.mxu0 0
  %2423 = vmatprep.subr.bf16.mxu0 0
  %2424 = vmatpush2.bf16.msra.mxu0 0
  %2425 = vmatprep.subr.bf16.mxu0 0
  %2426 = vmatpush2.bf16.msra.mxu0 0
  %2427 = vmatprep.subr.bf16.mxu0 0
  %2428 = vmatpush2.bf16.msra.mxu0 0
  %2429 = vmatprep.subr.bf16.mxu0 0
  %2430 = vmatpush2.bf16.msra.mxu0 0
  %2431 = vmatprep.subr.bf16.mxu0 0
  %2432 = vmatpush2.bf16.msra.mxu0 0
  %2433 = vmatprep.subr.bf16.mxu0 0
  %2434 = vmatpush2.bf16.msra.mxu0 0
  %2435 = vmatprep.mubr.bf16.mxu0 0
  %2436 = vmatmul.mubr.bf16.gmra.mxu0 %v2305
  %v2437 = vpop.f32.mrf.mxu0
  %v2438 = vadd.f32 0.0, %v2437
  %v2439 = vpop.f32.mrf.mxu0
  %v2440 = vpop.f32.mrf.mxu0
  %v2441 = vadd.f32 0.0, %v2440
  %v2442 = vpop.f32.mrf.mxu0
  %2443 = vmatprep.mubr.bf16.mxu0 0
  %2444 = vmatmul.mubr.bf16.gmra.mxu0 %v2308
  %v2445 = vpop.f32.mrf.mxu0
  %v2446 = vadd.f32 0.0, %v2445
  %v2447 = vpop.f32.mrf.mxu0
  %v2448 = vpop.f32.mrf.mxu0
  %v2449 = vadd.f32 0.0, %v2448
  %v2450 = vpop.f32.mrf.mxu0
  %2451 = vmatprep.mubr.bf16.mxu0 0
  %2452 = vmatmul.mubr.bf16.gmra.mxu0 %v2311
  %v2453 = vpop.f32.mrf.mxu0
  %v2454 = vadd.f32 0.0, %v2453
  %v2455 = vpop.f32.mrf.mxu0
  %v2456 = vpop.f32.mrf.mxu0
  %v2457 = vadd.f32 0.0, %v2456
  %v2458 = vpop.f32.mrf.mxu0
  %2459 = vmatprep.mubr.bf16.mxu0 0
  %2460 = vmatmul.mubr.bf16.gmra.mxu0 %v2314
  %v2461 = vpop.f32.mrf.mxu0
  %v2462 = vadd.f32 0.0, %v2461
  %v2463 = vpop.f32.mrf.mxu0
  %v2464 = vpop.f32.mrf.mxu0
  %v2465 = vadd.f32 0.0, %v2464
  %v2466 = vpop.f32.mrf.mxu0
  %2467 = vmatprep.mubr.bf16.mxu0 0
  %2468 = vmatmul.mubr.bf16.gmra.mxu0 %v2317
  %v2469 = vpop.f32.mrf.mxu0
  %v2470 = vadd.f32 0.0, %v2469
  %v2471 = vpop.f32.mrf.mxu0
  %v2472 = vpop.f32.mrf.mxu0
  %v2473 = vadd.f32 0.0, %v2472
  %v2474 = vpop.f32.mrf.mxu0
  %2475 = vmatprep.mubr.bf16.mxu0 0
  %2476 = vmatmul.mubr.bf16.gmra.mxu0 %v2320
  %v2477 = vpop.f32.mrf.mxu0
  %v2478 = vadd.f32 0.0, %v2477
  %v2479 = vpop.f32.mrf.mxu0
  %v2480 = vpop.f32.mrf.mxu0
  %v2481 = vadd.f32 0.0, %v2480
  %v2482 = vpop.f32.mrf.mxu0
  %2483 = vmatprep.mubr.bf16.mxu0 0
  %2484 = vmatmul.mubr.bf16.gmra.mxu0 %v2323
  %v2485 = vpop.f32.mrf.mxu0
  %v2486 = vadd.f32 0.0, %v2485
  %v2487 = vpop.f32.mrf.mxu0
  %v2488 = vpop.f32.mrf.mxu0
  %v2489 = vadd.f32 0.0, %v2488
  %v2490 = vpop.f32.mrf.mxu0
  %2491 = vmatprep.mubr.bf16.mxu0 0
  %2492 = vmatmul.mubr.bf16.gmra.mxu0 %v2326
  %v2493 = vpop.f32.mrf.mxu0
  %v2494 = vadd.f32 0.0, %v2493
  %v2495 = vpop.f32.mrf.mxu0
  %v2496 = vpop.f32.mrf.mxu0
  %v2497 = vadd.f32 0.0, %v2496
  %v2498 = vpop.f32.mrf.mxu0
  %2499 = vmatprep.mubr.bf16.mxu0 0
  %2500 = vmatmul.mubr.bf16.gmra.mxu0 %v2329
  %v2501 = vpop.f32.mrf.mxu0
  %v2502 = vadd.f32 0.0, %v2501
  %v2503 = vpop.f32.mrf.mxu0
  %v2504 = vpop.f32.mrf.mxu0
  %v2505 = vadd.f32 0.0, %v2504
  %v2506 = vpop.f32.mrf.mxu0
  %2507 = vmatprep.mubr.bf16.mxu0 0
  %2508 = vmatmul.mubr.bf16.gmra.mxu0 %v2332
  %v2509 = vpop.f32.mrf.mxu0
  %v2510 = vadd.f32 0.0, %v2509
  %v2511 = vpop.f32.mrf.mxu0
  %v2512 = vpop.f32.mrf.mxu0
  %v2513 = vadd.f32 0.0, %v2512
  %v2514 = vpop.f32.mrf.mxu0
  %2515 = vmatprep.mubr.bf16.mxu0 0
  %2516 = vmatmul.mubr.bf16.gmra.mxu0 %v2335
  %v2517 = vpop.f32.mrf.mxu0
  %v2518 = vadd.f32 0.0, %v2517
  %v2519 = vpop.f32.mrf.mxu0
  %v2520 = vpop.f32.mrf.mxu0
  %v2521 = vadd.f32 0.0, %v2520
  %v2522 = vpop.f32.mrf.mxu0
  %2523 = vmatprep.mubr.bf16.mxu0 0
  %2524 = vmatmul.mubr.bf16.gmra.mxu0 %v2338
  %v2525 = vpop.f32.mrf.mxu0
  %v2526 = vadd.f32 0.0, %v2525
  %v2527 = vpop.f32.mrf.mxu0
  %v2528 = vpop.f32.mrf.mxu0
  %v2529 = vadd.f32 0.0, %v2528
  %v2530 = vpop.f32.mrf.mxu0
  %2531 = vmatprep.mubr.bf16.mxu0 0
  %2532 = vmatmul.mubr.bf16.gmra.mxu0 %v2341
  %v2533 = vpop.f32.mrf.mxu0
  %v2534 = vadd.f32 0.0, %v2533
  %v2535 = vpop.f32.mrf.mxu0
  %v2536 = vpop.f32.mrf.mxu0
  %v2537 = vadd.f32 0.0, %v2536
  %v2538 = vpop.f32.mrf.mxu0
  %2539 = vmatprep.mubr.bf16.mxu0 0
  %2540 = vmatmul.mubr.bf16.gmra.mxu0 %v2344
  %v2541 = vpop.f32.mrf.mxu0
  %v2542 = vadd.f32 0.0, %v2541
  %v2543 = vpop.f32.mrf.mxu0
  %v2544 = vpop.f32.mrf.mxu0
  %v2545 = vadd.f32 0.0, %v2544
  %v2546 = vpop.f32.mrf.mxu0
  %2547 = vmatprep.mubr.bf16.mxu0 0
  %2548 = vmatmul.mubr.bf16.gmra.mxu0 %v2347
  %v2549 = vpop.f32.mrf.mxu0
  %v2550 = vadd.f32 0.0, %v2549
  %v2551 = vpop.f32.mrf.mxu0
  %v2552 = vpop.f32.mrf.mxu0
  %v2553 = vadd.f32 0.0, %v2552
  %v2554 = vpop.f32.mrf.mxu0
  %2555 = vmatprep.mubr.bf16.mxu0 0
  %2556 = vmatmul.mubr.bf16.gmra.mxu0 %v2350
  %v2557 = vpop.f32.mrf.mxu0
  %v2558 = vadd.f32 0.0, %v2557
  %v2559 = vpop.f32.mrf.mxu0
  %v2560 = vpop.f32.mrf.mxu0
  %v2561 = vadd.f32 0.0, %v2560
  %v2562 = vpop.f32.mrf.mxu0
  %2563 = vmatprep.mubr.bf16.mxu0 0
  %2564 = vmatmul.mubr.bf16.gmra.mxu0 %v2353
  %v2565 = vpop.f32.mrf.mxu0
  %v2566 = vadd.f32 0.0, %v2565
  %v2567 = vpop.f32.mrf.mxu0
  %v2568 = vpop.f32.mrf.mxu0
  %v2569 = vadd.f32 0.0, %v2568
  %v2570 = vpop.f32.mrf.mxu0
  %2571 = vmatprep.mubr.bf16.mxu0 0
  %2572 = vmatmul.mubr.bf16.gmra.mxu0 %v2356
  %v2573 = vpop.f32.mrf.mxu0
  %v2574 = vadd.f32 0.0, %v2573
  %v2575 = vpop.f32.mrf.mxu0
  %v2576 = vpop.f32.mrf.mxu0
  %v2577 = vadd.f32 0.0, %v2576
  %v2578 = vpop.f32.mrf.mxu0
  %2579 = vmatprep.mubr.bf16.mxu0 0
  %2580 = vmatmul.mubr.bf16.gmra.mxu0 %v2359
  %v2581 = vpop.f32.mrf.mxu0
  %v2582 = vadd.f32 0.0, %v2581
  %v2583 = vpop.f32.mrf.mxu0
  %v2584 = vpop.f32.mrf.mxu0
  %v2585 = vadd.f32 0.0, %v2584
  %v2586 = vpop.f32.mrf.mxu0
  %2587 = vmatprep.mubr.bf16.mxu0 0
  %2588 = vmatmul.mubr.bf16.gmra.mxu0 %v2362
  %v2589 = vpop.f32.mrf.mxu0
  %v2590 = vadd.f32 0.0, %v2589
  %v2591 = vpop.f32.mrf.mxu0
  %v2592 = vpop.f32.mrf.mxu0
  %v2593 = vadd.f32 0.0, %v2592
  %v2594 = vpop.f32.mrf.mxu0
  %2595 = vmatprep.mubr.bf16.mxu0 0
  %2596 = vmatmul.mubr.bf16.gmra.mxu0 %v2365
  %v2597 = vpop.f32.mrf.mxu0
  %v2598 = vadd.f32 0.0, %v2597
  %v2599 = vpop.f32.mrf.mxu0
  %v2600 = vpop.f32.mrf.mxu0
  %v2601 = vadd.f32 0.0, %v2600
  %v2602 = vpop.f32.mrf.mxu0
  %2603 = vmatprep.mubr.bf16.mxu0 0
  %2604 = vmatmul.mubr.bf16.gmra.mxu0 %v2368
  %v2605 = vpop.f32.mrf.mxu0
  %v2606 = vadd.f32 0.0, %v2605
  %v2607 = vpop.f32.mrf.mxu0
  %v2608 = vpop.f32.mrf.mxu0
  %v2609 = vadd.f32 0.0, %v2608
  %v2610 = vpop.f32.mrf.mxu0
  %2611 = vmatprep.mubr.bf16.mxu0 0
  %2612 = vmatmul.mubr.bf16.gmra.mxu0 %v2371
  %v2613 = vpop.f32.mrf.mxu0
  %v2614 = vadd.f32 0.0, %v2613
  %v2615 = vpop.f32.mrf.mxu0
  %v2616 = vpop.f32.mrf.mxu0
  %v2617 = vadd.f32 0.0, %v2616
  %v2618 = vpop.f32.mrf.mxu0
  %2619 = vmatprep.mubr.bf16.mxu0 0
  %2620 = vmatmul.mubr.bf16.gmra.mxu0 %v2374
  %v2621 = vpop.f32.mrf.mxu0
  %v2622 = vadd.f32 0.0, %v2621
  %v2623 = vpop.f32.mrf.mxu0
  %v2624 = vpop.f32.mrf.mxu0
  %v2625 = vadd.f32 0.0, %v2624
  %v2626 = vpop.f32.mrf.mxu0
  %2627 = vmatprep.mubr.bf16.mxu0 0
  %2628 = vmatmul.mubr.bf16.gmra.mxu0 %v2377
  %v2629 = vpop.f32.mrf.mxu0
  %v2630 = vadd.f32 0.0, %v2629
  %v2631 = vpop.f32.mrf.mxu0
  %v2632 = vpop.f32.mrf.mxu0
  %v2633 = vadd.f32 0.0, %v2632
  %v2634 = vpop.f32.mrf.mxu0
  %2635 = vmatprep.mubr.bf16.mxu0 0
  %2636 = vmatmul.mubr.bf16.gmra.mxu0 %v2380
  %v2637 = vpop.f32.mrf.mxu0
  %v2638 = vadd.f32 0.0, %v2637
  %v2639 = vpop.f32.mrf.mxu0
  %v2640 = vpop.f32.mrf.mxu0
  %v2641 = vadd.f32 0.0, %v2640
  %v2642 = vpop.f32.mrf.mxu0
  %2643 = vmatprep.mubr.bf16.mxu0 0
  %2644 = vmatmul.mubr.bf16.gmra.mxu0 %v2383
  %v2645 = vpop.f32.mrf.mxu0
  %v2646 = vadd.f32 0.0, %v2645
  %v2647 = vpop.f32.mrf.mxu0
  %v2648 = vpop.f32.mrf.mxu0
  %v2649 = vadd.f32 0.0, %v2648
  %v2650 = vpop.f32.mrf.mxu0
  %2651 = vmatprep.mubr.bf16.mxu0 0
  %2652 = vmatmul.mubr.bf16.gmra.mxu0 %v2386
  %v2653 = vpop.f32.mrf.mxu0
  %v2654 = vadd.f32 0.0, %v2653
  %v2655 = vpop.f32.mrf.mxu0
  %v2656 = vpop.f32.mrf.mxu0
  %v2657 = vadd.f32 0.0, %v2656
  %v2658 = vpop.f32.mrf.mxu0
  %2659 = vmatprep.mubr.bf16.mxu0 0
  %2660 = vmatmul.mubr.bf16.gmra.mxu0 %v2389
  %v2661 = vpop.f32.mrf.mxu0
  %v2662 = vadd.f32 0.0, %v2661
  %v2663 = vpop.f32.mrf.mxu0
  %v2664 = vpop.f32.mrf.mxu0
  %v2665 = vadd.f32 0.0, %v2664
  %v2666 = vpop.f32.mrf.mxu0
  %2667 = vmatprep.mubr.bf16.mxu0 0
  %2668 = vmatmul.mubr.bf16.gmra.mxu0 %v2392
  %v2669 = vpop.f32.mrf.mxu0
  %v2670 = vadd.f32 0.0, %v2669
  %v2671 = vpop.f32.mrf.mxu0
  %v2672 = vpop.f32.mrf.mxu0
  %v2673 = vadd.f32 0.0, %v2672
  %v2674 = vpop.f32.mrf.mxu0
  %2675 = vmatprep.mubr.bf16.mxu0 0
  %2676 = vmatmul.mubr.bf16.gmra.mxu0 %v2395
  %v2677 = vpop.f32.mrf.mxu0
  %v2678 = vadd.f32 0.0, %v2677
  %v2679 = vpop.f32.mrf.mxu0
  %v2680 = vpop.f32.mrf.mxu0
  %v2681 = vadd.f32 0.0, %v2680
  %v2682 = vpop.f32.mrf.mxu0
  %2683 = vmatprep.mubr.bf16.mxu0 0
  %2684 = vmatmul.mubr.bf16.gmra.mxu0 %v2398
  %v2685 = vpop.f32.mrf.mxu0
  %v2686 = vadd.f32 0.0, %v2685
  %v2687 = vpop.f32.mrf.mxu0
  %v2688 = vpop.f32.mrf.mxu0
  %v2689 = vadd.f32 0.0, %v2688
  %v2690 = vpop.f32.mrf.mxu0
  %2691 = vdwg.mxu0
  %v2692 = vadd.f32 %v2059, %v2438
  %v2693 = vadd.f32 %v2060, %v2441
  %v2694 = vadd.f32 %v2061, %v2446
  %v2695 = vadd.f32 %v2062, %v2449
  %v2696 = vadd.f32 %v2063, %v2454
  %v2697 = vadd.f32 %v2064, %v2457
  %v2698 = vadd.f32 %v2065, %v2462
  %v2699 = vadd.f32 %v2066, %v2465
  %v2700 = vadd.f32 %v2067, %v2470
  %v2701 = vadd.f32 %v2068, %v2473
  %v2702 = vadd.f32 %v2069, %v2478
  %v2703 = vadd.f32 %v2070, %v2481
  %v2704 = vadd.f32 %v2071, %v2486
  %v2705 = vadd.f32 %v2072, %v2489
  %v2706 = vadd.f32 %v2073, %v2494
  %v2707 = vadd.f32 %v2074, %v2497
  %v2708 = vadd.f32 %v2075, %v2502
  %v2709 = vadd.f32 %v2076, %v2505
  %v2710 = vadd.f32 %v2077, %v2510
  %v2711 = vadd.f32 %v2078, %v2513
  %v2712 = vadd.f32 %v2079, %v2518
  %v2713 = vadd.f32 %v2080, %v2521
  %v2714 = vadd.f32 %v2081, %v2526
  %v2715 = vadd.f32 %v2082, %v2529
  %v2716 = vadd.f32 %v2083, %v2534
  %v2717 = vadd.f32 %v2084, %v2537
  %v2718 = vadd.f32 %v2085, %v2542
  %v2719 = vadd.f32 %v2086, %v2545
  %v2720 = vadd.f32 %v2087, %v2550
  %v2721 = vadd.f32 %v2088, %v2553
  %v2722 = vadd.f32 %v2089, %v2558
  %v2723 = vadd.f32 %v2090, %v2561
  %v2724 = vadd.f32 %v2091, %v2566
  %v2725 = vadd.f32 %v2092, %v2569
  %v2726 = vadd.f32 %v2093, %v2574
  %v2727 = vadd.f32 %v2094, %v2577
  %v2728 = vadd.f32 %v2095, %v2582
  %v2729 = vadd.f32 %v2096, %v2585
  %v2730 = vadd.f32 %v2097, %v2590
  %v2731 = vadd.f32 %v2098, %v2593
  %v2732 = vadd.f32 %v2099, %v2598
  %v2733 = vadd.f32 %v2100, %v2601
  %v2734 = vadd.f32 %v2101, %v2606
  %v2735 = vadd.f32 %v2102, %v2609
  %v2736 = vadd.f32 %v2103, %v2614
  %v2737 = vadd.f32 %v2104, %v2617
  %v2738 = vadd.f32 %v2105, %v2622
  %v2739 = vadd.f32 %v2106, %v2625
  %v2740 = vadd.f32 %v2107, %v2630
  %v2741 = vadd.f32 %v2108, %v2633
  %v2742 = vadd.f32 %v2109, %v2638
  %v2743 = vadd.f32 %v2110, %v2641
  %v2744 = vadd.f32 %v2111, %v2646
  %v2745 = vadd.f32 %v2112, %v2649
  %v2746 = vadd.f32 %v2113, %v2654
  %v2747 = vadd.f32 %v2114, %v2657
  %v2748 = vadd.f32 %v2115, %v2662
  %v2749 = vadd.f32 %v2116, %v2665
  %v2750 = vadd.f32 %v2117, %v2670
  %v2751 = vadd.f32 %v2118, %v2673
  %v2752 = vadd.f32 %v2119, %v2678
  %v2753 = vadd.f32 %v2120, %v2681
  %v2754 = vadd.f32 %v2121, %v2686
  %v2755 = vadd.f32 %v2122, %v2689
  %s2756 = scalar_lea.vmem %s1, 320
  %v2757 = vld [vmem:[%s2756] sm:$0xf]
  %v2758 = vld [vmem:[%s2756 + $0x4] sm:$0xf]
  %v2759 = vld [vmem:[%s2756 + $0x8] sm:$0xf]
  %v2760 = vld [vmem:[%s2756 + $0xc] sm:$0xf]
  %v2761 = vld [vmem:[%s2756 + $0x10] sm:$0x3]
  %v2826 = vunpack.c.l.b16 %v287
  %v2827 = vunpack.c.l.b16 %v288
  %v2828 = vunpack.c.l.b16 %v289
  %v2829 = vunpack.c.l.b16 %v290
  %v2830 = vunpack.c.l.b16 %v291
  %v2831 = vunpack.c.l.b16 %v292
  %v2832 = vunpack.c.l.b16 %v293
  %v2833 = vunpack.c.l.b16 %v294
  %v2834 = vunpack.c.l.b16 %v295
  %v2835 = vunpack.c.l.b16 %v296
  %v2836 = vunpack.c.l.b16 %v297
  %v2837 = vunpack.c.l.b16 %v298
  %v2838 = vunpack.c.l.b16 %v299
  %v2839 = vunpack.c.l.b16 %v300
  %v2840 = vunpack.c.l.b16 %v301
  %v2841 = vunpack.c.l.b16 %v302
  %v2842 = vunpack.c.l.b16 %v303
  %v2843 = vunpack.c.l.b16 %v304
  %v2844 = vunpack.c.l.b16 %v305
  %v2845 = vunpack.c.l.b16 %v306
  %v2846 = vunpack.c.l.b16 %v307
  %v2847 = vunpack.c.l.b16 %v308
  %v2848 = vunpack.c.l.b16 %v309
  %v2849 = vunpack.c.l.b16 %v310
  %v2850 = vunpack.c.l.b16 %v311
  %v2851 = vunpack.c.l.b16 %v312
  %v2852 = vunpack.c.l.b16 %v313
  %v2853 = vunpack.c.l.b16 %v314
  %v2854 = vunpack.c.l.b16 %v315
  %v2855 = vunpack.c.l.b16 %v316
  %v2856 = vunpack.c.l.b16 %v317
  %v2857 = vunpack.c.l.b16 %v318
  %v2858 = vunpack.c.l.b16 %v319
  %v2859 = vunpack.c.l.b16 %v320
  %v2860 = vunpack.c.l.b16 %v321
  %v2861 = vunpack.c.l.b16 %v322
  %v2862 = vunpack.c.l.b16 %v323
  %v2863 = vunpack.c.l.b16 %v324
  %v2864 = vunpack.c.l.b16 %v325
  %v2865 = vunpack.c.l.b16 %v326
  %v2866 = vunpack.c.l.b16 %v327
  %v2867 = vunpack.c.l.b16 %v328
  %v2868 = vunpack.c.l.b16 %v329
  %v2869 = vunpack.c.l.b16 %v330
  %v2870 = vunpack.c.l.b16 %v331
  %v2871 = vunpack.c.l.b16 %v332
  %v2872 = vunpack.c.l.b16 %v333
  %v2873 = vunpack.c.l.b16 %v334
  %v2874 = vunpack.c.l.b16 %v335
  %v2875 = vunpack.c.l.b16 %v336
  %v2876 = vunpack.c.l.b16 %v337
  %v2877 = vunpack.c.l.b16 %v338
  %v2878 = vunpack.c.l.b16 %v339
  %v2879 = vunpack.c.l.b16 %v340
  %v2880 = vunpack.c.l.b16 %v341
  %v2881 = vunpack.c.l.b16 %v342
  %v2882 = vunpack.c.l.b16 %v343
  %v2883 = vunpack.c.l.b16 %v344
  %v2884 = vunpack.c.l.b16 %v345
  %v2885 = vunpack.c.l.b16 %v346
  %v2886 = vunpack.c.l.b16 %v347
  %v2887 = vunpack.c.l.b16 %v348
  %v2888 = vunpack.c.l.b16 %v349
  %v2889 = vunpack.c.l.b16 %v350
  %v2890 = vpack.c.b16 %v2827, %v2826
  %v2891 = vpack.c.b16 %v2829, %v2828
  %v2892 = vpack.c.b16 %v2831, %v2830
  %v2893 = vpack.c.b16 %v2833, %v2832
  %v2894 = vpack.c.b16 %v2835, %v2834
  %v2895 = vpack.c.b16 %v2837, %v2836
  %v2896 = vpack.c.b16 %v2839, %v2838
  %v2897 = vpack.c.b16 %v2841, %v2840
  %v2898 = vpack.c.b16 %v2843, %v2842
  %v2899 = vpack.c.b16 %v2845, %v2844
  %v2900 = vpack.c.b16 %v2847, %v2846
  %v2901 = vpack.c.b16 %v2849, %v2848
  %v2902 = vpack.c.b16 %v2851, %v2850
  %v2903 = vpack.c.b16 %v2853, %v2852
  %v2904 = vpack.c.b16 %v2855, %v2854
  %v2905 = vpack.c.b16 %v2857, %v2856
  %v2906 = vpack.c.b16 %v2859, %v2858
  %v2907 = vpack.c.b16 %v2861, %v2860
  %v2908 = vpack.c.b16 %v2863, %v2862
  %v2909 = vpack.c.b16 %v2865, %v2864
  %v2910 = vpack.c.b16 %v2867, %v2866
  %v2911 = vpack.c.b16 %v2869, %v2868
  %v2912 = vpack.c.b16 %v2871, %v2870
  %v2913 = vpack.c.b16 %v2873, %v2872
  %v2914 = vpack.c.b16 %v2875, %v2874
  %v2915 = vpack.c.b16 %v2877, %v2876
  %v2916 = vpack.c.b16 %v2879, %v2878
  %v2917 = vpack.c.b16 %v2881, %v2880
  %v2918 = vpack.c.b16 %v2883, %v2882
  %v2919 = vpack.c.b16 %v2885, %v2884
  %v2920 = vpack.c.b16 %v2887, %v2886
  %v2921 = vpack.c.b16 %v2889, %v2888
  %v2927 = vunpack.c.l.b16 %v2757
  %v2928 = vunpack.c.l.b16 %v2758
  %v2929 = vunpack.c.l.b16 %v2759
  %v2930 = vunpack.c.l.b16 %v2760
  %v2931 = vunpack.c.l.b16 %v2761
  %v2932 = vpack.c.b16 %v2928, %v2927
  %v2933 = vpack.c.b16 %v2930, %v2929
  %v2934 = vpack.c.b16 %v2931, %v2931
  %v2938 = vsel %vm537, %v2890, 0
  %v2941 = vsel %vm537, %v2891, 0
  %v2944 = vsel %vm537, %v2892, 0
  %v2947 = vsel %vm537, %v2893, 0
  %v2950 = vsel %vm537, %v2894, 0
  %v2953 = vsel %vm537, %v2895, 0
  %v2956 = vsel %vm537, %v2896, 0
  %v2959 = vsel %vm537, %v2897, 0
  %v2962 = vsel %vm537, %v2898, 0
  %v2965 = vsel %vm537, %v2899, 0
  %v2968 = vsel %vm537, %v2900, 0
  %v2971 = vsel %vm537, %v2901, 0
  %v2974 = vsel %vm537, %v2902, 0
  %v2977 = vsel %vm537, %v2903, 0
  %v2980 = vsel %vm537, %v2904, 0
  %v2983 = vsel %vm537, %v2905, 0
  %v2986 = vsel %vm537, %v2906, 0
  %v2989 = vsel %vm537, %v2907, 0
  %v2992 = vsel %vm537, %v2908, 0
  %v2995 = vsel %vm537, %v2909, 0
  %v2998 = vsel %vm537, %v2910, 0
  %v3001 = vsel %vm537, %v2911, 0
  %v3004 = vsel %vm537, %v2912, 0
  %v3007 = vsel %vm537, %v2913, 0
  %v3010 = vsel %vm537, %v2914, 0
  %v3013 = vsel %vm537, %v2915, 0
  %v3016 = vsel %vm537, %v2916, 0
  %v3019 = vsel %vm537, %v2917, 0
  %v3022 = vsel %vm537, %v2918, 0
  %v3025 = vsel %vm537, %v2919, 0
  %v3028 = vsel %vm537, %v2920, 0
  %v3031 = vsel %vm537, %v2921, 0
  %v3034 = vsel %vm634, %v2934, 0
  %3036 = vmatprep.subr.bf16.mxu0 0
  %3037 = vmatpush1.bf16.msra.mxu0 0
  %3038 = vmatprep.subr.bf16.mxu0 0
  %3039 = vmatpush1.bf16.msra.mxu0 0
  %3040 = vmatprep.subr.bf16.mxu0 0
  %3041 = vmatpush1.bf16.msra.mxu0 0
  %3042 = vmatprep.subr.bf16.mxu0 0
  %3043 = vmatpush1.bf16.msra.mxu0 0
  %3044 = vmatprep.subr.bf16.mxu0 0
  %3045 = vmatpush1.bf16.msra.mxu0 0
  %3046 = vmatprep.subr.bf16.mxu0 0
  %3047 = vmatpush1.bf16.msra.mxu0 %v3034
  %3048 = vmatprep.subr.bf16.mxu0 0
  %3049 = vmatpush1.bf16.msra.mxu0 %v2933
  %3050 = vmatprep.subr.bf16.mxu0 0
  %3051 = vmatpush1.bf16.msra.mxu0 %v2932
  %3052 = vmatprep.subr.bf16.mxu0 0
  %3053 = vmatpush2.bf16.msra.mxu0 0
  %3054 = vmatprep.subr.bf16.mxu0 0
  %3055 = vmatpush2.bf16.msra.mxu0 0
  %3056 = vmatprep.subr.bf16.mxu0 0
  %3057 = vmatpush2.bf16.msra.mxu0 0
  %3058 = vmatprep.subr.bf16.mxu0 0
  %3059 = vmatpush2.bf16.msra.mxu0 0
  %3060 = vmatprep.subr.bf16.mxu0 0
  %3061 = vmatpush2.bf16.msra.mxu0 0
  %3062 = vmatprep.subr.bf16.mxu0 0
  %3063 = vmatpush2.bf16.msra.mxu0 0
  %3064 = vmatprep.subr.bf16.mxu0 0
  %3065 = vmatpush2.bf16.msra.mxu0 0
  %3066 = vmatprep.subr.bf16.mxu0 0
  %3067 = vmatpush2.bf16.msra.mxu0 0
  %3068 = vmatprep.mubr.bf16.mxu0 0
  %3069 = vmatmul.mubr.bf16.gmra.mxu0 %v2938
  %v3070 = vpop.f32.mrf.mxu0
  %v3071 = vadd.f32 0.0, %v3070
  %v3072 = vpop.f32.mrf.mxu0
  %v3073 = vpop.f32.mrf.mxu0
  %v3074 = vadd.f32 0.0, %v3073
  %v3075 = vpop.f32.mrf.mxu0
  %3076 = vmatprep.mubr.bf16.mxu0 0
  %3077 = vmatmul.mubr.bf16.gmra.mxu0 %v2941
  %v3078 = vpop.f32.mrf.mxu0
  %v3079 = vadd.f32 0.0, %v3078
  %v3080 = vpop.f32.mrf.mxu0
  %v3081 = vpop.f32.mrf.mxu0
  %v3082 = vadd.f32 0.0, %v3081
  %v3083 = vpop.f32.mrf.mxu0
  %3084 = vmatprep.mubr.bf16.mxu0 0
  %3085 = vmatmul.mubr.bf16.gmra.mxu0 %v2944
  %v3086 = vpop.f32.mrf.mxu0
  %v3087 = vadd.f32 0.0, %v3086
  %v3088 = vpop.f32.mrf.mxu0
  %v3089 = vpop.f32.mrf.mxu0
  %v3090 = vadd.f32 0.0, %v3089
  %v3091 = vpop.f32.mrf.mxu0
  %3092 = vmatprep.mubr.bf16.mxu0 0
  %3093 = vmatmul.mubr.bf16.gmra.mxu0 %v2947
  %v3094 = vpop.f32.mrf.mxu0
  %v3095 = vadd.f32 0.0, %v3094
  %v3096 = vpop.f32.mrf.mxu0
  %v3097 = vpop.f32.mrf.mxu0
  %v3098 = vadd.f32 0.0, %v3097
  %v3099 = vpop.f32.mrf.mxu0
  %3100 = vmatprep.mubr.bf16.mxu0 0
  %3101 = vmatmul.mubr.bf16.gmra.mxu0 %v2950
  %v3102 = vpop.f32.mrf.mxu0
  %v3103 = vadd.f32 0.0, %v3102
  %v3104 = vpop.f32.mrf.mxu0
  %v3105 = vpop.f32.mrf.mxu0
  %v3106 = vadd.f32 0.0, %v3105
  %v3107 = vpop.f32.mrf.mxu0
  %3108 = vmatprep.mubr.bf16.mxu0 0
  %3109 = vmatmul.mubr.bf16.gmra.mxu0 %v2953
  %v3110 = vpop.f32.mrf.mxu0
  %v3111 = vadd.f32 0.0, %v3110
  %v3112 = vpop.f32.mrf.mxu0
  %v3113 = vpop.f32.mrf.mxu0
  %v3114 = vadd.f32 0.0, %v3113
  %v3115 = vpop.f32.mrf.mxu0
  %3116 = vmatprep.mubr.bf16.mxu0 0
  %3117 = vmatmul.mubr.bf16.gmra.mxu0 %v2956
  %v3118 = vpop.f32.mrf.mxu0
  %v3119 = vadd.f32 0.0, %v3118
  %v3120 = vpop.f32.mrf.mxu0
  %v3121 = vpop.f32.mrf.mxu0
  %v3122 = vadd.f32 0.0, %v3121
  %v3123 = vpop.f32.mrf.mxu0
  %3124 = vmatprep.mubr.bf16.mxu0 0
  %3125 = vmatmul.mubr.bf16.gmra.mxu0 %v2959
  %v3126 = vpop.f32.mrf.mxu0
  %v3127 = vadd.f32 0.0, %v3126
  %v3128 = vpop.f32.mrf.mxu0
  %v3129 = vpop.f32.mrf.mxu0
  %v3130 = vadd.f32 0.0, %v3129
  %v3131 = vpop.f32.mrf.mxu0
  %3132 = vmatprep.mubr.bf16.mxu0 0
  %3133 = vmatmul.mubr.bf16.gmra.mxu0 %v2962
  %v3134 = vpop.f32.mrf.mxu0
  %v3135 = vadd.f32 0.0, %v3134
  %v3136 = vpop.f32.mrf.mxu0
  %v3137 = vpop.f32.mrf.mxu0
  %v3138 = vadd.f32 0.0, %v3137
  %v3139 = vpop.f32.mrf.mxu0
  %3140 = vmatprep.mubr.bf16.mxu0 0
  %3141 = vmatmul.mubr.bf16.gmra.mxu0 %v2965
  %v3142 = vpop.f32.mrf.mxu0
  %v3143 = vadd.f32 0.0, %v3142
  %v3144 = vpop.f32.mrf.mxu0
  %v3145 = vpop.f32.mrf.mxu0
  %v3146 = vadd.f32 0.0, %v3145
  %v3147 = vpop.f32.mrf.mxu0
  %3148 = vmatprep.mubr.bf16.mxu0 0
  %3149 = vmatmul.mubr.bf16.gmra.mxu0 %v2968
  %v3150 = vpop.f32.mrf.mxu0
  %v3151 = vadd.f32 0.0, %v3150
  %v3152 = vpop.f32.mrf.mxu0
  %v3153 = vpop.f32.mrf.mxu0
  %v3154 = vadd.f32 0.0, %v3153
  %v3155 = vpop.f32.mrf.mxu0
  %3156 = vmatprep.mubr.bf16.mxu0 0
  %3157 = vmatmul.mubr.bf16.gmra.mxu0 %v2971
  %v3158 = vpop.f32.mrf.mxu0
  %v3159 = vadd.f32 0.0, %v3158
  %v3160 = vpop.f32.mrf.mxu0
  %v3161 = vpop.f32.mrf.mxu0
  %v3162 = vadd.f32 0.0, %v3161
  %v3163 = vpop.f32.mrf.mxu0
  %3164 = vmatprep.mubr.bf16.mxu0 0
  %3165 = vmatmul.mubr.bf16.gmra.mxu0 %v2974
  %v3166 = vpop.f32.mrf.mxu0
  %v3167 = vadd.f32 0.0, %v3166
  %v3168 = vpop.f32.mrf.mxu0
  %v3169 = vpop.f32.mrf.mxu0
  %v3170 = vadd.f32 0.0, %v3169
  %v3171 = vpop.f32.mrf.mxu0
  %3172 = vmatprep.mubr.bf16.mxu0 0
  %3173 = vmatmul.mubr.bf16.gmra.mxu0 %v2977
  %v3174 = vpop.f32.mrf.mxu0
  %v3175 = vadd.f32 0.0, %v3174
  %v3176 = vpop.f32.mrf.mxu0
  %v3177 = vpop.f32.mrf.mxu0
  %v3178 = vadd.f32 0.0, %v3177
  %v3179 = vpop.f32.mrf.mxu0
  %3180 = vmatprep.mubr.bf16.mxu0 0
  %3181 = vmatmul.mubr.bf16.gmra.mxu0 %v2980
  %v3182 = vpop.f32.mrf.mxu0
  %v3183 = vadd.f32 0.0, %v3182
  %v3184 = vpop.f32.mrf.mxu0
  %v3185 = vpop.f32.mrf.mxu0
  %v3186 = vadd.f32 0.0, %v3185
  %v3187 = vpop.f32.mrf.mxu0
  %3188 = vmatprep.mubr.bf16.mxu0 0
  %3189 = vmatmul.mubr.bf16.gmra.mxu0 %v2983
  %v3190 = vpop.f32.mrf.mxu0
  %v3191 = vadd.f32 0.0, %v3190
  %v3192 = vpop.f32.mrf.mxu0
  %v3193 = vpop.f32.mrf.mxu0
  %v3194 = vadd.f32 0.0, %v3193
  %v3195 = vpop.f32.mrf.mxu0
  %3196 = vmatprep.mubr.bf16.mxu0 0
  %3197 = vmatmul.mubr.bf16.gmra.mxu0 %v2986
  %v3198 = vpop.f32.mrf.mxu0
  %v3199 = vadd.f32 0.0, %v3198
  %v3200 = vpop.f32.mrf.mxu0
  %v3201 = vpop.f32.mrf.mxu0
  %v3202 = vadd.f32 0.0, %v3201
  %v3203 = vpop.f32.mrf.mxu0
  %3204 = vmatprep.mubr.bf16.mxu0 0
  %3205 = vmatmul.mubr.bf16.gmra.mxu0 %v2989
  %v3206 = vpop.f32.mrf.mxu0
  %v3207 = vadd.f32 0.0, %v3206
  %v3208 = vpop.f32.mrf.mxu0
  %v3209 = vpop.f32.mrf.mxu0
  %v3210 = vadd.f32 0.0, %v3209
  %v3211 = vpop.f32.mrf.mxu0
  %3212 = vmatprep.mubr.bf16.mxu0 0
  %3213 = vmatmul.mubr.bf16.gmra.mxu0 %v2992
  %v3214 = vpop.f32.mrf.mxu0
  %v3215 = vadd.f32 0.0, %v3214
  %v3216 = vpop.f32.mrf.mxu0
  %v3217 = vpop.f32.mrf.mxu0
  %v3218 = vadd.f32 0.0, %v3217
  %v3219 = vpop.f32.mrf.mxu0
  %3220 = vmatprep.mubr.bf16.mxu0 0
  %3221 = vmatmul.mubr.bf16.gmra.mxu0 %v2995
  %v3222 = vpop.f32.mrf.mxu0
  %v3223 = vadd.f32 0.0, %v3222
  %v3224 = vpop.f32.mrf.mxu0
  %v3225 = vpop.f32.mrf.mxu0
  %v3226 = vadd.f32 0.0, %v3225
  %v3227 = vpop.f32.mrf.mxu0
  %3228 = vmatprep.mubr.bf16.mxu0 0
  %3229 = vmatmul.mubr.bf16.gmra.mxu0 %v2998
  %v3230 = vpop.f32.mrf.mxu0
  %v3231 = vadd.f32 0.0, %v3230
  %v3232 = vpop.f32.mrf.mxu0
  %v3233 = vpop.f32.mrf.mxu0
  %v3234 = vadd.f32 0.0, %v3233
  %v3235 = vpop.f32.mrf.mxu0
  %3236 = vmatprep.mubr.bf16.mxu0 0
  %3237 = vmatmul.mubr.bf16.gmra.mxu0 %v3001
  %v3238 = vpop.f32.mrf.mxu0
  %v3239 = vadd.f32 0.0, %v3238
  %v3240 = vpop.f32.mrf.mxu0
  %v3241 = vpop.f32.mrf.mxu0
  %v3242 = vadd.f32 0.0, %v3241
  %v3243 = vpop.f32.mrf.mxu0
  %3244 = vmatprep.mubr.bf16.mxu0 0
  %3245 = vmatmul.mubr.bf16.gmra.mxu0 %v3004
  %v3246 = vpop.f32.mrf.mxu0
  %v3247 = vadd.f32 0.0, %v3246
  %v3248 = vpop.f32.mrf.mxu0
  %v3249 = vpop.f32.mrf.mxu0
  %v3250 = vadd.f32 0.0, %v3249
  %v3251 = vpop.f32.mrf.mxu0
  %3252 = vmatprep.mubr.bf16.mxu0 0
  %3253 = vmatmul.mubr.bf16.gmra.mxu0 %v3007
  %v3254 = vpop.f32.mrf.mxu0
  %v3255 = vadd.f32 0.0, %v3254
  %v3256 = vpop.f32.mrf.mxu0
  %v3257 = vpop.f32.mrf.mxu0
  %v3258 = vadd.f32 0.0, %v3257
  %v3259 = vpop.f32.mrf.mxu0
  %3260 = vmatprep.mubr.bf16.mxu0 0
  %3261 = vmatmul.mubr.bf16.gmra.mxu0 %v3010
  %v3262 = vpop.f32.mrf.mxu0
  %v3263 = vadd.f32 0.0, %v3262
  %v3264 = vpop.f32.mrf.mxu0
  %v3265 = vpop.f32.mrf.mxu0
  %v3266 = vadd.f32 0.0, %v3265
  %v3267 = vpop.f32.mrf.mxu0
  %3268 = vmatprep.mubr.bf16.mxu0 0
  %3269 = vmatmul.mubr.bf16.gmra.mxu0 %v3013
  %v3270 = vpop.f32.mrf.mxu0
  %v3271 = vadd.f32 0.0, %v3270
  %v3272 = vpop.f32.mrf.mxu0
  %v3273 = vpop.f32.mrf.mxu0
  %v3274 = vadd.f32 0.0, %v3273
  %v3275 = vpop.f32.mrf.mxu0
  %3276 = vmatprep.mubr.bf16.mxu0 0
  %3277 = vmatmul.mubr.bf16.gmra.mxu0 %v3016
  %v3278 = vpop.f32.mrf.mxu0
  %v3279 = vadd.f32 0.0, %v3278
  %v3280 = vpop.f32.mrf.mxu0
  %v3281 = vpop.f32.mrf.mxu0
  %v3282 = vadd.f32 0.0, %v3281
  %v3283 = vpop.f32.mrf.mxu0
  %3284 = vmatprep.mubr.bf16.mxu0 0
  %3285 = vmatmul.mubr.bf16.gmra.mxu0 %v3019
  %v3286 = vpop.f32.mrf.mxu0
  %v3287 = vadd.f32 0.0, %v3286
  %v3288 = vpop.f32.mrf.mxu0
  %v3289 = vpop.f32.mrf.mxu0
  %v3290 = vadd.f32 0.0, %v3289
  %v3291 = vpop.f32.mrf.mxu0
  %3292 = vmatprep.mubr.bf16.mxu0 0
  %3293 = vmatmul.mubr.bf16.gmra.mxu0 %v3022
  %v3294 = vpop.f32.mrf.mxu0
  %v3295 = vadd.f32 0.0, %v3294
  %v3296 = vpop.f32.mrf.mxu0
  %v3297 = vpop.f32.mrf.mxu0
  %v3298 = vadd.f32 0.0, %v3297
  %v3299 = vpop.f32.mrf.mxu0
  %3300 = vmatprep.mubr.bf16.mxu0 0
  %3301 = vmatmul.mubr.bf16.gmra.mxu0 %v3025
  %v3302 = vpop.f32.mrf.mxu0
  %v3303 = vadd.f32 0.0, %v3302
  %v3304 = vpop.f32.mrf.mxu0
  %v3305 = vpop.f32.mrf.mxu0
  %v3306 = vadd.f32 0.0, %v3305
  %v3307 = vpop.f32.mrf.mxu0
  %3308 = vmatprep.mubr.bf16.mxu0 0
  %3309 = vmatmul.mubr.bf16.gmra.mxu0 %v3028
  %v3310 = vpop.f32.mrf.mxu0
  %v3311 = vadd.f32 0.0, %v3310
  %v3312 = vpop.f32.mrf.mxu0
  %v3313 = vpop.f32.mrf.mxu0
  %v3314 = vadd.f32 0.0, %v3313
  %v3315 = vpop.f32.mrf.mxu0
  %3316 = vmatprep.mubr.bf16.mxu0 0
  %3317 = vmatmul.mubr.bf16.gmra.mxu0 %v3031
  %v3318 = vpop.f32.mrf.mxu0
  %v3319 = vadd.f32 0.0, %v3318
  %v3320 = vpop.f32.mrf.mxu0
  %v3321 = vpop.f32.mrf.mxu0
  %v3322 = vadd.f32 0.0, %v3321
  %v3323 = vpop.f32.mrf.mxu0
  %3324 = vdwg.mxu0
  %v3325 = vadd.f32 %v2692, %v3071
  %v3326 = vadd.f32 %v2693, %v3074
  %v3327 = vadd.f32 %v2694, %v3079
  %v3328 = vadd.f32 %v2695, %v3082
  %v3329 = vadd.f32 %v2696, %v3087
  %v3330 = vadd.f32 %v2697, %v3090
  %v3331 = vadd.f32 %v2698, %v3095
  %v3332 = vadd.f32 %v2699, %v3098
  %v3333 = vadd.f32 %v2700, %v3103
  %v3334 = vadd.f32 %v2701, %v3106
  %v3335 = vadd.f32 %v2702, %v3111
  %v3336 = vadd.f32 %v2703, %v3114
  %v3337 = vadd.f32 %v2704, %v3119
  %v3338 = vadd.f32 %v2705, %v3122
  %v3339 = vadd.f32 %v2706, %v3127
  %v3340 = vadd.f32 %v2707, %v3130
  %v3341 = vadd.f32 %v2708, %v3135
  %v3342 = vadd.f32 %v2709, %v3138
  %v3343 = vadd.f32 %v2710, %v3143
  %v3344 = vadd.f32 %v2711, %v3146
  %v3345 = vadd.f32 %v2712, %v3151
  %v3346 = vadd.f32 %v2713, %v3154
  %v3347 = vadd.f32 %v2714, %v3159
  %v3348 = vadd.f32 %v2715, %v3162
  %v3349 = vadd.f32 %v2716, %v3167
  %v3350 = vadd.f32 %v2717, %v3170
  %v3351 = vadd.f32 %v2718, %v3175
  %v3352 = vadd.f32 %v2719, %v3178
  %v3353 = vadd.f32 %v2720, %v3183
  %v3354 = vadd.f32 %v2721, %v3186
  %v3355 = vadd.f32 %v2722, %v3191
  %v3356 = vadd.f32 %v2723, %v3194
  %v3357 = vadd.f32 %v2724, %v3199
  %v3358 = vadd.f32 %v2725, %v3202
  %v3359 = vadd.f32 %v2726, %v3207
  %v3360 = vadd.f32 %v2727, %v3210
  %v3361 = vadd.f32 %v2728, %v3215
  %v3362 = vadd.f32 %v2729, %v3218
  %v3363 = vadd.f32 %v2730, %v3223
  %v3364 = vadd.f32 %v2731, %v3226
  %v3365 = vadd.f32 %v2732, %v3231
  %v3366 = vadd.f32 %v2733, %v3234
  %v3367 = vadd.f32 %v2734, %v3239
  %v3368 = vadd.f32 %v2735, %v3242
  %v3369 = vadd.f32 %v2736, %v3247
  %v3370 = vadd.f32 %v2737, %v3250
  %v3371 = vadd.f32 %v2738, %v3255
  %v3372 = vadd.f32 %v2739, %v3258
  %v3373 = vadd.f32 %v2740, %v3263
  %v3374 = vadd.f32 %v2741, %v3266
  %v3375 = vadd.f32 %v2742, %v3271
  %v3376 = vadd.f32 %v2743, %v3274
  %v3377 = vadd.f32 %v2744, %v3279
  %v3378 = vadd.f32 %v2745, %v3282
  %v3379 = vadd.f32 %v2746, %v3287
  %v3380 = vadd.f32 %v2747, %v3290
  %v3381 = vadd.f32 %v2748, %v3295
  %v3382 = vadd.f32 %v2749, %v3298
  %v3383 = vadd.f32 %v2750, %v3303
  %v3384 = vadd.f32 %v2751, %v3306
  %v3385 = vadd.f32 %v2752, %v3311
  %v3386 = vadd.f32 %v2753, %v3314
  %v3387 = vadd.f32 %v2754, %v3319
  %v3388 = vadd.f32 %v2755, %v3322
  %s3389 = scalar_lea.vmem %s1, 20
  %v3390 = vld [vmem:[%s3389] sm:$0xf]
  %v3391 = vld [vmem:[%s3389 + $0x4] sm:$0xf]
  %v3392 = vld [vmem:[%s3389 + $0x8] sm:$0xf]
  %v3393 = vld [vmem:[%s3389 + $0xc] sm:$0xf]
  %v3394 = vld [vmem:[%s3389 + $0x10] sm:$0x3]
  %s3395 = scalar_lea.vmem %s1, 100
  %v3396 = vld [vmem:[%s3395] sm:$0xf]
  %v3397 = vld [vmem:[%s3395 + $0x4] sm:$0xf]
  %v3398 = vld [vmem:[%s3395 + $0x8] sm:$0xf]
  %v3399 = vld [vmem:[%s3395 + $0xc] sm:$0xf]
  %v3400 = vld [vmem:[%s3395 + $0x10] sm:$0x3]
  %v3406 = vunpack.c.l.b16 %v3396
  %v3407 = vunpack.c.l.b16 %v3397
  %v3408 = vunpack.c.l.b16 %v3398
  %v3409 = vunpack.c.l.b16 %v3399
  %v3410 = vunpack.c.l.b16 %v3400
  %v3411 = vpack.c.b16 %v3407, %v3406
  %v3412 = vpack.c.b16 %v3409, %v3408
  %v3413 = vpack.c.b16 %v3410, %v3410
  %v3417 = vsel %vm634, %v3413, 0
  %3419 = vmatprep.subr.bf16.mxu0 0
  %3420 = vmatpush1.bf16.msra.mxu0 0
  %3421 = vmatprep.subr.bf16.mxu0 0
  %3422 = vmatpush1.bf16.msra.mxu0 0
  %3423 = vmatprep.subr.bf16.mxu0 0
  %3424 = vmatpush1.bf16.msra.mxu0 0
  %3425 = vmatprep.subr.bf16.mxu0 0
  %3426 = vmatpush1.bf16.msra.mxu0 0
  %3427 = vmatprep.subr.bf16.mxu0 0
  %3428 = vmatpush1.bf16.msra.mxu0 0
  %3429 = vmatprep.subr.bf16.mxu0 0
  %3430 = vmatpush1.bf16.msra.mxu0 %v3417
  %3431 = vmatprep.subr.bf16.mxu0 0
  %3432 = vmatpush1.bf16.msra.mxu0 %v3412
  %3433 = vmatprep.subr.bf16.mxu0 0
  %3434 = vmatpush1.bf16.msra.mxu0 %v3411
  %3435 = vmatprep.subr.bf16.mxu0 0
  %3436 = vmatpush2.bf16.msra.mxu0 0
  %3437 = vmatprep.subr.bf16.mxu0 0
  %3438 = vmatpush2.bf16.msra.mxu0 0
  %3439 = vmatprep.subr.bf16.mxu0 0
  %3440 = vmatpush2.bf16.msra.mxu0 0
  %3441 = vmatprep.subr.bf16.mxu0 0
  %3442 = vmatpush2.bf16.msra.mxu0 0
  %3443 = vmatprep.subr.bf16.mxu0 0
  %3444 = vmatpush2.bf16.msra.mxu0 0
  %3445 = vmatprep.subr.bf16.mxu0 0
  %3446 = vmatpush2.bf16.msra.mxu0 0
  %3447 = vmatprep.subr.bf16.mxu0 0
  %3448 = vmatpush2.bf16.msra.mxu0 0
  %3449 = vmatprep.subr.bf16.mxu0 0
  %3450 = vmatpush2.bf16.msra.mxu0 0
  %3451 = vmatprep.mubr.bf16.mxu0 0
  %3452 = vmatmul.mubr.bf16.gmra.mxu0 %v539
  %v3453 = vpop.f32.mrf.mxu0
  %v3454 = vadd.f32 0.0, %v3453
  %v3455 = vpop.f32.mrf.mxu0
  %v3456 = vpop.f32.mrf.mxu0
  %v3457 = vadd.f32 0.0, %v3456
  %v3458 = vpop.f32.mrf.mxu0
  %3459 = vmatprep.mubr.bf16.mxu0 0
  %3460 = vmatmul.mubr.bf16.gmra.mxu0 %v542
  %v3461 = vpop.f32.mrf.mxu0
  %v3462 = vadd.f32 0.0, %v3461
  %v3463 = vpop.f32.mrf.mxu0
  %v3464 = vpop.f32.mrf.mxu0
  %v3465 = vadd.f32 0.0, %v3464
  %v3466 = vpop.f32.mrf.mxu0
  %3467 = vmatprep.mubr.bf16.mxu0 0
  %3468 = vmatmul.mubr.bf16.gmra.mxu0 %v545
  %v3469 = vpop.f32.mrf.mxu0
  %v3470 = vadd.f32 0.0, %v3469
  %v3471 = vpop.f32.mrf.mxu0
  %v3472 = vpop.f32.mrf.mxu0
  %v3473 = vadd.f32 0.0, %v3472
  %v3474 = vpop.f32.mrf.mxu0
  %3475 = vmatprep.mubr.bf16.mxu0 0
  %3476 = vmatmul.mubr.bf16.gmra.mxu0 %v548
  %v3477 = vpop.f32.mrf.mxu0
  %v3478 = vadd.f32 0.0, %v3477
  %v3479 = vpop.f32.mrf.mxu0
  %v3480 = vpop.f32.mrf.mxu0
  %v3481 = vadd.f32 0.0, %v3480
  %v3482 = vpop.f32.mrf.mxu0
  %3483 = vmatprep.mubr.bf16.mxu0 0
  %3484 = vmatmul.mubr.bf16.gmra.mxu0 %v551
  %v3485 = vpop.f32.mrf.mxu0
  %v3486 = vadd.f32 0.0, %v3485
  %v3487 = vpop.f32.mrf.mxu0
  %v3488 = vpop.f32.mrf.mxu0
  %v3489 = vadd.f32 0.0, %v3488
  %v3490 = vpop.f32.mrf.mxu0
  %3491 = vmatprep.mubr.bf16.mxu0 0
  %3492 = vmatmul.mubr.bf16.gmra.mxu0 %v554
  %v3493 = vpop.f32.mrf.mxu0
  %v3494 = vadd.f32 0.0, %v3493
  %v3495 = vpop.f32.mrf.mxu0
  %v3496 = vpop.f32.mrf.mxu0
  %v3497 = vadd.f32 0.0, %v3496
  %v3498 = vpop.f32.mrf.mxu0
  %3499 = vmatprep.mubr.bf16.mxu0 0
  %3500 = vmatmul.mubr.bf16.gmra.mxu0 %v557
  %v3501 = vpop.f32.mrf.mxu0
  %v3502 = vadd.f32 0.0, %v3501
  %v3503 = vpop.f32.mrf.mxu0
  %v3504 = vpop.f32.mrf.mxu0
  %v3505 = vadd.f32 0.0, %v3504
  %v3506 = vpop.f32.mrf.mxu0
  %3507 = vmatprep.mubr.bf16.mxu0 0
  %3508 = vmatmul.mubr.bf16.gmra.mxu0 %v560
  %v3509 = vpop.f32.mrf.mxu0
  %v3510 = vadd.f32 0.0, %v3509
  %v3511 = vpop.f32.mrf.mxu0
  %v3512 = vpop.f32.mrf.mxu0
  %v3513 = vadd.f32 0.0, %v3512
  %v3514 = vpop.f32.mrf.mxu0
  %3515 = vmatprep.mubr.bf16.mxu0 0
  %3516 = vmatmul.mubr.bf16.gmra.mxu0 %v563
  %v3517 = vpop.f32.mrf.mxu0
  %v3518 = vadd.f32 0.0, %v3517
  %v3519 = vpop.f32.mrf.mxu0
  %v3520 = vpop.f32.mrf.mxu0
  %v3521 = vadd.f32 0.0, %v3520
  %v3522 = vpop.f32.mrf.mxu0
  %3523 = vmatprep.mubr.bf16.mxu0 0
  %3524 = vmatmul.mubr.bf16.gmra.mxu0 %v566
  %v3525 = vpop.f32.mrf.mxu0
  %v3526 = vadd.f32 0.0, %v3525
  %v3527 = vpop.f32.mrf.mxu0
  %v3528 = vpop.f32.mrf.mxu0
  %v3529 = vadd.f32 0.0, %v3528
  %v3530 = vpop.f32.mrf.mxu0
  %3531 = vmatprep.mubr.bf16.mxu0 0
  %3532 = vmatmul.mubr.bf16.gmra.mxu0 %v569
  %v3533 = vpop.f32.mrf.mxu0
  %v3534 = vadd.f32 0.0, %v3533
  %v3535 = vpop.f32.mrf.mxu0
  %v3536 = vpop.f32.mrf.mxu0
  %v3537 = vadd.f32 0.0, %v3536
  %v3538 = vpop.f32.mrf.mxu0
  %3539 = vmatprep.mubr.bf16.mxu0 0
  %3540 = vmatmul.mubr.bf16.gmra.mxu0 %v572
  %v3541 = vpop.f32.mrf.mxu0
  %v3542 = vadd.f32 0.0, %v3541
  %v3543 = vpop.f32.mrf.mxu0
  %v3544 = vpop.f32.mrf.mxu0
  %v3545 = vadd.f32 0.0, %v3544
  %v3546 = vpop.f32.mrf.mxu0
  %3547 = vmatprep.mubr.bf16.mxu0 0
  %3548 = vmatmul.mubr.bf16.gmra.mxu0 %v575
  %v3549 = vpop.f32.mrf.mxu0
  %v3550 = vadd.f32 0.0, %v3549
  %v3551 = vpop.f32.mrf.mxu0
  %v3552 = vpop.f32.mrf.mxu0
  %v3553 = vadd.f32 0.0, %v3552
  %v3554 = vpop.f32.mrf.mxu0
  %3555 = vmatprep.mubr.bf16.mxu0 0
  %3556 = vmatmul.mubr.bf16.gmra.mxu0 %v578
  %v3557 = vpop.f32.mrf.mxu0
  %v3558 = vadd.f32 0.0, %v3557
  %v3559 = vpop.f32.mrf.mxu0
  %v3560 = vpop.f32.mrf.mxu0
  %v3561 = vadd.f32 0.0, %v3560
  %v3562 = vpop.f32.mrf.mxu0
  %3563 = vmatprep.mubr.bf16.mxu0 0
  %3564 = vmatmul.mubr.bf16.gmra.mxu0 %v581
  %v3565 = vpop.f32.mrf.mxu0
  %v3566 = vadd.f32 0.0, %v3565
  %v3567 = vpop.f32.mrf.mxu0
  %v3568 = vpop.f32.mrf.mxu0
  %v3569 = vadd.f32 0.0, %v3568
  %v3570 = vpop.f32.mrf.mxu0
  %3571 = vmatprep.mubr.bf16.mxu0 0
  %3572 = vmatmul.mubr.bf16.gmra.mxu0 %v584
  %v3573 = vpop.f32.mrf.mxu0
  %v3574 = vadd.f32 0.0, %v3573
  %v3575 = vpop.f32.mrf.mxu0
  %v3576 = vpop.f32.mrf.mxu0
  %v3577 = vadd.f32 0.0, %v3576
  %v3578 = vpop.f32.mrf.mxu0
  %3579 = vmatprep.mubr.bf16.mxu0 0
  %3580 = vmatmul.mubr.bf16.gmra.mxu0 %v587
  %v3581 = vpop.f32.mrf.mxu0
  %v3582 = vadd.f32 0.0, %v3581
  %v3583 = vpop.f32.mrf.mxu0
  %v3584 = vpop.f32.mrf.mxu0
  %v3585 = vadd.f32 0.0, %v3584
  %v3586 = vpop.f32.mrf.mxu0
  %3587 = vmatprep.mubr.bf16.mxu0 0
  %3588 = vmatmul.mubr.bf16.gmra.mxu0 %v590
  %v3589 = vpop.f32.mrf.mxu0
  %v3590 = vadd.f32 0.0, %v3589
  %v3591 = vpop.f32.mrf.mxu0
  %v3592 = vpop.f32.mrf.mxu0
  %v3593 = vadd.f32 0.0, %v3592
  %v3594 = vpop.f32.mrf.mxu0
  %3595 = vmatprep.mubr.bf16.mxu0 0
  %3596 = vmatmul.mubr.bf16.gmra.mxu0 %v593
  %v3597 = vpop.f32.mrf.mxu0
  %v3598 = vadd.f32 0.0, %v3597
  %v3599 = vpop.f32.mrf.mxu0
  %v3600 = vpop.f32.mrf.mxu0
  %v3601 = vadd.f32 0.0, %v3600
  %v3602 = vpop.f32.mrf.mxu0
  %3603 = vmatprep.mubr.bf16.mxu0 0
  %3604 = vmatmul.mubr.bf16.gmra.mxu0 %v596
  %v3605 = vpop.f32.mrf.mxu0
  %v3606 = vadd.f32 0.0, %v3605
  %v3607 = vpop.f32.mrf.mxu0
  %v3608 = vpop.f32.mrf.mxu0
  %v3609 = vadd.f32 0.0, %v3608
  %v3610 = vpop.f32.mrf.mxu0
  %3611 = vmatprep.mubr.bf16.mxu0 0
  %3612 = vmatmul.mubr.bf16.gmra.mxu0 %v599
  %v3613 = vpop.f32.mrf.mxu0
  %v3614 = vadd.f32 0.0, %v3613
  %v3615 = vpop.f32.mrf.mxu0
  %v3616 = vpop.f32.mrf.mxu0
  %v3617 = vadd.f32 0.0, %v3616
  %v3618 = vpop.f32.mrf.mxu0
  %3619 = vmatprep.mubr.bf16.mxu0 0
  %3620 = vmatmul.mubr.bf16.gmra.mxu0 %v602
  %v3621 = vpop.f32.mrf.mxu0
  %v3622 = vadd.f32 0.0, %v3621
  %v3623 = vpop.f32.mrf.mxu0
  %v3624 = vpop.f32.mrf.mxu0
  %v3625 = vadd.f32 0.0, %v3624
  %v3626 = vpop.f32.mrf.mxu0
  %3627 = vmatprep.mubr.bf16.mxu0 0
  %3628 = vmatmul.mubr.bf16.gmra.mxu0 %v605
  %v3629 = vpop.f32.mrf.mxu0
  %v3630 = vadd.f32 0.0, %v3629
  %v3631 = vpop.f32.mrf.mxu0
  %v3632 = vpop.f32.mrf.mxu0
  %v3633 = vadd.f32 0.0, %v3632
  %v3634 = vpop.f32.mrf.mxu0
  %3635 = vmatprep.mubr.bf16.mxu0 0
  %3636 = vmatmul.mubr.bf16.gmra.mxu0 %v608
  %v3637 = vpop.f32.mrf.mxu0
  %v3638 = vadd.f32 0.0, %v3637
  %v3639 = vpop.f32.mrf.mxu0
  %v3640 = vpop.f32.mrf.mxu0
  %v3641 = vadd.f32 0.0, %v3640
  %v3642 = vpop.f32.mrf.mxu0
  %3643 = vmatprep.mubr.bf16.mxu0 0
  %3644 = vmatmul.mubr.bf16.gmra.mxu0 %v611
  %v3645 = vpop.f32.mrf.mxu0
  %v3646 = vadd.f32 0.0, %v3645
  %v3647 = vpop.f32.mrf.mxu0
  %v3648 = vpop.f32.mrf.mxu0
  %v3649 = vadd.f32 0.0, %v3648
  %v3650 = vpop.f32.mrf.mxu0
  %3651 = vmatprep.mubr.bf16.mxu0 0
  %3652 = vmatmul.mubr.bf16.gmra.mxu0 %v614
  %v3653 = vpop.f32.mrf.mxu0
  %v3654 = vadd.f32 0.0, %v3653
  %v3655 = vpop.f32.mrf.mxu0
  %v3656 = vpop.f32.mrf.mxu0
  %v3657 = vadd.f32 0.0, %v3656
  %v3658 = vpop.f32.mrf.mxu0
  %3659 = vmatprep.mubr.bf16.mxu0 0
  %3660 = vmatmul.mubr.bf16.gmra.mxu0 %v617
  %v3661 = vpop.f32.mrf.mxu0
  %v3662 = vadd.f32 0.0, %v3661
  %v3663 = vpop.f32.mrf.mxu0
  %v3664 = vpop.f32.mrf.mxu0
  %v3665 = vadd.f32 0.0, %v3664
  %v3666 = vpop.f32.mrf.mxu0
  %3667 = vmatprep.mubr.bf16.mxu0 0
  %3668 = vmatmul.mubr.bf16.gmra.mxu0 %v620
  %v3669 = vpop.f32.mrf.mxu0
  %v3670 = vadd.f32 0.0, %v3669
  %v3671 = vpop.f32.mrf.mxu0
  %v3672 = vpop.f32.mrf.mxu0
  %v3673 = vadd.f32 0.0, %v3672
  %v3674 = vpop.f32.mrf.mxu0
  %3675 = vmatprep.mubr.bf16.mxu0 0
  %3676 = vmatmul.mubr.bf16.gmra.mxu0 %v623
  %v3677 = vpop.f32.mrf.mxu0
  %v3678 = vadd.f32 0.0, %v3677
  %v3679 = vpop.f32.mrf.mxu0
  %v3680 = vpop.f32.mrf.mxu0
  %v3681 = vadd.f32 0.0, %v3680
  %v3682 = vpop.f32.mrf.mxu0
  %3683 = vmatprep.mubr.bf16.mxu0 0
  %3684 = vmatmul.mubr.bf16.gmra.mxu0 %v626
  %v3685 = vpop.f32.mrf.mxu0
  %v3686 = vadd.f32 0.0, %v3685
  %v3687 = vpop.f32.mrf.mxu0
  %v3688 = vpop.f32.mrf.mxu0
  %v3689 = vadd.f32 0.0, %v3688
  %v3690 = vpop.f32.mrf.mxu0
  %3691 = vmatprep.mubr.bf16.mxu0 0
  %3692 = vmatmul.mubr.bf16.gmra.mxu0 %v629
  %v3693 = vpop.f32.mrf.mxu0
  %v3694 = vadd.f32 0.0, %v3693
  %v3695 = vpop.f32.mrf.mxu0
  %v3696 = vpop.f32.mrf.mxu0
  %v3697 = vadd.f32 0.0, %v3696
  %v3698 = vpop.f32.mrf.mxu0
  %3699 = vmatprep.mubr.bf16.mxu0 0
  %3700 = vmatmul.mubr.bf16.gmra.mxu0 %v632
  %v3701 = vpop.f32.mrf.mxu0
  %v3702 = vadd.f32 0.0, %v3701
  %v3703 = vpop.f32.mrf.mxu0
  %v3704 = vpop.f32.mrf.mxu0
  %v3705 = vadd.f32 0.0, %v3704
  %v3706 = vpop.f32.mrf.mxu0
  %3707 = vdwg.mxu0
  %v3713 = vunpack.c.l.b16 %v3390
  %v3714 = vunpack.c.l.b16 %v3391
  %v3715 = vunpack.c.l.b16 %v3392
  %v3716 = vunpack.c.l.b16 %v3393
  %v3717 = vunpack.c.l.b16 %v3394
  %v3718 = vpack.c.b16 %v3714, %v3713
  %v3719 = vpack.c.b16 %v3716, %v3715
  %v3720 = vpack.c.b16 %v3717, %v3717
  %v3724 = vsel %vm634, %v3720, 0
  %3726 = vmatprep.subr.bf16.mxu0 0
  %3727 = vmatpush1.bf16.msra.mxu0 0
  %3728 = vmatprep.subr.bf16.mxu0 0
  %3729 = vmatpush1.bf16.msra.mxu0 0
  %3730 = vmatprep.subr.bf16.mxu0 0
  %3731 = vmatpush1.bf16.msra.mxu0 0
  %3732 = vmatprep.subr.bf16.mxu0 0
  %3733 = vmatpush1.bf16.msra.mxu0 0
  %3734 = vmatprep.subr.bf16.mxu0 0
  %3735 = vmatpush1.bf16.msra.mxu0 0
  %3736 = vmatprep.subr.bf16.mxu0 0
  %3737 = vmatpush1.bf16.msra.mxu0 %v3724
  %3738 = vmatprep.subr.bf16.mxu0 0
  %3739 = vmatpush1.bf16.msra.mxu0 %v3719
  %3740 = vmatprep.subr.bf16.mxu0 0
  %3741 = vmatpush1.bf16.msra.mxu0 %v3718
  %3742 = vmatprep.subr.bf16.mxu0 0
  %3743 = vmatpush2.bf16.msra.mxu0 0
  %3744 = vmatprep.subr.bf16.mxu0 0
  %3745 = vmatpush2.bf16.msra.mxu0 0
  %3746 = vmatprep.subr.bf16.mxu0 0
  %3747 = vmatpush2.bf16.msra.mxu0 0
  %3748 = vmatprep.subr.bf16.mxu0 0
  %3749 = vmatpush2.bf16.msra.mxu0 0
  %3750 = vmatprep.subr.bf16.mxu0 0
  %3751 = vmatpush2.bf16.msra.mxu0 0
  %3752 = vmatprep.subr.bf16.mxu0 0
  %3753 = vmatpush2.bf16.msra.mxu0 0
  %3754 = vmatprep.subr.bf16.mxu0 0
  %3755 = vmatpush2.bf16.msra.mxu0 0
  %3756 = vmatprep.subr.bf16.mxu0 0
  %3757 = vmatpush2.bf16.msra.mxu0 0
  %3758 = vmatprep.mubr.bf16.mxu0 0
  %3759 = vmatmul.mubr.bf16.gmra.mxu0 %v1103
  %v3760 = vpop.f32.mrf.mxu0
  %v3761 = vadd.f32 %v3454, %v3760
  %v3762 = vpop.f32.mrf.mxu0
  %v3763 = vpop.f32.mrf.mxu0
  %v3764 = vadd.f32 %v3457, %v3763
  %v3765 = vpop.f32.mrf.mxu0
  %3766 = vmatprep.mubr.bf16.mxu0 0
  %3767 = vmatmul.mubr.bf16.gmra.mxu0 %v1106
  %v3768 = vpop.f32.mrf.mxu0
  %v3769 = vadd.f32 %v3462, %v3768
  %v3770 = vpop.f32.mrf.mxu0
  %v3771 = vpop.f32.mrf.mxu0
  %v3772 = vadd.f32 %v3465, %v3771
  %v3773 = vpop.f32.mrf.mxu0
  %3774 = vmatprep.mubr.bf16.mxu0 0
  %3775 = vmatmul.mubr.bf16.gmra.mxu0 %v1109
  %v3776 = vpop.f32.mrf.mxu0
  %v3777 = vadd.f32 %v3470, %v3776
  %v3778 = vpop.f32.mrf.mxu0
  %v3779 = vpop.f32.mrf.mxu0
  %v3780 = vadd.f32 %v3473, %v3779
  %v3781 = vpop.f32.mrf.mxu0
  %3782 = vmatprep.mubr.bf16.mxu0 0
  %3783 = vmatmul.mubr.bf16.gmra.mxu0 %v1112
  %v3784 = vpop.f32.mrf.mxu0
  %v3785 = vadd.f32 %v3478, %v3784
  %v3786 = vpop.f32.mrf.mxu0
  %v3787 = vpop.f32.mrf.mxu0
  %v3788 = vadd.f32 %v3481, %v3787
  %v3789 = vpop.f32.mrf.mxu0
  %3790 = vmatprep.mubr.bf16.mxu0 0
  %3791 = vmatmul.mubr.bf16.gmra.mxu0 %v1115
  %v3792 = vpop.f32.mrf.mxu0
  %v3793 = vadd.f32 %v3486, %v3792
  %v3794 = vpop.f32.mrf.mxu0
  %v3795 = vpop.f32.mrf.mxu0
  %v3796 = vadd.f32 %v3489, %v3795
  %v3797 = vpop.f32.mrf.mxu0
  %3798 = vmatprep.mubr.bf16.mxu0 0
  %3799 = vmatmul.mubr.bf16.gmra.mxu0 %v1118
  %v3800 = vpop.f32.mrf.mxu0
  %v3801 = vadd.f32 %v3494, %v3800
  %v3802 = vpop.f32.mrf.mxu0
  %v3803 = vpop.f32.mrf.mxu0
  %v3804 = vadd.f32 %v3497, %v3803
  %v3805 = vpop.f32.mrf.mxu0
  %3806 = vmatprep.mubr.bf16.mxu0 0
  %3807 = vmatmul.mubr.bf16.gmra.mxu0 %v1121
  %v3808 = vpop.f32.mrf.mxu0
  %v3809 = vadd.f32 %v3502, %v3808
  %v3810 = vpop.f32.mrf.mxu0
  %v3811 = vpop.f32.mrf.mxu0
  %v3812 = vadd.f32 %v3505, %v3811
  %v3813 = vpop.f32.mrf.mxu0
  %3814 = vmatprep.mubr.bf16.mxu0 0
  %3815 = vmatmul.mubr.bf16.gmra.mxu0 %v1124
  %v3816 = vpop.f32.mrf.mxu0
  %v3817 = vadd.f32 %v3510, %v3816
  %v3818 = vpop.f32.mrf.mxu0
  %v3819 = vpop.f32.mrf.mxu0
  %v3820 = vadd.f32 %v3513, %v3819
  %v3821 = vpop.f32.mrf.mxu0
  %3822 = vmatprep.mubr.bf16.mxu0 0
  %3823 = vmatmul.mubr.bf16.gmra.mxu0 %v1127
  %v3824 = vpop.f32.mrf.mxu0
  %v3825 = vadd.f32 %v3518, %v3824
  %v3826 = vpop.f32.mrf.mxu0
  %v3827 = vpop.f32.mrf.mxu0
  %v3828 = vadd.f32 %v3521, %v3827
  %v3829 = vpop.f32.mrf.mxu0
  %3830 = vmatprep.mubr.bf16.mxu0 0
  %3831 = vmatmul.mubr.bf16.gmra.mxu0 %v1130
  %v3832 = vpop.f32.mrf.mxu0
  %v3833 = vadd.f32 %v3526, %v3832
  %v3834 = vpop.f32.mrf.mxu0
  %v3835 = vpop.f32.mrf.mxu0
  %v3836 = vadd.f32 %v3529, %v3835
  %v3837 = vpop.f32.mrf.mxu0
  %3838 = vmatprep.mubr.bf16.mxu0 0
  %3839 = vmatmul.mubr.bf16.gmra.mxu0 %v1133
  %v3840 = vpop.f32.mrf.mxu0
  %v3841 = vadd.f32 %v3534, %v3840
  %v3842 = vpop.f32.mrf.mxu0
  %v3843 = vpop.f32.mrf.mxu0
  %v3844 = vadd.f32 %v3537, %v3843
  %v3845 = vpop.f32.mrf.mxu0
  %3846 = vmatprep.mubr.bf16.mxu0 0
  %3847 = vmatmul.mubr.bf16.gmra.mxu0 %v1136
  %v3848 = vpop.f32.mrf.mxu0
  %v3849 = vadd.f32 %v3542, %v3848
  %v3850 = vpop.f32.mrf.mxu0
  %v3851 = vpop.f32.mrf.mxu0
  %v3852 = vadd.f32 %v3545, %v3851
  %v3853 = vpop.f32.mrf.mxu0
  %3854 = vmatprep.mubr.bf16.mxu0 0
  %3855 = vmatmul.mubr.bf16.gmra.mxu0 %v1139
  %v3856 = vpop.f32.mrf.mxu0
  %v3857 = vadd.f32 %v3550, %v3856
  %v3858 = vpop.f32.mrf.mxu0
  %v3859 = vpop.f32.mrf.mxu0
  %v3860 = vadd.f32 %v3553, %v3859
  %v3861 = vpop.f32.mrf.mxu0
  %3862 = vmatprep.mubr.bf16.mxu0 0
  %3863 = vmatmul.mubr.bf16.gmra.mxu0 %v1142
  %v3864 = vpop.f32.mrf.mxu0
  %v3865 = vadd.f32 %v3558, %v3864
  %v3866 = vpop.f32.mrf.mxu0
  %v3867 = vpop.f32.mrf.mxu0
  %v3868 = vadd.f32 %v3561, %v3867
  %v3869 = vpop.f32.mrf.mxu0
  %3870 = vmatprep.mubr.bf16.mxu0 0
  %3871 = vmatmul.mubr.bf16.gmra.mxu0 %v1145
  %v3872 = vpop.f32.mrf.mxu0
  %v3873 = vadd.f32 %v3566, %v3872
  %v3874 = vpop.f32.mrf.mxu0
  %v3875 = vpop.f32.mrf.mxu0
  %v3876 = vadd.f32 %v3569, %v3875
  %v3877 = vpop.f32.mrf.mxu0
  %3878 = vmatprep.mubr.bf16.mxu0 0
  %3879 = vmatmul.mubr.bf16.gmra.mxu0 %v1148
  %v3880 = vpop.f32.mrf.mxu0
  %v3881 = vadd.f32 %v3574, %v3880
  %v3882 = vpop.f32.mrf.mxu0
  %v3883 = vpop.f32.mrf.mxu0
  %v3884 = vadd.f32 %v3577, %v3883
  %v3885 = vpop.f32.mrf.mxu0
  %3886 = vmatprep.mubr.bf16.mxu0 0
  %3887 = vmatmul.mubr.bf16.gmra.mxu0 %v1151
  %v3888 = vpop.f32.mrf.mxu0
  %v3889 = vadd.f32 %v3582, %v3888
  %v3890 = vpop.f32.mrf.mxu0
  %v3891 = vpop.f32.mrf.mxu0
  %v3892 = vadd.f32 %v3585, %v3891
  %v3893 = vpop.f32.mrf.mxu0
  %3894 = vmatprep.mubr.bf16.mxu0 0
  %3895 = vmatmul.mubr.bf16.gmra.mxu0 %v1154
  %v3896 = vpop.f32.mrf.mxu0
  %v3897 = vadd.f32 %v3590, %v3896
  %v3898 = vpop.f32.mrf.mxu0
  %v3899 = vpop.f32.mrf.mxu0
  %v3900 = vadd.f32 %v3593, %v3899
  %v3901 = vpop.f32.mrf.mxu0
  %3902 = vmatprep.mubr.bf16.mxu0 0
  %3903 = vmatmul.mubr.bf16.gmra.mxu0 %v1157
  %v3904 = vpop.f32.mrf.mxu0
  %v3905 = vadd.f32 %v3598, %v3904
  %v3906 = vpop.f32.mrf.mxu0
  %v3907 = vpop.f32.mrf.mxu0
  %v3908 = vadd.f32 %v3601, %v3907
  %v3909 = vpop.f32.mrf.mxu0
  %3910 = vmatprep.mubr.bf16.mxu0 0
  %3911 = vmatmul.mubr.bf16.gmra.mxu0 %v1160
  %v3912 = vpop.f32.mrf.mxu0
  %v3913 = vadd.f32 %v3606, %v3912
  %v3914 = vpop.f32.mrf.mxu0
  %v3915 = vpop.f32.mrf.mxu0
  %v3916 = vadd.f32 %v3609, %v3915
  %v3917 = vpop.f32.mrf.mxu0
  %3918 = vmatprep.mubr.bf16.mxu0 0
  %3919 = vmatmul.mubr.bf16.gmra.mxu0 %v1163
  %v3920 = vpop.f32.mrf.mxu0
  %v3921 = vadd.f32 %v3614, %v3920
  %v3922 = vpop.f32.mrf.mxu0
  %v3923 = vpop.f32.mrf.mxu0
  %v3924 = vadd.f32 %v3617, %v3923
  %v3925 = vpop.f32.mrf.mxu0
  %3926 = vmatprep.mubr.bf16.mxu0 0
  %3927 = vmatmul.mubr.bf16.gmra.mxu0 %v1166
  %v3928 = vpop.f32.mrf.mxu0
  %v3929 = vadd.f32 %v3622, %v3928
  %v3930 = vpop.f32.mrf.mxu0
  %v3931 = vpop.f32.mrf.mxu0
  %v3932 = vadd.f32 %v3625, %v3931
  %v3933 = vpop.f32.mrf.mxu0
  %3934 = vmatprep.mubr.bf16.mxu0 0
  %3935 = vmatmul.mubr.bf16.gmra.mxu0 %v1169
  %v3936 = vpop.f32.mrf.mxu0
  %v3937 = vadd.f32 %v3630, %v3936
  %v3938 = vpop.f32.mrf.mxu0
  %v3939 = vpop.f32.mrf.mxu0
  %v3940 = vadd.f32 %v3633, %v3939
  %v3941 = vpop.f32.mrf.mxu0
  %3942 = vmatprep.mubr.bf16.mxu0 0
  %3943 = vmatmul.mubr.bf16.gmra.mxu0 %v1172
  %v3944 = vpop.f32.mrf.mxu0
  %v3945 = vadd.f32 %v3638, %v3944
  %v3946 = vpop.f32.mrf.mxu0
  %v3947 = vpop.f32.mrf.mxu0
  %v3948 = vadd.f32 %v3641, %v3947
  %v3949 = vpop.f32.mrf.mxu0
  %3950 = vmatprep.mubr.bf16.mxu0 0
  %3951 = vmatmul.mubr.bf16.gmra.mxu0 %v1175
  %v3952 = vpop.f32.mrf.mxu0
  %v3953 = vadd.f32 %v3646, %v3952
  %v3954 = vpop.f32.mrf.mxu0
  %v3955 = vpop.f32.mrf.mxu0
  %v3956 = vadd.f32 %v3649, %v3955
  %v3957 = vpop.f32.mrf.mxu0
  %3958 = vmatprep.mubr.bf16.mxu0 0
  %3959 = vmatmul.mubr.bf16.gmra.mxu0 %v1178
  %v3960 = vpop.f32.mrf.mxu0
  %v3961 = vadd.f32 %v3654, %v3960
  %v3962 = vpop.f32.mrf.mxu0
  %v3963 = vpop.f32.mrf.mxu0
  %v3964 = vadd.f32 %v3657, %v3963
  %v3965 = vpop.f32.mrf.mxu0
  %3966 = vmatprep.mubr.bf16.mxu0 0
  %3967 = vmatmul.mubr.bf16.gmra.mxu0 %v1181
  %v3968 = vpop.f32.mrf.mxu0
  %v3969 = vadd.f32 %v3662, %v3968
  %v3970 = vpop.f32.mrf.mxu0
  %v3971 = vpop.f32.mrf.mxu0
  %v3972 = vadd.f32 %v3665, %v3971
  %v3973 = vpop.f32.mrf.mxu0
  %3974 = vmatprep.mubr.bf16.mxu0 0
  %3975 = vmatmul.mubr.bf16.gmra.mxu0 %v1184
  %v3976 = vpop.f32.mrf.mxu0
  %v3977 = vadd.f32 %v3670, %v3976
  %v3978 = vpop.f32.mrf.mxu0
  %v3979 = vpop.f32.mrf.mxu0
  %v3980 = vadd.f32 %v3673, %v3979
  %v3981 = vpop.f32.mrf.mxu0
  %3982 = vmatprep.mubr.bf16.mxu0 0
  %3983 = vmatmul.mubr.bf16.gmra.mxu0 %v1187
  %v3984 = vpop.f32.mrf.mxu0
  %v3985 = vadd.f32 %v3678, %v3984
  %v3986 = vpop.f32.mrf.mxu0
  %v3987 = vpop.f32.mrf.mxu0
  %v3988 = vadd.f32 %v3681, %v3987
  %v3989 = vpop.f32.mrf.mxu0
  %3990 = vmatprep.mubr.bf16.mxu0 0
  %3991 = vmatmul.mubr.bf16.gmra.mxu0 %v1190
  %v3992 = vpop.f32.mrf.mxu0
  %v3993 = vadd.f32 %v3686, %v3992
  %v3994 = vpop.f32.mrf.mxu0
  %v3995 = vpop.f32.mrf.mxu0
  %v3996 = vadd.f32 %v3689, %v3995
  %v3997 = vpop.f32.mrf.mxu0
  %3998 = vmatprep.mubr.bf16.mxu0 0
  %3999 = vmatmul.mubr.bf16.gmra.mxu0 %v1193
  %v4000 = vpop.f32.mrf.mxu0
  %v4001 = vadd.f32 %v3694, %v4000
  %v4002 = vpop.f32.mrf.mxu0
  %v4003 = vpop.f32.mrf.mxu0
  %v4004 = vadd.f32 %v3697, %v4003
  %v4005 = vpop.f32.mrf.mxu0
  %4006 = vmatprep.mubr.bf16.mxu0 0
  %4007 = vmatmul.mubr.bf16.gmra.mxu0 %v1196
  %v4008 = vpop.f32.mrf.mxu0
  %v4009 = vadd.f32 %v3702, %v4008
  %v4010 = vpop.f32.mrf.mxu0
  %v4011 = vpop.f32.mrf.mxu0
  %v4012 = vadd.f32 %v3705, %v4011
  %v4013 = vpop.f32.mrf.mxu0
  %4014 = vdwg.mxu0
  %s4015 = scalar_lea.vmem %s1, 180
  %v4016 = vld [vmem:[%s4015] sm:$0xf]
  %v4017 = vld [vmem:[%s4015 + $0x4] sm:$0xf]
  %v4018 = vld [vmem:[%s4015 + $0x8] sm:$0xf]
  %v4019 = vld [vmem:[%s4015 + $0xc] sm:$0xf]
  %v4020 = vld [vmem:[%s4015 + $0x10] sm:$0x3]
  %v4026 = vunpack.c.l.b16 %v4016
  %v4027 = vunpack.c.l.b16 %v4017
  %v4028 = vunpack.c.l.b16 %v4018
  %v4029 = vunpack.c.l.b16 %v4019
  %v4030 = vunpack.c.l.b16 %v4020
  %v4031 = vpack.c.b16 %v4027, %v4026
  %v4032 = vpack.c.b16 %v4029, %v4028
  %v4033 = vpack.c.b16 %v4030, %v4030
  %v4037 = vsel %vm634, %v4033, 0
  %4039 = vmatprep.subr.bf16.mxu0 0
  %4040 = vmatpush1.bf16.msra.mxu0 0
  %4041 = vmatprep.subr.bf16.mxu0 0
  %4042 = vmatpush1.bf16.msra.mxu0 0
  %4043 = vmatprep.subr.bf16.mxu0 0
  %4044 = vmatpush1.bf16.msra.mxu0 0
  %4045 = vmatprep.subr.bf16.mxu0 0
  %4046 = vmatpush1.bf16.msra.mxu0 0
  %4047 = vmatprep.subr.bf16.mxu0 0
  %4048 = vmatpush1.bf16.msra.mxu0 0
  %4049 = vmatprep.subr.bf16.mxu0 0
  %4050 = vmatpush1.bf16.msra.mxu0 %v4037
  %4051 = vmatprep.subr.bf16.mxu0 0
  %4052 = vmatpush1.bf16.msra.mxu0 %v4032
  %4053 = vmatprep.subr.bf16.mxu0 0
  %4054 = vmatpush1.bf16.msra.mxu0 %v4031
  %4055 = vmatprep.subr.bf16.mxu0 0
  %4056 = vmatpush2.bf16.msra.mxu0 0
  %4057 = vmatprep.subr.bf16.mxu0 0
  %4058 = vmatpush2.bf16.msra.mxu0 0
  %4059 = vmatprep.subr.bf16.mxu0 0
  %4060 = vmatpush2.bf16.msra.mxu0 0
  %4061 = vmatprep.subr.bf16.mxu0 0
  %4062 = vmatpush2.bf16.msra.mxu0 0
  %4063 = vmatprep.subr.bf16.mxu0 0
  %4064 = vmatpush2.bf16.msra.mxu0 0
  %4065 = vmatprep.subr.bf16.mxu0 0
  %4066 = vmatpush2.bf16.msra.mxu0 0
  %4067 = vmatprep.subr.bf16.mxu0 0
  %4068 = vmatpush2.bf16.msra.mxu0 0
  %4069 = vmatprep.subr.bf16.mxu0 0
  %4070 = vmatpush2.bf16.msra.mxu0 0
  %4071 = vmatprep.mubr.bf16.mxu0 0
  %4072 = vmatmul.mubr.bf16.gmra.mxu0 %v1672
  %v4073 = vpop.f32.mrf.mxu0
  %v4074 = vadd.f32 0.0, %v4073
  %v4075 = vpop.f32.mrf.mxu0
  %v4076 = vpop.f32.mrf.mxu0
  %v4077 = vadd.f32 0.0, %v4076
  %v4078 = vpop.f32.mrf.mxu0
  %4079 = vmatprep.mubr.bf16.mxu0 0
  %4080 = vmatmul.mubr.bf16.gmra.mxu0 %v1675
  %v4081 = vpop.f32.mrf.mxu0
  %v4082 = vadd.f32 0.0, %v4081
  %v4083 = vpop.f32.mrf.mxu0
  %v4084 = vpop.f32.mrf.mxu0
  %v4085 = vadd.f32 0.0, %v4084
  %v4086 = vpop.f32.mrf.mxu0
  %4087 = vmatprep.mubr.bf16.mxu0 0
  %4088 = vmatmul.mubr.bf16.gmra.mxu0 %v1678
  %v4089 = vpop.f32.mrf.mxu0
  %v4090 = vadd.f32 0.0, %v4089
  %v4091 = vpop.f32.mrf.mxu0
  %v4092 = vpop.f32.mrf.mxu0
  %v4093 = vadd.f32 0.0, %v4092
  %v4094 = vpop.f32.mrf.mxu0
  %4095 = vmatprep.mubr.bf16.mxu0 0
  %4096 = vmatmul.mubr.bf16.gmra.mxu0 %v1681
  %v4097 = vpop.f32.mrf.mxu0
  %v4098 = vadd.f32 0.0, %v4097
  %v4099 = vpop.f32.mrf.mxu0
  %v4100 = vpop.f32.mrf.mxu0
  %v4101 = vadd.f32 0.0, %v4100
  %v4102 = vpop.f32.mrf.mxu0
  %4103 = vmatprep.mubr.bf16.mxu0 0
  %4104 = vmatmul.mubr.bf16.gmra.mxu0 %v1684
  %v4105 = vpop.f32.mrf.mxu0
  %v4106 = vadd.f32 0.0, %v4105
  %v4107 = vpop.f32.mrf.mxu0
  %v4108 = vpop.f32.mrf.mxu0
  %v4109 = vadd.f32 0.0, %v4108
  %v4110 = vpop.f32.mrf.mxu0
  %4111 = vmatprep.mubr.bf16.mxu0 0
  %4112 = vmatmul.mubr.bf16.gmra.mxu0 %v1687
  %v4113 = vpop.f32.mrf.mxu0
  %v4114 = vadd.f32 0.0, %v4113
  %v4115 = vpop.f32.mrf.mxu0
  %v4116 = vpop.f32.mrf.mxu0
  %v4117 = vadd.f32 0.0, %v4116
  %v4118 = vpop.f32.mrf.mxu0
  %4119 = vmatprep.mubr.bf16.mxu0 0
  %4120 = vmatmul.mubr.bf16.gmra.mxu0 %v1690
  %v4121 = vpop.f32.mrf.mxu0
  %v4122 = vadd.f32 0.0, %v4121
  %v4123 = vpop.f32.mrf.mxu0
  %v4124 = vpop.f32.mrf.mxu0
  %v4125 = vadd.f32 0.0, %v4124
  %v4126 = vpop.f32.mrf.mxu0
  %4127 = vmatprep.mubr.bf16.mxu0 0
  %4128 = vmatmul.mubr.bf16.gmra.mxu0 %v1693
  %v4129 = vpop.f32.mrf.mxu0
  %v4130 = vadd.f32 0.0, %v4129
  %v4131 = vpop.f32.mrf.mxu0
  %v4132 = vpop.f32.mrf.mxu0
  %v4133 = vadd.f32 0.0, %v4132
  %v4134 = vpop.f32.mrf.mxu0
  %4135 = vmatprep.mubr.bf16.mxu0 0
  %4136 = vmatmul.mubr.bf16.gmra.mxu0 %v1696
  %v4137 = vpop.f32.mrf.mxu0
  %v4138 = vadd.f32 0.0, %v4137
  %v4139 = vpop.f32.mrf.mxu0
  %v4140 = vpop.f32.mrf.mxu0
  %v4141 = vadd.f32 0.0, %v4140
  %v4142 = vpop.f32.mrf.mxu0
  %4143 = vmatprep.mubr.bf16.mxu0 0
  %4144 = vmatmul.mubr.bf16.gmra.mxu0 %v1699
  %v4145 = vpop.f32.mrf.mxu0
  %v4146 = vadd.f32 0.0, %v4145
  %v4147 = vpop.f32.mrf.mxu0
  %v4148 = vpop.f32.mrf.mxu0
  %v4149 = vadd.f32 0.0, %v4148
  %v4150 = vpop.f32.mrf.mxu0
  %4151 = vmatprep.mubr.bf16.mxu0 0
  %4152 = vmatmul.mubr.bf16.gmra.mxu0 %v1702
  %v4153 = vpop.f32.mrf.mxu0
  %v4154 = vadd.f32 0.0, %v4153
  %v4155 = vpop.f32.mrf.mxu0
  %v4156 = vpop.f32.mrf.mxu0
  %v4157 = vadd.f32 0.0, %v4156
  %v4158 = vpop.f32.mrf.mxu0
  %4159 = vmatprep.mubr.bf16.mxu0 0
  %4160 = vmatmul.mubr.bf16.gmra.mxu0 %v1705
  %v4161 = vpop.f32.mrf.mxu0
  %v4162 = vadd.f32 0.0, %v4161
  %v4163 = vpop.f32.mrf.mxu0
  %v4164 = vpop.f32.mrf.mxu0
  %v4165 = vadd.f32 0.0, %v4164
  %v4166 = vpop.f32.mrf.mxu0
  %4167 = vmatprep.mubr.bf16.mxu0 0
  %4168 = vmatmul.mubr.bf16.gmra.mxu0 %v1708
  %v4169 = vpop.f32.mrf.mxu0
  %v4170 = vadd.f32 0.0, %v4169
  %v4171 = vpop.f32.mrf.mxu0
  %v4172 = vpop.f32.mrf.mxu0
  %v4173 = vadd.f32 0.0, %v4172
  %v4174 = vpop.f32.mrf.mxu0
  %4175 = vmatprep.mubr.bf16.mxu0 0
  %4176 = vmatmul.mubr.bf16.gmra.mxu0 %v1711
  %v4177 = vpop.f32.mrf.mxu0
  %v4178 = vadd.f32 0.0, %v4177
  %v4179 = vpop.f32.mrf.mxu0
  %v4180 = vpop.f32.mrf.mxu0
  %v4181 = vadd.f32 0.0, %v4180
  %v4182 = vpop.f32.mrf.mxu0
  %4183 = vmatprep.mubr.bf16.mxu0 0
  %4184 = vmatmul.mubr.bf16.gmra.mxu0 %v1714
  %v4185 = vpop.f32.mrf.mxu0
  %v4186 = vadd.f32 0.0, %v4185
  %v4187 = vpop.f32.mrf.mxu0
  %v4188 = vpop.f32.mrf.mxu0
  %v4189 = vadd.f32 0.0, %v4188
  %v4190 = vpop.f32.mrf.mxu0
  %4191 = vmatprep.mubr.bf16.mxu0 0
  %4192 = vmatmul.mubr.bf16.gmra.mxu0 %v1717
  %v4193 = vpop.f32.mrf.mxu0
  %v4194 = vadd.f32 0.0, %v4193
  %v4195 = vpop.f32.mrf.mxu0
  %v4196 = vpop.f32.mrf.mxu0
  %v4197 = vadd.f32 0.0, %v4196
  %v4198 = vpop.f32.mrf.mxu0
  %4199 = vmatprep.mubr.bf16.mxu0 0
  %4200 = vmatmul.mubr.bf16.gmra.mxu0 %v1720
  %v4201 = vpop.f32.mrf.mxu0
  %v4202 = vadd.f32 0.0, %v4201
  %v4203 = vpop.f32.mrf.mxu0
  %v4204 = vpop.f32.mrf.mxu0
  %v4205 = vadd.f32 0.0, %v4204
  %v4206 = vpop.f32.mrf.mxu0
  %4207 = vmatprep.mubr.bf16.mxu0 0
  %4208 = vmatmul.mubr.bf16.gmra.mxu0 %v1723
  %v4209 = vpop.f32.mrf.mxu0
  %v4210 = vadd.f32 0.0, %v4209
  %v4211 = vpop.f32.mrf.mxu0
  %v4212 = vpop.f32.mrf.mxu0
  %v4213 = vadd.f32 0.0, %v4212
  %v4214 = vpop.f32.mrf.mxu0
  %4215 = vmatprep.mubr.bf16.mxu0 0
  %4216 = vmatmul.mubr.bf16.gmra.mxu0 %v1726
  %v4217 = vpop.f32.mrf.mxu0
  %v4218 = vadd.f32 0.0, %v4217
  %v4219 = vpop.f32.mrf.mxu0
  %v4220 = vpop.f32.mrf.mxu0
  %v4221 = vadd.f32 0.0, %v4220
  %v4222 = vpop.f32.mrf.mxu0
  %4223 = vmatprep.mubr.bf16.mxu0 0
  %4224 = vmatmul.mubr.bf16.gmra.mxu0 %v1729
  %v4225 = vpop.f32.mrf.mxu0
  %v4226 = vadd.f32 0.0, %v4225
  %v4227 = vpop.f32.mrf.mxu0
  %v4228 = vpop.f32.mrf.mxu0
  %v4229 = vadd.f32 0.0, %v4228
  %v4230 = vpop.f32.mrf.mxu0
  %4231 = vmatprep.mubr.bf16.mxu0 0
  %4232 = vmatmul.mubr.bf16.gmra.mxu0 %v1732
  %v4233 = vpop.f32.mrf.mxu0
  %v4234 = vadd.f32 0.0, %v4233
  %v4235 = vpop.f32.mrf.mxu0
  %v4236 = vpop.f32.mrf.mxu0
  %v4237 = vadd.f32 0.0, %v4236
  %v4238 = vpop.f32.mrf.mxu0
  %4239 = vmatprep.mubr.bf16.mxu0 0
  %4240 = vmatmul.mubr.bf16.gmra.mxu0 %v1735
  %v4241 = vpop.f32.mrf.mxu0
  %v4242 = vadd.f32 0.0, %v4241
  %v4243 = vpop.f32.mrf.mxu0
  %v4244 = vpop.f32.mrf.mxu0
  %v4245 = vadd.f32 0.0, %v4244
  %v4246 = vpop.f32.mrf.mxu0
  %4247 = vmatprep.mubr.bf16.mxu0 0
  %4248 = vmatmul.mubr.bf16.gmra.mxu0 %v1738
  %v4249 = vpop.f32.mrf.mxu0
  %v4250 = vadd.f32 0.0, %v4249
  %v4251 = vpop.f32.mrf.mxu0
  %v4252 = vpop.f32.mrf.mxu0
  %v4253 = vadd.f32 0.0, %v4252
  %v4254 = vpop.f32.mrf.mxu0
  %4255 = vmatprep.mubr.bf16.mxu0 0
  %4256 = vmatmul.mubr.bf16.gmra.mxu0 %v1741
  %v4257 = vpop.f32.mrf.mxu0
  %v4258 = vadd.f32 0.0, %v4257
  %v4259 = vpop.f32.mrf.mxu0
  %v4260 = vpop.f32.mrf.mxu0
  %v4261 = vadd.f32 0.0, %v4260
  %v4262 = vpop.f32.mrf.mxu0
  %4263 = vmatprep.mubr.bf16.mxu0 0
  %4264 = vmatmul.mubr.bf16.gmra.mxu0 %v1744
  %v4265 = vpop.f32.mrf.mxu0
  %v4266 = vadd.f32 0.0, %v4265
  %v4267 = vpop.f32.mrf.mxu0
  %v4268 = vpop.f32.mrf.mxu0
  %v4269 = vadd.f32 0.0, %v4268
  %v4270 = vpop.f32.mrf.mxu0
  %4271 = vmatprep.mubr.bf16.mxu0 0
  %4272 = vmatmul.mubr.bf16.gmra.mxu0 %v1747
  %v4273 = vpop.f32.mrf.mxu0
  %v4274 = vadd.f32 0.0, %v4273
  %v4275 = vpop.f32.mrf.mxu0
  %v4276 = vpop.f32.mrf.mxu0
  %v4277 = vadd.f32 0.0, %v4276
  %v4278 = vpop.f32.mrf.mxu0
  %4279 = vmatprep.mubr.bf16.mxu0 0
  %4280 = vmatmul.mubr.bf16.gmra.mxu0 %v1750
  %v4281 = vpop.f32.mrf.mxu0
  %v4282 = vadd.f32 0.0, %v4281
  %v4283 = vpop.f32.mrf.mxu0
  %v4284 = vpop.f32.mrf.mxu0
  %v4285 = vadd.f32 0.0, %v4284
  %v4286 = vpop.f32.mrf.mxu0
  %4287 = vmatprep.mubr.bf16.mxu0 0
  %4288 = vmatmul.mubr.bf16.gmra.mxu0 %v1753
  %v4289 = vpop.f32.mrf.mxu0
  %v4290 = vadd.f32 0.0, %v4289
  %v4291 = vpop.f32.mrf.mxu0
  %v4292 = vpop.f32.mrf.mxu0
  %v4293 = vadd.f32 0.0, %v4292
  %v4294 = vpop.f32.mrf.mxu0
  %4295 = vmatprep.mubr.bf16.mxu0 0
  %4296 = vmatmul.mubr.bf16.gmra.mxu0 %v1756
  %v4297 = vpop.f32.mrf.mxu0
  %v4298 = vadd.f32 0.0, %v4297
  %v4299 = vpop.f32.mrf.mxu0
  %v4300 = vpop.f32.mrf.mxu0
  %v4301 = vadd.f32 0.0, %v4300
  %v4302 = vpop.f32.mrf.mxu0
  %4303 = vmatprep.mubr.bf16.mxu0 0
  %4304 = vmatmul.mubr.bf16.gmra.mxu0 %v1759
  %v4305 = vpop.f32.mrf.mxu0
  %v4306 = vadd.f32 0.0, %v4305
  %v4307 = vpop.f32.mrf.mxu0
  %v4308 = vpop.f32.mrf.mxu0
  %v4309 = vadd.f32 0.0, %v4308
  %v4310 = vpop.f32.mrf.mxu0
  %4311 = vmatprep.mubr.bf16.mxu0 0
  %4312 = vmatmul.mubr.bf16.gmra.mxu0 %v1762
  %v4313 = vpop.f32.mrf.mxu0
  %v4314 = vadd.f32 0.0, %v4313
  %v4315 = vpop.f32.mrf.mxu0
  %v4316 = vpop.f32.mrf.mxu0
  %v4317 = vadd.f32 0.0, %v4316
  %v4318 = vpop.f32.mrf.mxu0
  %4319 = vmatprep.mubr.bf16.mxu0 0
  %4320 = vmatmul.mubr.bf16.gmra.mxu0 %v1765
  %v4321 = vpop.f32.mrf.mxu0
  %v4322 = vadd.f32 0.0, %v4321
  %v4323 = vpop.f32.mrf.mxu0
  %v4324 = vpop.f32.mrf.mxu0
  %v4325 = vadd.f32 0.0, %v4324
  %v4326 = vpop.f32.mrf.mxu0
  %4327 = vdwg.mxu0
  %v4328 = vadd.f32 %v3761, %v4074
  %v4329 = vadd.f32 %v3764, %v4077
  %v4330 = vadd.f32 %v3769, %v4082
  %v4331 = vadd.f32 %v3772, %v4085
  %v4332 = vadd.f32 %v3777, %v4090
  %v4333 = vadd.f32 %v3780, %v4093
  %v4334 = vadd.f32 %v3785, %v4098
  %v4335 = vadd.f32 %v3788, %v4101
  %v4336 = vadd.f32 %v3793, %v4106
  %v4337 = vadd.f32 %v3796, %v4109
  %v4338 = vadd.f32 %v3801, %v4114
  %v4339 = vadd.f32 %v3804, %v4117
  %v4340 = vadd.f32 %v3809, %v4122
  %v4341 = vadd.f32 %v3812, %v4125
  %v4342 = vadd.f32 %v3817, %v4130
  %v4343 = vadd.f32 %v3820, %v4133
  %v4344 = vadd.f32 %v3825, %v4138
  %v4345 = vadd.f32 %v3828, %v4141
  %v4346 = vadd.f32 %v3833, %v4146
  %v4347 = vadd.f32 %v3836, %v4149
  %v4348 = vadd.f32 %v3841, %v4154
  %v4349 = vadd.f32 %v3844, %v4157
  %v4350 = vadd.f32 %v3849, %v4162
  %v4351 = vadd.f32 %v3852, %v4165
  %v4352 = vadd.f32 %v3857, %v4170
  %v4353 = vadd.f32 %v3860, %v4173
  %v4354 = vadd.f32 %v3865, %v4178
  %v4355 = vadd.f32 %v3868, %v4181
  %v4356 = vadd.f32 %v3873, %v4186
  %v4357 = vadd.f32 %v3876, %v4189
  %v4358 = vadd.f32 %v3881, %v4194
  %v4359 = vadd.f32 %v3884, %v4197
  %v4360 = vadd.f32 %v3889, %v4202
  %v4361 = vadd.f32 %v3892, %v4205
  %v4362 = vadd.f32 %v3897, %v4210
  %v4363 = vadd.f32 %v3900, %v4213
  %v4364 = vadd.f32 %v3905, %v4218
  %v4365 = vadd.f32 %v3908, %v4221
  %v4366 = vadd.f32 %v3913, %v4226
  %v4367 = vadd.f32 %v3916, %v4229
  %v4368 = vadd.f32 %v3921, %v4234
  %v4369 = vadd.f32 %v3924, %v4237
  %v4370 = vadd.f32 %v3929, %v4242
  %v4371 = vadd.f32 %v3932, %v4245
  %v4372 = vadd.f32 %v3937, %v4250
  %v4373 = vadd.f32 %v3940, %v4253
  %v4374 = vadd.f32 %v3945, %v4258
  %v4375 = vadd.f32 %v3948, %v4261
  %v4376 = vadd.f32 %v3953, %v4266
  %v4377 = vadd.f32 %v3956, %v4269
  %v4378 = vadd.f32 %v3961, %v4274
  %v4379 = vadd.f32 %v3964, %v4277
  %v4380 = vadd.f32 %v3969, %v4282
  %v4381 = vadd.f32 %v3972, %v4285
  %v4382 = vadd.f32 %v3977, %v4290
  %v4383 = vadd.f32 %v3980, %v4293
  %v4384 = vadd.f32 %v3985, %v4298
  %v4385 = vadd.f32 %v3988, %v4301
  %v4386 = vadd.f32 %v3993, %v4306
  %v4387 = vadd.f32 %v3996, %v4309
  %v4388 = vadd.f32 %v4001, %v4314
  %v4389 = vadd.f32 %v4004, %v4317
  %v4390 = vadd.f32 %v4009, %v4322
  %v4391 = vadd.f32 %v4012, %v4325
  %s4392 = scalar_lea.vmem %s1, 260
  %v4393 = vld [vmem:[%s4392] sm:$0xf]
  %v4394 = vld [vmem:[%s4392 + $0x4] sm:$0xf]
  %v4395 = vld [vmem:[%s4392 + $0x8] sm:$0xf]
  %v4396 = vld [vmem:[%s4392 + $0xc] sm:$0xf]
  %v4397 = vld [vmem:[%s4392 + $0x10] sm:$0x3]
  %v4403 = vunpack.c.l.b16 %v4393
  %v4404 = vunpack.c.l.b16 %v4394
  %v4405 = vunpack.c.l.b16 %v4395
  %v4406 = vunpack.c.l.b16 %v4396
  %v4407 = vunpack.c.l.b16 %v4397
  %v4408 = vpack.c.b16 %v4404, %v4403
  %v4409 = vpack.c.b16 %v4406, %v4405
  %v4410 = vpack.c.b16 %v4407, %v4407
  %v4414 = vsel %vm634, %v4410, 0
  %4416 = vmatprep.subr.bf16.mxu0 0
  %4417 = vmatpush1.bf16.msra.mxu0 0
  %4418 = vmatprep.subr.bf16.mxu0 0
  %4419 = vmatpush1.bf16.msra.mxu0 0
  %4420 = vmatprep.subr.bf16.mxu0 0
  %4421 = vmatpush1.bf16.msra.mxu0 0
  %4422 = vmatprep.subr.bf16.mxu0 0
  %4423 = vmatpush1.bf16.msra.mxu0 0
  %4424 = vmatprep.subr.bf16.mxu0 0
  %4425 = vmatpush1.bf16.msra.mxu0 0
  %4426 = vmatprep.subr.bf16.mxu0 0
  %4427 = vmatpush1.bf16.msra.mxu0 %v4414
  %4428 = vmatprep.subr.bf16.mxu0 0
  %4429 = vmatpush1.bf16.msra.mxu0 %v4409
  %4430 = vmatprep.subr.bf16.mxu0 0
  %4431 = vmatpush1.bf16.msra.mxu0 %v4408
  %4432 = vmatprep.subr.bf16.mxu0 0
  %4433 = vmatpush2.bf16.msra.mxu0 0
  %4434 = vmatprep.subr.bf16.mxu0 0
  %4435 = vmatpush2.bf16.msra.mxu0 0
  %4436 = vmatprep.subr.bf16.mxu0 0
  %4437 = vmatpush2.bf16.msra.mxu0 0
  %4438 = vmatprep.subr.bf16.mxu0 0
  %4439 = vmatpush2.bf16.msra.mxu0 0
  %4440 = vmatprep.subr.bf16.mxu0 0
  %4441 = vmatpush2.bf16.msra.mxu0 0
  %4442 = vmatprep.subr.bf16.mxu0 0
  %4443 = vmatpush2.bf16.msra.mxu0 0
  %4444 = vmatprep.subr.bf16.mxu0 0
  %4445 = vmatpush2.bf16.msra.mxu0 0
  %4446 = vmatprep.subr.bf16.mxu0 0
  %4447 = vmatpush2.bf16.msra.mxu0 0
  %4448 = vmatprep.mubr.bf16.mxu0 0
  %4449 = vmatmul.mubr.bf16.gmra.mxu0 %v2305
  %v4450 = vpop.f32.mrf.mxu0
  %v4451 = vadd.f32 0.0, %v4450
  %v4452 = vpop.f32.mrf.mxu0
  %v4453 = vpop.f32.mrf.mxu0
  %v4454 = vadd.f32 0.0, %v4453
  %v4455 = vpop.f32.mrf.mxu0
  %4456 = vmatprep.mubr.bf16.mxu0 0
  %4457 = vmatmul.mubr.bf16.gmra.mxu0 %v2308
  %v4458 = vpop.f32.mrf.mxu0
  %v4459 = vadd.f32 0.0, %v4458
  %v4460 = vpop.f32.mrf.mxu0
  %v4461 = vpop.f32.mrf.mxu0
  %v4462 = vadd.f32 0.0, %v4461
  %v4463 = vpop.f32.mrf.mxu0
  %4464 = vmatprep.mubr.bf16.mxu0 0
  %4465 = vmatmul.mubr.bf16.gmra.mxu0 %v2311
  %v4466 = vpop.f32.mrf.mxu0
  %v4467 = vadd.f32 0.0, %v4466
  %v4468 = vpop.f32.mrf.mxu0
  %v4469 = vpop.f32.mrf.mxu0
  %v4470 = vadd.f32 0.0, %v4469
  %v4471 = vpop.f32.mrf.mxu0
  %4472 = vmatprep.mubr.bf16.mxu0 0
  %4473 = vmatmul.mubr.bf16.gmra.mxu0 %v2314
  %v4474 = vpop.f32.mrf.mxu0
  %v4475 = vadd.f32 0.0, %v4474
  %v4476 = vpop.f32.mrf.mxu0
  %v4477 = vpop.f32.mrf.mxu0
  %v4478 = vadd.f32 0.0, %v4477
  %v4479 = vpop.f32.mrf.mxu0
  %4480 = vmatprep.mubr.bf16.mxu0 0
  %4481 = vmatmul.mubr.bf16.gmra.mxu0 %v2317
  %v4482 = vpop.f32.mrf.mxu0
  %v4483 = vadd.f32 0.0, %v4482
  %v4484 = vpop.f32.mrf.mxu0
  %v4485 = vpop.f32.mrf.mxu0
  %v4486 = vadd.f32 0.0, %v4485
  %v4487 = vpop.f32.mrf.mxu0
  %4488 = vmatprep.mubr.bf16.mxu0 0
  %4489 = vmatmul.mubr.bf16.gmra.mxu0 %v2320
  %v4490 = vpop.f32.mrf.mxu0
  %v4491 = vadd.f32 0.0, %v4490
  %v4492 = vpop.f32.mrf.mxu0
  %v4493 = vpop.f32.mrf.mxu0
  %v4494 = vadd.f32 0.0, %v4493
  %v4495 = vpop.f32.mrf.mxu0
  %4496 = vmatprep.mubr.bf16.mxu0 0
  %4497 = vmatmul.mubr.bf16.gmra.mxu0 %v2323
  %v4498 = vpop.f32.mrf.mxu0
  %v4499 = vadd.f32 0.0, %v4498
  %v4500 = vpop.f32.mrf.mxu0
  %v4501 = vpop.f32.mrf.mxu0
  %v4502 = vadd.f32 0.0, %v4501
  %v4503 = vpop.f32.mrf.mxu0
  %4504 = vmatprep.mubr.bf16.mxu0 0
  %4505 = vmatmul.mubr.bf16.gmra.mxu0 %v2326
  %v4506 = vpop.f32.mrf.mxu0
  %v4507 = vadd.f32 0.0, %v4506
  %v4508 = vpop.f32.mrf.mxu0
  %v4509 = vpop.f32.mrf.mxu0
  %v4510 = vadd.f32 0.0, %v4509
  %v4511 = vpop.f32.mrf.mxu0
  %4512 = vmatprep.mubr.bf16.mxu0 0
  %4513 = vmatmul.mubr.bf16.gmra.mxu0 %v2329
  %v4514 = vpop.f32.mrf.mxu0
  %v4515 = vadd.f32 0.0, %v4514
  %v4516 = vpop.f32.mrf.mxu0
  %v4517 = vpop.f32.mrf.mxu0
  %v4518 = vadd.f32 0.0, %v4517
  %v4519 = vpop.f32.mrf.mxu0
  %4520 = vmatprep.mubr.bf16.mxu0 0
  %4521 = vmatmul.mubr.bf16.gmra.mxu0 %v2332
  %v4522 = vpop.f32.mrf.mxu0
  %v4523 = vadd.f32 0.0, %v4522
  %v4524 = vpop.f32.mrf.mxu0
  %v4525 = vpop.f32.mrf.mxu0
  %v4526 = vadd.f32 0.0, %v4525
  %v4527 = vpop.f32.mrf.mxu0
  %4528 = vmatprep.mubr.bf16.mxu0 0
  %4529 = vmatmul.mubr.bf16.gmra.mxu0 %v2335
  %v4530 = vpop.f32.mrf.mxu0
  %v4531 = vadd.f32 0.0, %v4530
  %v4532 = vpop.f32.mrf.mxu0
  %v4533 = vpop.f32.mrf.mxu0
  %v4534 = vadd.f32 0.0, %v4533
  %v4535 = vpop.f32.mrf.mxu0
  %4536 = vmatprep.mubr.bf16.mxu0 0
  %4537 = vmatmul.mubr.bf16.gmra.mxu0 %v2338
  %v4538 = vpop.f32.mrf.mxu0
  %v4539 = vadd.f32 0.0, %v4538
  %v4540 = vpop.f32.mrf.mxu0
  %v4541 = vpop.f32.mrf.mxu0
  %v4542 = vadd.f32 0.0, %v4541
  %v4543 = vpop.f32.mrf.mxu0
  %4544 = vmatprep.mubr.bf16.mxu0 0
  %4545 = vmatmul.mubr.bf16.gmra.mxu0 %v2341
  %v4546 = vpop.f32.mrf.mxu0
  %v4547 = vadd.f32 0.0, %v4546
  %v4548 = vpop.f32.mrf.mxu0
  %v4549 = vpop.f32.mrf.mxu0
  %v4550 = vadd.f32 0.0, %v4549
  %v4551 = vpop.f32.mrf.mxu0
  %4552 = vmatprep.mubr.bf16.mxu0 0
  %4553 = vmatmul.mubr.bf16.gmra.mxu0 %v2344
  %v4554 = vpop.f32.mrf.mxu0
  %v4555 = vadd.f32 0.0, %v4554
  %v4556 = vpop.f32.mrf.mxu0
  %v4557 = vpop.f32.mrf.mxu0
  %v4558 = vadd.f32 0.0, %v4557
  %v4559 = vpop.f32.mrf.mxu0
  %4560 = vmatprep.mubr.bf16.mxu0 0
  %4561 = vmatmul.mubr.bf16.gmra.mxu0 %v2347
  %v4562 = vpop.f32.mrf.mxu0
  %v4563 = vadd.f32 0.0, %v4562
  %v4564 = vpop.f32.mrf.mxu0
  %v4565 = vpop.f32.mrf.mxu0
  %v4566 = vadd.f32 0.0, %v4565
  %v4567 = vpop.f32.mrf.mxu0
  %4568 = vmatprep.mubr.bf16.mxu0 0
  %4569 = vmatmul.mubr.bf16.gmra.mxu0 %v2350
  %v4570 = vpop.f32.mrf.mxu0
  %v4571 = vadd.f32 0.0, %v4570
  %v4572 = vpop.f32.mrf.mxu0
  %v4573 = vpop.f32.mrf.mxu0
  %v4574 = vadd.f32 0.0, %v4573
  %v4575 = vpop.f32.mrf.mxu0
  %4576 = vmatprep.mubr.bf16.mxu0 0
  %4577 = vmatmul.mubr.bf16.gmra.mxu0 %v2353
  %v4578 = vpop.f32.mrf.mxu0
  %v4579 = vadd.f32 0.0, %v4578
  %v4580 = vpop.f32.mrf.mxu0
  %v4581 = vpop.f32.mrf.mxu0
  %v4582 = vadd.f32 0.0, %v4581
  %v4583 = vpop.f32.mrf.mxu0
  %4584 = vmatprep.mubr.bf16.mxu0 0
  %4585 = vmatmul.mubr.bf16.gmra.mxu0 %v2356
  %v4586 = vpop.f32.mrf.mxu0
  %v4587 = vadd.f32 0.0, %v4586
  %v4588 = vpop.f32.mrf.mxu0
  %v4589 = vpop.f32.mrf.mxu0
  %v4590 = vadd.f32 0.0, %v4589
  %v4591 = vpop.f32.mrf.mxu0
  %4592 = vmatprep.mubr.bf16.mxu0 0
  %4593 = vmatmul.mubr.bf16.gmra.mxu0 %v2359
  %v4594 = vpop.f32.mrf.mxu0
  %v4595 = vadd.f32 0.0, %v4594
  %v4596 = vpop.f32.mrf.mxu0
  %v4597 = vpop.f32.mrf.mxu0
  %v4598 = vadd.f32 0.0, %v4597
  %v4599 = vpop.f32.mrf.mxu0
  %4600 = vmatprep.mubr.bf16.mxu0 0
  %4601 = vmatmul.mubr.bf16.gmra.mxu0 %v2362
  %v4602 = vpop.f32.mrf.mxu0
  %v4603 = vadd.f32 0.0, %v4602
  %v4604 = vpop.f32.mrf.mxu0
  %v4605 = vpop.f32.mrf.mxu0
  %v4606 = vadd.f32 0.0, %v4605
  %v4607 = vpop.f32.mrf.mxu0
  %4608 = vmatprep.mubr.bf16.mxu0 0
  %4609 = vmatmul.mubr.bf16.gmra.mxu0 %v2365
  %v4610 = vpop.f32.mrf.mxu0
  %v4611 = vadd.f32 0.0, %v4610
  %v4612 = vpop.f32.mrf.mxu0
  %v4613 = vpop.f32.mrf.mxu0
  %v4614 = vadd.f32 0.0, %v4613
  %v4615 = vpop.f32.mrf.mxu0
  %4616 = vmatprep.mubr.bf16.mxu0 0
  %4617 = vmatmul.mubr.bf16.gmra.mxu0 %v2368
  %v4618 = vpop.f32.mrf.mxu0
  %v4619 = vadd.f32 0.0, %v4618
  %v4620 = vpop.f32.mrf.mxu0
  %v4621 = vpop.f32.mrf.mxu0
  %v4622 = vadd.f32 0.0, %v4621
  %v4623 = vpop.f32.mrf.mxu0
  %4624 = vmatprep.mubr.bf16.mxu0 0
  %4625 = vmatmul.mubr.bf16.gmra.mxu0 %v2371
  %v4626 = vpop.f32.mrf.mxu0
  %v4627 = vadd.f32 0.0, %v4626
  %v4628 = vpop.f32.mrf.mxu0
  %v4629 = vpop.f32.mrf.mxu0
  %v4630 = vadd.f32 0.0, %v4629
  %v4631 = vpop.f32.mrf.mxu0
  %4632 = vmatprep.mubr.bf16.mxu0 0
  %4633 = vmatmul.mubr.bf16.gmra.mxu0 %v2374
  %v4634 = vpop.f32.mrf.mxu0
  %v4635 = vadd.f32 0.0, %v4634
  %v4636 = vpop.f32.mrf.mxu0
  %v4637 = vpop.f32.mrf.mxu0
  %v4638 = vadd.f32 0.0, %v4637
  %v4639 = vpop.f32.mrf.mxu0
  %4640 = vmatprep.mubr.bf16.mxu0 0
  %4641 = vmatmul.mubr.bf16.gmra.mxu0 %v2377
  %v4642 = vpop.f32.mrf.mxu0
  %v4643 = vadd.f32 0.0, %v4642
  %v4644 = vpop.f32.mrf.mxu0
  %v4645 = vpop.f32.mrf.mxu0
  %v4646 = vadd.f32 0.0, %v4645
  %v4647 = vpop.f32.mrf.mxu0
  %4648 = vmatprep.mubr.bf16.mxu0 0
  %4649 = vmatmul.mubr.bf16.gmra.mxu0 %v2380
  %v4650 = vpop.f32.mrf.mxu0
  %v4651 = vadd.f32 0.0, %v4650
  %v4652 = vpop.f32.mrf.mxu0
  %v4653 = vpop.f32.mrf.mxu0
  %v4654 = vadd.f32 0.0, %v4653
  %v4655 = vpop.f32.mrf.mxu0
  %4656 = vmatprep.mubr.bf16.mxu0 0
  %4657 = vmatmul.mubr.bf16.gmra.mxu0 %v2383
  %v4658 = vpop.f32.mrf.mxu0
  %v4659 = vadd.f32 0.0, %v4658
  %v4660 = vpop.f32.mrf.mxu0
  %v4661 = vpop.f32.mrf.mxu0
  %v4662 = vadd.f32 0.0, %v4661
  %v4663 = vpop.f32.mrf.mxu0
  %4664 = vmatprep.mubr.bf16.mxu0 0
  %4665 = vmatmul.mubr.bf16.gmra.mxu0 %v2386
  %v4666 = vpop.f32.mrf.mxu0
  %v4667 = vadd.f32 0.0, %v4666
  %v4668 = vpop.f32.mrf.mxu0
  %v4669 = vpop.f32.mrf.mxu0
  %v4670 = vadd.f32 0.0, %v4669
  %v4671 = vpop.f32.mrf.mxu0
  %4672 = vmatprep.mubr.bf16.mxu0 0
  %4673 = vmatmul.mubr.bf16.gmra.mxu0 %v2389
  %v4674 = vpop.f32.mrf.mxu0
  %v4675 = vadd.f32 0.0, %v4674
  %v4676 = vpop.f32.mrf.mxu0
  %v4677 = vpop.f32.mrf.mxu0
  %v4678 = vadd.f32 0.0, %v4677
  %v4679 = vpop.f32.mrf.mxu0
  %4680 = vmatprep.mubr.bf16.mxu0 0
  %4681 = vmatmul.mubr.bf16.gmra.mxu0 %v2392
  %v4682 = vpop.f32.mrf.mxu0
  %v4683 = vadd.f32 0.0, %v4682
  %v4684 = vpop.f32.mrf.mxu0
  %v4685 = vpop.f32.mrf.mxu0
  %v4686 = vadd.f32 0.0, %v4685
  %v4687 = vpop.f32.mrf.mxu0
  %4688 = vmatprep.mubr.bf16.mxu0 0
  %4689 = vmatmul.mubr.bf16.gmra.mxu0 %v2395
  %v4690 = vpop.f32.mrf.mxu0
  %v4691 = vadd.f32 0.0, %v4690
  %v4692 = vpop.f32.mrf.mxu0
  %v4693 = vpop.f32.mrf.mxu0
  %v4694 = vadd.f32 0.0, %v4693
  %v4695 = vpop.f32.mrf.mxu0
  %4696 = vmatprep.mubr.bf16.mxu0 0
  %4697 = vmatmul.mubr.bf16.gmra.mxu0 %v2398
  %v4698 = vpop.f32.mrf.mxu0
  %v4699 = vadd.f32 0.0, %v4698
  %v4700 = vpop.f32.mrf.mxu0
  %v4701 = vpop.f32.mrf.mxu0
  %v4702 = vadd.f32 0.0, %v4701
  %v4703 = vpop.f32.mrf.mxu0
  %4704 = vdwg.mxu0
  %v4705 = vadd.f32 %v4328, %v4451
  %v4706 = vadd.f32 %v4329, %v4454
  %v4707 = vadd.f32 %v4330, %v4459
  %v4708 = vadd.f32 %v4331, %v4462
  %v4709 = vadd.f32 %v4332, %v4467
  %v4710 = vadd.f32 %v4333, %v4470
  %v4711 = vadd.f32 %v4334, %v4475
  %v4712 = vadd.f32 %v4335, %v4478
  %v4713 = vadd.f32 %v4336, %v4483
  %v4714 = vadd.f32 %v4337, %v4486
  %v4715 = vadd.f32 %v4338, %v4491
  %v4716 = vadd.f32 %v4339, %v4494
  %v4717 = vadd.f32 %v4340, %v4499
  %v4718 = vadd.f32 %v4341, %v4502
  %v4719 = vadd.f32 %v4342, %v4507
  %v4720 = vadd.f32 %v4343, %v4510
  %v4721 = vadd.f32 %v4344, %v4515
  %v4722 = vadd.f32 %v4345, %v4518
  %v4723 = vadd.f32 %v4346, %v4523
  %v4724 = vadd.f32 %v4347, %v4526
  %v4725 = vadd.f32 %v4348, %v4531
  %v4726 = vadd.f32 %v4349, %v4534
  %v4727 = vadd.f32 %v4350, %v4539
  %v4728 = vadd.f32 %v4351, %v4542
  %v4729 = vadd.f32 %v4352, %v4547
  %v4730 = vadd.f32 %v4353, %v4550
  %v4731 = vadd.f32 %v4354, %v4555
  %v4732 = vadd.f32 %v4355, %v4558
  %v4733 = vadd.f32 %v4356, %v4563
  %v4734 = vadd.f32 %v4357, %v4566
  %v4735 = vadd.f32 %v4358, %v4571
  %v4736 = vadd.f32 %v4359, %v4574
  %v4737 = vadd.f32 %v4360, %v4579
  %v4738 = vadd.f32 %v4361, %v4582
  %v4739 = vadd.f32 %v4362, %v4587
  %v4740 = vadd.f32 %v4363, %v4590
  %v4741 = vadd.f32 %v4364, %v4595
  %v4742 = vadd.f32 %v4365, %v4598
  %v4743 = vadd.f32 %v4366, %v4603
  %v4744 = vadd.f32 %v4367, %v4606
  %v4745 = vadd.f32 %v4368, %v4611
  %v4746 = vadd.f32 %v4369, %v4614
  %v4747 = vadd.f32 %v4370, %v4619
  %v4748 = vadd.f32 %v4371, %v4622
  %v4749 = vadd.f32 %v4372, %v4627
  %v4750 = vadd.f32 %v4373, %v4630
  %v4751 = vadd.f32 %v4374, %v4635
  %v4752 = vadd.f32 %v4375, %v4638
  %v4753 = vadd.f32 %v4376, %v4643
  %v4754 = vadd.f32 %v4377, %v4646
  %v4755 = vadd.f32 %v4378, %v4651
  %v4756 = vadd.f32 %v4379, %v4654
  %v4757 = vadd.f32 %v4380, %v4659
  %v4758 = vadd.f32 %v4381, %v4662
  %v4759 = vadd.f32 %v4382, %v4667
  %v4760 = vadd.f32 %v4383, %v4670
  %v4761 = vadd.f32 %v4384, %v4675
  %v4762 = vadd.f32 %v4385, %v4678
  %v4763 = vadd.f32 %v4386, %v4683
  %v4764 = vadd.f32 %v4387, %v4686
  %v4765 = vadd.f32 %v4388, %v4691
  %v4766 = vadd.f32 %v4389, %v4694
  %v4767 = vadd.f32 %v4390, %v4699
  %v4768 = vadd.f32 %v4391, %v4702
  %s4769 = scalar_lea.vmem %s1, 340
  %v4770 = vld [vmem:[%s4769] sm:$0xf]
  %v4771 = vld [vmem:[%s4769 + $0x4] sm:$0xf]
  %v4772 = vld [vmem:[%s4769 + $0x8] sm:$0xf]
  %v4773 = vld [vmem:[%s4769 + $0xc] sm:$0xf]
  %v4774 = vld [vmem:[%s4769 + $0x10] sm:$0x3]
  %v4780 = vunpack.c.l.b16 %v4770
  %v4781 = vunpack.c.l.b16 %v4771
  %v4782 = vunpack.c.l.b16 %v4772
  %v4783 = vunpack.c.l.b16 %v4773
  %v4784 = vunpack.c.l.b16 %v4774
  %v4785 = vpack.c.b16 %v4781, %v4780
  %v4786 = vpack.c.b16 %v4783, %v4782
  %v4787 = vpack.c.b16 %v4784, %v4784
  %v4791 = vsel %vm634, %v4787, 0
  %4793 = vmatprep.subr.bf16.mxu0 0
  %4794 = vmatpush1.bf16.msra.mxu0 0
  %4795 = vmatprep.subr.bf16.mxu0 0
  %4796 = vmatpush1.bf16.msra.mxu0 0
  %4797 = vmatprep.subr.bf16.mxu0 0
  %4798 = vmatpush1.bf16.msra.mxu0 0
  %4799 = vmatprep.subr.bf16.mxu0 0
  %4800 = vmatpush1.bf16.msra.mxu0 0
  %4801 = vmatprep.subr.bf16.mxu0 0
  %4802 = vmatpush1.bf16.msra.mxu0 0
  %4803 = vmatprep.subr.bf16.mxu0 0
  %4804 = vmatpush1.bf16.msra.mxu0 %v4791
  %4805 = vmatprep.subr.bf16.mxu0 0
  %4806 = vmatpush1.bf16.msra.mxu0 %v4786
  %4807 = vmatprep.subr.bf16.mxu0 0
  %4808 = vmatpush1.bf16.msra.mxu0 %v4785
  %4809 = vmatprep.subr.bf16.mxu0 0
  %4810 = vmatpush2.bf16.msra.mxu0 0
  %4811 = vmatprep.subr.bf16.mxu0 0
  %4812 = vmatpush2.bf16.msra.mxu0 0
  %4813 = vmatprep.subr.bf16.mxu0 0
  %4814 = vmatpush2.bf16.msra.mxu0 0
  %4815 = vmatprep.subr.bf16.mxu0 0
  %4816 = vmatpush2.bf16.msra.mxu0 0
  %4817 = vmatprep.subr.bf16.mxu0 0
  %4818 = vmatpush2.bf16.msra.mxu0 0
  %4819 = vmatprep.subr.bf16.mxu0 0
  %4820 = vmatpush2.bf16.msra.mxu0 0
  %4821 = vmatprep.subr.bf16.mxu0 0
  %4822 = vmatpush2.bf16.msra.mxu0 0
  %4823 = vmatprep.subr.bf16.mxu0 0
  %4824 = vmatpush2.bf16.msra.mxu0 0
  %4825 = vmatprep.mubr.bf16.mxu0 0
  %4826 = vmatmul.mubr.bf16.gmra.mxu0 %v2938
  %v4827 = vpop.f32.mrf.mxu0
  %v4828 = vadd.f32 0.0, %v4827
  %v4829 = vpop.f32.mrf.mxu0
  %v4830 = vpop.f32.mrf.mxu0
  %v4831 = vadd.f32 0.0, %v4830
  %v4832 = vpop.f32.mrf.mxu0
  %4833 = vmatprep.mubr.bf16.mxu0 0
  %4834 = vmatmul.mubr.bf16.gmra.mxu0 %v2941
  %v4835 = vpop.f32.mrf.mxu0
  %v4836 = vadd.f32 0.0, %v4835
  %v4837 = vpop.f32.mrf.mxu0
  %v4838 = vpop.f32.mrf.mxu0
  %v4839 = vadd.f32 0.0, %v4838
  %v4840 = vpop.f32.mrf.mxu0
  %4841 = vmatprep.mubr.bf16.mxu0 0
  %4842 = vmatmul.mubr.bf16.gmra.mxu0 %v2944
  %v4843 = vpop.f32.mrf.mxu0
  %v4844 = vadd.f32 0.0, %v4843
  %v4845 = vpop.f32.mrf.mxu0
  %v4846 = vpop.f32.mrf.mxu0
  %v4847 = vadd.f32 0.0, %v4846
  %v4848 = vpop.f32.mrf.mxu0
  %4849 = vmatprep.mubr.bf16.mxu0 0
  %4850 = vmatmul.mubr.bf16.gmra.mxu0 %v2947
  %v4851 = vpop.f32.mrf.mxu0
  %v4852 = vadd.f32 0.0, %v4851
  %v4853 = vpop.f32.mrf.mxu0
  %v4854 = vpop.f32.mrf.mxu0
  %v4855 = vadd.f32 0.0, %v4854
  %v4856 = vpop.f32.mrf.mxu0
  %4857 = vmatprep.mubr.bf16.mxu0 0
  %4858 = vmatmul.mubr.bf16.gmra.mxu0 %v2950
  %v4859 = vpop.f32.mrf.mxu0
  %v4860 = vadd.f32 0.0, %v4859
  %v4861 = vpop.f32.mrf.mxu0
  %v4862 = vpop.f32.mrf.mxu0
  %v4863 = vadd.f32 0.0, %v4862
  %v4864 = vpop.f32.mrf.mxu0
  %4865 = vmatprep.mubr.bf16.mxu0 0
  %4866 = vmatmul.mubr.bf16.gmra.mxu0 %v2953
  %v4867 = vpop.f32.mrf.mxu0
  %v4868 = vadd.f32 0.0, %v4867
  %v4869 = vpop.f32.mrf.mxu0
  %v4870 = vpop.f32.mrf.mxu0
  %v4871 = vadd.f32 0.0, %v4870
  %v4872 = vpop.f32.mrf.mxu0
  %4873 = vmatprep.mubr.bf16.mxu0 0
  %4874 = vmatmul.mubr.bf16.gmra.mxu0 %v2956
  %v4875 = vpop.f32.mrf.mxu0
  %v4876 = vadd.f32 0.0, %v4875
  %v4877 = vpop.f32.mrf.mxu0
  %v4878 = vpop.f32.mrf.mxu0
  %v4879 = vadd.f32 0.0, %v4878
  %v4880 = vpop.f32.mrf.mxu0
  %4881 = vmatprep.mubr.bf16.mxu0 0
  %4882 = vmatmul.mubr.bf16.gmra.mxu0 %v2959
  %v4883 = vpop.f32.mrf.mxu0
  %v4884 = vadd.f32 0.0, %v4883
  %v4885 = vpop.f32.mrf.mxu0
  %v4886 = vpop.f32.mrf.mxu0
  %v4887 = vadd.f32 0.0, %v4886
  %v4888 = vpop.f32.mrf.mxu0
  %4889 = vmatprep.mubr.bf16.mxu0 0
  %4890 = vmatmul.mubr.bf16.gmra.mxu0 %v2962
  %v4891 = vpop.f32.mrf.mxu0
  %v4892 = vadd.f32 0.0, %v4891
  %v4893 = vpop.f32.mrf.mxu0
  %v4894 = vpop.f32.mrf.mxu0
  %v4895 = vadd.f32 0.0, %v4894
  %v4896 = vpop.f32.mrf.mxu0
  %4897 = vmatprep.mubr.bf16.mxu0 0
  %4898 = vmatmul.mubr.bf16.gmra.mxu0 %v2965
  %v4899 = vpop.f32.mrf.mxu0
  %v4900 = vadd.f32 0.0, %v4899
  %v4901 = vpop.f32.mrf.mxu0
  %v4902 = vpop.f32.mrf.mxu0
  %v4903 = vadd.f32 0.0, %v4902
  %v4904 = vpop.f32.mrf.mxu0
  %4905 = vmatprep.mubr.bf16.mxu0 0
  %4906 = vmatmul.mubr.bf16.gmra.mxu0 %v2968
  %v4907 = vpop.f32.mrf.mxu0
  %v4908 = vadd.f32 0.0, %v4907
  %v4909 = vpop.f32.mrf.mxu0
  %v4910 = vpop.f32.mrf.mxu0
  %v4911 = vadd.f32 0.0, %v4910
  %v4912 = vpop.f32.mrf.mxu0
  %4913 = vmatprep.mubr.bf16.mxu0 0
  %4914 = vmatmul.mubr.bf16.gmra.mxu0 %v2971
  %v4915 = vpop.f32.mrf.mxu0
  %v4916 = vadd.f32 0.0, %v4915
  %v4917 = vpop.f32.mrf.mxu0
  %v4918 = vpop.f32.mrf.mxu0
  %v4919 = vadd.f32 0.0, %v4918
  %v4920 = vpop.f32.mrf.mxu0
  %4921 = vmatprep.mubr.bf16.mxu0 0
  %4922 = vmatmul.mubr.bf16.gmra.mxu0 %v2974
  %v4923 = vpop.f32.mrf.mxu0
  %v4924 = vadd.f32 0.0, %v4923
  %v4925 = vpop.f32.mrf.mxu0
  %v4926 = vpop.f32.mrf.mxu0
  %v4927 = vadd.f32 0.0, %v4926
  %v4928 = vpop.f32.mrf.mxu0
  %4929 = vmatprep.mubr.bf16.mxu0 0
  %4930 = vmatmul.mubr.bf16.gmra.mxu0 %v2977
  %v4931 = vpop.f32.mrf.mxu0
  %v4932 = vadd.f32 0.0, %v4931
  %v4933 = vpop.f32.mrf.mxu0
  %v4934 = vpop.f32.mrf.mxu0
  %v4935 = vadd.f32 0.0, %v4934
  %v4936 = vpop.f32.mrf.mxu0
  %4937 = vmatprep.mubr.bf16.mxu0 0
  %4938 = vmatmul.mubr.bf16.gmra.mxu0 %v2980
  %v4939 = vpop.f32.mrf.mxu0
  %v4940 = vadd.f32 0.0, %v4939
  %v4941 = vpop.f32.mrf.mxu0
  %v4942 = vpop.f32.mrf.mxu0
  %v4943 = vadd.f32 0.0, %v4942
  %v4944 = vpop.f32.mrf.mxu0
  %4945 = vmatprep.mubr.bf16.mxu0 0
  %4946 = vmatmul.mubr.bf16.gmra.mxu0 %v2983
  %v4947 = vpop.f32.mrf.mxu0
  %v4948 = vadd.f32 0.0, %v4947
  %v4949 = vpop.f32.mrf.mxu0
  %v4950 = vpop.f32.mrf.mxu0
  %v4951 = vadd.f32 0.0, %v4950
  %v4952 = vpop.f32.mrf.mxu0
  %4953 = vmatprep.mubr.bf16.mxu0 0
  %4954 = vmatmul.mubr.bf16.gmra.mxu0 %v2986
  %v4955 = vpop.f32.mrf.mxu0
  %v4956 = vadd.f32 0.0, %v4955
  %v4957 = vpop.f32.mrf.mxu0
  %v4958 = vpop.f32.mrf.mxu0
  %v4959 = vadd.f32 0.0, %v4958
  %v4960 = vpop.f32.mrf.mxu0
  %4961 = vmatprep.mubr.bf16.mxu0 0
  %4962 = vmatmul.mubr.bf16.gmra.mxu0 %v2989
  %v4963 = vpop.f32.mrf.mxu0
  %v4964 = vadd.f32 0.0, %v4963
  %v4965 = vpop.f32.mrf.mxu0
  %v4966 = vpop.f32.mrf.mxu0
  %v4967 = vadd.f32 0.0, %v4966
  %v4968 = vpop.f32.mrf.mxu0
  %4969 = vmatprep.mubr.bf16.mxu0 0
  %4970 = vmatmul.mubr.bf16.gmra.mxu0 %v2992
  %v4971 = vpop.f32.mrf.mxu0
  %v4972 = vadd.f32 0.0, %v4971
  %v4973 = vpop.f32.mrf.mxu0
  %v4974 = vpop.f32.mrf.mxu0
  %v4975 = vadd.f32 0.0, %v4974
  %v4976 = vpop.f32.mrf.mxu0
  %4977 = vmatprep.mubr.bf16.mxu0 0
  %4978 = vmatmul.mubr.bf16.gmra.mxu0 %v2995
  %v4979 = vpop.f32.mrf.mxu0
  %v4980 = vadd.f32 0.0, %v4979
  %v4981 = vpop.f32.mrf.mxu0
  %v4982 = vpop.f32.mrf.mxu0
  %v4983 = vadd.f32 0.0, %v4982
  %v4984 = vpop.f32.mrf.mxu0
  %4985 = vmatprep.mubr.bf16.mxu0 0
  %4986 = vmatmul.mubr.bf16.gmra.mxu0 %v2998
  %v4987 = vpop.f32.mrf.mxu0
  %v4988 = vadd.f32 0.0, %v4987
  %v4989 = vpop.f32.mrf.mxu0
  %v4990 = vpop.f32.mrf.mxu0
  %v4991 = vadd.f32 0.0, %v4990
  %v4992 = vpop.f32.mrf.mxu0
  %4993 = vmatprep.mubr.bf16.mxu0 0
  %4994 = vmatmul.mubr.bf16.gmra.mxu0 %v3001
  %v4995 = vpop.f32.mrf.mxu0
  %v4996 = vadd.f32 0.0, %v4995
  %v4997 = vpop.f32.mrf.mxu0
  %v4998 = vpop.f32.mrf.mxu0
  %v4999 = vadd.f32 0.0, %v4998
  %v5000 = vpop.f32.mrf.mxu0
  %5001 = vmatprep.mubr.bf16.mxu0 0
  %5002 = vmatmul.mubr.bf16.gmra.mxu0 %v3004
  %v5003 = vpop.f32.mrf.mxu0
  %v5004 = vadd.f32 0.0, %v5003
  %v5005 = vpop.f32.mrf.mxu0
  %v5006 = vpop.f32.mrf.mxu0
  %v5007 = vadd.f32 0.0, %v5006
  %v5008 = vpop.f32.mrf.mxu0
  %5009 = vmatprep.mubr.bf16.mxu0 0
  %5010 = vmatmul.mubr.bf16.gmra.mxu0 %v3007
  %v5011 = vpop.f32.mrf.mxu0
  %v5012 = vadd.f32 0.0, %v5011
  %v5013 = vpop.f32.mrf.mxu0
  %v5014 = vpop.f32.mrf.mxu0
  %v5015 = vadd.f32 0.0, %v5014
  %v5016 = vpop.f32.mrf.mxu0
  %5017 = vmatprep.mubr.bf16.mxu0 0
  %5018 = vmatmul.mubr.bf16.gmra.mxu0 %v3010
  %v5019 = vpop.f32.mrf.mxu0
  %v5020 = vadd.f32 0.0, %v5019
  %v5021 = vpop.f32.mrf.mxu0
  %v5022 = vpop.f32.mrf.mxu0
  %v5023 = vadd.f32 0.0, %v5022
  %v5024 = vpop.f32.mrf.mxu0
  %5025 = vmatprep.mubr.bf16.mxu0 0
  %5026 = vmatmul.mubr.bf16.gmra.mxu0 %v3013
  %v5027 = vpop.f32.mrf.mxu0
  %v5028 = vadd.f32 0.0, %v5027
  %v5029 = vpop.f32.mrf.mxu0
  %v5030 = vpop.f32.mrf.mxu0
  %v5031 = vadd.f32 0.0, %v5030
  %v5032 = vpop.f32.mrf.mxu0
  %5033 = vmatprep.mubr.bf16.mxu0 0
  %5034 = vmatmul.mubr.bf16.gmra.mxu0 %v3016
  %v5035 = vpop.f32.mrf.mxu0
  %v5036 = vadd.f32 0.0, %v5035
  %v5037 = vpop.f32.mrf.mxu0
  %v5038 = vpop.f32.mrf.mxu0
  %v5039 = vadd.f32 0.0, %v5038
  %v5040 = vpop.f32.mrf.mxu0
  %5041 = vmatprep.mubr.bf16.mxu0 0
  %5042 = vmatmul.mubr.bf16.gmra.mxu0 %v3019
  %v5043 = vpop.f32.mrf.mxu0
  %v5044 = vadd.f32 0.0, %v5043
  %v5045 = vpop.f32.mrf.mxu0
  %v5046 = vpop.f32.mrf.mxu0
  %v5047 = vadd.f32 0.0, %v5046
  %v5048 = vpop.f32.mrf.mxu0
  %5049 = vmatprep.mubr.bf16.mxu0 0
  %5050 = vmatmul.mubr.bf16.gmra.mxu0 %v3022
  %v5051 = vpop.f32.mrf.mxu0
  %v5052 = vadd.f32 0.0, %v5051
  %v5053 = vpop.f32.mrf.mxu0
  %v5054 = vpop.f32.mrf.mxu0
  %v5055 = vadd.f32 0.0, %v5054
  %v5056 = vpop.f32.mrf.mxu0
  %5057 = vmatprep.mubr.bf16.mxu0 0
  %5058 = vmatmul.mubr.bf16.gmra.mxu0 %v3025
  %v5059 = vpop.f32.mrf.mxu0
  %v5060 = vadd.f32 0.0, %v5059
  %v5061 = vpop.f32.mrf.mxu0
  %v5062 = vpop.f32.mrf.mxu0
  %v5063 = vadd.f32 0.0, %v5062
  %v5064 = vpop.f32.mrf.mxu0
  %5065 = vmatprep.mubr.bf16.mxu0 0
  %5066 = vmatmul.mubr.bf16.gmra.mxu0 %v3028
  %v5067 = vpop.f32.mrf.mxu0
  %v5068 = vadd.f32 0.0, %v5067
  %v5069 = vpop.f32.mrf.mxu0
  %v5070 = vpop.f32.mrf.mxu0
  %v5071 = vadd.f32 0.0, %v5070
  %v5072 = vpop.f32.mrf.mxu0
  %5073 = vmatprep.mubr.bf16.mxu0 0
  %5074 = vmatmul.mubr.bf16.gmra.mxu0 %v3031
  %v5075 = vpop.f32.mrf.mxu0
  %v5076 = vadd.f32 0.0, %v5075
  %v5077 = vpop.f32.mrf.mxu0
  %v5078 = vpop.f32.mrf.mxu0
  %v5079 = vadd.f32 0.0, %v5078
  %v5080 = vpop.f32.mrf.mxu0
  %5081 = vdwg.mxu0
  %v5082 = vadd.f32 %v4705, %v4828
  %v5083 = vadd.f32 %v4706, %v4831
  %v5084 = vadd.f32 %v4707, %v4836
  %v5085 = vadd.f32 %v4708, %v4839
  %v5086 = vadd.f32 %v4709, %v4844
  %v5087 = vadd.f32 %v4710, %v4847
  %v5088 = vadd.f32 %v4711, %v4852
  %v5089 = vadd.f32 %v4712, %v4855
  %v5090 = vadd.f32 %v4713, %v4860
  %v5091 = vadd.f32 %v4714, %v4863
  %v5092 = vadd.f32 %v4715, %v4868
  %v5093 = vadd.f32 %v4716, %v4871
  %v5094 = vadd.f32 %v4717, %v4876
  %v5095 = vadd.f32 %v4718, %v4879
  %v5096 = vadd.f32 %v4719, %v4884
  %v5097 = vadd.f32 %v4720, %v4887
  %v5098 = vadd.f32 %v4721, %v4892
  %v5099 = vadd.f32 %v4722, %v4895
  %v5100 = vadd.f32 %v4723, %v4900
  %v5101 = vadd.f32 %v4724, %v4903
  %v5102 = vadd.f32 %v4725, %v4908
  %v5103 = vadd.f32 %v4726, %v4911
  %v5104 = vadd.f32 %v4727, %v4916
  %v5105 = vadd.f32 %v4728, %v4919
  %v5106 = vadd.f32 %v4729, %v4924
  %v5107 = vadd.f32 %v4730, %v4927
  %v5108 = vadd.f32 %v4731, %v4932
  %v5109 = vadd.f32 %v4732, %v4935
  %v5110 = vadd.f32 %v4733, %v4940
  %v5111 = vadd.f32 %v4734, %v4943
  %v5112 = vadd.f32 %v4735, %v4948
  %v5113 = vadd.f32 %v4736, %v4951
  %v5114 = vadd.f32 %v4737, %v4956
  %v5115 = vadd.f32 %v4738, %v4959
  %v5116 = vadd.f32 %v4739, %v4964
  %v5117 = vadd.f32 %v4740, %v4967
  %v5118 = vadd.f32 %v4741, %v4972
  %v5119 = vadd.f32 %v4742, %v4975
  %v5120 = vadd.f32 %v4743, %v4980
  %v5121 = vadd.f32 %v4744, %v4983
  %v5122 = vadd.f32 %v4745, %v4988
  %v5123 = vadd.f32 %v4746, %v4991
  %v5124 = vadd.f32 %v4747, %v4996
  %v5125 = vadd.f32 %v4748, %v4999
  %v5126 = vadd.f32 %v4749, %v5004
  %v5127 = vadd.f32 %v4750, %v5007
  %v5128 = vadd.f32 %v4751, %v5012
  %v5129 = vadd.f32 %v4752, %v5015
  %v5130 = vadd.f32 %v4753, %v5020
  %v5131 = vadd.f32 %v4754, %v5023
  %v5132 = vadd.f32 %v4755, %v5028
  %v5133 = vadd.f32 %v4756, %v5031
  %v5134 = vadd.f32 %v4757, %v5036
  %v5135 = vadd.f32 %v4758, %v5039
  %v5136 = vadd.f32 %v4759, %v5044
  %v5137 = vadd.f32 %v4760, %v5047
  %v5138 = vadd.f32 %v4761, %v5052
  %v5139 = vadd.f32 %v4762, %v5055
  %v5140 = vadd.f32 %v4763, %v5060
  %v5141 = vadd.f32 %v4764, %v5063
  %v5142 = vadd.f32 %v4765, %v5068
  %v5143 = vadd.f32 %v4766, %v5071
  %v5144 = vadd.f32 %v4767, %v5076
  %v5145 = vadd.f32 %v4768, %v5079
  %v5146 = vmax.f32 %v3325, %v5082
  %v5147 = vmax.f32 %v3326, %v5083
  %v5148 = vmax.f32 %v3327, %v5084
  %v5149 = vmax.f32 %v3328, %v5085
  %v5150 = vmax.f32 %v3329, %v5086
  %v5151 = vmax.f32 %v3330, %v5087
  %v5152 = vmax.f32 %v3331, %v5088
  %v5153 = vmax.f32 %v3332, %v5089
  %v5154 = vmax.f32 %v3333, %v5090
  %v5155 = vmax.f32 %v3334, %v5091
  %v5156 = vmax.f32 %v3335, %v5092
  %v5157 = vmax.f32 %v3336, %v5093
  %v5158 = vmax.f32 %v3337, %v5094
  %v5159 = vmax.f32 %v3338, %v5095
  %v5160 = vmax.f32 %v3339, %v5096
  %v5161 = vmax.f32 %v3340, %v5097
  %v5162 = vmax.f32 %v3341, %v5098
  %v5163 = vmax.f32 %v3342, %v5099
  %v5164 = vmax.f32 %v3343, %v5100
  %v5165 = vmax.f32 %v3344, %v5101
  %v5166 = vmax.f32 %v3345, %v5102
  %v5167 = vmax.f32 %v3346, %v5103
  %v5168 = vmax.f32 %v3347, %v5104
  %v5169 = vmax.f32 %v3348, %v5105
  %v5170 = vmax.f32 %v3349, %v5106
  %v5171 = vmax.f32 %v3350, %v5107
  %v5172 = vmax.f32 %v3351, %v5108
  %v5173 = vmax.f32 %v3352, %v5109
  %v5174 = vmax.f32 %v3353, %v5110
  %v5175 = vmax.f32 %v3354, %v5111
  %v5176 = vmax.f32 %v3355, %v5112
  %v5177 = vmax.f32 %v3356, %v5113
  %v5178 = vmax.f32 %v3357, %v5114
  %v5179 = vmax.f32 %v3358, %v5115
  %v5180 = vmax.f32 %v3359, %v5116
  %v5181 = vmax.f32 %v3360, %v5117
  %v5182 = vmax.f32 %v3361, %v5118
  %v5183 = vmax.f32 %v3362, %v5119
  %v5184 = vmax.f32 %v3363, %v5120
  %v5185 = vmax.f32 %v3364, %v5121
  %v5186 = vmax.f32 %v3365, %v5122
  %v5187 = vmax.f32 %v3366, %v5123
  %v5188 = vmax.f32 %v3367, %v5124
  %v5189 = vmax.f32 %v3368, %v5125
  %v5190 = vmax.f32 %v3369, %v5126
  %v5191 = vmax.f32 %v3370, %v5127
  %v5192 = vmax.f32 %v3371, %v5128
  %v5193 = vmax.f32 %v3372, %v5129
  %v5194 = vmax.f32 %v3373, %v5130
  %v5195 = vmax.f32 %v3374, %v5131
  %v5196 = vmax.f32 %v3375, %v5132
  %v5197 = vmax.f32 %v3376, %v5133
  %v5198 = vmax.f32 %v3377, %v5134
  %v5199 = vmax.f32 %v3378, %v5135
  %v5200 = vmax.f32 %v3379, %v5136
  %v5201 = vmax.f32 %v3380, %v5137
  %v5202 = vmax.f32 %v3381, %v5138
  %v5203 = vmax.f32 %v3382, %v5139
  %v5204 = vmax.f32 %v3383, %v5140
  %v5205 = vmax.f32 %v3384, %v5141
  %v5206 = vmax.f32 %v3385, %v5142
  %v5207 = vmax.f32 %v3386, %v5143
  %v5208 = vmax.f32 %v3387, %v5144
  %v5209 = vmax.f32 %v3388, %v5145
  %s5210 = scalar_lea.vmem %s1, 40
  %v5211 = vld [vmem:[%s5210] sm:$0xf]
  %v5212 = vld [vmem:[%s5210 + $0x4] sm:$0xf]
  %v5213 = vld [vmem:[%s5210 + $0x8] sm:$0xf]
  %v5214 = vld [vmem:[%s5210 + $0xc] sm:$0xf]
  %v5215 = vld [vmem:[%s5210 + $0x10] sm:$0x3]
  %s5216 = scalar_lea.vmem %s1, 120
  %v5217 = vld [vmem:[%s5216] sm:$0xf]
  %v5218 = vld [vmem:[%s5216 + $0x4] sm:$0xf]
  %v5219 = vld [vmem:[%s5216 + $0x8] sm:$0xf]
  %v5220 = vld [vmem:[%s5216 + $0xc] sm:$0xf]
  %v5221 = vld [vmem:[%s5216 + $0x10] sm:$0x3]
  %v5227 = vunpack.c.l.b16 %v5217
  %v5228 = vunpack.c.l.b16 %v5218
  %v5229 = vunpack.c.l.b16 %v5219
  %v5230 = vunpack.c.l.b16 %v5220
  %v5231 = vunpack.c.l.b16 %v5221
  %v5232 = vpack.c.b16 %v5228, %v5227
  %v5233 = vpack.c.b16 %v5230, %v5229
  %v5234 = vpack.c.b16 %v5231, %v5231
  %v5238 = vsel %vm634, %v5234, 0
  %5240 = vmatprep.subr.bf16.mxu0 0
  %5241 = vmatpush1.bf16.msra.mxu0 0
  %5242 = vmatprep.subr.bf16.mxu0 0
  %5243 = vmatpush1.bf16.msra.mxu0 0
  %5244 = vmatprep.subr.bf16.mxu0 0
  %5245 = vmatpush1.bf16.msra.mxu0 0
  %5246 = vmatprep.subr.bf16.mxu0 0
  %5247 = vmatpush1.bf16.msra.mxu0 0
  %5248 = vmatprep.subr.bf16.mxu0 0
  %5249 = vmatpush1.bf16.msra.mxu0 0
  %5250 = vmatprep.subr.bf16.mxu0 0
  %5251 = vmatpush1.bf16.msra.mxu0 %v5238
  %5252 = vmatprep.subr.bf16.mxu0 0
  %5253 = vmatpush1.bf16.msra.mxu0 %v5233
  %5254 = vmatprep.subr.bf16.mxu0 0
  %5255 = vmatpush1.bf16.msra.mxu0 %v5232
  %5256 = vmatprep.subr.bf16.mxu0 0
  %5257 = vmatpush2.bf16.msra.mxu0 0
  %5258 = vmatprep.subr.bf16.mxu0 0
  %5259 = vmatpush2.bf16.msra.mxu0 0
  %5260 = vmatprep.subr.bf16.mxu0 0
  %5261 = vmatpush2.bf16.msra.mxu0 0
  %5262 = vmatprep.subr.bf16.mxu0 0
  %5263 = vmatpush2.bf16.msra.mxu0 0
  %5264 = vmatprep.subr.bf16.mxu0 0
  %5265 = vmatpush2.bf16.msra.mxu0 0
  %5266 = vmatprep.subr.bf16.mxu0 0
  %5267 = vmatpush2.bf16.msra.mxu0 0
  %5268 = vmatprep.subr.bf16.mxu0 0
  %5269 = vmatpush2.bf16.msra.mxu0 0
  %5270 = vmatprep.subr.bf16.mxu0 0
  %5271 = vmatpush2.bf16.msra.mxu0 0
  %5272 = vmatprep.mubr.bf16.mxu0 0
  %5273 = vmatmul.mubr.bf16.gmra.mxu0 %v539
  %v5274 = vpop.f32.mrf.mxu0
  %v5275 = vadd.f32 0.0, %v5274
  %v5276 = vpop.f32.mrf.mxu0
  %v5277 = vpop.f32.mrf.mxu0
  %v5278 = vadd.f32 0.0, %v5277
  %v5279 = vpop.f32.mrf.mxu0
  %5280 = vmatprep.mubr.bf16.mxu0 0
  %5281 = vmatmul.mubr.bf16.gmra.mxu0 %v542
  %v5282 = vpop.f32.mrf.mxu0
  %v5283 = vadd.f32 0.0, %v5282
  %v5284 = vpop.f32.mrf.mxu0
  %v5285 = vpop.f32.mrf.mxu0
  %v5286 = vadd.f32 0.0, %v5285
  %v5287 = vpop.f32.mrf.mxu0
  %5288 = vmatprep.mubr.bf16.mxu0 0
  %5289 = vmatmul.mubr.bf16.gmra.mxu0 %v545
  %v5290 = vpop.f32.mrf.mxu0
  %v5291 = vadd.f32 0.0, %v5290
  %v5292 = vpop.f32.mrf.mxu0
  %v5293 = vpop.f32.mrf.mxu0
  %v5294 = vadd.f32 0.0, %v5293
  %v5295 = vpop.f32.mrf.mxu0
  %5296 = vmatprep.mubr.bf16.mxu0 0
  %5297 = vmatmul.mubr.bf16.gmra.mxu0 %v548
  %v5298 = vpop.f32.mrf.mxu0
  %v5299 = vadd.f32 0.0, %v5298
  %v5300 = vpop.f32.mrf.mxu0
  %v5301 = vpop.f32.mrf.mxu0
  %v5302 = vadd.f32 0.0, %v5301
  %v5303 = vpop.f32.mrf.mxu0
  %5304 = vmatprep.mubr.bf16.mxu0 0
  %5305 = vmatmul.mubr.bf16.gmra.mxu0 %v551
  %v5306 = vpop.f32.mrf.mxu0
  %v5307 = vadd.f32 0.0, %v5306
  %v5308 = vpop.f32.mrf.mxu0
  %v5309 = vpop.f32.mrf.mxu0
  %v5310 = vadd.f32 0.0, %v5309
  %v5311 = vpop.f32.mrf.mxu0
  %5312 = vmatprep.mubr.bf16.mxu0 0
  %5313 = vmatmul.mubr.bf16.gmra.mxu0 %v554
  %v5314 = vpop.f32.mrf.mxu0
  %v5315 = vadd.f32 0.0, %v5314
  %v5316 = vpop.f32.mrf.mxu0
  %v5317 = vpop.f32.mrf.mxu0
  %v5318 = vadd.f32 0.0, %v5317
  %v5319 = vpop.f32.mrf.mxu0
  %5320 = vmatprep.mubr.bf16.mxu0 0
  %5321 = vmatmul.mubr.bf16.gmra.mxu0 %v557
  %v5322 = vpop.f32.mrf.mxu0
  %v5323 = vadd.f32 0.0, %v5322
  %v5324 = vpop.f32.mrf.mxu0
  %v5325 = vpop.f32.mrf.mxu0
  %v5326 = vadd.f32 0.0, %v5325
  %v5327 = vpop.f32.mrf.mxu0
  %5328 = vmatprep.mubr.bf16.mxu0 0
  %5329 = vmatmul.mubr.bf16.gmra.mxu0 %v560
  %v5330 = vpop.f32.mrf.mxu0
  %v5331 = vadd.f32 0.0, %v5330
  %v5332 = vpop.f32.mrf.mxu0
  %v5333 = vpop.f32.mrf.mxu0
  %v5334 = vadd.f32 0.0, %v5333
  %v5335 = vpop.f32.mrf.mxu0
  %5336 = vmatprep.mubr.bf16.mxu0 0
  %5337 = vmatmul.mubr.bf16.gmra.mxu0 %v563
  %v5338 = vpop.f32.mrf.mxu0
  %v5339 = vadd.f32 0.0, %v5338
  %v5340 = vpop.f32.mrf.mxu0
  %v5341 = vpop.f32.mrf.mxu0
  %v5342 = vadd.f32 0.0, %v5341
  %v5343 = vpop.f32.mrf.mxu0
  %5344 = vmatprep.mubr.bf16.mxu0 0
  %5345 = vmatmul.mubr.bf16.gmra.mxu0 %v566
  %v5346 = vpop.f32.mrf.mxu0
  %v5347 = vadd.f32 0.0, %v5346
  %v5348 = vpop.f32.mrf.mxu0
  %v5349 = vpop.f32.mrf.mxu0
  %v5350 = vadd.f32 0.0, %v5349
  %v5351 = vpop.f32.mrf.mxu0
  %5352 = vmatprep.mubr.bf16.mxu0 0
  %5353 = vmatmul.mubr.bf16.gmra.mxu0 %v569
  %v5354 = vpop.f32.mrf.mxu0
  %v5355 = vadd.f32 0.0, %v5354
  %v5356 = vpop.f32.mrf.mxu0
  %v5357 = vpop.f32.mrf.mxu0
  %v5358 = vadd.f32 0.0, %v5357
  %v5359 = vpop.f32.mrf.mxu0
  %5360 = vmatprep.mubr.bf16.mxu0 0
  %5361 = vmatmul.mubr.bf16.gmra.mxu0 %v572
  %v5362 = vpop.f32.mrf.mxu0
  %v5363 = vadd.f32 0.0, %v5362
  %v5364 = vpop.f32.mrf.mxu0
  %v5365 = vpop.f32.mrf.mxu0
  %v5366 = vadd.f32 0.0, %v5365
  %v5367 = vpop.f32.mrf.mxu0
  %5368 = vmatprep.mubr.bf16.mxu0 0
  %5369 = vmatmul.mubr.bf16.gmra.mxu0 %v575
  %v5370 = vpop.f32.mrf.mxu0
  %v5371 = vadd.f32 0.0, %v5370
  %v5372 = vpop.f32.mrf.mxu0
  %v5373 = vpop.f32.mrf.mxu0
  %v5374 = vadd.f32 0.0, %v5373
  %v5375 = vpop.f32.mrf.mxu0
  %5376 = vmatprep.mubr.bf16.mxu0 0
  %5377 = vmatmul.mubr.bf16.gmra.mxu0 %v578
  %v5378 = vpop.f32.mrf.mxu0
  %v5379 = vadd.f32 0.0, %v5378
  %v5380 = vpop.f32.mrf.mxu0
  %v5381 = vpop.f32.mrf.mxu0
  %v5382 = vadd.f32 0.0, %v5381
  %v5383 = vpop.f32.mrf.mxu0
  %5384 = vmatprep.mubr.bf16.mxu0 0
  %5385 = vmatmul.mubr.bf16.gmra.mxu0 %v581
  %v5386 = vpop.f32.mrf.mxu0
  %v5387 = vadd.f32 0.0, %v5386
  %v5388 = vpop.f32.mrf.mxu0
  %v5389 = vpop.f32.mrf.mxu0
  %v5390 = vadd.f32 0.0, %v5389
  %v5391 = vpop.f32.mrf.mxu0
  %5392 = vmatprep.mubr.bf16.mxu0 0
  %5393 = vmatmul.mubr.bf16.gmra.mxu0 %v584
  %v5394 = vpop.f32.mrf.mxu0
  %v5395 = vadd.f32 0.0, %v5394
  %v5396 = vpop.f32.mrf.mxu0
  %v5397 = vpop.f32.mrf.mxu0
  %v5398 = vadd.f32 0.0, %v5397
  %v5399 = vpop.f32.mrf.mxu0
  %5400 = vmatprep.mubr.bf16.mxu0 0
  %5401 = vmatmul.mubr.bf16.gmra.mxu0 %v587
  %v5402 = vpop.f32.mrf.mxu0
  %v5403 = vadd.f32 0.0, %v5402
  %v5404 = vpop.f32.mrf.mxu0
  %v5405 = vpop.f32.mrf.mxu0
  %v5406 = vadd.f32 0.0, %v5405
  %v5407 = vpop.f32.mrf.mxu0
  %5408 = vmatprep.mubr.bf16.mxu0 0
  %5409 = vmatmul.mubr.bf16.gmra.mxu0 %v590
  %v5410 = vpop.f32.mrf.mxu0
  %v5411 = vadd.f32 0.0, %v5410
  %v5412 = vpop.f32.mrf.mxu0
  %v5413 = vpop.f32.mrf.mxu0
  %v5414 = vadd.f32 0.0, %v5413
  %v5415 = vpop.f32.mrf.mxu0
  %5416 = vmatprep.mubr.bf16.mxu0 0
  %5417 = vmatmul.mubr.bf16.gmra.mxu0 %v593
  %v5418 = vpop.f32.mrf.mxu0
  %v5419 = vadd.f32 0.0, %v5418
  %v5420 = vpop.f32.mrf.mxu0
  %v5421 = vpop.f32.mrf.mxu0
  %v5422 = vadd.f32 0.0, %v5421
  %v5423 = vpop.f32.mrf.mxu0
  %5424 = vmatprep.mubr.bf16.mxu0 0
  %5425 = vmatmul.mubr.bf16.gmra.mxu0 %v596
  %v5426 = vpop.f32.mrf.mxu0
  %v5427 = vadd.f32 0.0, %v5426
  %v5428 = vpop.f32.mrf.mxu0
  %v5429 = vpop.f32.mrf.mxu0
  %v5430 = vadd.f32 0.0, %v5429
  %v5431 = vpop.f32.mrf.mxu0
  %5432 = vmatprep.mubr.bf16.mxu0 0
  %5433 = vmatmul.mubr.bf16.gmra.mxu0 %v599
  %v5434 = vpop.f32.mrf.mxu0
  %v5435 = vadd.f32 0.0, %v5434
  %v5436 = vpop.f32.mrf.mxu0
  %v5437 = vpop.f32.mrf.mxu0
  %v5438 = vadd.f32 0.0, %v5437
  %v5439 = vpop.f32.mrf.mxu0
  %5440 = vmatprep.mubr.bf16.mxu0 0
  %5441 = vmatmul.mubr.bf16.gmra.mxu0 %v602
  %v5442 = vpop.f32.mrf.mxu0
  %v5443 = vadd.f32 0.0, %v5442
  %v5444 = vpop.f32.mrf.mxu0
  %v5445 = vpop.f32.mrf.mxu0
  %v5446 = vadd.f32 0.0, %v5445
  %v5447 = vpop.f32.mrf.mxu0
  %5448 = vmatprep.mubr.bf16.mxu0 0
  %5449 = vmatmul.mubr.bf16.gmra.mxu0 %v605
  %v5450 = vpop.f32.mrf.mxu0
  %v5451 = vadd.f32 0.0, %v5450
  %v5452 = vpop.f32.mrf.mxu0
  %v5453 = vpop.f32.mrf.mxu0
  %v5454 = vadd.f32 0.0, %v5453
  %v5455 = vpop.f32.mrf.mxu0
  %5456 = vmatprep.mubr.bf16.mxu0 0
  %5457 = vmatmul.mubr.bf16.gmra.mxu0 %v608
  %v5458 = vpop.f32.mrf.mxu0
  %v5459 = vadd.f32 0.0, %v5458
  %v5460 = vpop.f32.mrf.mxu0
  %v5461 = vpop.f32.mrf.mxu0
  %v5462 = vadd.f32 0.0, %v5461
  %v5463 = vpop.f32.mrf.mxu0
  %5464 = vmatprep.mubr.bf16.mxu0 0
  %5465 = vmatmul.mubr.bf16.gmra.mxu0 %v611
  %v5466 = vpop.f32.mrf.mxu0
  %v5467 = vadd.f32 0.0, %v5466
  %v5468 = vpop.f32.mrf.mxu0
  %v5469 = vpop.f32.mrf.mxu0
  %v5470 = vadd.f32 0.0, %v5469
  %v5471 = vpop.f32.mrf.mxu0
  %5472 = vmatprep.mubr.bf16.mxu0 0
  %5473 = vmatmul.mubr.bf16.gmra.mxu0 %v614
  %v5474 = vpop.f32.mrf.mxu0
  %v5475 = vadd.f32 0.0, %v5474
  %v5476 = vpop.f32.mrf.mxu0
  %v5477 = vpop.f32.mrf.mxu0
  %v5478 = vadd.f32 0.0, %v5477
  %v5479 = vpop.f32.mrf.mxu0
  %5480 = vmatprep.mubr.bf16.mxu0 0
  %5481 = vmatmul.mubr.bf16.gmra.mxu0 %v617
  %v5482 = vpop.f32.mrf.mxu0
  %v5483 = vadd.f32 0.0, %v5482
  %v5484 = vpop.f32.mrf.mxu0
  %v5485 = vpop.f32.mrf.mxu0
  %v5486 = vadd.f32 0.0, %v5485
  %v5487 = vpop.f32.mrf.mxu0
  %5488 = vmatprep.mubr.bf16.mxu0 0
  %5489 = vmatmul.mubr.bf16.gmra.mxu0 %v620
  %v5490 = vpop.f32.mrf.mxu0
  %v5491 = vadd.f32 0.0, %v5490
  %v5492 = vpop.f32.mrf.mxu0
  %v5493 = vpop.f32.mrf.mxu0
  %v5494 = vadd.f32 0.0, %v5493
  %v5495 = vpop.f32.mrf.mxu0
  %5496 = vmatprep.mubr.bf16.mxu0 0
  %5497 = vmatmul.mubr.bf16.gmra.mxu0 %v623
  %v5498 = vpop.f32.mrf.mxu0
  %v5499 = vadd.f32 0.0, %v5498
  %v5500 = vpop.f32.mrf.mxu0
  %v5501 = vpop.f32.mrf.mxu0
  %v5502 = vadd.f32 0.0, %v5501
  %v5503 = vpop.f32.mrf.mxu0
  %5504 = vmatprep.mubr.bf16.mxu0 0
  %5505 = vmatmul.mubr.bf16.gmra.mxu0 %v626
  %v5506 = vpop.f32.mrf.mxu0
  %v5507 = vadd.f32 0.0, %v5506
  %v5508 = vpop.f32.mrf.mxu0
  %v5509 = vpop.f32.mrf.mxu0
  %v5510 = vadd.f32 0.0, %v5509
  %v5511 = vpop.f32.mrf.mxu0
  %5512 = vmatprep.mubr.bf16.mxu0 0
  %5513 = vmatmul.mubr.bf16.gmra.mxu0 %v629
  %v5514 = vpop.f32.mrf.mxu0
  %v5515 = vadd.f32 0.0, %v5514
  %v5516 = vpop.f32.mrf.mxu0
  %v5517 = vpop.f32.mrf.mxu0
  %v5518 = vadd.f32 0.0, %v5517
  %v5519 = vpop.f32.mrf.mxu0
  %5520 = vmatprep.mubr.bf16.mxu0 0
  %5521 = vmatmul.mubr.bf16.gmra.mxu0 %v632
  %v5522 = vpop.f32.mrf.mxu0
  %v5523 = vadd.f32 0.0, %v5522
  %v5524 = vpop.f32.mrf.mxu0
  %v5525 = vpop.f32.mrf.mxu0
  %v5526 = vadd.f32 0.0, %v5525
  %v5527 = vpop.f32.mrf.mxu0
  %5528 = vdwg.mxu0
  %v5534 = vunpack.c.l.b16 %v5211
  %v5535 = vunpack.c.l.b16 %v5212
  %v5536 = vunpack.c.l.b16 %v5213
  %v5537 = vunpack.c.l.b16 %v5214
  %v5538 = vunpack.c.l.b16 %v5215
  %v5539 = vpack.c.b16 %v5535, %v5534
  %v5540 = vpack.c.b16 %v5537, %v5536
  %v5541 = vpack.c.b16 %v5538, %v5538
  %v5545 = vsel %vm634, %v5541, 0
  %5547 = vmatprep.subr.bf16.mxu0 0
  %5548 = vmatpush1.bf16.msra.mxu0 0
  %5549 = vmatprep.subr.bf16.mxu0 0
  %5550 = vmatpush1.bf16.msra.mxu0 0
  %5551 = vmatprep.subr.bf16.mxu0 0
  %5552 = vmatpush1.bf16.msra.mxu0 0
  %5553 = vmatprep.subr.bf16.mxu0 0
  %5554 = vmatpush1.bf16.msra.mxu0 0
  %5555 = vmatprep.subr.bf16.mxu0 0
  %5556 = vmatpush1.bf16.msra.mxu0 0
  %5557 = vmatprep.subr.bf16.mxu0 0
  %5558 = vmatpush1.bf16.msra.mxu0 %v5545
  %5559 = vmatprep.subr.bf16.mxu0 0
  %5560 = vmatpush1.bf16.msra.mxu0 %v5540
  %5561 = vmatprep.subr.bf16.mxu0 0
  %5562 = vmatpush1.bf16.msra.mxu0 %v5539
  %5563 = vmatprep.subr.bf16.mxu0 0
  %5564 = vmatpush2.bf16.msra.mxu0 0
  %5565 = vmatprep.subr.bf16.mxu0 0
  %5566 = vmatpush2.bf16.msra.mxu0 0
  %5567 = vmatprep.subr.bf16.mxu0 0
  %5568 = vmatpush2.bf16.msra.mxu0 0
  %5569 = vmatprep.subr.bf16.mxu0 0
  %5570 = vmatpush2.bf16.msra.mxu0 0
  %5571 = vmatprep.subr.bf16.mxu0 0
  %5572 = vmatpush2.bf16.msra.mxu0 0
  %5573 = vmatprep.subr.bf16.mxu0 0
  %5574 = vmatpush2.bf16.msra.mxu0 0
  %5575 = vmatprep.subr.bf16.mxu0 0
  %5576 = vmatpush2.bf16.msra.mxu0 0
  %5577 = vmatprep.subr.bf16.mxu0 0
  %5578 = vmatpush2.bf16.msra.mxu0 0
  %5579 = vmatprep.mubr.bf16.mxu0 0
  %5580 = vmatmul.mubr.bf16.gmra.mxu0 %v1103
  %v5581 = vpop.f32.mrf.mxu0
  %v5582 = vadd.f32 %v5275, %v5581
  %v5583 = vpop.f32.mrf.mxu0
  %v5584 = vpop.f32.mrf.mxu0
  %v5585 = vadd.f32 %v5278, %v5584
  %v5586 = vpop.f32.mrf.mxu0
  %5587 = vmatprep.mubr.bf16.mxu0 0
  %5588 = vmatmul.mubr.bf16.gmra.mxu0 %v1106
  %v5589 = vpop.f32.mrf.mxu0
  %v5590 = vadd.f32 %v5283, %v5589
  %v5591 = vpop.f32.mrf.mxu0
  %v5592 = vpop.f32.mrf.mxu0
  %v5593 = vadd.f32 %v5286, %v5592
  %v5594 = vpop.f32.mrf.mxu0
  %5595 = vmatprep.mubr.bf16.mxu0 0
  %5596 = vmatmul.mubr.bf16.gmra.mxu0 %v1109
  %v5597 = vpop.f32.mrf.mxu0
  %v5598 = vadd.f32 %v5291, %v5597
  %v5599 = vpop.f32.mrf.mxu0
  %v5600 = vpop.f32.mrf.mxu0
  %v5601 = vadd.f32 %v5294, %v5600
  %v5602 = vpop.f32.mrf.mxu0
  %5603 = vmatprep.mubr.bf16.mxu0 0
  %5604 = vmatmul.mubr.bf16.gmra.mxu0 %v1112
  %v5605 = vpop.f32.mrf.mxu0
  %v5606 = vadd.f32 %v5299, %v5605
  %v5607 = vpop.f32.mrf.mxu0
  %v5608 = vpop.f32.mrf.mxu0
  %v5609 = vadd.f32 %v5302, %v5608
  %v5610 = vpop.f32.mrf.mxu0
  %5611 = vmatprep.mubr.bf16.mxu0 0
  %5612 = vmatmul.mubr.bf16.gmra.mxu0 %v1115
  %v5613 = vpop.f32.mrf.mxu0
  %v5614 = vadd.f32 %v5307, %v5613
  %v5615 = vpop.f32.mrf.mxu0
  %v5616 = vpop.f32.mrf.mxu0
  %v5617 = vadd.f32 %v5310, %v5616
  %v5618 = vpop.f32.mrf.mxu0
  %5619 = vmatprep.mubr.bf16.mxu0 0
  %5620 = vmatmul.mubr.bf16.gmra.mxu0 %v1118
  %v5621 = vpop.f32.mrf.mxu0
  %v5622 = vadd.f32 %v5315, %v5621
  %v5623 = vpop.f32.mrf.mxu0
  %v5624 = vpop.f32.mrf.mxu0
  %v5625 = vadd.f32 %v5318, %v5624
  %v5626 = vpop.f32.mrf.mxu0
  %5627 = vmatprep.mubr.bf16.mxu0 0
  %5628 = vmatmul.mubr.bf16.gmra.mxu0 %v1121
  %v5629 = vpop.f32.mrf.mxu0
  %v5630 = vadd.f32 %v5323, %v5629
  %v5631 = vpop.f32.mrf.mxu0
  %v5632 = vpop.f32.mrf.mxu0
  %v5633 = vadd.f32 %v5326, %v5632
  %v5634 = vpop.f32.mrf.mxu0
  %5635 = vmatprep.mubr.bf16.mxu0 0
  %5636 = vmatmul.mubr.bf16.gmra.mxu0 %v1124
  %v5637 = vpop.f32.mrf.mxu0
  %v5638 = vadd.f32 %v5331, %v5637
  %v5639 = vpop.f32.mrf.mxu0
  %v5640 = vpop.f32.mrf.mxu0
  %v5641 = vadd.f32 %v5334, %v5640
  %v5642 = vpop.f32.mrf.mxu0
  %5643 = vmatprep.mubr.bf16.mxu0 0
  %5644 = vmatmul.mubr.bf16.gmra.mxu0 %v1127
  %v5645 = vpop.f32.mrf.mxu0
  %v5646 = vadd.f32 %v5339, %v5645
  %v5647 = vpop.f32.mrf.mxu0
  %v5648 = vpop.f32.mrf.mxu0
  %v5649 = vadd.f32 %v5342, %v5648
  %v5650 = vpop.f32.mrf.mxu0
  %5651 = vmatprep.mubr.bf16.mxu0 0
  %5652 = vmatmul.mubr.bf16.gmra.mxu0 %v1130
  %v5653 = vpop.f32.mrf.mxu0
  %v5654 = vadd.f32 %v5347, %v5653
  %v5655 = vpop.f32.mrf.mxu0
  %v5656 = vpop.f32.mrf.mxu0
  %v5657 = vadd.f32 %v5350, %v5656
  %v5658 = vpop.f32.mrf.mxu0
  %5659 = vmatprep.mubr.bf16.mxu0 0
  %5660 = vmatmul.mubr.bf16.gmra.mxu0 %v1133
  %v5661 = vpop.f32.mrf.mxu0
  %v5662 = vadd.f32 %v5355, %v5661
  %v5663 = vpop.f32.mrf.mxu0
  %v5664 = vpop.f32.mrf.mxu0
  %v5665 = vadd.f32 %v5358, %v5664
  %v5666 = vpop.f32.mrf.mxu0
  %5667 = vmatprep.mubr.bf16.mxu0 0
  %5668 = vmatmul.mubr.bf16.gmra.mxu0 %v1136
  %v5669 = vpop.f32.mrf.mxu0
  %v5670 = vadd.f32 %v5363, %v5669
  %v5671 = vpop.f32.mrf.mxu0
  %v5672 = vpop.f32.mrf.mxu0
  %v5673 = vadd.f32 %v5366, %v5672
  %v5674 = vpop.f32.mrf.mxu0
  %5675 = vmatprep.mubr.bf16.mxu0 0
  %5676 = vmatmul.mubr.bf16.gmra.mxu0 %v1139
  %v5677 = vpop.f32.mrf.mxu0
  %v5678 = vadd.f32 %v5371, %v5677
  %v5679 = vpop.f32.mrf.mxu0
  %v5680 = vpop.f32.mrf.mxu0
  %v5681 = vadd.f32 %v5374, %v5680
  %v5682 = vpop.f32.mrf.mxu0
  %5683 = vmatprep.mubr.bf16.mxu0 0
  %5684 = vmatmul.mubr.bf16.gmra.mxu0 %v1142
  %v5685 = vpop.f32.mrf.mxu0
  %v5686 = vadd.f32 %v5379, %v5685
  %v5687 = vpop.f32.mrf.mxu0
  %v5688 = vpop.f32.mrf.mxu0
  %v5689 = vadd.f32 %v5382, %v5688
  %v5690 = vpop.f32.mrf.mxu0
  %5691 = vmatprep.mubr.bf16.mxu0 0
  %5692 = vmatmul.mubr.bf16.gmra.mxu0 %v1145
  %v5693 = vpop.f32.mrf.mxu0
  %v5694 = vadd.f32 %v5387, %v5693
  %v5695 = vpop.f32.mrf.mxu0
  %v5696 = vpop.f32.mrf.mxu0
  %v5697 = vadd.f32 %v5390, %v5696
  %v5698 = vpop.f32.mrf.mxu0
  %5699 = vmatprep.mubr.bf16.mxu0 0
  %5700 = vmatmul.mubr.bf16.gmra.mxu0 %v1148
  %v5701 = vpop.f32.mrf.mxu0
  %v5702 = vadd.f32 %v5395, %v5701
  %v5703 = vpop.f32.mrf.mxu0
  %v5704 = vpop.f32.mrf.mxu0
  %v5705 = vadd.f32 %v5398, %v5704
  %v5706 = vpop.f32.mrf.mxu0
  %5707 = vmatprep.mubr.bf16.mxu0 0
  %5708 = vmatmul.mubr.bf16.gmra.mxu0 %v1151
  %v5709 = vpop.f32.mrf.mxu0
  %v5710 = vadd.f32 %v5403, %v5709
  %v5711 = vpop.f32.mrf.mxu0
  %v5712 = vpop.f32.mrf.mxu0
  %v5713 = vadd.f32 %v5406, %v5712
  %v5714 = vpop.f32.mrf.mxu0
  %5715 = vmatprep.mubr.bf16.mxu0 0
  %5716 = vmatmul.mubr.bf16.gmra.mxu0 %v1154
  %v5717 = vpop.f32.mrf.mxu0
  %v5718 = vadd.f32 %v5411, %v5717
  %v5719 = vpop.f32.mrf.mxu0
  %v5720 = vpop.f32.mrf.mxu0
  %v5721 = vadd.f32 %v5414, %v5720
  %v5722 = vpop.f32.mrf.mxu0
  %5723 = vmatprep.mubr.bf16.mxu0 0
  %5724 = vmatmul.mubr.bf16.gmra.mxu0 %v1157
  %v5725 = vpop.f32.mrf.mxu0
  %v5726 = vadd.f32 %v5419, %v5725
  %v5727 = vpop.f32.mrf.mxu0
  %v5728 = vpop.f32.mrf.mxu0
  %v5729 = vadd.f32 %v5422, %v5728
  %v5730 = vpop.f32.mrf.mxu0
  %5731 = vmatprep.mubr.bf16.mxu0 0
  %5732 = vmatmul.mubr.bf16.gmra.mxu0 %v1160
  %v5733 = vpop.f32.mrf.mxu0
  %v5734 = vadd.f32 %v5427, %v5733
  %v5735 = vpop.f32.mrf.mxu0
  %v5736 = vpop.f32.mrf.mxu0
  %v5737 = vadd.f32 %v5430, %v5736
  %v5738 = vpop.f32.mrf.mxu0
  %5739 = vmatprep.mubr.bf16.mxu0 0
  %5740 = vmatmul.mubr.bf16.gmra.mxu0 %v1163
  %v5741 = vpop.f32.mrf.mxu0
  %v5742 = vadd.f32 %v5435, %v5741
  %v5743 = vpop.f32.mrf.mxu0
  %v5744 = vpop.f32.mrf.mxu0
  %v5745 = vadd.f32 %v5438, %v5744
  %v5746 = vpop.f32.mrf.mxu0
  %5747 = vmatprep.mubr.bf16.mxu0 0
  %5748 = vmatmul.mubr.bf16.gmra.mxu0 %v1166
  %v5749 = vpop.f32.mrf.mxu0
  %v5750 = vadd.f32 %v5443, %v5749
  %v5751 = vpop.f32.mrf.mxu0
  %v5752 = vpop.f32.mrf.mxu0
  %v5753 = vadd.f32 %v5446, %v5752
  %v5754 = vpop.f32.mrf.mxu0
  %5755 = vmatprep.mubr.bf16.mxu0 0
  %5756 = vmatmul.mubr.bf16.gmra.mxu0 %v1169
  %v5757 = vpop.f32.mrf.mxu0
  %v5758 = vadd.f32 %v5451, %v5757
  %v5759 = vpop.f32.mrf.mxu0
  %v5760 = vpop.f32.mrf.mxu0
  %v5761 = vadd.f32 %v5454, %v5760
  %v5762 = vpop.f32.mrf.mxu0
  %5763 = vmatprep.mubr.bf16.mxu0 0
  %5764 = vmatmul.mubr.bf16.gmra.mxu0 %v1172
  %v5765 = vpop.f32.mrf.mxu0
  %v5766 = vadd.f32 %v5459, %v5765
  %v5767 = vpop.f32.mrf.mxu0
  %v5768 = vpop.f32.mrf.mxu0
  %v5769 = vadd.f32 %v5462, %v5768
  %v5770 = vpop.f32.mrf.mxu0
  %5771 = vmatprep.mubr.bf16.mxu0 0
  %5772 = vmatmul.mubr.bf16.gmra.mxu0 %v1175
  %v5773 = vpop.f32.mrf.mxu0
  %v5774 = vadd.f32 %v5467, %v5773
  %v5775 = vpop.f32.mrf.mxu0
  %v5776 = vpop.f32.mrf.mxu0
  %v5777 = vadd.f32 %v5470, %v5776
  %v5778 = vpop.f32.mrf.mxu0
  %5779 = vmatprep.mubr.bf16.mxu0 0
  %5780 = vmatmul.mubr.bf16.gmra.mxu0 %v1178
  %v5781 = vpop.f32.mrf.mxu0
  %v5782 = vadd.f32 %v5475, %v5781
  %v5783 = vpop.f32.mrf.mxu0
  %v5784 = vpop.f32.mrf.mxu0
  %v5785 = vadd.f32 %v5478, %v5784
  %v5786 = vpop.f32.mrf.mxu0
  %5787 = vmatprep.mubr.bf16.mxu0 0
  %5788 = vmatmul.mubr.bf16.gmra.mxu0 %v1181
  %v5789 = vpop.f32.mrf.mxu0
  %v5790 = vadd.f32 %v5483, %v5789
  %v5791 = vpop.f32.mrf.mxu0
  %v5792 = vpop.f32.mrf.mxu0
  %v5793 = vadd.f32 %v5486, %v5792
  %v5794 = vpop.f32.mrf.mxu0
  %5795 = vmatprep.mubr.bf16.mxu0 0
  %5796 = vmatmul.mubr.bf16.gmra.mxu0 %v1184
  %v5797 = vpop.f32.mrf.mxu0
  %v5798 = vadd.f32 %v5491, %v5797
  %v5799 = vpop.f32.mrf.mxu0
  %v5800 = vpop.f32.mrf.mxu0
  %v5801 = vadd.f32 %v5494, %v5800
  %v5802 = vpop.f32.mrf.mxu0
  %5803 = vmatprep.mubr.bf16.mxu0 0
  %5804 = vmatmul.mubr.bf16.gmra.mxu0 %v1187
  %v5805 = vpop.f32.mrf.mxu0
  %v5806 = vadd.f32 %v5499, %v5805
  %v5807 = vpop.f32.mrf.mxu0
  %v5808 = vpop.f32.mrf.mxu0
  %v5809 = vadd.f32 %v5502, %v5808
  %v5810 = vpop.f32.mrf.mxu0
  %5811 = vmatprep.mubr.bf16.mxu0 0
  %5812 = vmatmul.mubr.bf16.gmra.mxu0 %v1190
  %v5813 = vpop.f32.mrf.mxu0
  %v5814 = vadd.f32 %v5507, %v5813
  %v5815 = vpop.f32.mrf.mxu0
  %v5816 = vpop.f32.mrf.mxu0
  %v5817 = vadd.f32 %v5510, %v5816
  %v5818 = vpop.f32.mrf.mxu0
  %5819 = vmatprep.mubr.bf16.mxu0 0
  %5820 = vmatmul.mubr.bf16.gmra.mxu0 %v1193
  %v5821 = vpop.f32.mrf.mxu0
  %v5822 = vadd.f32 %v5515, %v5821
  %v5823 = vpop.f32.mrf.mxu0
  %v5824 = vpop.f32.mrf.mxu0
  %v5825 = vadd.f32 %v5518, %v5824
  %v5826 = vpop.f32.mrf.mxu0
  %5827 = vmatprep.mubr.bf16.mxu0 0
  %5828 = vmatmul.mubr.bf16.gmra.mxu0 %v1196
  %v5829 = vpop.f32.mrf.mxu0
  %v5830 = vadd.f32 %v5523, %v5829
  %v5831 = vpop.f32.mrf.mxu0
  %v5832 = vpop.f32.mrf.mxu0
  %v5833 = vadd.f32 %v5526, %v5832
  %v5834 = vpop.f32.mrf.mxu0
  %5835 = vdwg.mxu0
  %s5836 = scalar_lea.vmem %s1, 200
  %v5837 = vld [vmem:[%s5836] sm:$0xf]
  %v5838 = vld [vmem:[%s5836 + $0x4] sm:$0xf]
  %v5839 = vld [vmem:[%s5836 + $0x8] sm:$0xf]
  %v5840 = vld [vmem:[%s5836 + $0xc] sm:$0xf]
  %v5841 = vld [vmem:[%s5836 + $0x10] sm:$0x3]
  %v5847 = vunpack.c.l.b16 %v5837
  %v5848 = vunpack.c.l.b16 %v5838
  %v5849 = vunpack.c.l.b16 %v5839
  %v5850 = vunpack.c.l.b16 %v5840
  %v5851 = vunpack.c.l.b16 %v5841
  %v5852 = vpack.c.b16 %v5848, %v5847
  %v5853 = vpack.c.b16 %v5850, %v5849
  %v5854 = vpack.c.b16 %v5851, %v5851
  %v5858 = vsel %vm634, %v5854, 0
  %5860 = vmatprep.subr.bf16.mxu0 0
  %5861 = vmatpush1.bf16.msra.mxu0 0
  %5862 = vmatprep.subr.bf16.mxu0 0
  %5863 = vmatpush1.bf16.msra.mxu0 0
  %5864 = vmatprep.subr.bf16.mxu0 0
  %5865 = vmatpush1.bf16.msra.mxu0 0
  %5866 = vmatprep.subr.bf16.mxu0 0
  %5867 = vmatpush1.bf16.msra.mxu0 0
  %5868 = vmatprep.subr.bf16.mxu0 0
  %5869 = vmatpush1.bf16.msra.mxu0 0
  %5870 = vmatprep.subr.bf16.mxu0 0
  %5871 = vmatpush1.bf16.msra.mxu0 %v5858
  %5872 = vmatprep.subr.bf16.mxu0 0
  %5873 = vmatpush1.bf16.msra.mxu0 %v5853
  %5874 = vmatprep.subr.bf16.mxu0 0
  %5875 = vmatpush1.bf16.msra.mxu0 %v5852
  %5876 = vmatprep.subr.bf16.mxu0 0
  %5877 = vmatpush2.bf16.msra.mxu0 0
  %5878 = vmatprep.subr.bf16.mxu0 0
  %5879 = vmatpush2.bf16.msra.mxu0 0
  %5880 = vmatprep.subr.bf16.mxu0 0
  %5881 = vmatpush2.bf16.msra.mxu0 0
  %5882 = vmatprep.subr.bf16.mxu0 0
  %5883 = vmatpush2.bf16.msra.mxu0 0
  %5884 = vmatprep.subr.bf16.mxu0 0
  %5885 = vmatpush2.bf16.msra.mxu0 0
  %5886 = vmatprep.subr.bf16.mxu0 0
  %5887 = vmatpush2.bf16.msra.mxu0 0
  %5888 = vmatprep.subr.bf16.mxu0 0
  %5889 = vmatpush2.bf16.msra.mxu0 0
  %5890 = vmatprep.subr.bf16.mxu0 0
  %5891 = vmatpush2.bf16.msra.mxu0 0
  %5892 = vmatprep.mubr.bf16.mxu0 0
  %5893 = vmatmul.mubr.bf16.gmra.mxu0 %v1672
  %v5894 = vpop.f32.mrf.mxu0
  %v5895 = vadd.f32 0.0, %v5894
  %v5896 = vpop.f32.mrf.mxu0
  %v5897 = vpop.f32.mrf.mxu0
  %v5898 = vadd.f32 0.0, %v5897
  %v5899 = vpop.f32.mrf.mxu0
  %5900 = vmatprep.mubr.bf16.mxu0 0
  %5901 = vmatmul.mubr.bf16.gmra.mxu0 %v1675
  %v5902 = vpop.f32.mrf.mxu0
  %v5903 = vadd.f32 0.0, %v5902
  %v5904 = vpop.f32.mrf.mxu0
  %v5905 = vpop.f32.mrf.mxu0
  %v5906 = vadd.f32 0.0, %v5905
  %v5907 = vpop.f32.mrf.mxu0
  %5908 = vmatprep.mubr.bf16.mxu0 0
  %5909 = vmatmul.mubr.bf16.gmra.mxu0 %v1678
  %v5910 = vpop.f32.mrf.mxu0
  %v5911 = vadd.f32 0.0, %v5910
  %v5912 = vpop.f32.mrf.mxu0
  %v5913 = vpop.f32.mrf.mxu0
  %v5914 = vadd.f32 0.0, %v5913
  %v5915 = vpop.f32.mrf.mxu0
  %5916 = vmatprep.mubr.bf16.mxu0 0
  %5917 = vmatmul.mubr.bf16.gmra.mxu0 %v1681
  %v5918 = vpop.f32.mrf.mxu0
  %v5919 = vadd.f32 0.0, %v5918
  %v5920 = vpop.f32.mrf.mxu0
  %v5921 = vpop.f32.mrf.mxu0
  %v5922 = vadd.f32 0.0, %v5921
  %v5923 = vpop.f32.mrf.mxu0
  %5924 = vmatprep.mubr.bf16.mxu0 0
  %5925 = vmatmul.mubr.bf16.gmra.mxu0 %v1684
  %v5926 = vpop.f32.mrf.mxu0
  %v5927 = vadd.f32 0.0, %v5926
  %v5928 = vpop.f32.mrf.mxu0
  %v5929 = vpop.f32.mrf.mxu0
  %v5930 = vadd.f32 0.0, %v5929
  %v5931 = vpop.f32.mrf.mxu0
  %5932 = vmatprep.mubr.bf16.mxu0 0
  %5933 = vmatmul.mubr.bf16.gmra.mxu0 %v1687
  %v5934 = vpop.f32.mrf.mxu0
  %v5935 = vadd.f32 0.0, %v5934
  %v5936 = vpop.f32.mrf.mxu0
  %v5937 = vpop.f32.mrf.mxu0
  %v5938 = vadd.f32 0.0, %v5937
  %v5939 = vpop.f32.mrf.mxu0
  %5940 = vmatprep.mubr.bf16.mxu0 0
  %5941 = vmatmul.mubr.bf16.gmra.mxu0 %v1690
  %v5942 = vpop.f32.mrf.mxu0
  %v5943 = vadd.f32 0.0, %v5942
  %v5944 = vpop.f32.mrf.mxu0
  %v5945 = vpop.f32.mrf.mxu0
  %v5946 = vadd.f32 0.0, %v5945
  %v5947 = vpop.f32.mrf.mxu0
  %5948 = vmatprep.mubr.bf16.mxu0 0
  %5949 = vmatmul.mubr.bf16.gmra.mxu0 %v1693
  %v5950 = vpop.f32.mrf.mxu0
  %v5951 = vadd.f32 0.0, %v5950
  %v5952 = vpop.f32.mrf.mxu0
  %v5953 = vpop.f32.mrf.mxu0
  %v5954 = vadd.f32 0.0, %v5953
  %v5955 = vpop.f32.mrf.mxu0
  %5956 = vmatprep.mubr.bf16.mxu0 0
  %5957 = vmatmul.mubr.bf16.gmra.mxu0 %v1696
  %v5958 = vpop.f32.mrf.mxu0
  %v5959 = vadd.f32 0.0, %v5958
  %v5960 = vpop.f32.mrf.mxu0
  %v5961 = vpop.f32.mrf.mxu0
  %v5962 = vadd.f32 0.0, %v5961
  %v5963 = vpop.f32.mrf.mxu0
  %5964 = vmatprep.mubr.bf16.mxu0 0
  %5965 = vmatmul.mubr.bf16.gmra.mxu0 %v1699
  %v5966 = vpop.f32.mrf.mxu0
  %v5967 = vadd.f32 0.0, %v5966
  %v5968 = vpop.f32.mrf.mxu0
  %v5969 = vpop.f32.mrf.mxu0
  %v5970 = vadd.f32 0.0, %v5969
  %v5971 = vpop.f32.mrf.mxu0
  %5972 = vmatprep.mubr.bf16.mxu0 0
  %5973 = vmatmul.mubr.bf16.gmra.mxu0 %v1702
  %v5974 = vpop.f32.mrf.mxu0
  %v5975 = vadd.f32 0.0, %v5974
  %v5976 = vpop.f32.mrf.mxu0
  %v5977 = vpop.f32.mrf.mxu0
  %v5978 = vadd.f32 0.0, %v5977
  %v5979 = vpop.f32.mrf.mxu0
  %5980 = vmatprep.mubr.bf16.mxu0 0
  %5981 = vmatmul.mubr.bf16.gmra.mxu0 %v1705
  %v5982 = vpop.f32.mrf.mxu0
  %v5983 = vadd.f32 0.0, %v5982
  %v5984 = vpop.f32.mrf.mxu0
  %v5985 = vpop.f32.mrf.mxu0
  %v5986 = vadd.f32 0.0, %v5985
  %v5987 = vpop.f32.mrf.mxu0
  %5988 = vmatprep.mubr.bf16.mxu0 0
  %5989 = vmatmul.mubr.bf16.gmra.mxu0 %v1708
  %v5990 = vpop.f32.mrf.mxu0
  %v5991 = vadd.f32 0.0, %v5990
  %v5992 = vpop.f32.mrf.mxu0
  %v5993 = vpop.f32.mrf.mxu0
  %v5994 = vadd.f32 0.0, %v5993
  %v5995 = vpop.f32.mrf.mxu0
  %5996 = vmatprep.mubr.bf16.mxu0 0
  %5997 = vmatmul.mubr.bf16.gmra.mxu0 %v1711
  %v5998 = vpop.f32.mrf.mxu0
  %v5999 = vadd.f32 0.0, %v5998
  %v6000 = vpop.f32.mrf.mxu0
  %v6001 = vpop.f32.mrf.mxu0
  %v6002 = vadd.f32 0.0, %v6001
  %v6003 = vpop.f32.mrf.mxu0
  %6004 = vmatprep.mubr.bf16.mxu0 0
  %6005 = vmatmul.mubr.bf16.gmra.mxu0 %v1714
  %v6006 = vpop.f32.mrf.mxu0
  %v6007 = vadd.f32 0.0, %v6006
  %v6008 = vpop.f32.mrf.mxu0
  %v6009 = vpop.f32.mrf.mxu0
  %v6010 = vadd.f32 0.0, %v6009
  %v6011 = vpop.f32.mrf.mxu0
  %6012 = vmatprep.mubr.bf16.mxu0 0
  %6013 = vmatmul.mubr.bf16.gmra.mxu0 %v1717
  %v6014 = vpop.f32.mrf.mxu0
  %v6015 = vadd.f32 0.0, %v6014
  %v6016 = vpop.f32.mrf.mxu0
  %v6017 = vpop.f32.mrf.mxu0
  %v6018 = vadd.f32 0.0, %v6017
  %v6019 = vpop.f32.mrf.mxu0
  %6020 = vmatprep.mubr.bf16.mxu0 0
  %6021 = vmatmul.mubr.bf16.gmra.mxu0 %v1720
  %v6022 = vpop.f32.mrf.mxu0
  %v6023 = vadd.f32 0.0, %v6022
  %v6024 = vpop.f32.mrf.mxu0
  %v6025 = vpop.f32.mrf.mxu0
  %v6026 = vadd.f32 0.0, %v6025
  %v6027 = vpop.f32.mrf.mxu0
  %6028 = vmatprep.mubr.bf16.mxu0 0
  %6029 = vmatmul.mubr.bf16.gmra.mxu0 %v1723
  %v6030 = vpop.f32.mrf.mxu0
  %v6031 = vadd.f32 0.0, %v6030
  %v6032 = vpop.f32.mrf.mxu0
  %v6033 = vpop.f32.mrf.mxu0
  %v6034 = vadd.f32 0.0, %v6033
  %v6035 = vpop.f32.mrf.mxu0
  %6036 = vmatprep.mubr.bf16.mxu0 0
  %6037 = vmatmul.mubr.bf16.gmra.mxu0 %v1726
  %v6038 = vpop.f32.mrf.mxu0
  %v6039 = vadd.f32 0.0, %v6038
  %v6040 = vpop.f32.mrf.mxu0
  %v6041 = vpop.f32.mrf.mxu0
  %v6042 = vadd.f32 0.0, %v6041
  %v6043 = vpop.f32.mrf.mxu0
  %6044 = vmatprep.mubr.bf16.mxu0 0
  %6045 = vmatmul.mubr.bf16.gmra.mxu0 %v1729
  %v6046 = vpop.f32.mrf.mxu0
  %v6047 = vadd.f32 0.0, %v6046
  %v6048 = vpop.f32.mrf.mxu0
  %v6049 = vpop.f32.mrf.mxu0
  %v6050 = vadd.f32 0.0, %v6049
  %v6051 = vpop.f32.mrf.mxu0
  %6052 = vmatprep.mubr.bf16.mxu0 0
  %6053 = vmatmul.mubr.bf16.gmra.mxu0 %v1732
  %v6054 = vpop.f32.mrf.mxu0
  %v6055 = vadd.f32 0.0, %v6054
  %v6056 = vpop.f32.mrf.mxu0
  %v6057 = vpop.f32.mrf.mxu0
  %v6058 = vadd.f32 0.0, %v6057
  %v6059 = vpop.f32.mrf.mxu0
  %6060 = vmatprep.mubr.bf16.mxu0 0
  %6061 = vmatmul.mubr.bf16.gmra.mxu0 %v1735
  %v6062 = vpop.f32.mrf.mxu0
  %v6063 = vadd.f32 0.0, %v6062
  %v6064 = vpop.f32.mrf.mxu0
  %v6065 = vpop.f32.mrf.mxu0
  %v6066 = vadd.f32 0.0, %v6065
  %v6067 = vpop.f32.mrf.mxu0
  %6068 = vmatprep.mubr.bf16.mxu0 0
  %6069 = vmatmul.mubr.bf16.gmra.mxu0 %v1738
  %v6070 = vpop.f32.mrf.mxu0
  %v6071 = vadd.f32 0.0, %v6070
  %v6072 = vpop.f32.mrf.mxu0
  %v6073 = vpop.f32.mrf.mxu0
  %v6074 = vadd.f32 0.0, %v6073
  %v6075 = vpop.f32.mrf.mxu0
  %6076 = vmatprep.mubr.bf16.mxu0 0
  %6077 = vmatmul.mubr.bf16.gmra.mxu0 %v1741
  %v6078 = vpop.f32.mrf.mxu0
  %v6079 = vadd.f32 0.0, %v6078
  %v6080 = vpop.f32.mrf.mxu0
  %v6081 = vpop.f32.mrf.mxu0
  %v6082 = vadd.f32 0.0, %v6081
  %v6083 = vpop.f32.mrf.mxu0
  %6084 = vmatprep.mubr.bf16.mxu0 0
  %6085 = vmatmul.mubr.bf16.gmra.mxu0 %v1744
  %v6086 = vpop.f32.mrf.mxu0
  %v6087 = vadd.f32 0.0, %v6086
  %v6088 = vpop.f32.mrf.mxu0
  %v6089 = vpop.f32.mrf.mxu0
  %v6090 = vadd.f32 0.0, %v6089
  %v6091 = vpop.f32.mrf.mxu0
  %6092 = vmatprep.mubr.bf16.mxu0 0
  %6093 = vmatmul.mubr.bf16.gmra.mxu0 %v1747
  %v6094 = vpop.f32.mrf.mxu0
  %v6095 = vadd.f32 0.0, %v6094
  %v6096 = vpop.f32.mrf.mxu0
  %v6097 = vpop.f32.mrf.mxu0
  %v6098 = vadd.f32 0.0, %v6097
  %v6099 = vpop.f32.mrf.mxu0
  %6100 = vmatprep.mubr.bf16.mxu0 0
  %6101 = vmatmul.mubr.bf16.gmra.mxu0 %v1750
  %v6102 = vpop.f32.mrf.mxu0
  %v6103 = vadd.f32 0.0, %v6102
  %v6104 = vpop.f32.mrf.mxu0
  %v6105 = vpop.f32.mrf.mxu0
  %v6106 = vadd.f32 0.0, %v6105
  %v6107 = vpop.f32.mrf.mxu0
  %6108 = vmatprep.mubr.bf16.mxu0 0
  %6109 = vmatmul.mubr.bf16.gmra.mxu0 %v1753
  %v6110 = vpop.f32.mrf.mxu0
  %v6111 = vadd.f32 0.0, %v6110
  %v6112 = vpop.f32.mrf.mxu0
  %v6113 = vpop.f32.mrf.mxu0
  %v6114 = vadd.f32 0.0, %v6113
  %v6115 = vpop.f32.mrf.mxu0
  %6116 = vmatprep.mubr.bf16.mxu0 0
  %6117 = vmatmul.mubr.bf16.gmra.mxu0 %v1756
  %v6118 = vpop.f32.mrf.mxu0
  %v6119 = vadd.f32 0.0, %v6118
  %v6120 = vpop.f32.mrf.mxu0
  %v6121 = vpop.f32.mrf.mxu0
  %v6122 = vadd.f32 0.0, %v6121
  %v6123 = vpop.f32.mrf.mxu0
  %6124 = vmatprep.mubr.bf16.mxu0 0
  %6125 = vmatmul.mubr.bf16.gmra.mxu0 %v1759
  %v6126 = vpop.f32.mrf.mxu0
  %v6127 = vadd.f32 0.0, %v6126
  %v6128 = vpop.f32.mrf.mxu0
  %v6129 = vpop.f32.mrf.mxu0
  %v6130 = vadd.f32 0.0, %v6129
  %v6131 = vpop.f32.mrf.mxu0
  %6132 = vmatprep.mubr.bf16.mxu0 0
  %6133 = vmatmul.mubr.bf16.gmra.mxu0 %v1762
  %v6134 = vpop.f32.mrf.mxu0
  %v6135 = vadd.f32 0.0, %v6134
  %v6136 = vpop.f32.mrf.mxu0
  %v6137 = vpop.f32.mrf.mxu0
  %v6138 = vadd.f32 0.0, %v6137
  %v6139 = vpop.f32.mrf.mxu0
  %6140 = vmatprep.mubr.bf16.mxu0 0
  %6141 = vmatmul.mubr.bf16.gmra.mxu0 %v1765
  %v6142 = vpop.f32.mrf.mxu0
  %v6143 = vadd.f32 0.0, %v6142
  %v6144 = vpop.f32.mrf.mxu0
  %v6145 = vpop.f32.mrf.mxu0
  %v6146 = vadd.f32 0.0, %v6145
  %v6147 = vpop.f32.mrf.mxu0
  %6148 = vdwg.mxu0
  %v6149 = vadd.f32 %v5582, %v5895
  %v6150 = vadd.f32 %v5585, %v5898
  %v6151 = vadd.f32 %v5590, %v5903
  %v6152 = vadd.f32 %v5593, %v5906
  %v6153 = vadd.f32 %v5598, %v5911
  %v6154 = vadd.f32 %v5601, %v5914
  %v6155 = vadd.f32 %v5606, %v5919
  %v6156 = vadd.f32 %v5609, %v5922
  %v6157 = vadd.f32 %v5614, %v5927
  %v6158 = vadd.f32 %v5617, %v5930
  %v6159 = vadd.f32 %v5622, %v5935
  %v6160 = vadd.f32 %v5625, %v5938
  %v6161 = vadd.f32 %v5630, %v5943
  %v6162 = vadd.f32 %v5633, %v5946
  %v6163 = vadd.f32 %v5638, %v5951
  %v6164 = vadd.f32 %v5641, %v5954
  %v6165 = vadd.f32 %v5646, %v5959
  %v6166 = vadd.f32 %v5649, %v5962
  %v6167 = vadd.f32 %v5654, %v5967
  %v6168 = vadd.f32 %v5657, %v5970
  %v6169 = vadd.f32 %v5662, %v5975
  %v6170 = vadd.f32 %v5665, %v5978
  %v6171 = vadd.f32 %v5670, %v5983
  %v6172 = vadd.f32 %v5673, %v5986
  %v6173 = vadd.f32 %v5678, %v5991
  %v6174 = vadd.f32 %v5681, %v5994
  %v6175 = vadd.f32 %v5686, %v5999
  %v6176 = vadd.f32 %v5689, %v6002
  %v6177 = vadd.f32 %v5694, %v6007
  %v6178 = vadd.f32 %v5697, %v6010
  %v6179 = vadd.f32 %v5702, %v6015
  %v6180 = vadd.f32 %v5705, %v6018
  %v6181 = vadd.f32 %v5710, %v6023
  %v6182 = vadd.f32 %v5713, %v6026
  %v6183 = vadd.f32 %v5718, %v6031
  %v6184 = vadd.f32 %v5721, %v6034
  %v6185 = vadd.f32 %v5726, %v6039
  %v6186 = vadd.f32 %v5729, %v6042
  %v6187 = vadd.f32 %v5734, %v6047
  %v6188 = vadd.f32 %v5737, %v6050
  %v6189 = vadd.f32 %v5742, %v6055
  %v6190 = vadd.f32 %v5745, %v6058
  %v6191 = vadd.f32 %v5750, %v6063
  %v6192 = vadd.f32 %v5753, %v6066
  %v6193 = vadd.f32 %v5758, %v6071
  %v6194 = vadd.f32 %v5761, %v6074
  %v6195 = vadd.f32 %v5766, %v6079
  %v6196 = vadd.f32 %v5769, %v6082
  %v6197 = vadd.f32 %v5774, %v6087
  %v6198 = vadd.f32 %v5777, %v6090
  %v6199 = vadd.f32 %v5782, %v6095
  %v6200 = vadd.f32 %v5785, %v6098
  %v6201 = vadd.f32 %v5790, %v6103
  %v6202 = vadd.f32 %v5793, %v6106
  %v6203 = vadd.f32 %v5798, %v6111
  %v6204 = vadd.f32 %v5801, %v6114
  %v6205 = vadd.f32 %v5806, %v6119
  %v6206 = vadd.f32 %v5809, %v6122
  %v6207 = vadd.f32 %v5814, %v6127
  %v6208 = vadd.f32 %v5817, %v6130
  %v6209 = vadd.f32 %v5822, %v6135
  %v6210 = vadd.f32 %v5825, %v6138
  %v6211 = vadd.f32 %v5830, %v6143
  %v6212 = vadd.f32 %v5833, %v6146
  %s6213 = scalar_lea.vmem %s1, 280
  %v6214 = vld [vmem:[%s6213] sm:$0xf]
  %v6215 = vld [vmem:[%s6213 + $0x4] sm:$0xf]
  %v6216 = vld [vmem:[%s6213 + $0x8] sm:$0xf]
  %v6217 = vld [vmem:[%s6213 + $0xc] sm:$0xf]
  %v6218 = vld [vmem:[%s6213 + $0x10] sm:$0x3]
  %v6224 = vunpack.c.l.b16 %v6214
  %v6225 = vunpack.c.l.b16 %v6215
  %v6226 = vunpack.c.l.b16 %v6216
  %v6227 = vunpack.c.l.b16 %v6217
  %v6228 = vunpack.c.l.b16 %v6218
  %v6229 = vpack.c.b16 %v6225, %v6224
  %v6230 = vpack.c.b16 %v6227, %v6226
  %v6231 = vpack.c.b16 %v6228, %v6228
  %v6235 = vsel %vm634, %v6231, 0
  %6237 = vmatprep.subr.bf16.mxu0 0
  %6238 = vmatpush1.bf16.msra.mxu0 0
  %6239 = vmatprep.subr.bf16.mxu0 0
  %6240 = vmatpush1.bf16.msra.mxu0 0
  %6241 = vmatprep.subr.bf16.mxu0 0
  %6242 = vmatpush1.bf16.msra.mxu0 0
  %6243 = vmatprep.subr.bf16.mxu0 0
  %6244 = vmatpush1.bf16.msra.mxu0 0
  %6245 = vmatprep.subr.bf16.mxu0 0
  %6246 = vmatpush1.bf16.msra.mxu0 0
  %6247 = vmatprep.subr.bf16.mxu0 0
  %6248 = vmatpush1.bf16.msra.mxu0 %v6235
  %6249 = vmatprep.subr.bf16.mxu0 0
  %6250 = vmatpush1.bf16.msra.mxu0 %v6230
  %6251 = vmatprep.subr.bf16.mxu0 0
  %6252 = vmatpush1.bf16.msra.mxu0 %v6229
  %6253 = vmatprep.subr.bf16.mxu0 0
  %6254 = vmatpush2.bf16.msra.mxu0 0
  %6255 = vmatprep.subr.bf16.mxu0 0
  %6256 = vmatpush2.bf16.msra.mxu0 0
  %6257 = vmatprep.subr.bf16.mxu0 0
  %6258 = vmatpush2.bf16.msra.mxu0 0
  %6259 = vmatprep.subr.bf16.mxu0 0
  %6260 = vmatpush2.bf16.msra.mxu0 0
  %6261 = vmatprep.subr.bf16.mxu0 0
  %6262 = vmatpush2.bf16.msra.mxu0 0
  %6263 = vmatprep.subr.bf16.mxu0 0
  %6264 = vmatpush2.bf16.msra.mxu0 0
  %6265 = vmatprep.subr.bf16.mxu0 0
  %6266 = vmatpush2.bf16.msra.mxu0 0
  %6267 = vmatprep.subr.bf16.mxu0 0
  %6268 = vmatpush2.bf16.msra.mxu0 0
  %6269 = vmatprep.mubr.bf16.mxu0 0
  %6270 = vmatmul.mubr.bf16.gmra.mxu0 %v2305
  %v6271 = vpop.f32.mrf.mxu0
  %v6272 = vadd.f32 0.0, %v6271
  %v6273 = vpop.f32.mrf.mxu0
  %v6274 = vpop.f32.mrf.mxu0
  %v6275 = vadd.f32 0.0, %v6274
  %v6276 = vpop.f32.mrf.mxu0
  %6277 = vmatprep.mubr.bf16.mxu0 0
  %6278 = vmatmul.mubr.bf16.gmra.mxu0 %v2308
  %v6279 = vpop.f32.mrf.mxu0
  %v6280 = vadd.f32 0.0, %v6279
  %v6281 = vpop.f32.mrf.mxu0
  %v6282 = vpop.f32.mrf.mxu0
  %v6283 = vadd.f32 0.0, %v6282
  %v6284 = vpop.f32.mrf.mxu0
  %6285 = vmatprep.mubr.bf16.mxu0 0
  %6286 = vmatmul.mubr.bf16.gmra.mxu0 %v2311
  %v6287 = vpop.f32.mrf.mxu0
  %v6288 = vadd.f32 0.0, %v6287
  %v6289 = vpop.f32.mrf.mxu0
  %v6290 = vpop.f32.mrf.mxu0
  %v6291 = vadd.f32 0.0, %v6290
  %v6292 = vpop.f32.mrf.mxu0
  %6293 = vmatprep.mubr.bf16.mxu0 0
  %6294 = vmatmul.mubr.bf16.gmra.mxu0 %v2314
  %v6295 = vpop.f32.mrf.mxu0
  %v6296 = vadd.f32 0.0, %v6295
  %v6297 = vpop.f32.mrf.mxu0
  %v6298 = vpop.f32.mrf.mxu0
  %v6299 = vadd.f32 0.0, %v6298
  %v6300 = vpop.f32.mrf.mxu0
  %6301 = vmatprep.mubr.bf16.mxu0 0
  %6302 = vmatmul.mubr.bf16.gmra.mxu0 %v2317
  %v6303 = vpop.f32.mrf.mxu0
  %v6304 = vadd.f32 0.0, %v6303
  %v6305 = vpop.f32.mrf.mxu0
  %v6306 = vpop.f32.mrf.mxu0
  %v6307 = vadd.f32 0.0, %v6306
  %v6308 = vpop.f32.mrf.mxu0
  %6309 = vmatprep.mubr.bf16.mxu0 0
  %6310 = vmatmul.mubr.bf16.gmra.mxu0 %v2320
  %v6311 = vpop.f32.mrf.mxu0
  %v6312 = vadd.f32 0.0, %v6311
  %v6313 = vpop.f32.mrf.mxu0
  %v6314 = vpop.f32.mrf.mxu0
  %v6315 = vadd.f32 0.0, %v6314
  %v6316 = vpop.f32.mrf.mxu0
  %6317 = vmatprep.mubr.bf16.mxu0 0
  %6318 = vmatmul.mubr.bf16.gmra.mxu0 %v2323
  %v6319 = vpop.f32.mrf.mxu0
  %v6320 = vadd.f32 0.0, %v6319
  %v6321 = vpop.f32.mrf.mxu0
  %v6322 = vpop.f32.mrf.mxu0
  %v6323 = vadd.f32 0.0, %v6322
  %v6324 = vpop.f32.mrf.mxu0
  %6325 = vmatprep.mubr.bf16.mxu0 0
  %6326 = vmatmul.mubr.bf16.gmra.mxu0 %v2326
  %v6327 = vpop.f32.mrf.mxu0
  %v6328 = vadd.f32 0.0, %v6327
  %v6329 = vpop.f32.mrf.mxu0
  %v6330 = vpop.f32.mrf.mxu0
  %v6331 = vadd.f32 0.0, %v6330
  %v6332 = vpop.f32.mrf.mxu0
  %6333 = vmatprep.mubr.bf16.mxu0 0
  %6334 = vmatmul.mubr.bf16.gmra.mxu0 %v2329
  %v6335 = vpop.f32.mrf.mxu0
  %v6336 = vadd.f32 0.0, %v6335
  %v6337 = vpop.f32.mrf.mxu0
  %v6338 = vpop.f32.mrf.mxu0
  %v6339 = vadd.f32 0.0, %v6338
  %v6340 = vpop.f32.mrf.mxu0
  %6341 = vmatprep.mubr.bf16.mxu0 0
  %6342 = vmatmul.mubr.bf16.gmra.mxu0 %v2332
  %v6343 = vpop.f32.mrf.mxu0
  %v6344 = vadd.f32 0.0, %v6343
  %v6345 = vpop.f32.mrf.mxu0
  %v6346 = vpop.f32.mrf.mxu0
  %v6347 = vadd.f32 0.0, %v6346
  %v6348 = vpop.f32.mrf.mxu0
  %6349 = vmatprep.mubr.bf16.mxu0 0
  %6350 = vmatmul.mubr.bf16.gmra.mxu0 %v2335
  %v6351 = vpop.f32.mrf.mxu0
  %v6352 = vadd.f32 0.0, %v6351
  %v6353 = vpop.f32.mrf.mxu0
  %v6354 = vpop.f32.mrf.mxu0
  %v6355 = vadd.f32 0.0, %v6354
  %v6356 = vpop.f32.mrf.mxu0
  %6357 = vmatprep.mubr.bf16.mxu0 0
  %6358 = vmatmul.mubr.bf16.gmra.mxu0 %v2338
  %v6359 = vpop.f32.mrf.mxu0
  %v6360 = vadd.f32 0.0, %v6359
  %v6361 = vpop.f32.mrf.mxu0
  %v6362 = vpop.f32.mrf.mxu0
  %v6363 = vadd.f32 0.0, %v6362
  %v6364 = vpop.f32.mrf.mxu0
  %6365 = vmatprep.mubr.bf16.mxu0 0
  %6366 = vmatmul.mubr.bf16.gmra.mxu0 %v2341
  %v6367 = vpop.f32.mrf.mxu0
  %v6368 = vadd.f32 0.0, %v6367
  %v6369 = vpop.f32.mrf.mxu0
  %v6370 = vpop.f32.mrf.mxu0
  %v6371 = vadd.f32 0.0, %v6370
  %v6372 = vpop.f32.mrf.mxu0
  %6373 = vmatprep.mubr.bf16.mxu0 0
  %6374 = vmatmul.mubr.bf16.gmra.mxu0 %v2344
  %v6375 = vpop.f32.mrf.mxu0
  %v6376 = vadd.f32 0.0, %v6375
  %v6377 = vpop.f32.mrf.mxu0
  %v6378 = vpop.f32.mrf.mxu0
  %v6379 = vadd.f32 0.0, %v6378
  %v6380 = vpop.f32.mrf.mxu0
  %6381 = vmatprep.mubr.bf16.mxu0 0
  %6382 = vmatmul.mubr.bf16.gmra.mxu0 %v2347
  %v6383 = vpop.f32.mrf.mxu0
  %v6384 = vadd.f32 0.0, %v6383
  %v6385 = vpop.f32.mrf.mxu0
  %v6386 = vpop.f32.mrf.mxu0
  %v6387 = vadd.f32 0.0, %v6386
  %v6388 = vpop.f32.mrf.mxu0
  %6389 = vmatprep.mubr.bf16.mxu0 0
  %6390 = vmatmul.mubr.bf16.gmra.mxu0 %v2350
  %v6391 = vpop.f32.mrf.mxu0
  %v6392 = vadd.f32 0.0, %v6391
  %v6393 = vpop.f32.mrf.mxu0
  %v6394 = vpop.f32.mrf.mxu0
  %v6395 = vadd.f32 0.0, %v6394
  %v6396 = vpop.f32.mrf.mxu0
  %6397 = vmatprep.mubr.bf16.mxu0 0
  %6398 = vmatmul.mubr.bf16.gmra.mxu0 %v2353
  %v6399 = vpop.f32.mrf.mxu0
  %v6400 = vadd.f32 0.0, %v6399
  %v6401 = vpop.f32.mrf.mxu0
  %v6402 = vpop.f32.mrf.mxu0
  %v6403 = vadd.f32 0.0, %v6402
  %v6404 = vpop.f32.mrf.mxu0
  %6405 = vmatprep.mubr.bf16.mxu0 0
  %6406 = vmatmul.mubr.bf16.gmra.mxu0 %v2356
  %v6407 = vpop.f32.mrf.mxu0
  %v6408 = vadd.f32 0.0, %v6407
  %v6409 = vpop.f32.mrf.mxu0
  %v6410 = vpop.f32.mrf.mxu0
  %v6411 = vadd.f32 0.0, %v6410
  %v6412 = vpop.f32.mrf.mxu0
  %6413 = vmatprep.mubr.bf16.mxu0 0
  %6414 = vmatmul.mubr.bf16.gmra.mxu0 %v2359
  %v6415 = vpop.f32.mrf.mxu0
  %v6416 = vadd.f32 0.0, %v6415
  %v6417 = vpop.f32.mrf.mxu0
  %v6418 = vpop.f32.mrf.mxu0
  %v6419 = vadd.f32 0.0, %v6418
  %v6420 = vpop.f32.mrf.mxu0
  %6421 = vmatprep.mubr.bf16.mxu0 0
  %6422 = vmatmul.mubr.bf16.gmra.mxu0 %v2362
  %v6423 = vpop.f32.mrf.mxu0
  %v6424 = vadd.f32 0.0, %v6423
  %v6425 = vpop.f32.mrf.mxu0
  %v6426 = vpop.f32.mrf.mxu0
  %v6427 = vadd.f32 0.0, %v6426
  %v6428 = vpop.f32.mrf.mxu0
  %6429 = vmatprep.mubr.bf16.mxu0 0
  %6430 = vmatmul.mubr.bf16.gmra.mxu0 %v2365
  %v6431 = vpop.f32.mrf.mxu0
  %v6432 = vadd.f32 0.0, %v6431
  %v6433 = vpop.f32.mrf.mxu0
  %v6434 = vpop.f32.mrf.mxu0
  %v6435 = vadd.f32 0.0, %v6434
  %v6436 = vpop.f32.mrf.mxu0
  %6437 = vmatprep.mubr.bf16.mxu0 0
  %6438 = vmatmul.mubr.bf16.gmra.mxu0 %v2368
  %v6439 = vpop.f32.mrf.mxu0
  %v6440 = vadd.f32 0.0, %v6439
  %v6441 = vpop.f32.mrf.mxu0
  %v6442 = vpop.f32.mrf.mxu0
  %v6443 = vadd.f32 0.0, %v6442
  %v6444 = vpop.f32.mrf.mxu0
  %6445 = vmatprep.mubr.bf16.mxu0 0
  %6446 = vmatmul.mubr.bf16.gmra.mxu0 %v2371
  %v6447 = vpop.f32.mrf.mxu0
  %v6448 = vadd.f32 0.0, %v6447
  %v6449 = vpop.f32.mrf.mxu0
  %v6450 = vpop.f32.mrf.mxu0
  %v6451 = vadd.f32 0.0, %v6450
  %v6452 = vpop.f32.mrf.mxu0
  %6453 = vmatprep.mubr.bf16.mxu0 0
  %6454 = vmatmul.mubr.bf16.gmra.mxu0 %v2374
  %v6455 = vpop.f32.mrf.mxu0
  %v6456 = vadd.f32 0.0, %v6455
  %v6457 = vpop.f32.mrf.mxu0
  %v6458 = vpop.f32.mrf.mxu0
  %v6459 = vadd.f32 0.0, %v6458
  %v6460 = vpop.f32.mrf.mxu0
  %6461 = vmatprep.mubr.bf16.mxu0 0
  %6462 = vmatmul.mubr.bf16.gmra.mxu0 %v2377
  %v6463 = vpop.f32.mrf.mxu0
  %v6464 = vadd.f32 0.0, %v6463
  %v6465 = vpop.f32.mrf.mxu0
  %v6466 = vpop.f32.mrf.mxu0
  %v6467 = vadd.f32 0.0, %v6466
  %v6468 = vpop.f32.mrf.mxu0
  %6469 = vmatprep.mubr.bf16.mxu0 0
  %6470 = vmatmul.mubr.bf16.gmra.mxu0 %v2380
  %v6471 = vpop.f32.mrf.mxu0
  %v6472 = vadd.f32 0.0, %v6471
  %v6473 = vpop.f32.mrf.mxu0
  %v6474 = vpop.f32.mrf.mxu0
  %v6475 = vadd.f32 0.0, %v6474
  %v6476 = vpop.f32.mrf.mxu0
  %6477 = vmatprep.mubr.bf16.mxu0 0
  %6478 = vmatmul.mubr.bf16.gmra.mxu0 %v2383
  %v6479 = vpop.f32.mrf.mxu0
  %v6480 = vadd.f32 0.0, %v6479
  %v6481 = vpop.f32.mrf.mxu0
  %v6482 = vpop.f32.mrf.mxu0
  %v6483 = vadd.f32 0.0, %v6482
  %v6484 = vpop.f32.mrf.mxu0
  %6485 = vmatprep.mubr.bf16.mxu0 0
  %6486 = vmatmul.mubr.bf16.gmra.mxu0 %v2386
  %v6487 = vpop.f32.mrf.mxu0
  %v6488 = vadd.f32 0.0, %v6487
  %v6489 = vpop.f32.mrf.mxu0
  %v6490 = vpop.f32.mrf.mxu0
  %v6491 = vadd.f32 0.0, %v6490
  %v6492 = vpop.f32.mrf.mxu0
  %6493 = vmatprep.mubr.bf16.mxu0 0
  %6494 = vmatmul.mubr.bf16.gmra.mxu0 %v2389
  %v6495 = vpop.f32.mrf.mxu0
  %v6496 = vadd.f32 0.0, %v6495
  %v6497 = vpop.f32.mrf.mxu0
  %v6498 = vpop.f32.mrf.mxu0
  %v6499 = vadd.f32 0.0, %v6498
  %v6500 = vpop.f32.mrf.mxu0
  %6501 = vmatprep.mubr.bf16.mxu0 0
  %6502 = vmatmul.mubr.bf16.gmra.mxu0 %v2392
  %v6503 = vpop.f32.mrf.mxu0
  %v6504 = vadd.f32 0.0, %v6503
  %v6505 = vpop.f32.mrf.mxu0
  %v6506 = vpop.f32.mrf.mxu0
  %v6507 = vadd.f32 0.0, %v6506
  %v6508 = vpop.f32.mrf.mxu0
  %6509 = vmatprep.mubr.bf16.mxu0 0
  %6510 = vmatmul.mubr.bf16.gmra.mxu0 %v2395
  %v6511 = vpop.f32.mrf.mxu0
  %v6512 = vadd.f32 0.0, %v6511
  %v6513 = vpop.f32.mrf.mxu0
  %v6514 = vpop.f32.mrf.mxu0
  %v6515 = vadd.f32 0.0, %v6514
  %v6516 = vpop.f32.mrf.mxu0
  %6517 = vmatprep.mubr.bf16.mxu0 0
  %6518 = vmatmul.mubr.bf16.gmra.mxu0 %v2398
  %v6519 = vpop.f32.mrf.mxu0
  %v6520 = vadd.f32 0.0, %v6519
  %v6521 = vpop.f32.mrf.mxu0
  %v6522 = vpop.f32.mrf.mxu0
  %v6523 = vadd.f32 0.0, %v6522
  %v6524 = vpop.f32.mrf.mxu0
  %6525 = vdwg.mxu0
  %v6526 = vadd.f32 %v6149, %v6272
  %v6527 = vadd.f32 %v6150, %v6275
  %v6528 = vadd.f32 %v6151, %v6280
  %v6529 = vadd.f32 %v6152, %v6283
  %v6530 = vadd.f32 %v6153, %v6288
  %v6531 = vadd.f32 %v6154, %v6291
  %v6532 = vadd.f32 %v6155, %v6296
  %v6533 = vadd.f32 %v6156, %v6299
  %v6534 = vadd.f32 %v6157, %v6304
  %v6535 = vadd.f32 %v6158, %v6307
  %v6536 = vadd.f32 %v6159, %v6312
  %v6537 = vadd.f32 %v6160, %v6315
  %v6538 = vadd.f32 %v6161, %v6320
  %v6539 = vadd.f32 %v6162, %v6323
  %v6540 = vadd.f32 %v6163, %v6328
  %v6541 = vadd.f32 %v6164, %v6331
  %v6542 = vadd.f32 %v6165, %v6336
  %v6543 = vadd.f32 %v6166, %v6339
  %v6544 = vadd.f32 %v6167, %v6344
  %v6545 = vadd.f32 %v6168, %v6347
  %v6546 = vadd.f32 %v6169, %v6352
  %v6547 = vadd.f32 %v6170, %v6355
  %v6548 = vadd.f32 %v6171, %v6360
  %v6549 = vadd.f32 %v6172, %v6363
  %v6550 = vadd.f32 %v6173, %v6368
  %v6551 = vadd.f32 %v6174, %v6371
  %v6552 = vadd.f32 %v6175, %v6376
  %v6553 = vadd.f32 %v6176, %v6379
  %v6554 = vadd.f32 %v6177, %v6384
  %v6555 = vadd.f32 %v6178, %v6387
  %v6556 = vadd.f32 %v6179, %v6392
  %v6557 = vadd.f32 %v6180, %v6395
  %v6558 = vadd.f32 %v6181, %v6400
  %v6559 = vadd.f32 %v6182, %v6403
  %v6560 = vadd.f32 %v6183, %v6408
  %v6561 = vadd.f32 %v6184, %v6411
  %v6562 = vadd.f32 %v6185, %v6416
  %v6563 = vadd.f32 %v6186, %v6419
  %v6564 = vadd.f32 %v6187, %v6424
  %v6565 = vadd.f32 %v6188, %v6427
  %v6566 = vadd.f32 %v6189, %v6432
  %v6567 = vadd.f32 %v6190, %v6435
  %v6568 = vadd.f32 %v6191, %v6440
  %v6569 = vadd.f32 %v6192, %v6443
  %v6570 = vadd.f32 %v6193, %v6448
  %v6571 = vadd.f32 %v6194, %v6451
  %v6572 = vadd.f32 %v6195, %v6456
  %v6573 = vadd.f32 %v6196, %v6459
  %v6574 = vadd.f32 %v6197, %v6464
  %v6575 = vadd.f32 %v6198, %v6467
  %v6576 = vadd.f32 %v6199, %v6472
  %v6577 = vadd.f32 %v6200, %v6475
  %v6578 = vadd.f32 %v6201, %v6480
  %v6579 = vadd.f32 %v6202, %v6483
  %v6580 = vadd.f32 %v6203, %v6488
  %v6581 = vadd.f32 %v6204, %v6491
  %v6582 = vadd.f32 %v6205, %v6496
  %v6583 = vadd.f32 %v6206, %v6499
  %v6584 = vadd.f32 %v6207, %v6504
  %v6585 = vadd.f32 %v6208, %v6507
  %v6586 = vadd.f32 %v6209, %v6512
  %v6587 = vadd.f32 %v6210, %v6515
  %v6588 = vadd.f32 %v6211, %v6520
  %v6589 = vadd.f32 %v6212, %v6523
  %s6590 = scalar_lea.vmem %s1, 360
  %v6591 = vld [vmem:[%s6590] sm:$0xf]
  %v6592 = vld [vmem:[%s6590 + $0x4] sm:$0xf]
  %v6593 = vld [vmem:[%s6590 + $0x8] sm:$0xf]
  %v6594 = vld [vmem:[%s6590 + $0xc] sm:$0xf]
  %v6595 = vld [vmem:[%s6590 + $0x10] sm:$0x3]
  %v6601 = vunpack.c.l.b16 %v6591
  %v6602 = vunpack.c.l.b16 %v6592
  %v6603 = vunpack.c.l.b16 %v6593
  %v6604 = vunpack.c.l.b16 %v6594
  %v6605 = vunpack.c.l.b16 %v6595
  %v6606 = vpack.c.b16 %v6602, %v6601
  %v6607 = vpack.c.b16 %v6604, %v6603
  %v6608 = vpack.c.b16 %v6605, %v6605
  %v6612 = vsel %vm634, %v6608, 0
  %6614 = vmatprep.subr.bf16.mxu0 0
  %6615 = vmatpush1.bf16.msra.mxu0 0
  %6616 = vmatprep.subr.bf16.mxu0 0
  %6617 = vmatpush1.bf16.msra.mxu0 0
  %6618 = vmatprep.subr.bf16.mxu0 0
  %6619 = vmatpush1.bf16.msra.mxu0 0
  %6620 = vmatprep.subr.bf16.mxu0 0
  %6621 = vmatpush1.bf16.msra.mxu0 0
  %6622 = vmatprep.subr.bf16.mxu0 0
  %6623 = vmatpush1.bf16.msra.mxu0 0
  %6624 = vmatprep.subr.bf16.mxu0 0
  %6625 = vmatpush1.bf16.msra.mxu0 %v6612
  %6626 = vmatprep.subr.bf16.mxu0 0
  %6627 = vmatpush1.bf16.msra.mxu0 %v6607
  %6628 = vmatprep.subr.bf16.mxu0 0
  %6629 = vmatpush1.bf16.msra.mxu0 %v6606
  %6630 = vmatprep.subr.bf16.mxu0 0
  %6631 = vmatpush2.bf16.msra.mxu0 0
  %6632 = vmatprep.subr.bf16.mxu0 0
  %6633 = vmatpush2.bf16.msra.mxu0 0
  %6634 = vmatprep.subr.bf16.mxu0 0
  %6635 = vmatpush2.bf16.msra.mxu0 0
  %6636 = vmatprep.subr.bf16.mxu0 0
  %6637 = vmatpush2.bf16.msra.mxu0 0
  %6638 = vmatprep.subr.bf16.mxu0 0
  %6639 = vmatpush2.bf16.msra.mxu0 0
  %6640 = vmatprep.subr.bf16.mxu0 0
  %6641 = vmatpush2.bf16.msra.mxu0 0
  %6642 = vmatprep.subr.bf16.mxu0 0
  %6643 = vmatpush2.bf16.msra.mxu0 0
  %6644 = vmatprep.subr.bf16.mxu0 0
  %6645 = vmatpush2.bf16.msra.mxu0 0
  %6646 = vmatprep.mubr.bf16.mxu0 0
  %6647 = vmatmul.mubr.bf16.gmra.mxu0 %v2938
  %v6648 = vpop.f32.mrf.mxu0
  %v6649 = vadd.f32 0.0, %v6648
  %v6650 = vpop.f32.mrf.mxu0
  %v6651 = vpop.f32.mrf.mxu0
  %v6652 = vadd.f32 0.0, %v6651
  %v6653 = vpop.f32.mrf.mxu0
  %6654 = vmatprep.mubr.bf16.mxu0 0
  %6655 = vmatmul.mubr.bf16.gmra.mxu0 %v2941
  %v6656 = vpop.f32.mrf.mxu0
  %v6657 = vadd.f32 0.0, %v6656
  %v6658 = vpop.f32.mrf.mxu0
  %v6659 = vpop.f32.mrf.mxu0
  %v6660 = vadd.f32 0.0, %v6659
  %v6661 = vpop.f32.mrf.mxu0
  %6662 = vmatprep.mubr.bf16.mxu0 0
  %6663 = vmatmul.mubr.bf16.gmra.mxu0 %v2944
  %v6664 = vpop.f32.mrf.mxu0
  %v6665 = vadd.f32 0.0, %v6664
  %v6666 = vpop.f32.mrf.mxu0
  %v6667 = vpop.f32.mrf.mxu0
  %v6668 = vadd.f32 0.0, %v6667
  %v6669 = vpop.f32.mrf.mxu0
  %6670 = vmatprep.mubr.bf16.mxu0 0
  %6671 = vmatmul.mubr.bf16.gmra.mxu0 %v2947
  %v6672 = vpop.f32.mrf.mxu0
  %v6673 = vadd.f32 0.0, %v6672
  %v6674 = vpop.f32.mrf.mxu0
  %v6675 = vpop.f32.mrf.mxu0
  %v6676 = vadd.f32 0.0, %v6675
  %v6677 = vpop.f32.mrf.mxu0
  %6678 = vmatprep.mubr.bf16.mxu0 0
  %6679 = vmatmul.mubr.bf16.gmra.mxu0 %v2950
  %v6680 = vpop.f32.mrf.mxu0
  %v6681 = vadd.f32 0.0, %v6680
  %v6682 = vpop.f32.mrf.mxu0
  %v6683 = vpop.f32.mrf.mxu0
  %v6684 = vadd.f32 0.0, %v6683
  %v6685 = vpop.f32.mrf.mxu0
  %6686 = vmatprep.mubr.bf16.mxu0 0
  %6687 = vmatmul.mubr.bf16.gmra.mxu0 %v2953
  %v6688 = vpop.f32.mrf.mxu0
  %v6689 = vadd.f32 0.0, %v6688
  %v6690 = vpop.f32.mrf.mxu0
  %v6691 = vpop.f32.mrf.mxu0
  %v6692 = vadd.f32 0.0, %v6691
  %v6693 = vpop.f32.mrf.mxu0
  %6694 = vmatprep.mubr.bf16.mxu0 0
  %6695 = vmatmul.mubr.bf16.gmra.mxu0 %v2956
  %v6696 = vpop.f32.mrf.mxu0
  %v6697 = vadd.f32 0.0, %v6696
  %v6698 = vpop.f32.mrf.mxu0
  %v6699 = vpop.f32.mrf.mxu0
  %v6700 = vadd.f32 0.0, %v6699
  %v6701 = vpop.f32.mrf.mxu0
  %6702 = vmatprep.mubr.bf16.mxu0 0
  %6703 = vmatmul.mubr.bf16.gmra.mxu0 %v2959
  %v6704 = vpop.f32.mrf.mxu0
  %v6705 = vadd.f32 0.0, %v6704
  %v6706 = vpop.f32.mrf.mxu0
  %v6707 = vpop.f32.mrf.mxu0
  %v6708 = vadd.f32 0.0, %v6707
  %v6709 = vpop.f32.mrf.mxu0
  %6710 = vmatprep.mubr.bf16.mxu0 0
  %6711 = vmatmul.mubr.bf16.gmra.mxu0 %v2962
  %v6712 = vpop.f32.mrf.mxu0
  %v6713 = vadd.f32 0.0, %v6712
  %v6714 = vpop.f32.mrf.mxu0
  %v6715 = vpop.f32.mrf.mxu0
  %v6716 = vadd.f32 0.0, %v6715
  %v6717 = vpop.f32.mrf.mxu0
  %6718 = vmatprep.mubr.bf16.mxu0 0
  %6719 = vmatmul.mubr.bf16.gmra.mxu0 %v2965
  %v6720 = vpop.f32.mrf.mxu0
  %v6721 = vadd.f32 0.0, %v6720
  %v6722 = vpop.f32.mrf.mxu0
  %v6723 = vpop.f32.mrf.mxu0
  %v6724 = vadd.f32 0.0, %v6723
  %v6725 = vpop.f32.mrf.mxu0
  %6726 = vmatprep.mubr.bf16.mxu0 0
  %6727 = vmatmul.mubr.bf16.gmra.mxu0 %v2968
  %v6728 = vpop.f32.mrf.mxu0
  %v6729 = vadd.f32 0.0, %v6728
  %v6730 = vpop.f32.mrf.mxu0
  %v6731 = vpop.f32.mrf.mxu0
  %v6732 = vadd.f32 0.0, %v6731
  %v6733 = vpop.f32.mrf.mxu0
  %6734 = vmatprep.mubr.bf16.mxu0 0
  %6735 = vmatmul.mubr.bf16.gmra.mxu0 %v2971
  %v6736 = vpop.f32.mrf.mxu0
  %v6737 = vadd.f32 0.0, %v6736
  %v6738 = vpop.f32.mrf.mxu0
  %v6739 = vpop.f32.mrf.mxu0
  %v6740 = vadd.f32 0.0, %v6739
  %v6741 = vpop.f32.mrf.mxu0
  %6742 = vmatprep.mubr.bf16.mxu0 0
  %6743 = vmatmul.mubr.bf16.gmra.mxu0 %v2974
  %v6744 = vpop.f32.mrf.mxu0
  %v6745 = vadd.f32 0.0, %v6744
  %v6746 = vpop.f32.mrf.mxu0
  %v6747 = vpop.f32.mrf.mxu0
  %v6748 = vadd.f32 0.0, %v6747
  %v6749 = vpop.f32.mrf.mxu0
  %6750 = vmatprep.mubr.bf16.mxu0 0
  %6751 = vmatmul.mubr.bf16.gmra.mxu0 %v2977
  %v6752 = vpop.f32.mrf.mxu0
  %v6753 = vadd.f32 0.0, %v6752
  %v6754 = vpop.f32.mrf.mxu0
  %v6755 = vpop.f32.mrf.mxu0
  %v6756 = vadd.f32 0.0, %v6755
  %v6757 = vpop.f32.mrf.mxu0
  %6758 = vmatprep.mubr.bf16.mxu0 0
  %6759 = vmatmul.mubr.bf16.gmra.mxu0 %v2980
  %v6760 = vpop.f32.mrf.mxu0
  %v6761 = vadd.f32 0.0, %v6760
  %v6762 = vpop.f32.mrf.mxu0
  %v6763 = vpop.f32.mrf.mxu0
  %v6764 = vadd.f32 0.0, %v6763
  %v6765 = vpop.f32.mrf.mxu0
  %6766 = vmatprep.mubr.bf16.mxu0 0
  %6767 = vmatmul.mubr.bf16.gmra.mxu0 %v2983
  %v6768 = vpop.f32.mrf.mxu0
  %v6769 = vadd.f32 0.0, %v6768
  %v6770 = vpop.f32.mrf.mxu0
  %v6771 = vpop.f32.mrf.mxu0
  %v6772 = vadd.f32 0.0, %v6771
  %v6773 = vpop.f32.mrf.mxu0
  %6774 = vmatprep.mubr.bf16.mxu0 0
  %6775 = vmatmul.mubr.bf16.gmra.mxu0 %v2986
  %v6776 = vpop.f32.mrf.mxu0
  %v6777 = vadd.f32 0.0, %v6776
  %v6778 = vpop.f32.mrf.mxu0
  %v6779 = vpop.f32.mrf.mxu0
  %v6780 = vadd.f32 0.0, %v6779
  %v6781 = vpop.f32.mrf.mxu0
  %6782 = vmatprep.mubr.bf16.mxu0 0
  %6783 = vmatmul.mubr.bf16.gmra.mxu0 %v2989
  %v6784 = vpop.f32.mrf.mxu0
  %v6785 = vadd.f32 0.0, %v6784
  %v6786 = vpop.f32.mrf.mxu0
  %v6787 = vpop.f32.mrf.mxu0
  %v6788 = vadd.f32 0.0, %v6787
  %v6789 = vpop.f32.mrf.mxu0
  %6790 = vmatprep.mubr.bf16.mxu0 0
  %6791 = vmatmul.mubr.bf16.gmra.mxu0 %v2992
  %v6792 = vpop.f32.mrf.mxu0
  %v6793 = vadd.f32 0.0, %v6792
  %v6794 = vpop.f32.mrf.mxu0
  %v6795 = vpop.f32.mrf.mxu0
  %v6796 = vadd.f32 0.0, %v6795
  %v6797 = vpop.f32.mrf.mxu0
  %6798 = vmatprep.mubr.bf16.mxu0 0
  %6799 = vmatmul.mubr.bf16.gmra.mxu0 %v2995
  %v6800 = vpop.f32.mrf.mxu0
  %v6801 = vadd.f32 0.0, %v6800
  %v6802 = vpop.f32.mrf.mxu0
  %v6803 = vpop.f32.mrf.mxu0
  %v6804 = vadd.f32 0.0, %v6803
  %v6805 = vpop.f32.mrf.mxu0
  %6806 = vmatprep.mubr.bf16.mxu0 0
  %6807 = vmatmul.mubr.bf16.gmra.mxu0 %v2998
  %v6808 = vpop.f32.mrf.mxu0
  %v6809 = vadd.f32 0.0, %v6808
  %v6810 = vpop.f32.mrf.mxu0
  %v6811 = vpop.f32.mrf.mxu0
  %v6812 = vadd.f32 0.0, %v6811
  %v6813 = vpop.f32.mrf.mxu0
  %6814 = vmatprep.mubr.bf16.mxu0 0
  %6815 = vmatmul.mubr.bf16.gmra.mxu0 %v3001
  %v6816 = vpop.f32.mrf.mxu0
  %v6817 = vadd.f32 0.0, %v6816
  %v6818 = vpop.f32.mrf.mxu0
  %v6819 = vpop.f32.mrf.mxu0
  %v6820 = vadd.f32 0.0, %v6819
  %v6821 = vpop.f32.mrf.mxu0
  %6822 = vmatprep.mubr.bf16.mxu0 0
  %6823 = vmatmul.mubr.bf16.gmra.mxu0 %v3004
  %v6824 = vpop.f32.mrf.mxu0
  %v6825 = vadd.f32 0.0, %v6824
  %v6826 = vpop.f32.mrf.mxu0
  %v6827 = vpop.f32.mrf.mxu0
  %v6828 = vadd.f32 0.0, %v6827
  %v6829 = vpop.f32.mrf.mxu0
  %6830 = vmatprep.mubr.bf16.mxu0 0
  %6831 = vmatmul.mubr.bf16.gmra.mxu0 %v3007
  %v6832 = vpop.f32.mrf.mxu0
  %v6833 = vadd.f32 0.0, %v6832
  %v6834 = vpop.f32.mrf.mxu0
  %v6835 = vpop.f32.mrf.mxu0
  %v6836 = vadd.f32 0.0, %v6835
  %v6837 = vpop.f32.mrf.mxu0
  %6838 = vmatprep.mubr.bf16.mxu0 0
  %6839 = vmatmul.mubr.bf16.gmra.mxu0 %v3010
  %v6840 = vpop.f32.mrf.mxu0
  %v6841 = vadd.f32 0.0, %v6840
  %v6842 = vpop.f32.mrf.mxu0
  %v6843 = vpop.f32.mrf.mxu0
  %v6844 = vadd.f32 0.0, %v6843
  %v6845 = vpop.f32.mrf.mxu0
  %6846 = vmatprep.mubr.bf16.mxu0 0
  %6847 = vmatmul.mubr.bf16.gmra.mxu0 %v3013
  %v6848 = vpop.f32.mrf.mxu0
  %v6849 = vadd.f32 0.0, %v6848
  %v6850 = vpop.f32.mrf.mxu0
  %v6851 = vpop.f32.mrf.mxu0
  %v6852 = vadd.f32 0.0, %v6851
  %v6853 = vpop.f32.mrf.mxu0
  %6854 = vmatprep.mubr.bf16.mxu0 0
  %6855 = vmatmul.mubr.bf16.gmra.mxu0 %v3016
  %v6856 = vpop.f32.mrf.mxu0
  %v6857 = vadd.f32 0.0, %v6856
  %v6858 = vpop.f32.mrf.mxu0
  %v6859 = vpop.f32.mrf.mxu0
  %v6860 = vadd.f32 0.0, %v6859
  %v6861 = vpop.f32.mrf.mxu0
  %6862 = vmatprep.mubr.bf16.mxu0 0
  %6863 = vmatmul.mubr.bf16.gmra.mxu0 %v3019
  %v6864 = vpop.f32.mrf.mxu0
  %v6865 = vadd.f32 0.0, %v6864
  %v6866 = vpop.f32.mrf.mxu0
  %v6867 = vpop.f32.mrf.mxu0
  %v6868 = vadd.f32 0.0, %v6867
  %v6869 = vpop.f32.mrf.mxu0
  %6870 = vmatprep.mubr.bf16.mxu0 0
  %6871 = vmatmul.mubr.bf16.gmra.mxu0 %v3022
  %v6872 = vpop.f32.mrf.mxu0
  %v6873 = vadd.f32 0.0, %v6872
  %v6874 = vpop.f32.mrf.mxu0
  %v6875 = vpop.f32.mrf.mxu0
  %v6876 = vadd.f32 0.0, %v6875
  %v6877 = vpop.f32.mrf.mxu0
  %6878 = vmatprep.mubr.bf16.mxu0 0
  %6879 = vmatmul.mubr.bf16.gmra.mxu0 %v3025
  %v6880 = vpop.f32.mrf.mxu0
  %v6881 = vadd.f32 0.0, %v6880
  %v6882 = vpop.f32.mrf.mxu0
  %v6883 = vpop.f32.mrf.mxu0
  %v6884 = vadd.f32 0.0, %v6883
  %v6885 = vpop.f32.mrf.mxu0
  %6886 = vmatprep.mubr.bf16.mxu0 0
  %6887 = vmatmul.mubr.bf16.gmra.mxu0 %v3028
  %v6888 = vpop.f32.mrf.mxu0
  %v6889 = vadd.f32 0.0, %v6888
  %v6890 = vpop.f32.mrf.mxu0
  %v6891 = vpop.f32.mrf.mxu0
  %v6892 = vadd.f32 0.0, %v6891
  %v6893 = vpop.f32.mrf.mxu0
  %6894 = vmatprep.mubr.bf16.mxu0 0
  %6895 = vmatmul.mubr.bf16.gmra.mxu0 %v3031
  %v6896 = vpop.f32.mrf.mxu0
  %v6897 = vadd.f32 0.0, %v6896
  %v6898 = vpop.f32.mrf.mxu0
  %v6899 = vpop.f32.mrf.mxu0
  %v6900 = vadd.f32 0.0, %v6899
  %v6901 = vpop.f32.mrf.mxu0
  %6902 = vdwg.mxu0
  %v6903 = vadd.f32 %v6526, %v6649
  %v6904 = vadd.f32 %v6527, %v6652
  %v6905 = vadd.f32 %v6528, %v6657
  %v6906 = vadd.f32 %v6529, %v6660
  %v6907 = vadd.f32 %v6530, %v6665
  %v6908 = vadd.f32 %v6531, %v6668
  %v6909 = vadd.f32 %v6532, %v6673
  %v6910 = vadd.f32 %v6533, %v6676
  %v6911 = vadd.f32 %v6534, %v6681
  %v6912 = vadd.f32 %v6535, %v6684
  %v6913 = vadd.f32 %v6536, %v6689
  %v6914 = vadd.f32 %v6537, %v6692
  %v6915 = vadd.f32 %v6538, %v6697
  %v6916 = vadd.f32 %v6539, %v6700
  %v6917 = vadd.f32 %v6540, %v6705
  %v6918 = vadd.f32 %v6541, %v6708
  %v6919 = vadd.f32 %v6542, %v6713
  %v6920 = vadd.f32 %v6543, %v6716
  %v6921 = vadd.f32 %v6544, %v6721
  %v6922 = vadd.f32 %v6545, %v6724
  %v6923 = vadd.f32 %v6546, %v6729
  %v6924 = vadd.f32 %v6547, %v6732
  %v6925 = vadd.f32 %v6548, %v6737
  %v6926 = vadd.f32 %v6549, %v6740
  %v6927 = vadd.f32 %v6550, %v6745
  %v6928 = vadd.f32 %v6551, %v6748
  %v6929 = vadd.f32 %v6552, %v6753
  %v6930 = vadd.f32 %v6553, %v6756
  %v6931 = vadd.f32 %v6554, %v6761
  %v6932 = vadd.f32 %v6555, %v6764
  %v6933 = vadd.f32 %v6556, %v6769
  %v6934 = vadd.f32 %v6557, %v6772
  %v6935 = vadd.f32 %v6558, %v6777
  %v6936 = vadd.f32 %v6559, %v6780
  %v6937 = vadd.f32 %v6560, %v6785
  %v6938 = vadd.f32 %v6561, %v6788
  %v6939 = vadd.f32 %v6562, %v6793
  %v6940 = vadd.f32 %v6563, %v6796
  %v6941 = vadd.f32 %v6564, %v6801
  %v6942 = vadd.f32 %v6565, %v6804
  %v6943 = vadd.f32 %v6566, %v6809
  %v6944 = vadd.f32 %v6567, %v6812
  %v6945 = vadd.f32 %v6568, %v6817
  %v6946 = vadd.f32 %v6569, %v6820
  %v6947 = vadd.f32 %v6570, %v6825
  %v6948 = vadd.f32 %v6571, %v6828
  %v6949 = vadd.f32 %v6572, %v6833
  %v6950 = vadd.f32 %v6573, %v6836
  %v6951 = vadd.f32 %v6574, %v6841
  %v6952 = vadd.f32 %v6575, %v6844
  %v6953 = vadd.f32 %v6576, %v6849
  %v6954 = vadd.f32 %v6577, %v6852
  %v6955 = vadd.f32 %v6578, %v6857
  %v6956 = vadd.f32 %v6579, %v6860
  %v6957 = vadd.f32 %v6580, %v6865
  %v6958 = vadd.f32 %v6581, %v6868
  %v6959 = vadd.f32 %v6582, %v6873
  %v6960 = vadd.f32 %v6583, %v6876
  %v6961 = vadd.f32 %v6584, %v6881
  %v6962 = vadd.f32 %v6585, %v6884
  %v6963 = vadd.f32 %v6586, %v6889
  %v6964 = vadd.f32 %v6587, %v6892
  %v6965 = vadd.f32 %v6588, %v6897
  %v6966 = vadd.f32 %v6589, %v6900
  %v6967 = vmax.f32 %v5146, %v6903
  %v6968 = vmax.f32 %v5147, %v6904
  %v6969 = vmax.f32 %v5148, %v6905
  %v6970 = vmax.f32 %v5149, %v6906
  %v6971 = vmax.f32 %v5150, %v6907
  %v6972 = vmax.f32 %v5151, %v6908
  %v6973 = vmax.f32 %v5152, %v6909
  %v6974 = vmax.f32 %v5153, %v6910
  %v6975 = vmax.f32 %v5154, %v6911
  %v6976 = vmax.f32 %v5155, %v6912
  %v6977 = vmax.f32 %v5156, %v6913
  %v6978 = vmax.f32 %v5157, %v6914
  %v6979 = vmax.f32 %v5158, %v6915
  %v6980 = vmax.f32 %v5159, %v6916
  %v6981 = vmax.f32 %v5160, %v6917
  %v6982 = vmax.f32 %v5161, %v6918
  %v6983 = vmax.f32 %v5162, %v6919
  %v6984 = vmax.f32 %v5163, %v6920
  %v6985 = vmax.f32 %v5164, %v6921
  %v6986 = vmax.f32 %v5165, %v6922
  %v6987 = vmax.f32 %v5166, %v6923
  %v6988 = vmax.f32 %v5167, %v6924
  %v6989 = vmax.f32 %v5168, %v6925
  %v6990 = vmax.f32 %v5169, %v6926
  %v6991 = vmax.f32 %v5170, %v6927
  %v6992 = vmax.f32 %v5171, %v6928
  %v6993 = vmax.f32 %v5172, %v6929
  %v6994 = vmax.f32 %v5173, %v6930
  %v6995 = vmax.f32 %v5174, %v6931
  %v6996 = vmax.f32 %v5175, %v6932
  %v6997 = vmax.f32 %v5176, %v6933
  %v6998 = vmax.f32 %v5177, %v6934
  %v6999 = vmax.f32 %v5178, %v6935
  %v7000 = vmax.f32 %v5179, %v6936
  %v7001 = vmax.f32 %v5180, %v6937
  %v7002 = vmax.f32 %v5181, %v6938
  %v7003 = vmax.f32 %v5182, %v6939
  %v7004 = vmax.f32 %v5183, %v6940
  %v7005 = vmax.f32 %v5184, %v6941
  %v7006 = vmax.f32 %v5185, %v6942
  %v7007 = vmax.f32 %v5186, %v6943
  %v7008 = vmax.f32 %v5187, %v6944
  %v7009 = vmax.f32 %v5188, %v6945
  %v7010 = vmax.f32 %v5189, %v6946
  %v7011 = vmax.f32 %v5190, %v6947
  %v7012 = vmax.f32 %v5191, %v6948
  %v7013 = vmax.f32 %v5192, %v6949
  %v7014 = vmax.f32 %v5193, %v6950
  %v7015 = vmax.f32 %v5194, %v6951
  %v7016 = vmax.f32 %v5195, %v6952
  %v7017 = vmax.f32 %v5196, %v6953
  %v7018 = vmax.f32 %v5197, %v6954
  %v7019 = vmax.f32 %v5198, %v6955
  %v7020 = vmax.f32 %v5199, %v6956
  %v7021 = vmax.f32 %v5200, %v6957
  %v7022 = vmax.f32 %v5201, %v6958
  %v7023 = vmax.f32 %v5202, %v6959
  %v7024 = vmax.f32 %v5203, %v6960
  %v7025 = vmax.f32 %v5204, %v6961
  %v7026 = vmax.f32 %v5205, %v6962
  %v7027 = vmax.f32 %v5206, %v6963
  %v7028 = vmax.f32 %v5207, %v6964
  %v7029 = vmax.f32 %v5208, %v6965
  %v7030 = vmax.f32 %v5209, %v6966
  %s7031 = scalar_lea.vmem %s1, 60
  %v7032 = vld [vmem:[%s7031] sm:$0xf]
  %v7033 = vld [vmem:[%s7031 + $0x4] sm:$0xf]
  %v7034 = vld [vmem:[%s7031 + $0x8] sm:$0xf]
  %v7035 = vld [vmem:[%s7031 + $0xc] sm:$0xf]
  %v7036 = vld [vmem:[%s7031 + $0x10] sm:$0x3]
  %s7037 = scalar_lea.vmem %s1, 140
  %v7038 = vld [vmem:[%s7037] sm:$0xf]
  %v7039 = vld [vmem:[%s7037 + $0x4] sm:$0xf]
  %v7040 = vld [vmem:[%s7037 + $0x8] sm:$0xf]
  %v7041 = vld [vmem:[%s7037 + $0xc] sm:$0xf]
  %v7042 = vld [vmem:[%s7037 + $0x10] sm:$0x3]
  %v7048 = vunpack.c.l.b16 %v7038
  %v7049 = vunpack.c.l.b16 %v7039
  %v7050 = vunpack.c.l.b16 %v7040
  %v7051 = vunpack.c.l.b16 %v7041
  %v7052 = vunpack.c.l.b16 %v7042
  %v7053 = vpack.c.b16 %v7049, %v7048
  %v7054 = vpack.c.b16 %v7051, %v7050
  %v7055 = vpack.c.b16 %v7052, %v7052
  %v7059 = vsel %vm634, %v7055, 0
  %7061 = vmatprep.subr.bf16.mxu0 0
  %7062 = vmatpush1.bf16.msra.mxu0 0
  %7063 = vmatprep.subr.bf16.mxu0 0
  %7064 = vmatpush1.bf16.msra.mxu0 0
  %7065 = vmatprep.subr.bf16.mxu0 0
  %7066 = vmatpush1.bf16.msra.mxu0 0
  %7067 = vmatprep.subr.bf16.mxu0 0
  %7068 = vmatpush1.bf16.msra.mxu0 0
  %7069 = vmatprep.subr.bf16.mxu0 0
  %7070 = vmatpush1.bf16.msra.mxu0 0
  %7071 = vmatprep.subr.bf16.mxu0 0
  %7072 = vmatpush1.bf16.msra.mxu0 %v7059
  %7073 = vmatprep.subr.bf16.mxu0 0
  %7074 = vmatpush1.bf16.msra.mxu0 %v7054
  %7075 = vmatprep.subr.bf16.mxu0 0
  %7076 = vmatpush1.bf16.msra.mxu0 %v7053
  %7077 = vmatprep.subr.bf16.mxu0 0
  %7078 = vmatpush2.bf16.msra.mxu0 0
  %7079 = vmatprep.subr.bf16.mxu0 0
  %7080 = vmatpush2.bf16.msra.mxu0 0
  %7081 = vmatprep.subr.bf16.mxu0 0
  %7082 = vmatpush2.bf16.msra.mxu0 0
  %7083 = vmatprep.subr.bf16.mxu0 0
  %7084 = vmatpush2.bf16.msra.mxu0 0
  %7085 = vmatprep.subr.bf16.mxu0 0
  %7086 = vmatpush2.bf16.msra.mxu0 0
  %7087 = vmatprep.subr.bf16.mxu0 0
  %7088 = vmatpush2.bf16.msra.mxu0 0
  %7089 = vmatprep.subr.bf16.mxu0 0
  %7090 = vmatpush2.bf16.msra.mxu0 0
  %7091 = vmatprep.subr.bf16.mxu0 0
  %7092 = vmatpush2.bf16.msra.mxu0 0
  %7093 = vmatprep.mubr.bf16.mxu0 0
  %7094 = vmatmul.mubr.bf16.gmra.mxu0 %v539
  %v7095 = vpop.f32.mrf.mxu0
  %v7096 = vadd.f32 0.0, %v7095
  %v7097 = vpop.f32.mrf.mxu0
  %v7098 = vpop.f32.mrf.mxu0
  %v7099 = vadd.f32 0.0, %v7098
  %v7100 = vpop.f32.mrf.mxu0
  %7101 = vmatprep.mubr.bf16.mxu0 0
  %7102 = vmatmul.mubr.bf16.gmra.mxu0 %v542
  %v7103 = vpop.f32.mrf.mxu0
  %v7104 = vadd.f32 0.0, %v7103
  %v7105 = vpop.f32.mrf.mxu0
  %v7106 = vpop.f32.mrf.mxu0
  %v7107 = vadd.f32 0.0, %v7106
  %v7108 = vpop.f32.mrf.mxu0
  %7109 = vmatprep.mubr.bf16.mxu0 0
  %7110 = vmatmul.mubr.bf16.gmra.mxu0 %v545
  %v7111 = vpop.f32.mrf.mxu0
  %v7112 = vadd.f32 0.0, %v7111
  %v7113 = vpop.f32.mrf.mxu0
  %v7114 = vpop.f32.mrf.mxu0
  %v7115 = vadd.f32 0.0, %v7114
  %v7116 = vpop.f32.mrf.mxu0
  %7117 = vmatprep.mubr.bf16.mxu0 0
  %7118 = vmatmul.mubr.bf16.gmra.mxu0 %v548
  %v7119 = vpop.f32.mrf.mxu0
  %v7120 = vadd.f32 0.0, %v7119
  %v7121 = vpop.f32.mrf.mxu0
  %v7122 = vpop.f32.mrf.mxu0
  %v7123 = vadd.f32 0.0, %v7122
  %v7124 = vpop.f32.mrf.mxu0
  %7125 = vmatprep.mubr.bf16.mxu0 0
  %7126 = vmatmul.mubr.bf16.gmra.mxu0 %v551
  %v7127 = vpop.f32.mrf.mxu0
  %v7128 = vadd.f32 0.0, %v7127
  %v7129 = vpop.f32.mrf.mxu0
  %v7130 = vpop.f32.mrf.mxu0
  %v7131 = vadd.f32 0.0, %v7130
  %v7132 = vpop.f32.mrf.mxu0
  %7133 = vmatprep.mubr.bf16.mxu0 0
  %7134 = vmatmul.mubr.bf16.gmra.mxu0 %v554
  %v7135 = vpop.f32.mrf.mxu0
  %v7136 = vadd.f32 0.0, %v7135
  %v7137 = vpop.f32.mrf.mxu0
  %v7138 = vpop.f32.mrf.mxu0
  %v7139 = vadd.f32 0.0, %v7138
  %v7140 = vpop.f32.mrf.mxu0
  %7141 = vmatprep.mubr.bf16.mxu0 0
  %7142 = vmatmul.mubr.bf16.gmra.mxu0 %v557
  %v7143 = vpop.f32.mrf.mxu0
  %v7144 = vadd.f32 0.0, %v7143
  %v7145 = vpop.f32.mrf.mxu0
  %v7146 = vpop.f32.mrf.mxu0
  %v7147 = vadd.f32 0.0, %v7146
  %v7148 = vpop.f32.mrf.mxu0
  %7149 = vmatprep.mubr.bf16.mxu0 0
  %7150 = vmatmul.mubr.bf16.gmra.mxu0 %v560
  %v7151 = vpop.f32.mrf.mxu0
  %v7152 = vadd.f32 0.0, %v7151
  %v7153 = vpop.f32.mrf.mxu0
  %v7154 = vpop.f32.mrf.mxu0
  %v7155 = vadd.f32 0.0, %v7154
  %v7156 = vpop.f32.mrf.mxu0
  %7157 = vmatprep.mubr.bf16.mxu0 0
  %7158 = vmatmul.mubr.bf16.gmra.mxu0 %v563
  %v7159 = vpop.f32.mrf.mxu0
  %v7160 = vadd.f32 0.0, %v7159
  %v7161 = vpop.f32.mrf.mxu0
  %v7162 = vpop.f32.mrf.mxu0
  %v7163 = vadd.f32 0.0, %v7162
  %v7164 = vpop.f32.mrf.mxu0
  %7165 = vmatprep.mubr.bf16.mxu0 0
  %7166 = vmatmul.mubr.bf16.gmra.mxu0 %v566
  %v7167 = vpop.f32.mrf.mxu0
  %v7168 = vadd.f32 0.0, %v7167
  %v7169 = vpop.f32.mrf.mxu0
  %v7170 = vpop.f32.mrf.mxu0
  %v7171 = vadd.f32 0.0, %v7170
  %v7172 = vpop.f32.mrf.mxu0
  %7173 = vmatprep.mubr.bf16.mxu0 0
  %7174 = vmatmul.mubr.bf16.gmra.mxu0 %v569
  %v7175 = vpop.f32.mrf.mxu0
  %v7176 = vadd.f32 0.0, %v7175
  %v7177 = vpop.f32.mrf.mxu0
  %v7178 = vpop.f32.mrf.mxu0
  %v7179 = vadd.f32 0.0, %v7178
  %v7180 = vpop.f32.mrf.mxu0
  %7181 = vmatprep.mubr.bf16.mxu0 0
  %7182 = vmatmul.mubr.bf16.gmra.mxu0 %v572
  %v7183 = vpop.f32.mrf.mxu0
  %v7184 = vadd.f32 0.0, %v7183
  %v7185 = vpop.f32.mrf.mxu0
  %v7186 = vpop.f32.mrf.mxu0
  %v7187 = vadd.f32 0.0, %v7186
  %v7188 = vpop.f32.mrf.mxu0
  %7189 = vmatprep.mubr.bf16.mxu0 0
  %7190 = vmatmul.mubr.bf16.gmra.mxu0 %v575
  %v7191 = vpop.f32.mrf.mxu0
  %v7192 = vadd.f32 0.0, %v7191
  %v7193 = vpop.f32.mrf.mxu0
  %v7194 = vpop.f32.mrf.mxu0
  %v7195 = vadd.f32 0.0, %v7194
  %v7196 = vpop.f32.mrf.mxu0
  %7197 = vmatprep.mubr.bf16.mxu0 0
  %7198 = vmatmul.mubr.bf16.gmra.mxu0 %v578
  %v7199 = vpop.f32.mrf.mxu0
  %v7200 = vadd.f32 0.0, %v7199
  %v7201 = vpop.f32.mrf.mxu0
  %v7202 = vpop.f32.mrf.mxu0
  %v7203 = vadd.f32 0.0, %v7202
  %v7204 = vpop.f32.mrf.mxu0
  %7205 = vmatprep.mubr.bf16.mxu0 0
  %7206 = vmatmul.mubr.bf16.gmra.mxu0 %v581
  %v7207 = vpop.f32.mrf.mxu0
  %v7208 = vadd.f32 0.0, %v7207
  %v7209 = vpop.f32.mrf.mxu0
  %v7210 = vpop.f32.mrf.mxu0
  %v7211 = vadd.f32 0.0, %v7210
  %v7212 = vpop.f32.mrf.mxu0
  %7213 = vmatprep.mubr.bf16.mxu0 0
  %7214 = vmatmul.mubr.bf16.gmra.mxu0 %v584
  %v7215 = vpop.f32.mrf.mxu0
  %v7216 = vadd.f32 0.0, %v7215
  %v7217 = vpop.f32.mrf.mxu0
  %v7218 = vpop.f32.mrf.mxu0
  %v7219 = vadd.f32 0.0, %v7218
  %v7220 = vpop.f32.mrf.mxu0
  %7221 = vmatprep.mubr.bf16.mxu0 0
  %7222 = vmatmul.mubr.bf16.gmra.mxu0 %v587
  %v7223 = vpop.f32.mrf.mxu0
  %v7224 = vadd.f32 0.0, %v7223
  %v7225 = vpop.f32.mrf.mxu0
  %v7226 = vpop.f32.mrf.mxu0
  %v7227 = vadd.f32 0.0, %v7226
  %v7228 = vpop.f32.mrf.mxu0
  %7229 = vmatprep.mubr.bf16.mxu0 0
  %7230 = vmatmul.mubr.bf16.gmra.mxu0 %v590
  %v7231 = vpop.f32.mrf.mxu0
  %v7232 = vadd.f32 0.0, %v7231
  %v7233 = vpop.f32.mrf.mxu0
  %v7234 = vpop.f32.mrf.mxu0
  %v7235 = vadd.f32 0.0, %v7234
  %v7236 = vpop.f32.mrf.mxu0
  %7237 = vmatprep.mubr.bf16.mxu0 0
  %7238 = vmatmul.mubr.bf16.gmra.mxu0 %v593
  %v7239 = vpop.f32.mrf.mxu0
  %v7240 = vadd.f32 0.0, %v7239
  %v7241 = vpop.f32.mrf.mxu0
  %v7242 = vpop.f32.mrf.mxu0
  %v7243 = vadd.f32 0.0, %v7242
  %v7244 = vpop.f32.mrf.mxu0
  %7245 = vmatprep.mubr.bf16.mxu0 0
  %7246 = vmatmul.mubr.bf16.gmra.mxu0 %v596
  %v7247 = vpop.f32.mrf.mxu0
  %v7248 = vadd.f32 0.0, %v7247
  %v7249 = vpop.f32.mrf.mxu0
  %v7250 = vpop.f32.mrf.mxu0
  %v7251 = vadd.f32 0.0, %v7250
  %v7252 = vpop.f32.mrf.mxu0
  %7253 = vmatprep.mubr.bf16.mxu0 0
  %7254 = vmatmul.mubr.bf16.gmra.mxu0 %v599
  %v7255 = vpop.f32.mrf.mxu0
  %v7256 = vadd.f32 0.0, %v7255
  %v7257 = vpop.f32.mrf.mxu0
  %v7258 = vpop.f32.mrf.mxu0
  %v7259 = vadd.f32 0.0, %v7258
  %v7260 = vpop.f32.mrf.mxu0
  %7261 = vmatprep.mubr.bf16.mxu0 0
  %7262 = vmatmul.mubr.bf16.gmra.mxu0 %v602
  %v7263 = vpop.f32.mrf.mxu0
  %v7264 = vadd.f32 0.0, %v7263
  %v7265 = vpop.f32.mrf.mxu0
  %v7266 = vpop.f32.mrf.mxu0
  %v7267 = vadd.f32 0.0, %v7266
  %v7268 = vpop.f32.mrf.mxu0
  %7269 = vmatprep.mubr.bf16.mxu0 0
  %7270 = vmatmul.mubr.bf16.gmra.mxu0 %v605
  %v7271 = vpop.f32.mrf.mxu0
  %v7272 = vadd.f32 0.0, %v7271
  %v7273 = vpop.f32.mrf.mxu0
  %v7274 = vpop.f32.mrf.mxu0
  %v7275 = vadd.f32 0.0, %v7274
  %v7276 = vpop.f32.mrf.mxu0
  %7277 = vmatprep.mubr.bf16.mxu0 0
  %7278 = vmatmul.mubr.bf16.gmra.mxu0 %v608
  %v7279 = vpop.f32.mrf.mxu0
  %v7280 = vadd.f32 0.0, %v7279
  %v7281 = vpop.f32.mrf.mxu0
  %v7282 = vpop.f32.mrf.mxu0
  %v7283 = vadd.f32 0.0, %v7282
  %v7284 = vpop.f32.mrf.mxu0
  %7285 = vmatprep.mubr.bf16.mxu0 0
  %7286 = vmatmul.mubr.bf16.gmra.mxu0 %v611
  %v7287 = vpop.f32.mrf.mxu0
  %v7288 = vadd.f32 0.0, %v7287
  %v7289 = vpop.f32.mrf.mxu0
  %v7290 = vpop.f32.mrf.mxu0
  %v7291 = vadd.f32 0.0, %v7290
  %v7292 = vpop.f32.mrf.mxu0
  %7293 = vmatprep.mubr.bf16.mxu0 0
  %7294 = vmatmul.mubr.bf16.gmra.mxu0 %v614
  %v7295 = vpop.f32.mrf.mxu0
  %v7296 = vadd.f32 0.0, %v7295
  %v7297 = vpop.f32.mrf.mxu0
  %v7298 = vpop.f32.mrf.mxu0
  %v7299 = vadd.f32 0.0, %v7298
  %v7300 = vpop.f32.mrf.mxu0
  %7301 = vmatprep.mubr.bf16.mxu0 0
  %7302 = vmatmul.mubr.bf16.gmra.mxu0 %v617
  %v7303 = vpop.f32.mrf.mxu0
  %v7304 = vadd.f32 0.0, %v7303
  %v7305 = vpop.f32.mrf.mxu0
  %v7306 = vpop.f32.mrf.mxu0
  %v7307 = vadd.f32 0.0, %v7306
  %v7308 = vpop.f32.mrf.mxu0
  %7309 = vmatprep.mubr.bf16.mxu0 0
  %7310 = vmatmul.mubr.bf16.gmra.mxu0 %v620
  %v7311 = vpop.f32.mrf.mxu0
  %v7312 = vadd.f32 0.0, %v7311
  %v7313 = vpop.f32.mrf.mxu0
  %v7314 = vpop.f32.mrf.mxu0
  %v7315 = vadd.f32 0.0, %v7314
  %v7316 = vpop.f32.mrf.mxu0
  %7317 = vmatprep.mubr.bf16.mxu0 0
  %7318 = vmatmul.mubr.bf16.gmra.mxu0 %v623
  %v7319 = vpop.f32.mrf.mxu0
  %v7320 = vadd.f32 0.0, %v7319
  %v7321 = vpop.f32.mrf.mxu0
  %v7322 = vpop.f32.mrf.mxu0
  %v7323 = vadd.f32 0.0, %v7322
  %v7324 = vpop.f32.mrf.mxu0
  %7325 = vmatprep.mubr.bf16.mxu0 0
  %7326 = vmatmul.mubr.bf16.gmra.mxu0 %v626
  %v7327 = vpop.f32.mrf.mxu0
  %v7328 = vadd.f32 0.0, %v7327
  %v7329 = vpop.f32.mrf.mxu0
  %v7330 = vpop.f32.mrf.mxu0
  %v7331 = vadd.f32 0.0, %v7330
  %v7332 = vpop.f32.mrf.mxu0
  %7333 = vmatprep.mubr.bf16.mxu0 0
  %7334 = vmatmul.mubr.bf16.gmra.mxu0 %v629
  %v7335 = vpop.f32.mrf.mxu0
  %v7336 = vadd.f32 0.0, %v7335
  %v7337 = vpop.f32.mrf.mxu0
  %v7338 = vpop.f32.mrf.mxu0
  %v7339 = vadd.f32 0.0, %v7338
  %v7340 = vpop.f32.mrf.mxu0
  %7341 = vmatprep.mubr.bf16.mxu0 0
  %7342 = vmatmul.mubr.bf16.gmra.mxu0 %v632
  %v7343 = vpop.f32.mrf.mxu0
  %v7344 = vadd.f32 0.0, %v7343
  %v7345 = vpop.f32.mrf.mxu0
  %v7346 = vpop.f32.mrf.mxu0
  %v7347 = vadd.f32 0.0, %v7346
  %v7348 = vpop.f32.mrf.mxu0
  %7349 = vdwg.mxu0
  %v7355 = vunpack.c.l.b16 %v7032
  %v7356 = vunpack.c.l.b16 %v7033
  %v7357 = vunpack.c.l.b16 %v7034
  %v7358 = vunpack.c.l.b16 %v7035
  %v7359 = vunpack.c.l.b16 %v7036
  %v7360 = vpack.c.b16 %v7356, %v7355
  %v7361 = vpack.c.b16 %v7358, %v7357
  %v7362 = vpack.c.b16 %v7359, %v7359
  %v7366 = vsel %vm634, %v7362, 0
  %7368 = vmatprep.subr.bf16.mxu0 0
  %7369 = vmatpush1.bf16.msra.mxu0 0
  %7370 = vmatprep.subr.bf16.mxu0 0
  %7371 = vmatpush1.bf16.msra.mxu0 0
  %7372 = vmatprep.subr.bf16.mxu0 0
  %7373 = vmatpush1.bf16.msra.mxu0 0
  %7374 = vmatprep.subr.bf16.mxu0 0
  %7375 = vmatpush1.bf16.msra.mxu0 0
  %7376 = vmatprep.subr.bf16.mxu0 0
  %7377 = vmatpush1.bf16.msra.mxu0 0
  %7378 = vmatprep.subr.bf16.mxu0 0
  %7379 = vmatpush1.bf16.msra.mxu0 %v7366
  %7380 = vmatprep.subr.bf16.mxu0 0
  %7381 = vmatpush1.bf16.msra.mxu0 %v7361
  %7382 = vmatprep.subr.bf16.mxu0 0
  %7383 = vmatpush1.bf16.msra.mxu0 %v7360
  %7384 = vmatprep.subr.bf16.mxu0 0
  %7385 = vmatpush2.bf16.msra.mxu0 0
  %7386 = vmatprep.subr.bf16.mxu0 0
  %7387 = vmatpush2.bf16.msra.mxu0 0
  %7388 = vmatprep.subr.bf16.mxu0 0
  %7389 = vmatpush2.bf16.msra.mxu0 0
  %7390 = vmatprep.subr.bf16.mxu0 0
  %7391 = vmatpush2.bf16.msra.mxu0 0
  %7392 = vmatprep.subr.bf16.mxu0 0
  %7393 = vmatpush2.bf16.msra.mxu0 0
  %7394 = vmatprep.subr.bf16.mxu0 0
  %7395 = vmatpush2.bf16.msra.mxu0 0
  %7396 = vmatprep.subr.bf16.mxu0 0
  %7397 = vmatpush2.bf16.msra.mxu0 0
  %7398 = vmatprep.subr.bf16.mxu0 0
  %7399 = vmatpush2.bf16.msra.mxu0 0
  %7400 = vmatprep.mubr.bf16.mxu0 0
  %7401 = vmatmul.mubr.bf16.gmra.mxu0 %v1103
  %v7402 = vpop.f32.mrf.mxu0
  %v7403 = vadd.f32 %v7096, %v7402
  %v7404 = vpop.f32.mrf.mxu0
  %v7405 = vpop.f32.mrf.mxu0
  %v7406 = vadd.f32 %v7099, %v7405
  %v7407 = vpop.f32.mrf.mxu0
  %7408 = vmatprep.mubr.bf16.mxu0 0
  %7409 = vmatmul.mubr.bf16.gmra.mxu0 %v1106
  %v7410 = vpop.f32.mrf.mxu0
  %v7411 = vadd.f32 %v7104, %v7410
  %v7412 = vpop.f32.mrf.mxu0
  %v7413 = vpop.f32.mrf.mxu0
  %v7414 = vadd.f32 %v7107, %v7413
  %v7415 = vpop.f32.mrf.mxu0
  %7416 = vmatprep.mubr.bf16.mxu0 0
  %7417 = vmatmul.mubr.bf16.gmra.mxu0 %v1109
  %v7418 = vpop.f32.mrf.mxu0
  %v7419 = vadd.f32 %v7112, %v7418
  %v7420 = vpop.f32.mrf.mxu0
  %v7421 = vpop.f32.mrf.mxu0
  %v7422 = vadd.f32 %v7115, %v7421
  %v7423 = vpop.f32.mrf.mxu0
  %7424 = vmatprep.mubr.bf16.mxu0 0
  %7425 = vmatmul.mubr.bf16.gmra.mxu0 %v1112
  %v7426 = vpop.f32.mrf.mxu0
  %v7427 = vadd.f32 %v7120, %v7426
  %v7428 = vpop.f32.mrf.mxu0
  %v7429 = vpop.f32.mrf.mxu0
  %v7430 = vadd.f32 %v7123, %v7429
  %v7431 = vpop.f32.mrf.mxu0
  %7432 = vmatprep.mubr.bf16.mxu0 0
  %7433 = vmatmul.mubr.bf16.gmra.mxu0 %v1115
  %v7434 = vpop.f32.mrf.mxu0
  %v7435 = vadd.f32 %v7128, %v7434
  %v7436 = vpop.f32.mrf.mxu0
  %v7437 = vpop.f32.mrf.mxu0
  %v7438 = vadd.f32 %v7131, %v7437
  %v7439 = vpop.f32.mrf.mxu0
  %7440 = vmatprep.mubr.bf16.mxu0 0
  %7441 = vmatmul.mubr.bf16.gmra.mxu0 %v1118
  %v7442 = vpop.f32.mrf.mxu0
  %v7443 = vadd.f32 %v7136, %v7442
  %v7444 = vpop.f32.mrf.mxu0
  %v7445 = vpop.f32.mrf.mxu0
  %v7446 = vadd.f32 %v7139, %v7445
  %v7447 = vpop.f32.mrf.mxu0
  %7448 = vmatprep.mubr.bf16.mxu0 0
  %7449 = vmatmul.mubr.bf16.gmra.mxu0 %v1121
  %v7450 = vpop.f32.mrf.mxu0
  %v7451 = vadd.f32 %v7144, %v7450
  %v7452 = vpop.f32.mrf.mxu0
  %v7453 = vpop.f32.mrf.mxu0
  %v7454 = vadd.f32 %v7147, %v7453
  %v7455 = vpop.f32.mrf.mxu0
  %7456 = vmatprep.mubr.bf16.mxu0 0
  %7457 = vmatmul.mubr.bf16.gmra.mxu0 %v1124
  %v7458 = vpop.f32.mrf.mxu0
  %v7459 = vadd.f32 %v7152, %v7458
  %v7460 = vpop.f32.mrf.mxu0
  %v7461 = vpop.f32.mrf.mxu0
  %v7462 = vadd.f32 %v7155, %v7461
  %v7463 = vpop.f32.mrf.mxu0
  %7464 = vmatprep.mubr.bf16.mxu0 0
  %7465 = vmatmul.mubr.bf16.gmra.mxu0 %v1127
  %v7466 = vpop.f32.mrf.mxu0
  %v7467 = vadd.f32 %v7160, %v7466
  %v7468 = vpop.f32.mrf.mxu0
  %v7469 = vpop.f32.mrf.mxu0
  %v7470 = vadd.f32 %v7163, %v7469
  %v7471 = vpop.f32.mrf.mxu0
  %7472 = vmatprep.mubr.bf16.mxu0 0
  %7473 = vmatmul.mubr.bf16.gmra.mxu0 %v1130
  %v7474 = vpop.f32.mrf.mxu0
  %v7475 = vadd.f32 %v7168, %v7474
  %v7476 = vpop.f32.mrf.mxu0
  %v7477 = vpop.f32.mrf.mxu0
  %v7478 = vadd.f32 %v7171, %v7477
  %v7479 = vpop.f32.mrf.mxu0
  %7480 = vmatprep.mubr.bf16.mxu0 0
  %7481 = vmatmul.mubr.bf16.gmra.mxu0 %v1133
  %v7482 = vpop.f32.mrf.mxu0
  %v7483 = vadd.f32 %v7176, %v7482
  %v7484 = vpop.f32.mrf.mxu0
  %v7485 = vpop.f32.mrf.mxu0
  %v7486 = vadd.f32 %v7179, %v7485
  %v7487 = vpop.f32.mrf.mxu0
  %7488 = vmatprep.mubr.bf16.mxu0 0
  %7489 = vmatmul.mubr.bf16.gmra.mxu0 %v1136
  %v7490 = vpop.f32.mrf.mxu0
  %v7491 = vadd.f32 %v7184, %v7490
  %v7492 = vpop.f32.mrf.mxu0
  %v7493 = vpop.f32.mrf.mxu0
  %v7494 = vadd.f32 %v7187, %v7493
  %v7495 = vpop.f32.mrf.mxu0
  %7496 = vmatprep.mubr.bf16.mxu0 0
  %7497 = vmatmul.mubr.bf16.gmra.mxu0 %v1139
  %v7498 = vpop.f32.mrf.mxu0
  %v7499 = vadd.f32 %v7192, %v7498
  %v7500 = vpop.f32.mrf.mxu0
  %v7501 = vpop.f32.mrf.mxu0
  %v7502 = vadd.f32 %v7195, %v7501
  %v7503 = vpop.f32.mrf.mxu0
  %7504 = vmatprep.mubr.bf16.mxu0 0
  %7505 = vmatmul.mubr.bf16.gmra.mxu0 %v1142
  %v7506 = vpop.f32.mrf.mxu0
  %v7507 = vadd.f32 %v7200, %v7506
  %v7508 = vpop.f32.mrf.mxu0
  %v7509 = vpop.f32.mrf.mxu0
  %v7510 = vadd.f32 %v7203, %v7509
  %v7511 = vpop.f32.mrf.mxu0
  %7512 = vmatprep.mubr.bf16.mxu0 0
  %7513 = vmatmul.mubr.bf16.gmra.mxu0 %v1145
  %v7514 = vpop.f32.mrf.mxu0
  %v7515 = vadd.f32 %v7208, %v7514
  %v7516 = vpop.f32.mrf.mxu0
  %v7517 = vpop.f32.mrf.mxu0
  %v7518 = vadd.f32 %v7211, %v7517
  %v7519 = vpop.f32.mrf.mxu0
  %7520 = vmatprep.mubr.bf16.mxu0 0
  %7521 = vmatmul.mubr.bf16.gmra.mxu0 %v1148
  %v7522 = vpop.f32.mrf.mxu0
  %v7523 = vadd.f32 %v7216, %v7522
  %v7524 = vpop.f32.mrf.mxu0
  %v7525 = vpop.f32.mrf.mxu0
  %v7526 = vadd.f32 %v7219, %v7525
  %v7527 = vpop.f32.mrf.mxu0
  %7528 = vmatprep.mubr.bf16.mxu0 0
  %7529 = vmatmul.mubr.bf16.gmra.mxu0 %v1151
  %v7530 = vpop.f32.mrf.mxu0
  %v7531 = vadd.f32 %v7224, %v7530
  %v7532 = vpop.f32.mrf.mxu0
  %v7533 = vpop.f32.mrf.mxu0
  %v7534 = vadd.f32 %v7227, %v7533
  %v7535 = vpop.f32.mrf.mxu0
  %7536 = vmatprep.mubr.bf16.mxu0 0
  %7537 = vmatmul.mubr.bf16.gmra.mxu0 %v1154
  %v7538 = vpop.f32.mrf.mxu0
  %v7539 = vadd.f32 %v7232, %v7538
  %v7540 = vpop.f32.mrf.mxu0
  %v7541 = vpop.f32.mrf.mxu0
  %v7542 = vadd.f32 %v7235, %v7541
  %v7543 = vpop.f32.mrf.mxu0
  %7544 = vmatprep.mubr.bf16.mxu0 0
  %7545 = vmatmul.mubr.bf16.gmra.mxu0 %v1157
  %v7546 = vpop.f32.mrf.mxu0
  %v7547 = vadd.f32 %v7240, %v7546
  %v7548 = vpop.f32.mrf.mxu0
  %v7549 = vpop.f32.mrf.mxu0
  %v7550 = vadd.f32 %v7243, %v7549
  %v7551 = vpop.f32.mrf.mxu0
  %7552 = vmatprep.mubr.bf16.mxu0 0
  %7553 = vmatmul.mubr.bf16.gmra.mxu0 %v1160
  %v7554 = vpop.f32.mrf.mxu0
  %v7555 = vadd.f32 %v7248, %v7554
  %v7556 = vpop.f32.mrf.mxu0
  %v7557 = vpop.f32.mrf.mxu0
  %v7558 = vadd.f32 %v7251, %v7557
  %v7559 = vpop.f32.mrf.mxu0
  %7560 = vmatprep.mubr.bf16.mxu0 0
  %7561 = vmatmul.mubr.bf16.gmra.mxu0 %v1163
  %v7562 = vpop.f32.mrf.mxu0
  %v7563 = vadd.f32 %v7256, %v7562
  %v7564 = vpop.f32.mrf.mxu0
  %v7565 = vpop.f32.mrf.mxu0
  %v7566 = vadd.f32 %v7259, %v7565
  %v7567 = vpop.f32.mrf.mxu0
  %7568 = vmatprep.mubr.bf16.mxu0 0
  %7569 = vmatmul.mubr.bf16.gmra.mxu0 %v1166
  %v7570 = vpop.f32.mrf.mxu0
  %v7571 = vadd.f32 %v7264, %v7570
  %v7572 = vpop.f32.mrf.mxu0
  %v7573 = vpop.f32.mrf.mxu0
  %v7574 = vadd.f32 %v7267, %v7573
  %v7575 = vpop.f32.mrf.mxu0
  %7576 = vmatprep.mubr.bf16.mxu0 0
  %7577 = vmatmul.mubr.bf16.gmra.mxu0 %v1169
  %v7578 = vpop.f32.mrf.mxu0
  %v7579 = vadd.f32 %v7272, %v7578
  %v7580 = vpop.f32.mrf.mxu0
  %v7581 = vpop.f32.mrf.mxu0
  %v7582 = vadd.f32 %v7275, %v7581
  %v7583 = vpop.f32.mrf.mxu0
  %7584 = vmatprep.mubr.bf16.mxu0 0
  %7585 = vmatmul.mubr.bf16.gmra.mxu0 %v1172
  %v7586 = vpop.f32.mrf.mxu0
  %v7587 = vadd.f32 %v7280, %v7586
  %v7588 = vpop.f32.mrf.mxu0
  %v7589 = vpop.f32.mrf.mxu0
  %v7590 = vadd.f32 %v7283, %v7589
  %v7591 = vpop.f32.mrf.mxu0
  %7592 = vmatprep.mubr.bf16.mxu0 0
  %7593 = vmatmul.mubr.bf16.gmra.mxu0 %v1175
  %v7594 = vpop.f32.mrf.mxu0
  %v7595 = vadd.f32 %v7288, %v7594
  %v7596 = vpop.f32.mrf.mxu0
  %v7597 = vpop.f32.mrf.mxu0
  %v7598 = vadd.f32 %v7291, %v7597
  %v7599 = vpop.f32.mrf.mxu0
  %7600 = vmatprep.mubr.bf16.mxu0 0
  %7601 = vmatmul.mubr.bf16.gmra.mxu0 %v1178
  %v7602 = vpop.f32.mrf.mxu0
  %v7603 = vadd.f32 %v7296, %v7602
  %v7604 = vpop.f32.mrf.mxu0
  %v7605 = vpop.f32.mrf.mxu0
  %v7606 = vadd.f32 %v7299, %v7605
  %v7607 = vpop.f32.mrf.mxu0
  %7608 = vmatprep.mubr.bf16.mxu0 0
  %7609 = vmatmul.mubr.bf16.gmra.mxu0 %v1181
  %v7610 = vpop.f32.mrf.mxu0
  %v7611 = vadd.f32 %v7304, %v7610
  %v7612 = vpop.f32.mrf.mxu0
  %v7613 = vpop.f32.mrf.mxu0
  %v7614 = vadd.f32 %v7307, %v7613
  %v7615 = vpop.f32.mrf.mxu0
  %7616 = vmatprep.mubr.bf16.mxu0 0
  %7617 = vmatmul.mubr.bf16.gmra.mxu0 %v1184
  %v7618 = vpop.f32.mrf.mxu0
  %v7619 = vadd.f32 %v7312, %v7618
  %v7620 = vpop.f32.mrf.mxu0
  %v7621 = vpop.f32.mrf.mxu0
  %v7622 = vadd.f32 %v7315, %v7621
  %v7623 = vpop.f32.mrf.mxu0
  %7624 = vmatprep.mubr.bf16.mxu0 0
  %7625 = vmatmul.mubr.bf16.gmra.mxu0 %v1187
  %v7626 = vpop.f32.mrf.mxu0
  %v7627 = vadd.f32 %v7320, %v7626
  %v7628 = vpop.f32.mrf.mxu0
  %v7629 = vpop.f32.mrf.mxu0
  %v7630 = vadd.f32 %v7323, %v7629
  %v7631 = vpop.f32.mrf.mxu0
  %7632 = vmatprep.mubr.bf16.mxu0 0
  %7633 = vmatmul.mubr.bf16.gmra.mxu0 %v1190
  %v7634 = vpop.f32.mrf.mxu0
  %v7635 = vadd.f32 %v7328, %v7634
  %v7636 = vpop.f32.mrf.mxu0
  %v7637 = vpop.f32.mrf.mxu0
  %v7638 = vadd.f32 %v7331, %v7637
  %v7639 = vpop.f32.mrf.mxu0
  %7640 = vmatprep.mubr.bf16.mxu0 0
  %7641 = vmatmul.mubr.bf16.gmra.mxu0 %v1193
  %v7642 = vpop.f32.mrf.mxu0
  %v7643 = vadd.f32 %v7336, %v7642
  %v7644 = vpop.f32.mrf.mxu0
  %v7645 = vpop.f32.mrf.mxu0
  %v7646 = vadd.f32 %v7339, %v7645
  %v7647 = vpop.f32.mrf.mxu0
  %7648 = vmatprep.mubr.bf16.mxu0 0
  %7649 = vmatmul.mubr.bf16.gmra.mxu0 %v1196
  %v7650 = vpop.f32.mrf.mxu0
  %v7651 = vadd.f32 %v7344, %v7650
  %v7652 = vpop.f32.mrf.mxu0
  %v7653 = vpop.f32.mrf.mxu0
  %v7654 = vadd.f32 %v7347, %v7653
  %v7655 = vpop.f32.mrf.mxu0
  %7656 = vdwg.mxu0
  %s7657 = scalar_lea.vmem %s1, 220
  %v7658 = vld [vmem:[%s7657] sm:$0xf]
  %v7659 = vld [vmem:[%s7657 + $0x4] sm:$0xf]
  %v7660 = vld [vmem:[%s7657 + $0x8] sm:$0xf]
  %v7661 = vld [vmem:[%s7657 + $0xc] sm:$0xf]
  %v7662 = vld [vmem:[%s7657 + $0x10] sm:$0x3]
  %v7668 = vunpack.c.l.b16 %v7658
  %v7669 = vunpack.c.l.b16 %v7659
  %v7670 = vunpack.c.l.b16 %v7660
  %v7671 = vunpack.c.l.b16 %v7661
  %v7672 = vunpack.c.l.b16 %v7662
  %v7673 = vpack.c.b16 %v7669, %v7668
  %v7674 = vpack.c.b16 %v7671, %v7670
  %v7675 = vpack.c.b16 %v7672, %v7672
  %v7679 = vsel %vm634, %v7675, 0
  %7681 = vmatprep.subr.bf16.mxu0 0
  %7682 = vmatpush1.bf16.msra.mxu0 0
  %7683 = vmatprep.subr.bf16.mxu0 0
  %7684 = vmatpush1.bf16.msra.mxu0 0
  %7685 = vmatprep.subr.bf16.mxu0 0
  %7686 = vmatpush1.bf16.msra.mxu0 0
  %7687 = vmatprep.subr.bf16.mxu0 0
  %7688 = vmatpush1.bf16.msra.mxu0 0
  %7689 = vmatprep.subr.bf16.mxu0 0
  %7690 = vmatpush1.bf16.msra.mxu0 0
  %7691 = vmatprep.subr.bf16.mxu0 0
  %7692 = vmatpush1.bf16.msra.mxu0 %v7679
  %7693 = vmatprep.subr.bf16.mxu0 0
  %7694 = vmatpush1.bf16.msra.mxu0 %v7674
  %7695 = vmatprep.subr.bf16.mxu0 0
  %7696 = vmatpush1.bf16.msra.mxu0 %v7673
  %7697 = vmatprep.subr.bf16.mxu0 0
  %7698 = vmatpush2.bf16.msra.mxu0 0
  %7699 = vmatprep.subr.bf16.mxu0 0
  %7700 = vmatpush2.bf16.msra.mxu0 0
  %7701 = vmatprep.subr.bf16.mxu0 0
  %7702 = vmatpush2.bf16.msra.mxu0 0
  %7703 = vmatprep.subr.bf16.mxu0 0
  %7704 = vmatpush2.bf16.msra.mxu0 0
  %7705 = vmatprep.subr.bf16.mxu0 0
  %7706 = vmatpush2.bf16.msra.mxu0 0
  %7707 = vmatprep.subr.bf16.mxu0 0
  %7708 = vmatpush2.bf16.msra.mxu0 0
  %7709 = vmatprep.subr.bf16.mxu0 0
  %7710 = vmatpush2.bf16.msra.mxu0 0
  %7711 = vmatprep.subr.bf16.mxu0 0
  %7712 = vmatpush2.bf16.msra.mxu0 0
  %7713 = vmatprep.mubr.bf16.mxu0 0
  %7714 = vmatmul.mubr.bf16.gmra.mxu0 %v1672
  %v7715 = vpop.f32.mrf.mxu0
  %v7716 = vadd.f32 0.0, %v7715
  %v7717 = vpop.f32.mrf.mxu0
  %v7718 = vpop.f32.mrf.mxu0
  %v7719 = vadd.f32 0.0, %v7718
  %v7720 = vpop.f32.mrf.mxu0
  %7721 = vmatprep.mubr.bf16.mxu0 0
  %7722 = vmatmul.mubr.bf16.gmra.mxu0 %v1675
  %v7723 = vpop.f32.mrf.mxu0
  %v7724 = vadd.f32 0.0, %v7723
  %v7725 = vpop.f32.mrf.mxu0
  %v7726 = vpop.f32.mrf.mxu0
  %v7727 = vadd.f32 0.0, %v7726
  %v7728 = vpop.f32.mrf.mxu0
  %7729 = vmatprep.mubr.bf16.mxu0 0
  %7730 = vmatmul.mubr.bf16.gmra.mxu0 %v1678
  %v7731 = vpop.f32.mrf.mxu0
  %v7732 = vadd.f32 0.0, %v7731
  %v7733 = vpop.f32.mrf.mxu0
  %v7734 = vpop.f32.mrf.mxu0
  %v7735 = vadd.f32 0.0, %v7734
  %v7736 = vpop.f32.mrf.mxu0
  %7737 = vmatprep.mubr.bf16.mxu0 0
  %7738 = vmatmul.mubr.bf16.gmra.mxu0 %v1681
  %v7739 = vpop.f32.mrf.mxu0
  %v7740 = vadd.f32 0.0, %v7739
  %v7741 = vpop.f32.mrf.mxu0
  %v7742 = vpop.f32.mrf.mxu0
  %v7743 = vadd.f32 0.0, %v7742
  %v7744 = vpop.f32.mrf.mxu0
  %7745 = vmatprep.mubr.bf16.mxu0 0
  %7746 = vmatmul.mubr.bf16.gmra.mxu0 %v1684
  %v7747 = vpop.f32.mrf.mxu0
  %v7748 = vadd.f32 0.0, %v7747
  %v7749 = vpop.f32.mrf.mxu0
  %v7750 = vpop.f32.mrf.mxu0
  %v7751 = vadd.f32 0.0, %v7750
  %v7752 = vpop.f32.mrf.mxu0
  %7753 = vmatprep.mubr.bf16.mxu0 0
  %7754 = vmatmul.mubr.bf16.gmra.mxu0 %v1687
  %v7755 = vpop.f32.mrf.mxu0
  %v7756 = vadd.f32 0.0, %v7755
  %v7757 = vpop.f32.mrf.mxu0
  %v7758 = vpop.f32.mrf.mxu0
  %v7759 = vadd.f32 0.0, %v7758
  %v7760 = vpop.f32.mrf.mxu0
  %7761 = vmatprep.mubr.bf16.mxu0 0
  %7762 = vmatmul.mubr.bf16.gmra.mxu0 %v1690
  %v7763 = vpop.f32.mrf.mxu0
  %v7764 = vadd.f32 0.0, %v7763
  %v7765 = vpop.f32.mrf.mxu0
  %v7766 = vpop.f32.mrf.mxu0
  %v7767 = vadd.f32 0.0, %v7766
  %v7768 = vpop.f32.mrf.mxu0
  %7769 = vmatprep.mubr.bf16.mxu0 0
  %7770 = vmatmul.mubr.bf16.gmra.mxu0 %v1693
  %v7771 = vpop.f32.mrf.mxu0
  %v7772 = vadd.f32 0.0, %v7771
  %v7773 = vpop.f32.mrf.mxu0
  %v7774 = vpop.f32.mrf.mxu0
  %v7775 = vadd.f32 0.0, %v7774
  %v7776 = vpop.f32.mrf.mxu0
  %7777 = vmatprep.mubr.bf16.mxu0 0
  %7778 = vmatmul.mubr.bf16.gmra.mxu0 %v1696
  %v7779 = vpop.f32.mrf.mxu0
  %v7780 = vadd.f32 0.0, %v7779
  %v7781 = vpop.f32.mrf.mxu0
  %v7782 = vpop.f32.mrf.mxu0
  %v7783 = vadd.f32 0.0, %v7782
  %v7784 = vpop.f32.mrf.mxu0
  %7785 = vmatprep.mubr.bf16.mxu0 0
  %7786 = vmatmul.mubr.bf16.gmra.mxu0 %v1699
  %v7787 = vpop.f32.mrf.mxu0
  %v7788 = vadd.f32 0.0, %v7787
  %v7789 = vpop.f32.mrf.mxu0
  %v7790 = vpop.f32.mrf.mxu0
  %v7791 = vadd.f32 0.0, %v7790
  %v7792 = vpop.f32.mrf.mxu0
  %7793 = vmatprep.mubr.bf16.mxu0 0
  %7794 = vmatmul.mubr.bf16.gmra.mxu0 %v1702
  %v7795 = vpop.f32.mrf.mxu0
  %v7796 = vadd.f32 0.0, %v7795
  %v7797 = vpop.f32.mrf.mxu0
  %v7798 = vpop.f32.mrf.mxu0
  %v7799 = vadd.f32 0.0, %v7798
  %v7800 = vpop.f32.mrf.mxu0
  %7801 = vmatprep.mubr.bf16.mxu0 0
  %7802 = vmatmul.mubr.bf16.gmra.mxu0 %v1705
  %v7803 = vpop.f32.mrf.mxu0
  %v7804 = vadd.f32 0.0, %v7803
  %v7805 = vpop.f32.mrf.mxu0
  %v7806 = vpop.f32.mrf.mxu0
  %v7807 = vadd.f32 0.0, %v7806
  %v7808 = vpop.f32.mrf.mxu0
  %7809 = vmatprep.mubr.bf16.mxu0 0
  %7810 = vmatmul.mubr.bf16.gmra.mxu0 %v1708
  %v7811 = vpop.f32.mrf.mxu0
  %v7812 = vadd.f32 0.0, %v7811
  %v7813 = vpop.f32.mrf.mxu0
  %v7814 = vpop.f32.mrf.mxu0
  %v7815 = vadd.f32 0.0, %v7814
  %v7816 = vpop.f32.mrf.mxu0
  %7817 = vmatprep.mubr.bf16.mxu0 0
  %7818 = vmatmul.mubr.bf16.gmra.mxu0 %v1711
  %v7819 = vpop.f32.mrf.mxu0
  %v7820 = vadd.f32 0.0, %v7819
  %v7821 = vpop.f32.mrf.mxu0
  %v7822 = vpop.f32.mrf.mxu0
  %v7823 = vadd.f32 0.0, %v7822
  %v7824 = vpop.f32.mrf.mxu0
  %7825 = vmatprep.mubr.bf16.mxu0 0
  %7826 = vmatmul.mubr.bf16.gmra.mxu0 %v1714
  %v7827 = vpop.f32.mrf.mxu0
  %v7828 = vadd.f32 0.0, %v7827
  %v7829 = vpop.f32.mrf.mxu0
  %v7830 = vpop.f32.mrf.mxu0
  %v7831 = vadd.f32 0.0, %v7830
  %v7832 = vpop.f32.mrf.mxu0
  %7833 = vmatprep.mubr.bf16.mxu0 0
  %7834 = vmatmul.mubr.bf16.gmra.mxu0 %v1717
  %v7835 = vpop.f32.mrf.mxu0
  %v7836 = vadd.f32 0.0, %v7835
  %v7837 = vpop.f32.mrf.mxu0
  %v7838 = vpop.f32.mrf.mxu0
  %v7839 = vadd.f32 0.0, %v7838
  %v7840 = vpop.f32.mrf.mxu0
  %7841 = vmatprep.mubr.bf16.mxu0 0
  %7842 = vmatmul.mubr.bf16.gmra.mxu0 %v1720
  %v7843 = vpop.f32.mrf.mxu0
  %v7844 = vadd.f32 0.0, %v7843
  %v7845 = vpop.f32.mrf.mxu0
  %v7846 = vpop.f32.mrf.mxu0
  %v7847 = vadd.f32 0.0, %v7846
  %v7848 = vpop.f32.mrf.mxu0
  %7849 = vmatprep.mubr.bf16.mxu0 0
  %7850 = vmatmul.mubr.bf16.gmra.mxu0 %v1723
  %v7851 = vpop.f32.mrf.mxu0
  %v7852 = vadd.f32 0.0, %v7851
  %v7853 = vpop.f32.mrf.mxu0
  %v7854 = vpop.f32.mrf.mxu0
  %v7855 = vadd.f32 0.0, %v7854
  %v7856 = vpop.f32.mrf.mxu0
  %7857 = vmatprep.mubr.bf16.mxu0 0
  %7858 = vmatmul.mubr.bf16.gmra.mxu0 %v1726
  %v7859 = vpop.f32.mrf.mxu0
  %v7860 = vadd.f32 0.0, %v7859
  %v7861 = vpop.f32.mrf.mxu0
  %v7862 = vpop.f32.mrf.mxu0
  %v7863 = vadd.f32 0.0, %v7862
  %v7864 = vpop.f32.mrf.mxu0
  %7865 = vmatprep.mubr.bf16.mxu0 0
  %7866 = vmatmul.mubr.bf16.gmra.mxu0 %v1729
  %v7867 = vpop.f32.mrf.mxu0
  %v7868 = vadd.f32 0.0, %v7867
  %v7869 = vpop.f32.mrf.mxu0
  %v7870 = vpop.f32.mrf.mxu0
  %v7871 = vadd.f32 0.0, %v7870
  %v7872 = vpop.f32.mrf.mxu0
  %7873 = vmatprep.mubr.bf16.mxu0 0
  %7874 = vmatmul.mubr.bf16.gmra.mxu0 %v1732
  %v7875 = vpop.f32.mrf.mxu0
  %v7876 = vadd.f32 0.0, %v7875
  %v7877 = vpop.f32.mrf.mxu0
  %v7878 = vpop.f32.mrf.mxu0
  %v7879 = vadd.f32 0.0, %v7878
  %v7880 = vpop.f32.mrf.mxu0
  %7881 = vmatprep.mubr.bf16.mxu0 0
  %7882 = vmatmul.mubr.bf16.gmra.mxu0 %v1735
  %v7883 = vpop.f32.mrf.mxu0
  %v7884 = vadd.f32 0.0, %v7883
  %v7885 = vpop.f32.mrf.mxu0
  %v7886 = vpop.f32.mrf.mxu0
  %v7887 = vadd.f32 0.0, %v7886
  %v7888 = vpop.f32.mrf.mxu0
  %7889 = vmatprep.mubr.bf16.mxu0 0
  %7890 = vmatmul.mubr.bf16.gmra.mxu0 %v1738
  %v7891 = vpop.f32.mrf.mxu0
  %v7892 = vadd.f32 0.0, %v7891
  %v7893 = vpop.f32.mrf.mxu0
  %v7894 = vpop.f32.mrf.mxu0
  %v7895 = vadd.f32 0.0, %v7894
  %v7896 = vpop.f32.mrf.mxu0
  %7897 = vmatprep.mubr.bf16.mxu0 0
  %7898 = vmatmul.mubr.bf16.gmra.mxu0 %v1741
  %v7899 = vpop.f32.mrf.mxu0
  %v7900 = vadd.f32 0.0, %v7899
  %v7901 = vpop.f32.mrf.mxu0
  %v7902 = vpop.f32.mrf.mxu0
  %v7903 = vadd.f32 0.0, %v7902
  %v7904 = vpop.f32.mrf.mxu0
  %7905 = vmatprep.mubr.bf16.mxu0 0
  %7906 = vmatmul.mubr.bf16.gmra.mxu0 %v1744
  %v7907 = vpop.f32.mrf.mxu0
  %v7908 = vadd.f32 0.0, %v7907
  %v7909 = vpop.f32.mrf.mxu0
  %v7910 = vpop.f32.mrf.mxu0
  %v7911 = vadd.f32 0.0, %v7910
  %v7912 = vpop.f32.mrf.mxu0
  %7913 = vmatprep.mubr.bf16.mxu0 0
  %7914 = vmatmul.mubr.bf16.gmra.mxu0 %v1747
  %v7915 = vpop.f32.mrf.mxu0
  %v7916 = vadd.f32 0.0, %v7915
  %v7917 = vpop.f32.mrf.mxu0
  %v7918 = vpop.f32.mrf.mxu0
  %v7919 = vadd.f32 0.0, %v7918
  %v7920 = vpop.f32.mrf.mxu0
  %7921 = vmatprep.mubr.bf16.mxu0 0
  %7922 = vmatmul.mubr.bf16.gmra.mxu0 %v1750
  %v7923 = vpop.f32.mrf.mxu0
  %v7924 = vadd.f32 0.0, %v7923
  %v7925 = vpop.f32.mrf.mxu0
  %v7926 = vpop.f32.mrf.mxu0
  %v7927 = vadd.f32 0.0, %v7926
  %v7928 = vpop.f32.mrf.mxu0
  %7929 = vmatprep.mubr.bf16.mxu0 0
  %7930 = vmatmul.mubr.bf16.gmra.mxu0 %v1753
  %v7931 = vpop.f32.mrf.mxu0
  %v7932 = vadd.f32 0.0, %v7931
  %v7933 = vpop.f32.mrf.mxu0
  %v7934 = vpop.f32.mrf.mxu0
  %v7935 = vadd.f32 0.0, %v7934
  %v7936 = vpop.f32.mrf.mxu0
  %7937 = vmatprep.mubr.bf16.mxu0 0
  %7938 = vmatmul.mubr.bf16.gmra.mxu0 %v1756
  %v7939 = vpop.f32.mrf.mxu0
  %v7940 = vadd.f32 0.0, %v7939
  %v7941 = vpop.f32.mrf.mxu0
  %v7942 = vpop.f32.mrf.mxu0
  %v7943 = vadd.f32 0.0, %v7942
  %v7944 = vpop.f32.mrf.mxu0
  %7945 = vmatprep.mubr.bf16.mxu0 0
  %7946 = vmatmul.mubr.bf16.gmra.mxu0 %v1759
  %v7947 = vpop.f32.mrf.mxu0
  %v7948 = vadd.f32 0.0, %v7947
  %v7949 = vpop.f32.mrf.mxu0
  %v7950 = vpop.f32.mrf.mxu0
  %v7951 = vadd.f32 0.0, %v7950
  %v7952 = vpop.f32.mrf.mxu0
  %7953 = vmatprep.mubr.bf16.mxu0 0
  %7954 = vmatmul.mubr.bf16.gmra.mxu0 %v1762
  %v7955 = vpop.f32.mrf.mxu0
  %v7956 = vadd.f32 0.0, %v7955
  %v7957 = vpop.f32.mrf.mxu0
  %v7958 = vpop.f32.mrf.mxu0
  %v7959 = vadd.f32 0.0, %v7958
  %v7960 = vpop.f32.mrf.mxu0
  %7961 = vmatprep.mubr.bf16.mxu0 0
  %7962 = vmatmul.mubr.bf16.gmra.mxu0 %v1765
  %v7963 = vpop.f32.mrf.mxu0
  %v7964 = vadd.f32 0.0, %v7963
  %v7965 = vpop.f32.mrf.mxu0
  %v7966 = vpop.f32.mrf.mxu0
  %v7967 = vadd.f32 0.0, %v7966
  %v7968 = vpop.f32.mrf.mxu0
  %7969 = vdwg.mxu0
  %v7970 = vadd.f32 %v7403, %v7716
  %v7971 = vadd.f32 %v7406, %v7719
  %v7972 = vadd.f32 %v7411, %v7724
  %v7973 = vadd.f32 %v7414, %v7727
  %v7974 = vadd.f32 %v7419, %v7732
  %v7975 = vadd.f32 %v7422, %v7735
  %v7976 = vadd.f32 %v7427, %v7740
  %v7977 = vadd.f32 %v7430, %v7743
  %v7978 = vadd.f32 %v7435, %v7748
  %v7979 = vadd.f32 %v7438, %v7751
  %v7980 = vadd.f32 %v7443, %v7756
  %v7981 = vadd.f32 %v7446, %v7759
  %v7982 = vadd.f32 %v7451, %v7764
  %v7983 = vadd.f32 %v7454, %v7767
  %v7984 = vadd.f32 %v7459, %v7772
  %v7985 = vadd.f32 %v7462, %v7775
  %v7986 = vadd.f32 %v7467, %v7780
  %v7987 = vadd.f32 %v7470, %v7783
  %v7988 = vadd.f32 %v7475, %v7788
  %v7989 = vadd.f32 %v7478, %v7791
  %v7990 = vadd.f32 %v7483, %v7796
  %v7991 = vadd.f32 %v7486, %v7799
  %v7992 = vadd.f32 %v7491, %v7804
  %v7993 = vadd.f32 %v7494, %v7807
  %v7994 = vadd.f32 %v7499, %v7812
  %v7995 = vadd.f32 %v7502, %v7815
  %v7996 = vadd.f32 %v7507, %v7820
  %v7997 = vadd.f32 %v7510, %v7823
  %v7998 = vadd.f32 %v7515, %v7828
  %v7999 = vadd.f32 %v7518, %v7831
  %v8000 = vadd.f32 %v7523, %v7836
  %v8001 = vadd.f32 %v7526, %v7839
  %v8002 = vadd.f32 %v7531, %v7844
  %v8003 = vadd.f32 %v7534, %v7847
  %v8004 = vadd.f32 %v7539, %v7852
  %v8005 = vadd.f32 %v7542, %v7855
  %v8006 = vadd.f32 %v7547, %v7860
  %v8007 = vadd.f32 %v7550, %v7863
  %v8008 = vadd.f32 %v7555, %v7868
  %v8009 = vadd.f32 %v7558, %v7871
  %v8010 = vadd.f32 %v7563, %v7876
  %v8011 = vadd.f32 %v7566, %v7879
  %v8012 = vadd.f32 %v7571, %v7884
  %v8013 = vadd.f32 %v7574, %v7887
  %v8014 = vadd.f32 %v7579, %v7892
  %v8015 = vadd.f32 %v7582, %v7895
  %v8016 = vadd.f32 %v7587, %v7900
  %v8017 = vadd.f32 %v7590, %v7903
  %v8018 = vadd.f32 %v7595, %v7908
  %v8019 = vadd.f32 %v7598, %v7911
  %v8020 = vadd.f32 %v7603, %v7916
  %v8021 = vadd.f32 %v7606, %v7919
  %v8022 = vadd.f32 %v7611, %v7924
  %v8023 = vadd.f32 %v7614, %v7927
  %v8024 = vadd.f32 %v7619, %v7932
  %v8025 = vadd.f32 %v7622, %v7935
  %v8026 = vadd.f32 %v7627, %v7940
  %v8027 = vadd.f32 %v7630, %v7943
  %v8028 = vadd.f32 %v7635, %v7948
  %v8029 = vadd.f32 %v7638, %v7951
  %v8030 = vadd.f32 %v7643, %v7956
  %v8031 = vadd.f32 %v7646, %v7959
  %v8032 = vadd.f32 %v7651, %v7964
  %v8033 = vadd.f32 %v7654, %v7967
  %s8034 = scalar_lea.vmem %s1, 300
  %v8035 = vld [vmem:[%s8034] sm:$0xf]
  %v8036 = vld [vmem:[%s8034 + $0x4] sm:$0xf]
  %v8037 = vld [vmem:[%s8034 + $0x8] sm:$0xf]
  %v8038 = vld [vmem:[%s8034 + $0xc] sm:$0xf]
  %v8039 = vld [vmem:[%s8034 + $0x10] sm:$0x3]
  %v8045 = vunpack.c.l.b16 %v8035
  %v8046 = vunpack.c.l.b16 %v8036
  %v8047 = vunpack.c.l.b16 %v8037
  %v8048 = vunpack.c.l.b16 %v8038
  %v8049 = vunpack.c.l.b16 %v8039
  %v8050 = vpack.c.b16 %v8046, %v8045
  %v8051 = vpack.c.b16 %v8048, %v8047
  %v8052 = vpack.c.b16 %v8049, %v8049
  %v8056 = vsel %vm634, %v8052, 0
  %8058 = vmatprep.subr.bf16.mxu0 0
  %8059 = vmatpush1.bf16.msra.mxu0 0
  %8060 = vmatprep.subr.bf16.mxu0 0
  %8061 = vmatpush1.bf16.msra.mxu0 0
  %8062 = vmatprep.subr.bf16.mxu0 0
  %8063 = vmatpush1.bf16.msra.mxu0 0
  %8064 = vmatprep.subr.bf16.mxu0 0
  %8065 = vmatpush1.bf16.msra.mxu0 0
  %8066 = vmatprep.subr.bf16.mxu0 0
  %8067 = vmatpush1.bf16.msra.mxu0 0
  %8068 = vmatprep.subr.bf16.mxu0 0
  %8069 = vmatpush1.bf16.msra.mxu0 %v8056
  %8070 = vmatprep.subr.bf16.mxu0 0
  %8071 = vmatpush1.bf16.msra.mxu0 %v8051
  %8072 = vmatprep.subr.bf16.mxu0 0
  %8073 = vmatpush1.bf16.msra.mxu0 %v8050
  %8074 = vmatprep.subr.bf16.mxu0 0
  %8075 = vmatpush2.bf16.msra.mxu0 0
  %8076 = vmatprep.subr.bf16.mxu0 0
  %8077 = vmatpush2.bf16.msra.mxu0 0
  %8078 = vmatprep.subr.bf16.mxu0 0
  %8079 = vmatpush2.bf16.msra.mxu0 0
  %8080 = vmatprep.subr.bf16.mxu0 0
  %8081 = vmatpush2.bf16.msra.mxu0 0
  %8082 = vmatprep.subr.bf16.mxu0 0
  %8083 = vmatpush2.bf16.msra.mxu0 0
  %8084 = vmatprep.subr.bf16.mxu0 0
  %8085 = vmatpush2.bf16.msra.mxu0 0
  %8086 = vmatprep.subr.bf16.mxu0 0
  %8087 = vmatpush2.bf16.msra.mxu0 0
  %8088 = vmatprep.subr.bf16.mxu0 0
  %8089 = vmatpush2.bf16.msra.mxu0 0
  %8090 = vmatprep.mubr.bf16.mxu0 0
  %8091 = vmatmul.mubr.bf16.gmra.mxu0 %v2305
  %v8092 = vpop.f32.mrf.mxu0
  %v8093 = vadd.f32 0.0, %v8092
  %v8094 = vpop.f32.mrf.mxu0
  %v8095 = vpop.f32.mrf.mxu0
  %v8096 = vadd.f32 0.0, %v8095
  %v8097 = vpop.f32.mrf.mxu0
  %8098 = vmatprep.mubr.bf16.mxu0 0
  %8099 = vmatmul.mubr.bf16.gmra.mxu0 %v2308
  %v8100 = vpop.f32.mrf.mxu0
  %v8101 = vadd.f32 0.0, %v8100
  %v8102 = vpop.f32.mrf.mxu0
  %v8103 = vpop.f32.mrf.mxu0
  %v8104 = vadd.f32 0.0, %v8103
  %v8105 = vpop.f32.mrf.mxu0
  %8106 = vmatprep.mubr.bf16.mxu0 0
  %8107 = vmatmul.mubr.bf16.gmra.mxu0 %v2311
  %v8108 = vpop.f32.mrf.mxu0
  %v8109 = vadd.f32 0.0, %v8108
  %v8110 = vpop.f32.mrf.mxu0
  %v8111 = vpop.f32.mrf.mxu0
  %v8112 = vadd.f32 0.0, %v8111
  %v8113 = vpop.f32.mrf.mxu0
  %8114 = vmatprep.mubr.bf16.mxu0 0
  %8115 = vmatmul.mubr.bf16.gmra.mxu0 %v2314
  %v8116 = vpop.f32.mrf.mxu0
  %v8117 = vadd.f32 0.0, %v8116
  %v8118 = vpop.f32.mrf.mxu0
  %v8119 = vpop.f32.mrf.mxu0
  %v8120 = vadd.f32 0.0, %v8119
  %v8121 = vpop.f32.mrf.mxu0
  %8122 = vmatprep.mubr.bf16.mxu0 0
  %8123 = vmatmul.mubr.bf16.gmra.mxu0 %v2317
  %v8124 = vpop.f32.mrf.mxu0
  %v8125 = vadd.f32 0.0, %v8124
  %v8126 = vpop.f32.mrf.mxu0
  %v8127 = vpop.f32.mrf.mxu0
  %v8128 = vadd.f32 0.0, %v8127
  %v8129 = vpop.f32.mrf.mxu0
  %8130 = vmatprep.mubr.bf16.mxu0 0
  %8131 = vmatmul.mubr.bf16.gmra.mxu0 %v2320
  %v8132 = vpop.f32.mrf.mxu0
  %v8133 = vadd.f32 0.0, %v8132
  %v8134 = vpop.f32.mrf.mxu0
  %v8135 = vpop.f32.mrf.mxu0
  %v8136 = vadd.f32 0.0, %v8135
  %v8137 = vpop.f32.mrf.mxu0
  %8138 = vmatprep.mubr.bf16.mxu0 0
  %8139 = vmatmul.mubr.bf16.gmra.mxu0 %v2323
  %v8140 = vpop.f32.mrf.mxu0
  %v8141 = vadd.f32 0.0, %v8140
  %v8142 = vpop.f32.mrf.mxu0
  %v8143 = vpop.f32.mrf.mxu0
  %v8144 = vadd.f32 0.0, %v8143
  %v8145 = vpop.f32.mrf.mxu0
  %8146 = vmatprep.mubr.bf16.mxu0 0
  %8147 = vmatmul.mubr.bf16.gmra.mxu0 %v2326
  %v8148 = vpop.f32.mrf.mxu0
  %v8149 = vadd.f32 0.0, %v8148
  %v8150 = vpop.f32.mrf.mxu0
  %v8151 = vpop.f32.mrf.mxu0
  %v8152 = vadd.f32 0.0, %v8151
  %v8153 = vpop.f32.mrf.mxu0
  %8154 = vmatprep.mubr.bf16.mxu0 0
  %8155 = vmatmul.mubr.bf16.gmra.mxu0 %v2329
  %v8156 = vpop.f32.mrf.mxu0
  %v8157 = vadd.f32 0.0, %v8156
  %v8158 = vpop.f32.mrf.mxu0
  %v8159 = vpop.f32.mrf.mxu0
  %v8160 = vadd.f32 0.0, %v8159
  %v8161 = vpop.f32.mrf.mxu0
  %8162 = vmatprep.mubr.bf16.mxu0 0
  %8163 = vmatmul.mubr.bf16.gmra.mxu0 %v2332
  %v8164 = vpop.f32.mrf.mxu0
  %v8165 = vadd.f32 0.0, %v8164
  %v8166 = vpop.f32.mrf.mxu0
  %v8167 = vpop.f32.mrf.mxu0
  %v8168 = vadd.f32 0.0, %v8167
  %v8169 = vpop.f32.mrf.mxu0
  %8170 = vmatprep.mubr.bf16.mxu0 0
  %8171 = vmatmul.mubr.bf16.gmra.mxu0 %v2335
  %v8172 = vpop.f32.mrf.mxu0
  %v8173 = vadd.f32 0.0, %v8172
  %v8174 = vpop.f32.mrf.mxu0
  %v8175 = vpop.f32.mrf.mxu0
  %v8176 = vadd.f32 0.0, %v8175
  %v8177 = vpop.f32.mrf.mxu0
  %8178 = vmatprep.mubr.bf16.mxu0 0
  %8179 = vmatmul.mubr.bf16.gmra.mxu0 %v2338
  %v8180 = vpop.f32.mrf.mxu0
  %v8181 = vadd.f32 0.0, %v8180
  %v8182 = vpop.f32.mrf.mxu0
  %v8183 = vpop.f32.mrf.mxu0
  %v8184 = vadd.f32 0.0, %v8183
  %v8185 = vpop.f32.mrf.mxu0
  %8186 = vmatprep.mubr.bf16.mxu0 0
  %8187 = vmatmul.mubr.bf16.gmra.mxu0 %v2341
  %v8188 = vpop.f32.mrf.mxu0
  %v8189 = vadd.f32 0.0, %v8188
  %v8190 = vpop.f32.mrf.mxu0
  %v8191 = vpop.f32.mrf.mxu0
  %v8192 = vadd.f32 0.0, %v8191
  %v8193 = vpop.f32.mrf.mxu0
  %8194 = vmatprep.mubr.bf16.mxu0 0
  %8195 = vmatmul.mubr.bf16.gmra.mxu0 %v2344
  %v8196 = vpop.f32.mrf.mxu0
  %v8197 = vadd.f32 0.0, %v8196
  %v8198 = vpop.f32.mrf.mxu0
  %v8199 = vpop.f32.mrf.mxu0
  %v8200 = vadd.f32 0.0, %v8199
  %v8201 = vpop.f32.mrf.mxu0
  %8202 = vmatprep.mubr.bf16.mxu0 0
  %8203 = vmatmul.mubr.bf16.gmra.mxu0 %v2347
  %v8204 = vpop.f32.mrf.mxu0
  %v8205 = vadd.f32 0.0, %v8204
  %v8206 = vpop.f32.mrf.mxu0
  %v8207 = vpop.f32.mrf.mxu0
  %v8208 = vadd.f32 0.0, %v8207
  %v8209 = vpop.f32.mrf.mxu0
  %8210 = vmatprep.mubr.bf16.mxu0 0
  %8211 = vmatmul.mubr.bf16.gmra.mxu0 %v2350
  %v8212 = vpop.f32.mrf.mxu0
  %v8213 = vadd.f32 0.0, %v8212
  %v8214 = vpop.f32.mrf.mxu0
  %v8215 = vpop.f32.mrf.mxu0
  %v8216 = vadd.f32 0.0, %v8215
  %v8217 = vpop.f32.mrf.mxu0
  %8218 = vmatprep.mubr.bf16.mxu0 0
  %8219 = vmatmul.mubr.bf16.gmra.mxu0 %v2353
  %v8220 = vpop.f32.mrf.mxu0
  %v8221 = vadd.f32 0.0, %v8220
  %v8222 = vpop.f32.mrf.mxu0
  %v8223 = vpop.f32.mrf.mxu0
  %v8224 = vadd.f32 0.0, %v8223
  %v8225 = vpop.f32.mrf.mxu0
  %8226 = vmatprep.mubr.bf16.mxu0 0
  %8227 = vmatmul.mubr.bf16.gmra.mxu0 %v2356
  %v8228 = vpop.f32.mrf.mxu0
  %v8229 = vadd.f32 0.0, %v8228
  %v8230 = vpop.f32.mrf.mxu0
  %v8231 = vpop.f32.mrf.mxu0
  %v8232 = vadd.f32 0.0, %v8231
  %v8233 = vpop.f32.mrf.mxu0
  %8234 = vmatprep.mubr.bf16.mxu0 0
  %8235 = vmatmul.mubr.bf16.gmra.mxu0 %v2359
  %v8236 = vpop.f32.mrf.mxu0
  %v8237 = vadd.f32 0.0, %v8236
  %v8238 = vpop.f32.mrf.mxu0
  %v8239 = vpop.f32.mrf.mxu0
  %v8240 = vadd.f32 0.0, %v8239
  %v8241 = vpop.f32.mrf.mxu0
  %8242 = vmatprep.mubr.bf16.mxu0 0
  %8243 = vmatmul.mubr.bf16.gmra.mxu0 %v2362
  %v8244 = vpop.f32.mrf.mxu0
  %v8245 = vadd.f32 0.0, %v8244
  %v8246 = vpop.f32.mrf.mxu0
  %v8247 = vpop.f32.mrf.mxu0
  %v8248 = vadd.f32 0.0, %v8247
  %v8249 = vpop.f32.mrf.mxu0
  %8250 = vmatprep.mubr.bf16.mxu0 0
  %8251 = vmatmul.mubr.bf16.gmra.mxu0 %v2365
  %v8252 = vpop.f32.mrf.mxu0
  %v8253 = vadd.f32 0.0, %v8252
  %v8254 = vpop.f32.mrf.mxu0
  %v8255 = vpop.f32.mrf.mxu0
  %v8256 = vadd.f32 0.0, %v8255
  %v8257 = vpop.f32.mrf.mxu0
  %8258 = vmatprep.mubr.bf16.mxu0 0
  %8259 = vmatmul.mubr.bf16.gmra.mxu0 %v2368
  %v8260 = vpop.f32.mrf.mxu0
  %v8261 = vadd.f32 0.0, %v8260
  %v8262 = vpop.f32.mrf.mxu0
  %v8263 = vpop.f32.mrf.mxu0
  %v8264 = vadd.f32 0.0, %v8263
  %v8265 = vpop.f32.mrf.mxu0
  %8266 = vmatprep.mubr.bf16.mxu0 0
  %8267 = vmatmul.mubr.bf16.gmra.mxu0 %v2371
  %v8268 = vpop.f32.mrf.mxu0
  %v8269 = vadd.f32 0.0, %v8268
  %v8270 = vpop.f32.mrf.mxu0
  %v8271 = vpop.f32.mrf.mxu0
  %v8272 = vadd.f32 0.0, %v8271
  %v8273 = vpop.f32.mrf.mxu0
  %8274 = vmatprep.mubr.bf16.mxu0 0
  %8275 = vmatmul.mubr.bf16.gmra.mxu0 %v2374
  %v8276 = vpop.f32.mrf.mxu0
  %v8277 = vadd.f32 0.0, %v8276
  %v8278 = vpop.f32.mrf.mxu0
  %v8279 = vpop.f32.mrf.mxu0
  %v8280 = vadd.f32 0.0, %v8279
  %v8281 = vpop.f32.mrf.mxu0
  %8282 = vmatprep.mubr.bf16.mxu0 0
  %8283 = vmatmul.mubr.bf16.gmra.mxu0 %v2377
  %v8284 = vpop.f32.mrf.mxu0
  %v8285 = vadd.f32 0.0, %v8284
  %v8286 = vpop.f32.mrf.mxu0
  %v8287 = vpop.f32.mrf.mxu0
  %v8288 = vadd.f32 0.0, %v8287
  %v8289 = vpop.f32.mrf.mxu0
  %8290 = vmatprep.mubr.bf16.mxu0 0
  %8291 = vmatmul.mubr.bf16.gmra.mxu0 %v2380
  %v8292 = vpop.f32.mrf.mxu0
  %v8293 = vadd.f32 0.0, %v8292
  %v8294 = vpop.f32.mrf.mxu0
  %v8295 = vpop.f32.mrf.mxu0
  %v8296 = vadd.f32 0.0, %v8295
  %v8297 = vpop.f32.mrf.mxu0
  %8298 = vmatprep.mubr.bf16.mxu0 0
  %8299 = vmatmul.mubr.bf16.gmra.mxu0 %v2383
  %v8300 = vpop.f32.mrf.mxu0
  %v8301 = vadd.f32 0.0, %v8300
  %v8302 = vpop.f32.mrf.mxu0
  %v8303 = vpop.f32.mrf.mxu0
  %v8304 = vadd.f32 0.0, %v8303
  %v8305 = vpop.f32.mrf.mxu0
  %8306 = vmatprep.mubr.bf16.mxu0 0
  %8307 = vmatmul.mubr.bf16.gmra.mxu0 %v2386
  %v8308 = vpop.f32.mrf.mxu0
  %v8309 = vadd.f32 0.0, %v8308
  %v8310 = vpop.f32.mrf.mxu0
  %v8311 = vpop.f32.mrf.mxu0
  %v8312 = vadd.f32 0.0, %v8311
  %v8313 = vpop.f32.mrf.mxu0
  %8314 = vmatprep.mubr.bf16.mxu0 0
  %8315 = vmatmul.mubr.bf16.gmra.mxu0 %v2389
  %v8316 = vpop.f32.mrf.mxu0
  %v8317 = vadd.f32 0.0, %v8316
  %v8318 = vpop.f32.mrf.mxu0
  %v8319 = vpop.f32.mrf.mxu0
  %v8320 = vadd.f32 0.0, %v8319
  %v8321 = vpop.f32.mrf.mxu0
  %8322 = vmatprep.mubr.bf16.mxu0 0
  %8323 = vmatmul.mubr.bf16.gmra.mxu0 %v2392
  %v8324 = vpop.f32.mrf.mxu0
  %v8325 = vadd.f32 0.0, %v8324
  %v8326 = vpop.f32.mrf.mxu0
  %v8327 = vpop.f32.mrf.mxu0
  %v8328 = vadd.f32 0.0, %v8327
  %v8329 = vpop.f32.mrf.mxu0
  %8330 = vmatprep.mubr.bf16.mxu0 0
  %8331 = vmatmul.mubr.bf16.gmra.mxu0 %v2395
  %v8332 = vpop.f32.mrf.mxu0
  %v8333 = vadd.f32 0.0, %v8332
  %v8334 = vpop.f32.mrf.mxu0
  %v8335 = vpop.f32.mrf.mxu0
  %v8336 = vadd.f32 0.0, %v8335
  %v8337 = vpop.f32.mrf.mxu0
  %8338 = vmatprep.mubr.bf16.mxu0 0
  %8339 = vmatmul.mubr.bf16.gmra.mxu0 %v2398
  %v8340 = vpop.f32.mrf.mxu0
  %v8341 = vadd.f32 0.0, %v8340
  %v8342 = vpop.f32.mrf.mxu0
  %v8343 = vpop.f32.mrf.mxu0
  %v8344 = vadd.f32 0.0, %v8343
  %v8345 = vpop.f32.mrf.mxu0
  %8346 = vdwg.mxu0
  %v8347 = vadd.f32 %v7970, %v8093
  %v8348 = vadd.f32 %v7971, %v8096
  %v8349 = vadd.f32 %v7972, %v8101
  %v8350 = vadd.f32 %v7973, %v8104
  %v8351 = vadd.f32 %v7974, %v8109
  %v8352 = vadd.f32 %v7975, %v8112
  %v8353 = vadd.f32 %v7976, %v8117
  %v8354 = vadd.f32 %v7977, %v8120
  %v8355 = vadd.f32 %v7978, %v8125
  %v8356 = vadd.f32 %v7979, %v8128
  %v8357 = vadd.f32 %v7980, %v8133
  %v8358 = vadd.f32 %v7981, %v8136
  %v8359 = vadd.f32 %v7982, %v8141
  %v8360 = vadd.f32 %v7983, %v8144
  %v8361 = vadd.f32 %v7984, %v8149
  %v8362 = vadd.f32 %v7985, %v8152
  %v8363 = vadd.f32 %v7986, %v8157
  %v8364 = vadd.f32 %v7987, %v8160
  %v8365 = vadd.f32 %v7988, %v8165
  %v8366 = vadd.f32 %v7989, %v8168
  %v8367 = vadd.f32 %v7990, %v8173
  %v8368 = vadd.f32 %v7991, %v8176
  %v8369 = vadd.f32 %v7992, %v8181
  %v8370 = vadd.f32 %v7993, %v8184
  %v8371 = vadd.f32 %v7994, %v8189
  %v8372 = vadd.f32 %v7995, %v8192
  %v8373 = vadd.f32 %v7996, %v8197
  %v8374 = vadd.f32 %v7997, %v8200
  %v8375 = vadd.f32 %v7998, %v8205
  %v8376 = vadd.f32 %v7999, %v8208
  %v8377 = vadd.f32 %v8000, %v8213
  %v8378 = vadd.f32 %v8001, %v8216
  %v8379 = vadd.f32 %v8002, %v8221
  %v8380 = vadd.f32 %v8003, %v8224
  %v8381 = vadd.f32 %v8004, %v8229
  %v8382 = vadd.f32 %v8005, %v8232
  %v8383 = vadd.f32 %v8006, %v8237
  %v8384 = vadd.f32 %v8007, %v8240
  %v8385 = vadd.f32 %v8008, %v8245
  %v8386 = vadd.f32 %v8009, %v8248
  %v8387 = vadd.f32 %v8010, %v8253
  %v8388 = vadd.f32 %v8011, %v8256
  %v8389 = vadd.f32 %v8012, %v8261
  %v8390 = vadd.f32 %v8013, %v8264
  %v8391 = vadd.f32 %v8014, %v8269
  %v8392 = vadd.f32 %v8015, %v8272
  %v8393 = vadd.f32 %v8016, %v8277
  %v8394 = vadd.f32 %v8017, %v8280
  %v8395 = vadd.f32 %v8018, %v8285
  %v8396 = vadd.f32 %v8019, %v8288
  %v8397 = vadd.f32 %v8020, %v8293
  %v8398 = vadd.f32 %v8021, %v8296
  %v8399 = vadd.f32 %v8022, %v8301
  %v8400 = vadd.f32 %v8023, %v8304
  %v8401 = vadd.f32 %v8024, %v8309
  %v8402 = vadd.f32 %v8025, %v8312
  %v8403 = vadd.f32 %v8026, %v8317
  %v8404 = vadd.f32 %v8027, %v8320
  %v8405 = vadd.f32 %v8028, %v8325
  %v8406 = vadd.f32 %v8029, %v8328
  %v8407 = vadd.f32 %v8030, %v8333
  %v8408 = vadd.f32 %v8031, %v8336
  %v8409 = vadd.f32 %v8032, %v8341
  %v8410 = vadd.f32 %v8033, %v8344
  %s8411 = scalar_lea.vmem %s1, 380
  %v8412 = vld [vmem:[%s8411] sm:$0xf]
  %v8413 = vld [vmem:[%s8411 + $0x4] sm:$0xf]
  %v8414 = vld [vmem:[%s8411 + $0x8] sm:$0xf]
  %v8415 = vld [vmem:[%s8411 + $0xc] sm:$0xf]
  %v8416 = vld [vmem:[%s8411 + $0x10] sm:$0x3]
  %v8422 = vunpack.c.l.b16 %v8412
  %v8423 = vunpack.c.l.b16 %v8413
  %v8424 = vunpack.c.l.b16 %v8414
  %v8425 = vunpack.c.l.b16 %v8415
  %v8426 = vunpack.c.l.b16 %v8416
  %v8427 = vpack.c.b16 %v8423, %v8422
  %v8428 = vpack.c.b16 %v8425, %v8424
  %v8429 = vpack.c.b16 %v8426, %v8426
  %v8433 = vsel %vm634, %v8429, 0
  %8435 = vmatprep.subr.bf16.mxu0 0
  %8436 = vmatpush1.bf16.msra.mxu0 0
  %8437 = vmatprep.subr.bf16.mxu0 0
  %8438 = vmatpush1.bf16.msra.mxu0 0
  %8439 = vmatprep.subr.bf16.mxu0 0
  %8440 = vmatpush1.bf16.msra.mxu0 0
  %8441 = vmatprep.subr.bf16.mxu0 0
  %8442 = vmatpush1.bf16.msra.mxu0 0
  %8443 = vmatprep.subr.bf16.mxu0 0
  %8444 = vmatpush1.bf16.msra.mxu0 0
  %8445 = vmatprep.subr.bf16.mxu0 0
  %8446 = vmatpush1.bf16.msra.mxu0 %v8433
  %8447 = vmatprep.subr.bf16.mxu0 0
  %8448 = vmatpush1.bf16.msra.mxu0 %v8428
  %8449 = vmatprep.subr.bf16.mxu0 0
  %8450 = vmatpush1.bf16.msra.mxu0 %v8427
  %8451 = vmatprep.subr.bf16.mxu0 0
  %8452 = vmatpush2.bf16.msra.mxu0 0
  %8453 = vmatprep.subr.bf16.mxu0 0
  %8454 = vmatpush2.bf16.msra.mxu0 0
  %8455 = vmatprep.subr.bf16.mxu0 0
  %8456 = vmatpush2.bf16.msra.mxu0 0
  %8457 = vmatprep.subr.bf16.mxu0 0
  %8458 = vmatpush2.bf16.msra.mxu0 0
  %8459 = vmatprep.subr.bf16.mxu0 0
  %8460 = vmatpush2.bf16.msra.mxu0 0
  %8461 = vmatprep.subr.bf16.mxu0 0
  %8462 = vmatpush2.bf16.msra.mxu0 0
  %8463 = vmatprep.subr.bf16.mxu0 0
  %8464 = vmatpush2.bf16.msra.mxu0 0
  %8465 = vmatprep.subr.bf16.mxu0 0
  %8466 = vmatpush2.bf16.msra.mxu0 0
  %8467 = vmatprep.mubr.bf16.mxu0 0
  %8468 = vmatmul.mubr.bf16.gmra.mxu0 %v2938
  %v8469 = vpop.f32.mrf.mxu0
  %v8470 = vadd.f32 0.0, %v8469
  %v8471 = vpop.f32.mrf.mxu0
  %v8472 = vpop.f32.mrf.mxu0
  %v8473 = vadd.f32 0.0, %v8472
  %v8474 = vpop.f32.mrf.mxu0
  %8475 = vmatprep.mubr.bf16.mxu0 0
  %8476 = vmatmul.mubr.bf16.gmra.mxu0 %v2941
  %v8477 = vpop.f32.mrf.mxu0
  %v8478 = vadd.f32 0.0, %v8477
  %v8479 = vpop.f32.mrf.mxu0
  %v8480 = vpop.f32.mrf.mxu0
  %v8481 = vadd.f32 0.0, %v8480
  %v8482 = vpop.f32.mrf.mxu0
  %8483 = vmatprep.mubr.bf16.mxu0 0
  %8484 = vmatmul.mubr.bf16.gmra.mxu0 %v2944
  %v8485 = vpop.f32.mrf.mxu0
  %v8486 = vadd.f32 0.0, %v8485
  %v8487 = vpop.f32.mrf.mxu0
  %v8488 = vpop.f32.mrf.mxu0
  %v8489 = vadd.f32 0.0, %v8488
  %v8490 = vpop.f32.mrf.mxu0
  %8491 = vmatprep.mubr.bf16.mxu0 0
  %8492 = vmatmul.mubr.bf16.gmra.mxu0 %v2947
  %v8493 = vpop.f32.mrf.mxu0
  %v8494 = vadd.f32 0.0, %v8493
  %v8495 = vpop.f32.mrf.mxu0
  %v8496 = vpop.f32.mrf.mxu0
  %v8497 = vadd.f32 0.0, %v8496
  %v8498 = vpop.f32.mrf.mxu0
  %8499 = vmatprep.mubr.bf16.mxu0 0
  %8500 = vmatmul.mubr.bf16.gmra.mxu0 %v2950
  %v8501 = vpop.f32.mrf.mxu0
  %v8502 = vadd.f32 0.0, %v8501
  %v8503 = vpop.f32.mrf.mxu0
  %v8504 = vpop.f32.mrf.mxu0
  %v8505 = vadd.f32 0.0, %v8504
  %v8506 = vpop.f32.mrf.mxu0
  %8507 = vmatprep.mubr.bf16.mxu0 0
  %8508 = vmatmul.mubr.bf16.gmra.mxu0 %v2953
  %v8509 = vpop.f32.mrf.mxu0
  %v8510 = vadd.f32 0.0, %v8509
  %v8511 = vpop.f32.mrf.mxu0
  %v8512 = vpop.f32.mrf.mxu0
  %v8513 = vadd.f32 0.0, %v8512
  %v8514 = vpop.f32.mrf.mxu0
  %8515 = vmatprep.mubr.bf16.mxu0 0
  %8516 = vmatmul.mubr.bf16.gmra.mxu0 %v2956
  %v8517 = vpop.f32.mrf.mxu0
  %v8518 = vadd.f32 0.0, %v8517
  %v8519 = vpop.f32.mrf.mxu0
  %v8520 = vpop.f32.mrf.mxu0
  %v8521 = vadd.f32 0.0, %v8520
  %v8522 = vpop.f32.mrf.mxu0
  %8523 = vmatprep.mubr.bf16.mxu0 0
  %8524 = vmatmul.mubr.bf16.gmra.mxu0 %v2959
  %v8525 = vpop.f32.mrf.mxu0
  %v8526 = vadd.f32 0.0, %v8525
  %v8527 = vpop.f32.mrf.mxu0
  %v8528 = vpop.f32.mrf.mxu0
  %v8529 = vadd.f32 0.0, %v8528
  %v8530 = vpop.f32.mrf.mxu0
  %8531 = vmatprep.mubr.bf16.mxu0 0
  %8532 = vmatmul.mubr.bf16.gmra.mxu0 %v2962
  %v8533 = vpop.f32.mrf.mxu0
  %v8534 = vadd.f32 0.0, %v8533
  %v8535 = vpop.f32.mrf.mxu0
  %v8536 = vpop.f32.mrf.mxu0
  %v8537 = vadd.f32 0.0, %v8536
  %v8538 = vpop.f32.mrf.mxu0
  %8539 = vmatprep.mubr.bf16.mxu0 0
  %8540 = vmatmul.mubr.bf16.gmra.mxu0 %v2965
  %v8541 = vpop.f32.mrf.mxu0
  %v8542 = vadd.f32 0.0, %v8541
  %v8543 = vpop.f32.mrf.mxu0
  %v8544 = vpop.f32.mrf.mxu0
  %v8545 = vadd.f32 0.0, %v8544
  %v8546 = vpop.f32.mrf.mxu0
  %8547 = vmatprep.mubr.bf16.mxu0 0
  %8548 = vmatmul.mubr.bf16.gmra.mxu0 %v2968
  %v8549 = vpop.f32.mrf.mxu0
  %v8550 = vadd.f32 0.0, %v8549
  %v8551 = vpop.f32.mrf.mxu0
  %v8552 = vpop.f32.mrf.mxu0
  %v8553 = vadd.f32 0.0, %v8552
  %v8554 = vpop.f32.mrf.mxu0
  %8555 = vmatprep.mubr.bf16.mxu0 0
  %8556 = vmatmul.mubr.bf16.gmra.mxu0 %v2971
  %v8557 = vpop.f32.mrf.mxu0
  %v8558 = vadd.f32 0.0, %v8557
  %v8559 = vpop.f32.mrf.mxu0
  %v8560 = vpop.f32.mrf.mxu0
  %v8561 = vadd.f32 0.0, %v8560
  %v8562 = vpop.f32.mrf.mxu0
  %8563 = vmatprep.mubr.bf16.mxu0 0
  %8564 = vmatmul.mubr.bf16.gmra.mxu0 %v2974
  %v8565 = vpop.f32.mrf.mxu0
  %v8566 = vadd.f32 0.0, %v8565
  %v8567 = vpop.f32.mrf.mxu0
  %v8568 = vpop.f32.mrf.mxu0
  %v8569 = vadd.f32 0.0, %v8568
  %v8570 = vpop.f32.mrf.mxu0
  %8571 = vmatprep.mubr.bf16.mxu0 0
  %8572 = vmatmul.mubr.bf16.gmra.mxu0 %v2977
  %v8573 = vpop.f32.mrf.mxu0
  %v8574 = vadd.f32 0.0, %v8573
  %v8575 = vpop.f32.mrf.mxu0
  %v8576 = vpop.f32.mrf.mxu0
  %v8577 = vadd.f32 0.0, %v8576
  %v8578 = vpop.f32.mrf.mxu0
  %8579 = vmatprep.mubr.bf16.mxu0 0
  %8580 = vmatmul.mubr.bf16.gmra.mxu0 %v2980
  %v8581 = vpop.f32.mrf.mxu0
  %v8582 = vadd.f32 0.0, %v8581
  %v8583 = vpop.f32.mrf.mxu0
  %v8584 = vpop.f32.mrf.mxu0
  %v8585 = vadd.f32 0.0, %v8584
  %v8586 = vpop.f32.mrf.mxu0
  %8587 = vmatprep.mubr.bf16.mxu0 0
  %8588 = vmatmul.mubr.bf16.gmra.mxu0 %v2983
  %v8589 = vpop.f32.mrf.mxu0
  %v8590 = vadd.f32 0.0, %v8589
  %v8591 = vpop.f32.mrf.mxu0
  %v8592 = vpop.f32.mrf.mxu0
  %v8593 = vadd.f32 0.0, %v8592
  %v8594 = vpop.f32.mrf.mxu0
  %8595 = vmatprep.mubr.bf16.mxu0 0
  %8596 = vmatmul.mubr.bf16.gmra.mxu0 %v2986
  %v8597 = vpop.f32.mrf.mxu0
  %v8598 = vadd.f32 0.0, %v8597
  %v8599 = vpop.f32.mrf.mxu0
  %v8600 = vpop.f32.mrf.mxu0
  %v8601 = vadd.f32 0.0, %v8600
  %v8602 = vpop.f32.mrf.mxu0
  %8603 = vmatprep.mubr.bf16.mxu0 0
  %8604 = vmatmul.mubr.bf16.gmra.mxu0 %v2989
  %v8605 = vpop.f32.mrf.mxu0
  %v8606 = vadd.f32 0.0, %v8605
  %v8607 = vpop.f32.mrf.mxu0
  %v8608 = vpop.f32.mrf.mxu0
  %v8609 = vadd.f32 0.0, %v8608
  %v8610 = vpop.f32.mrf.mxu0
  %8611 = vmatprep.mubr.bf16.mxu0 0
  %8612 = vmatmul.mubr.bf16.gmra.mxu0 %v2992
  %v8613 = vpop.f32.mrf.mxu0
  %v8614 = vadd.f32 0.0, %v8613
  %v8615 = vpop.f32.mrf.mxu0
  %v8616 = vpop.f32.mrf.mxu0
  %v8617 = vadd.f32 0.0, %v8616
  %v8618 = vpop.f32.mrf.mxu0
  %8619 = vmatprep.mubr.bf16.mxu0 0
  %8620 = vmatmul.mubr.bf16.gmra.mxu0 %v2995
  %v8621 = vpop.f32.mrf.mxu0
  %v8622 = vadd.f32 0.0, %v8621
  %v8623 = vpop.f32.mrf.mxu0
  %v8624 = vpop.f32.mrf.mxu0
  %v8625 = vadd.f32 0.0, %v8624
  %v8626 = vpop.f32.mrf.mxu0
  %8627 = vmatprep.mubr.bf16.mxu0 0
  %8628 = vmatmul.mubr.bf16.gmra.mxu0 %v2998
  %v8629 = vpop.f32.mrf.mxu0
  %v8630 = vadd.f32 0.0, %v8629
  %v8631 = vpop.f32.mrf.mxu0
  %v8632 = vpop.f32.mrf.mxu0
  %v8633 = vadd.f32 0.0, %v8632
  %v8634 = vpop.f32.mrf.mxu0
  %8635 = vmatprep.mubr.bf16.mxu0 0
  %8636 = vmatmul.mubr.bf16.gmra.mxu0 %v3001
  %v8637 = vpop.f32.mrf.mxu0
  %v8638 = vadd.f32 0.0, %v8637
  %v8639 = vpop.f32.mrf.mxu0
  %v8640 = vpop.f32.mrf.mxu0
  %v8641 = vadd.f32 0.0, %v8640
  %v8642 = vpop.f32.mrf.mxu0
  %8643 = vmatprep.mubr.bf16.mxu0 0
  %8644 = vmatmul.mubr.bf16.gmra.mxu0 %v3004
  %v8645 = vpop.f32.mrf.mxu0
  %v8646 = vadd.f32 0.0, %v8645
  %v8647 = vpop.f32.mrf.mxu0
  %v8648 = vpop.f32.mrf.mxu0
  %v8649 = vadd.f32 0.0, %v8648
  %v8650 = vpop.f32.mrf.mxu0
  %8651 = vmatprep.mubr.bf16.mxu0 0
  %8652 = vmatmul.mubr.bf16.gmra.mxu0 %v3007
  %v8653 = vpop.f32.mrf.mxu0
  %v8654 = vadd.f32 0.0, %v8653
  %v8655 = vpop.f32.mrf.mxu0
  %v8656 = vpop.f32.mrf.mxu0
  %v8657 = vadd.f32 0.0, %v8656
  %v8658 = vpop.f32.mrf.mxu0
  %8659 = vmatprep.mubr.bf16.mxu0 0
  %8660 = vmatmul.mubr.bf16.gmra.mxu0 %v3010
  %v8661 = vpop.f32.mrf.mxu0
  %v8662 = vadd.f32 0.0, %v8661
  %v8663 = vpop.f32.mrf.mxu0
  %v8664 = vpop.f32.mrf.mxu0
  %v8665 = vadd.f32 0.0, %v8664
  %v8666 = vpop.f32.mrf.mxu0
  %8667 = vmatprep.mubr.bf16.mxu0 0
  %8668 = vmatmul.mubr.bf16.gmra.mxu0 %v3013
  %v8669 = vpop.f32.mrf.mxu0
  %v8670 = vadd.f32 0.0, %v8669
  %v8671 = vpop.f32.mrf.mxu0
  %v8672 = vpop.f32.mrf.mxu0
  %v8673 = vadd.f32 0.0, %v8672
  %v8674 = vpop.f32.mrf.mxu0
  %8675 = vmatprep.mubr.bf16.mxu0 0
  %8676 = vmatmul.mubr.bf16.gmra.mxu0 %v3016
  %v8677 = vpop.f32.mrf.mxu0
  %v8678 = vadd.f32 0.0, %v8677
  %v8679 = vpop.f32.mrf.mxu0
  %v8680 = vpop.f32.mrf.mxu0
  %v8681 = vadd.f32 0.0, %v8680
  %v8682 = vpop.f32.mrf.mxu0
  %8683 = vmatprep.mubr.bf16.mxu0 0
  %8684 = vmatmul.mubr.bf16.gmra.mxu0 %v3019
  %v8685 = vpop.f32.mrf.mxu0
  %v8686 = vadd.f32 0.0, %v8685
  %v8687 = vpop.f32.mrf.mxu0
  %v8688 = vpop.f32.mrf.mxu0
  %v8689 = vadd.f32 0.0, %v8688
  %v8690 = vpop.f32.mrf.mxu0
  %8691 = vmatprep.mubr.bf16.mxu0 0
  %8692 = vmatmul.mubr.bf16.gmra.mxu0 %v3022
  %v8693 = vpop.f32.mrf.mxu0
  %v8694 = vadd.f32 0.0, %v8693
  %v8695 = vpop.f32.mrf.mxu0
  %v8696 = vpop.f32.mrf.mxu0
  %v8697 = vadd.f32 0.0, %v8696
  %v8698 = vpop.f32.mrf.mxu0
  %8699 = vmatprep.mubr.bf16.mxu0 0
  %8700 = vmatmul.mubr.bf16.gmra.mxu0 %v3025
  %v8701 = vpop.f32.mrf.mxu0
  %v8702 = vadd.f32 0.0, %v8701
  %v8703 = vpop.f32.mrf.mxu0
  %v8704 = vpop.f32.mrf.mxu0
  %v8705 = vadd.f32 0.0, %v8704
  %v8706 = vpop.f32.mrf.mxu0
  %8707 = vmatprep.mubr.bf16.mxu0 0
  %8708 = vmatmul.mubr.bf16.gmra.mxu0 %v3028
  %v8709 = vpop.f32.mrf.mxu0
  %v8710 = vadd.f32 0.0, %v8709
  %v8711 = vpop.f32.mrf.mxu0
  %v8712 = vpop.f32.mrf.mxu0
  %v8713 = vadd.f32 0.0, %v8712
  %v8714 = vpop.f32.mrf.mxu0
  %8715 = vmatprep.mubr.bf16.mxu0 0
  %8716 = vmatmul.mubr.bf16.gmra.mxu0 %v3031
  %v8717 = vpop.f32.mrf.mxu0
  %v8718 = vadd.f32 0.0, %v8717
  %v8719 = vpop.f32.mrf.mxu0
  %v8720 = vpop.f32.mrf.mxu0
  %v8721 = vadd.f32 0.0, %v8720
  %v8722 = vpop.f32.mrf.mxu0
  %8723 = vdwg.mxu0
  %v8724 = vadd.f32 %v8347, %v8470
  %v8725 = vadd.f32 %v8348, %v8473
  %v8726 = vadd.f32 %v8349, %v8478
  %v8727 = vadd.f32 %v8350, %v8481
  %v8728 = vadd.f32 %v8351, %v8486
  %v8729 = vadd.f32 %v8352, %v8489
  %v8730 = vadd.f32 %v8353, %v8494
  %v8731 = vadd.f32 %v8354, %v8497
  %v8732 = vadd.f32 %v8355, %v8502
  %v8733 = vadd.f32 %v8356, %v8505
  %v8734 = vadd.f32 %v8357, %v8510
  %v8735 = vadd.f32 %v8358, %v8513
  %v8736 = vadd.f32 %v8359, %v8518
  %v8737 = vadd.f32 %v8360, %v8521
  %v8738 = vadd.f32 %v8361, %v8526
  %v8739 = vadd.f32 %v8362, %v8529
  %v8740 = vadd.f32 %v8363, %v8534
  %v8741 = vadd.f32 %v8364, %v8537
  %v8742 = vadd.f32 %v8365, %v8542
  %v8743 = vadd.f32 %v8366, %v8545
  %v8744 = vadd.f32 %v8367, %v8550
  %v8745 = vadd.f32 %v8368, %v8553
  %v8746 = vadd.f32 %v8369, %v8558
  %v8747 = vadd.f32 %v8370, %v8561
  %v8748 = vadd.f32 %v8371, %v8566
  %v8749 = vadd.f32 %v8372, %v8569
  %v8750 = vadd.f32 %v8373, %v8574
  %v8751 = vadd.f32 %v8374, %v8577
  %v8752 = vadd.f32 %v8375, %v8582
  %v8753 = vadd.f32 %v8376, %v8585
  %v8754 = vadd.f32 %v8377, %v8590
  %v8755 = vadd.f32 %v8378, %v8593
  %v8756 = vadd.f32 %v8379, %v8598
  %v8757 = vadd.f32 %v8380, %v8601
  %v8758 = vadd.f32 %v8381, %v8606
  %v8759 = vadd.f32 %v8382, %v8609
  %v8760 = vadd.f32 %v8383, %v8614
  %v8761 = vadd.f32 %v8384, %v8617
  %v8762 = vadd.f32 %v8385, %v8622
  %v8763 = vadd.f32 %v8386, %v8625
  %v8764 = vadd.f32 %v8387, %v8630
  %v8765 = vadd.f32 %v8388, %v8633
  %v8766 = vadd.f32 %v8389, %v8638
  %v8767 = vadd.f32 %v8390, %v8641
  %v8768 = vadd.f32 %v8391, %v8646
  %v8769 = vadd.f32 %v8392, %v8649
  %v8770 = vadd.f32 %v8393, %v8654
  %v8771 = vadd.f32 %v8394, %v8657
  %v8772 = vadd.f32 %v8395, %v8662
  %v8773 = vadd.f32 %v8396, %v8665
  %v8774 = vadd.f32 %v8397, %v8670
  %v8775 = vadd.f32 %v8398, %v8673
  %v8776 = vadd.f32 %v8399, %v8678
  %v8777 = vadd.f32 %v8400, %v8681
  %v8778 = vadd.f32 %v8401, %v8686
  %v8779 = vadd.f32 %v8402, %v8689
  %v8780 = vadd.f32 %v8403, %v8694
  %v8781 = vadd.f32 %v8404, %v8697
  %v8782 = vadd.f32 %v8405, %v8702
  %v8783 = vadd.f32 %v8406, %v8705
  %v8784 = vadd.f32 %v8407, %v8710
  %v8785 = vadd.f32 %v8408, %v8713
  %v8786 = vadd.f32 %v8409, %v8718
  %v8787 = vadd.f32 %v8410, %v8721
  %v8788 = vmax.f32 %v6967, %v8724
  %v8789 = vmax.f32 %v6968, %v8725
  %v8790 = vmax.f32 %v6969, %v8726
  %v8791 = vmax.f32 %v6970, %v8727
  %v8792 = vmax.f32 %v6971, %v8728
  %v8793 = vmax.f32 %v6972, %v8729
  %v8794 = vmax.f32 %v6973, %v8730
  %v8795 = vmax.f32 %v6974, %v8731
  %v8796 = vmax.f32 %v6975, %v8732
  %v8797 = vmax.f32 %v6976, %v8733
  %v8798 = vmax.f32 %v6977, %v8734
  %v8799 = vmax.f32 %v6978, %v8735
  %v8800 = vmax.f32 %v6979, %v8736
  %v8801 = vmax.f32 %v6980, %v8737
  %v8802 = vmax.f32 %v6981, %v8738
  %v8803 = vmax.f32 %v6982, %v8739
  %v8804 = vmax.f32 %v6983, %v8740
  %v8805 = vmax.f32 %v6984, %v8741
  %v8806 = vmax.f32 %v6985, %v8742
  %v8807 = vmax.f32 %v6986, %v8743
  %v8808 = vmax.f32 %v6987, %v8744
  %v8809 = vmax.f32 %v6988, %v8745
  %v8810 = vmax.f32 %v6989, %v8746
  %v8811 = vmax.f32 %v6990, %v8747
  %v8812 = vmax.f32 %v6991, %v8748
  %v8813 = vmax.f32 %v6992, %v8749
  %v8814 = vmax.f32 %v6993, %v8750
  %v8815 = vmax.f32 %v6994, %v8751
  %v8816 = vmax.f32 %v6995, %v8752
  %v8817 = vmax.f32 %v6996, %v8753
  %v8818 = vmax.f32 %v6997, %v8754
  %v8819 = vmax.f32 %v6998, %v8755
  %v8820 = vmax.f32 %v6999, %v8756
  %v8821 = vmax.f32 %v7000, %v8757
  %v8822 = vmax.f32 %v7001, %v8758
  %v8823 = vmax.f32 %v7002, %v8759
  %v8824 = vmax.f32 %v7003, %v8760
  %v8825 = vmax.f32 %v7004, %v8761
  %v8826 = vmax.f32 %v7005, %v8762
  %v8827 = vmax.f32 %v7006, %v8763
  %v8828 = vmax.f32 %v7007, %v8764
  %v8829 = vmax.f32 %v7008, %v8765
  %v8830 = vmax.f32 %v7009, %v8766
  %v8831 = vmax.f32 %v7010, %v8767
  %v8832 = vmax.f32 %v7011, %v8768
  %v8833 = vmax.f32 %v7012, %v8769
  %v8834 = vmax.f32 %v7013, %v8770
  %v8835 = vmax.f32 %v7014, %v8771
  %v8836 = vmax.f32 %v7015, %v8772
  %v8837 = vmax.f32 %v7016, %v8773
  %v8838 = vmax.f32 %v7017, %v8774
  %v8839 = vmax.f32 %v7018, %v8775
  %v8840 = vmax.f32 %v7019, %v8776
  %v8841 = vmax.f32 %v7020, %v8777
  %v8842 = vmax.f32 %v7021, %v8778
  %v8843 = vmax.f32 %v7022, %v8779
  %v8844 = vmax.f32 %v7023, %v8780
  %v8845 = vmax.f32 %v7024, %v8781
  %v8846 = vmax.f32 %v7025, %v8782
  %v8847 = vmax.f32 %v7026, %v8783
  %v8848 = vmax.f32 %v7027, %v8784
  %v8849 = vmax.f32 %v7028, %v8785
  %v8850 = vmax.f32 %v7029, %v8786
  %v8851 = vmax.f32 %v7030, %v8787
  %v8852 = vmax.f32 %v8788, %v8790
  %v8853 = vmax.f32 %v8789, %v8791
  %v8854 = vmax.f32 %v8796, %v8798
  %v8855 = vmax.f32 %v8797, %v8799
  %v8856 = vmax.f32 %v8804, %v8806
  %v8857 = vmax.f32 %v8805, %v8807
  %v8858 = vmax.f32 %v8812, %v8814
  %v8859 = vmax.f32 %v8813, %v8815
  %v8860 = vmax.f32 %v8820, %v8822
  %v8861 = vmax.f32 %v8821, %v8823
  %v8862 = vmax.f32 %v8828, %v8830
  %v8863 = vmax.f32 %v8829, %v8831
  %v8864 = vmax.f32 %v8836, %v8838
  %v8865 = vmax.f32 %v8837, %v8839
  %v8866 = vmax.f32 %v8844, %v8846
  %v8867 = vmax.f32 %v8845, %v8847
  %v8868 = vmax.f32 %v8792, %v8794
  %v8869 = vmax.f32 %v8793, %v8795
  %v8870 = vmax.f32 %v8800, %v8802
  %v8871 = vmax.f32 %v8801, %v8803
  %v8872 = vmax.f32 %v8808, %v8810
  %v8873 = vmax.f32 %v8809, %v8811
  %v8874 = vmax.f32 %v8816, %v8818
  %v8875 = vmax.f32 %v8817, %v8819
  %v8876 = vmax.f32 %v8824, %v8826
  %v8877 = vmax.f32 %v8825, %v8827
  %v8878 = vmax.f32 %v8832, %v8834
  %v8879 = vmax.f32 %v8833, %v8835
  %v8880 = vmax.f32 %v8840, %v8842
  %v8881 = vmax.f32 %v8841, %v8843
  %v8882 = vmax.f32 %v8848, %v8850
  %v8883 = vmax.f32 %v8849, %v8851
  %v8884 = vmax.f32 %v8852, %v8868
  %v8885 = vmax.f32 %v8853, %v8869
  %v8886 = vmax.f32 %v8854, %v8870
  %v8887 = vmax.f32 %v8855, %v8871
  %v8888 = vmax.f32 %v8856, %v8872
  %v8889 = vmax.f32 %v8857, %v8873
  %v8890 = vmax.f32 %v8858, %v8874
  %v8891 = vmax.f32 %v8859, %v8875
  %v8892 = vmax.f32 %v8860, %v8876
  %v8893 = vmax.f32 %v8861, %v8877
  %v8894 = vmax.f32 %v8862, %v8878
  %v8895 = vmax.f32 %v8863, %v8879
  %v8896 = vmax.f32 %v8864, %v8880
  %v8897 = vmax.f32 %v8865, %v8881
  %v8898 = vmax.f32 %v8866, %v8882
  %v8899 = vmax.f32 %v8867, %v8883
  %v8900 = vld [vmem:[%s4] sm:$0x1]
  %v8902 = vlaneseq
  %v8903 = vshrl.u32 %v8902, 7
  %v8904 = vsub.s32 0, %v8903
  %v8905 = vrot.slane %v8900, %v8904
  %v8907 = vadd.f32 %v8884, %v8905
  %v8908 = vadd.f32 %v8885, %v8905
  %v8909 = vadd.f32 %v8886, %v8905
  %v8910 = vadd.f32 %v8887, %v8905
  %v8911 = vadd.f32 %v8888, %v8905
  %v8912 = vadd.f32 %v8889, %v8905
  %v8913 = vadd.f32 %v8890, %v8905
  %v8914 = vadd.f32 %v8891, %v8905
  %v8915 = vadd.f32 %v8892, %v8905
  %v8916 = vadd.f32 %v8893, %v8905
  %v8917 = vadd.f32 %v8894, %v8905
  %v8918 = vadd.f32 %v8895, %v8905
  %v8919 = vadd.f32 %v8896, %v8905
  %v8920 = vadd.f32 %v8897, %v8905
  %v8921 = vadd.f32 %v8898, %v8905
  %v8922 = vadd.f32 %v8899, %v8905
  %v8923 = vmax.f32 %v8907, 0.0
  %v8924 = vmax.f32 %v8908, 0.0
  %v8925 = vmax.f32 %v8909, 0.0
  %v8926 = vmax.f32 %v8910, 0.0
  %v8927 = vmax.f32 %v8911, 0.0
  %v8928 = vmax.f32 %v8912, 0.0
  %v8929 = vmax.f32 %v8913, 0.0
  %v8930 = vmax.f32 %v8914, 0.0
  %v8931 = vmax.f32 %v8915, 0.0
  %v8932 = vmax.f32 %v8916, 0.0
  %v8933 = vmax.f32 %v8917, 0.0
  %v8934 = vmax.f32 %v8918, 0.0
  %v8935 = vmax.f32 %v8919, 0.0
  %v8936 = vmax.f32 %v8920, 0.0
  %v8937 = vmax.f32 %v8921, 0.0
  %v8938 = vmax.f32 %v8922, 0.0
  %v8939 = vpack.c.bf16 0.0, 0.0
  %v8940 = vpack.c.bf16 %v8924, %v8923
  %v8941 = vpack.c.bf16 %v8926, %v8925
  %v8942 = vpack.c.bf16 %v8928, %v8927
  %v8943 = vpack.c.bf16 %v8930, %v8929
  %v8944 = vpack.c.bf16 %v8932, %v8931
  %v8945 = vpack.c.bf16 %v8934, %v8933
  %v8946 = vpack.c.bf16 %v8936, %v8935
  %v8947 = vpack.c.bf16 %v8938, %v8937
  %v8948 = vld [vmem:[%s2] sm:$0xf]
  %v8949 = vld [vmem:[%s2 + $0x4] sm:$0xf]
  %v8950 = vld [vmem:[%s2 + $0x8] sm:$0xf]
  %v8951 = vld [vmem:[%s2 + $0xc] sm:$0xf]
  %v8952 = vld [vmem:[%s2 + $0x10] sm:$0xf]
  %v8953 = vld [vmem:[%s2 + $0x14] sm:$0xf]
  %v8954 = vld [vmem:[%s2 + $0x18] sm:$0xf]
  %v8955 = vld [vmem:[%s2 + $0x1c] sm:$0x3]
  %s8956 = scalar_lea.vmem %s2, 64
  %v8957 = vld [vmem:[%s8956] sm:$0xf]
  %v8958 = vld [vmem:[%s8956 + $0x4] sm:$0xf]
  %v8959 = vld [vmem:[%s8956 + $0x8] sm:$0xf]
  %v8960 = vld [vmem:[%s8956 + $0xc] sm:$0xf]
  %v8961 = vld [vmem:[%s8956 + $0x10] sm:$0xf]
  %v8962 = vld [vmem:[%s8956 + $0x14] sm:$0xf]
  %v8963 = vld [vmem:[%s8956 + $0x18] sm:$0xf]
  %v8964 = vld [vmem:[%s8956 + $0x1c] sm:$0x3]
  %v8973 = vunpack.c.l.b16 %v8957
  %v8974 = vunpack.c.l.b16 %v8958
  %v8975 = vunpack.c.l.b16 %v8959
  %v8976 = vunpack.c.l.b16 %v8960
  %v8977 = vunpack.c.l.b16 %v8961
  %v8978 = vunpack.c.l.b16 %v8962
  %v8979 = vunpack.c.l.b16 %v8963
  %v8980 = vunpack.c.l.b16 %v8964
  %v8981 = vpack.c.b16 %v8974, %v8973
  %v8982 = vpack.c.b16 %v8976, %v8975
  %v8983 = vpack.c.b16 %v8978, %v8977
  %v8984 = vpack.c.b16 %v8980, %v8979
  %vm8988 = vcmask 490496
  %v8990 = vsel %vm8988, %v8939, 0
  %v8993 = vsel %vm8988, %v8940, 0
  %v8996 = vsel %vm8988, %v8941, 0
  %v8999 = vsel %vm8988, %v8942, 0
  %v9002 = vsel %vm8988, %v8943, 0
  %v9005 = vsel %vm8988, %v8944, 0
  %v9008 = vsel %vm8988, %v8945, 0
  %v9011 = vsel %vm8988, %v8946, 0
  %vm9013 = vcmask 1045504
  %v9015 = vsel %vm9013, %v8984, 0
  %9017 = vmatprep.subr.bf16.mxu0 0
  %9018 = vmatpush1.bf16.msra.mxu0 0
  %9019 = vmatprep.subr.bf16.mxu0 0
  %9020 = vmatpush1.bf16.msra.mxu0 0
  %9021 = vmatprep.subr.bf16.mxu0 0
  %9022 = vmatpush1.bf16.msra.mxu0 0
  %9023 = vmatprep.subr.bf16.mxu0 0
  %9024 = vmatpush1.bf16.msra.mxu0 0
  %9025 = vmatprep.subr.bf16.mxu0 0
  %9026 = vmatpush1.bf16.msra.mxu0 %v9015
  %9027 = vmatprep.subr.bf16.mxu0 0
  %9028 = vmatpush1.bf16.msra.mxu0 %v8983
  %9029 = vmatprep.subr.bf16.mxu0 0
  %9030 = vmatpush1.bf16.msra.mxu0 %v8982
  %9031 = vmatprep.subr.bf16.mxu0 0
  %9032 = vmatpush1.bf16.msra.mxu0 %v8981
  %9033 = vmatprep.subr.bf16.mxu0 0
  %9034 = vmatpush2.bf16.msra.mxu0 0
  %9035 = vmatprep.subr.bf16.mxu0 0
  %9036 = vmatpush2.bf16.msra.mxu0 0
  %9037 = vmatprep.subr.bf16.mxu0 0
  %9038 = vmatpush2.bf16.msra.mxu0 0
  %9039 = vmatprep.subr.bf16.mxu0 0
  %9040 = vmatpush2.bf16.msra.mxu0 0
  %9041 = vmatprep.subr.bf16.mxu0 0
  %9042 = vmatpush2.bf16.msra.mxu0 0
  %9043 = vmatprep.subr.bf16.mxu0 0
  %9044 = vmatpush2.bf16.msra.mxu0 0
  %9045 = vmatprep.subr.bf16.mxu0 0
  %9046 = vmatpush2.bf16.msra.mxu0 0
  %9047 = vmatprep.subr.bf16.mxu0 0
  %9048 = vmatpush2.bf16.msra.mxu0 0
  %9049 = vmatprep.mubr.bf16.mxu0 0
  %9050 = vmatmul.mubr.bf16.gmra.mxu0 %v8990
  %v9051 = vpop.f32.mrf.mxu0
  %v9052 = vadd.f32 0.0, %v9051
  %v9053 = vpop.f32.mrf.mxu0
  %v9054 = vpop.f32.mrf.mxu0
  %v9055 = vadd.f32 0.0, %v9054
  %v9056 = vpop.f32.mrf.mxu0
  %9057 = vmatprep.mubr.bf16.mxu0 0
  %9058 = vmatmul.mubr.bf16.gmra.mxu0 %v8993
  %v9059 = vpop.f32.mrf.mxu0
  %v9060 = vadd.f32 0.0, %v9059
  %v9061 = vpop.f32.mrf.mxu0
  %v9062 = vpop.f32.mrf.mxu0
  %v9063 = vadd.f32 0.0, %v9062
  %v9064 = vpop.f32.mrf.mxu0
  %9065 = vmatprep.mubr.bf16.mxu0 0
  %9066 = vmatmul.mubr.bf16.gmra.mxu0 %v8996
  %v9067 = vpop.f32.mrf.mxu0
  %v9068 = vadd.f32 0.0, %v9067
  %v9069 = vpop.f32.mrf.mxu0
  %v9070 = vpop.f32.mrf.mxu0
  %v9071 = vadd.f32 0.0, %v9070
  %v9072 = vpop.f32.mrf.mxu0
  %9073 = vmatprep.mubr.bf16.mxu0 0
  %9074 = vmatmul.mubr.bf16.gmra.mxu0 %v8999
  %v9075 = vpop.f32.mrf.mxu0
  %v9076 = vadd.f32 0.0, %v9075
  %v9077 = vpop.f32.mrf.mxu0
  %v9078 = vpop.f32.mrf.mxu0
  %v9079 = vadd.f32 0.0, %v9078
  %v9080 = vpop.f32.mrf.mxu0
  %9081 = vmatprep.mubr.bf16.mxu0 0
  %9082 = vmatmul.mubr.bf16.gmra.mxu0 %v9002
  %v9083 = vpop.f32.mrf.mxu0
  %v9084 = vadd.f32 0.0, %v9083
  %v9085 = vpop.f32.mrf.mxu0
  %v9086 = vpop.f32.mrf.mxu0
  %v9087 = vadd.f32 0.0, %v9086
  %v9088 = vpop.f32.mrf.mxu0
  %9089 = vmatprep.mubr.bf16.mxu0 0
  %9090 = vmatmul.mubr.bf16.gmra.mxu0 %v9005
  %v9091 = vpop.f32.mrf.mxu0
  %v9092 = vadd.f32 0.0, %v9091
  %v9093 = vpop.f32.mrf.mxu0
  %v9094 = vpop.f32.mrf.mxu0
  %v9095 = vadd.f32 0.0, %v9094
  %v9096 = vpop.f32.mrf.mxu0
  %9097 = vmatprep.mubr.bf16.mxu0 0
  %9098 = vmatmul.mubr.bf16.gmra.mxu0 %v9008
  %v9099 = vpop.f32.mrf.mxu0
  %v9100 = vadd.f32 0.0, %v9099
  %v9101 = vpop.f32.mrf.mxu0
  %v9102 = vpop.f32.mrf.mxu0
  %v9103 = vadd.f32 0.0, %v9102
  %v9104 = vpop.f32.mrf.mxu0
  %9105 = vmatprep.mubr.bf16.mxu0 0
  %9106 = vmatmul.mubr.bf16.gmra.mxu0 %v9011
  %v9107 = vpop.f32.mrf.mxu0
  %v9108 = vadd.f32 0.0, %v9107
  %v9109 = vpop.f32.mrf.mxu0
  %v9110 = vpop.f32.mrf.mxu0
  %v9111 = vadd.f32 0.0, %v9110
  %v9112 = vpop.f32.mrf.mxu0
  %9113 = vdwg.mxu0
  %v9122 = vunpack.c.l.b16 %v8948
  %v9123 = vunpack.c.l.b16 %v8949
  %v9124 = vunpack.c.l.b16 %v8950
  %v9125 = vunpack.c.l.b16 %v8951
  %v9126 = vunpack.c.l.b16 %v8952
  %v9127 = vunpack.c.l.b16 %v8953
  %v9128 = vunpack.c.l.b16 %v8954
  %v9129 = vunpack.c.l.b16 %v8955
  %v9130 = vpack.c.b16 %v9123, %v9122
  %v9131 = vpack.c.b16 %v9125, %v9124
  %v9132 = vpack.c.b16 %v9127, %v9126
  %v9133 = vpack.c.b16 %v9129, %v9128
  %v9138 = vsel %vm9013, %v9133, 0
  %9140 = vmatprep.subr.bf16.mxu0 0
  %9141 = vmatpush1.bf16.msra.mxu0 0
  %9142 = vmatprep.subr.bf16.mxu0 0
  %9143 = vmatpush1.bf16.msra.mxu0 0
  %9144 = vmatprep.subr.bf16.mxu0 0
  %9145 = vmatpush1.bf16.msra.mxu0 0
  %9146 = vmatprep.subr.bf16.mxu0 0
  %9147 = vmatpush1.bf16.msra.mxu0 0
  %9148 = vmatprep.subr.bf16.mxu0 0
  %9149 = vmatpush1.bf16.msra.mxu0 %v9138
  %9150 = vmatprep.subr.bf16.mxu0 0
  %9151 = vmatpush1.bf16.msra.mxu0 %v9132
  %9152 = vmatprep.subr.bf16.mxu0 0
  %9153 = vmatpush1.bf16.msra.mxu0 %v9131
  %9154 = vmatprep.subr.bf16.mxu0 0
  %9155 = vmatpush1.bf16.msra.mxu0 %v9130
  %9156 = vmatprep.subr.bf16.mxu0 0
  %9157 = vmatpush2.bf16.msra.mxu0 0
  %9158 = vmatprep.subr.bf16.mxu0 0
  %9159 = vmatpush2.bf16.msra.mxu0 0
  %9160 = vmatprep.subr.bf16.mxu0 0
  %9161 = vmatpush2.bf16.msra.mxu0 0
  %9162 = vmatprep.subr.bf16.mxu0 0
  %9163 = vmatpush2.bf16.msra.mxu0 0
  %9164 = vmatprep.subr.bf16.mxu0 0
  %9165 = vmatpush2.bf16.msra.mxu0 0
  %9166 = vmatprep.subr.bf16.mxu0 0
  %9167 = vmatpush2.bf16.msra.mxu0 0
  %9168 = vmatprep.subr.bf16.mxu0 0
  %9169 = vmatpush2.bf16.msra.mxu0 0
  %9170 = vmatprep.subr.bf16.mxu0 0
  %9171 = vmatpush2.bf16.msra.mxu0 0
  %9172 = vmatprep.mubr.bf16.mxu0 0
  %9173 = vmatmul.mubr.bf16.gmra.mxu0 %v8990
  %v9174 = vpop.f32.mrf.mxu0
  %v9175 = vadd.f32 %v9052, %v9174
  %v9176 = vpop.f32.mrf.mxu0
  %v9177 = vpop.f32.mrf.mxu0
  %v9178 = vadd.f32 %v9055, %v9177
  %v9179 = vpop.f32.mrf.mxu0
  %9180 = vmatprep.mubr.bf16.mxu0 0
  %9181 = vmatmul.mubr.bf16.gmra.mxu0 %v8990
  %v9182 = vpop.f32.mrf.mxu0
  %v9183 = vadd.f32 %v9060, %v9182
  %v9184 = vpop.f32.mrf.mxu0
  %v9185 = vpop.f32.mrf.mxu0
  %v9186 = vadd.f32 %v9063, %v9185
  %v9187 = vpop.f32.mrf.mxu0
  %9188 = vmatprep.mubr.bf16.mxu0 0
  %9189 = vmatmul.mubr.bf16.gmra.mxu0 %v8993
  %v9190 = vpop.f32.mrf.mxu0
  %v9191 = vadd.f32 %v9068, %v9190
  %v9192 = vpop.f32.mrf.mxu0
  %v9193 = vpop.f32.mrf.mxu0
  %v9194 = vadd.f32 %v9071, %v9193
  %v9195 = vpop.f32.mrf.mxu0
  %9196 = vmatprep.mubr.bf16.mxu0 0
  %9197 = vmatmul.mubr.bf16.gmra.mxu0 %v8996
  %v9198 = vpop.f32.mrf.mxu0
  %v9199 = vadd.f32 %v9076, %v9198
  %v9200 = vpop.f32.mrf.mxu0
  %v9201 = vpop.f32.mrf.mxu0
  %v9202 = vadd.f32 %v9079, %v9201
  %v9203 = vpop.f32.mrf.mxu0
  %9204 = vmatprep.mubr.bf16.mxu0 0
  %9205 = vmatmul.mubr.bf16.gmra.mxu0 %v8999
  %v9206 = vpop.f32.mrf.mxu0
  %v9207 = vadd.f32 %v9084, %v9206
  %v9208 = vpop.f32.mrf.mxu0
  %v9209 = vpop.f32.mrf.mxu0
  %v9210 = vadd.f32 %v9087, %v9209
  %v9211 = vpop.f32.mrf.mxu0
  %9212 = vmatprep.mubr.bf16.mxu0 0
  %9213 = vmatmul.mubr.bf16.gmra.mxu0 %v9002
  %v9214 = vpop.f32.mrf.mxu0
  %v9215 = vadd.f32 %v9092, %v9214
  %v9216 = vpop.f32.mrf.mxu0
  %v9217 = vpop.f32.mrf.mxu0
  %v9218 = vadd.f32 %v9095, %v9217
  %v9219 = vpop.f32.mrf.mxu0
  %9220 = vmatprep.mubr.bf16.mxu0 0
  %9221 = vmatmul.mubr.bf16.gmra.mxu0 %v9005
  %v9222 = vpop.f32.mrf.mxu0
  %v9223 = vadd.f32 %v9100, %v9222
  %v9224 = vpop.f32.mrf.mxu0
  %v9225 = vpop.f32.mrf.mxu0
  %v9226 = vadd.f32 %v9103, %v9225
  %v9227 = vpop.f32.mrf.mxu0
  %9228 = vmatprep.mubr.bf16.mxu0 0
  %9229 = vmatmul.mubr.bf16.gmra.mxu0 %v9008
  %v9230 = vpop.f32.mrf.mxu0
  %v9231 = vadd.f32 %v9108, %v9230
  %v9232 = vpop.f32.mrf.mxu0
  %v9233 = vpop.f32.mrf.mxu0
  %v9234 = vadd.f32 %v9111, %v9233
  %v9235 = vpop.f32.mrf.mxu0
  %9236 = vdwg.mxu0
  %s9237 = scalar_lea.vmem %s2, 128
  %v9238 = vld [vmem:[%s9237] sm:$0xf]
  %v9239 = vld [vmem:[%s9237 + $0x4] sm:$0xf]
  %v9240 = vld [vmem:[%s9237 + $0x8] sm:$0xf]
  %v9241 = vld [vmem:[%s9237 + $0xc] sm:$0xf]
  %v9242 = vld [vmem:[%s9237 + $0x10] sm:$0xf]
  %v9243 = vld [vmem:[%s9237 + $0x14] sm:$0xf]
  %v9244 = vld [vmem:[%s9237 + $0x18] sm:$0xf]
  %v9245 = vld [vmem:[%s9237 + $0x1c] sm:$0x3]
  %v9254 = vunpack.c.l.b16 %v9238
  %v9255 = vunpack.c.l.b16 %v9239
  %v9256 = vunpack.c.l.b16 %v9240
  %v9257 = vunpack.c.l.b16 %v9241
  %v9258 = vunpack.c.l.b16 %v9242
  %v9259 = vunpack.c.l.b16 %v9243
  %v9260 = vunpack.c.l.b16 %v9244
  %v9261 = vunpack.c.l.b16 %v9245
  %v9262 = vpack.c.b16 %v9255, %v9254
  %v9263 = vpack.c.b16 %v9257, %v9256
  %v9264 = vpack.c.b16 %v9259, %v9258
  %v9265 = vpack.c.b16 %v9261, %v9260
  %v9270 = vsel %vm8988, %v8947, 0
  %v9273 = vsel %vm9013, %v9265, 0
  %9275 = vmatprep.subr.bf16.mxu0 0
  %9276 = vmatpush1.bf16.msra.mxu0 0
  %9277 = vmatprep.subr.bf16.mxu0 0
  %9278 = vmatpush1.bf16.msra.mxu0 0
  %9279 = vmatprep.subr.bf16.mxu0 0
  %9280 = vmatpush1.bf16.msra.mxu0 0
  %9281 = vmatprep.subr.bf16.mxu0 0
  %9282 = vmatpush1.bf16.msra.mxu0 0
  %9283 = vmatprep.subr.bf16.mxu0 0
  %9284 = vmatpush1.bf16.msra.mxu0 %v9273
  %9285 = vmatprep.subr.bf16.mxu0 0
  %9286 = vmatpush1.bf16.msra.mxu0 %v9264
  %9287 = vmatprep.subr.bf16.mxu0 0
  %9288 = vmatpush1.bf16.msra.mxu0 %v9263
  %9289 = vmatprep.subr.bf16.mxu0 0
  %9290 = vmatpush1.bf16.msra.mxu0 %v9262
  %9291 = vmatprep.subr.bf16.mxu0 0
  %9292 = vmatpush2.bf16.msra.mxu0 0
  %9293 = vmatprep.subr.bf16.mxu0 0
  %9294 = vmatpush2.bf16.msra.mxu0 0
  %9295 = vmatprep.subr.bf16.mxu0 0
  %9296 = vmatpush2.bf16.msra.mxu0 0
  %9297 = vmatprep.subr.bf16.mxu0 0
  %9298 = vmatpush2.bf16.msra.mxu0 0
  %9299 = vmatprep.subr.bf16.mxu0 0
  %9300 = vmatpush2.bf16.msra.mxu0 0
  %9301 = vmatprep.subr.bf16.mxu0 0
  %9302 = vmatpush2.bf16.msra.mxu0 0
  %9303 = vmatprep.subr.bf16.mxu0 0
  %9304 = vmatpush2.bf16.msra.mxu0 0
  %9305 = vmatprep.subr.bf16.mxu0 0
  %9306 = vmatpush2.bf16.msra.mxu0 0
  %9307 = vmatprep.mubr.bf16.mxu0 0
  %9308 = vmatmul.mubr.bf16.gmra.mxu0 %v8993
  %v9309 = vpop.f32.mrf.mxu0
  %v9310 = vadd.f32 0.0, %v9309
  %v9311 = vpop.f32.mrf.mxu0
  %v9312 = vpop.f32.mrf.mxu0
  %v9313 = vadd.f32 0.0, %v9312
  %v9314 = vpop.f32.mrf.mxu0
  %9315 = vmatprep.mubr.bf16.mxu0 0
  %9316 = vmatmul.mubr.bf16.gmra.mxu0 %v8996
  %v9317 = vpop.f32.mrf.mxu0
  %v9318 = vadd.f32 0.0, %v9317
  %v9319 = vpop.f32.mrf.mxu0
  %v9320 = vpop.f32.mrf.mxu0
  %v9321 = vadd.f32 0.0, %v9320
  %v9322 = vpop.f32.mrf.mxu0
  %9323 = vmatprep.mubr.bf16.mxu0 0
  %9324 = vmatmul.mubr.bf16.gmra.mxu0 %v8999
  %v9325 = vpop.f32.mrf.mxu0
  %v9326 = vadd.f32 0.0, %v9325
  %v9327 = vpop.f32.mrf.mxu0
  %v9328 = vpop.f32.mrf.mxu0
  %v9329 = vadd.f32 0.0, %v9328
  %v9330 = vpop.f32.mrf.mxu0
  %9331 = vmatprep.mubr.bf16.mxu0 0
  %9332 = vmatmul.mubr.bf16.gmra.mxu0 %v9002
  %v9333 = vpop.f32.mrf.mxu0
  %v9334 = vadd.f32 0.0, %v9333
  %v9335 = vpop.f32.mrf.mxu0
  %v9336 = vpop.f32.mrf.mxu0
  %v9337 = vadd.f32 0.0, %v9336
  %v9338 = vpop.f32.mrf.mxu0
  %9339 = vmatprep.mubr.bf16.mxu0 0
  %9340 = vmatmul.mubr.bf16.gmra.mxu0 %v9005
  %v9341 = vpop.f32.mrf.mxu0
  %v9342 = vadd.f32 0.0, %v9341
  %v9343 = vpop.f32.mrf.mxu0
  %v9344 = vpop.f32.mrf.mxu0
  %v9345 = vadd.f32 0.0, %v9344
  %v9346 = vpop.f32.mrf.mxu0
  %9347 = vmatprep.mubr.bf16.mxu0 0
  %9348 = vmatmul.mubr.bf16.gmra.mxu0 %v9008
  %v9349 = vpop.f32.mrf.mxu0
  %v9350 = vadd.f32 0.0, %v9349
  %v9351 = vpop.f32.mrf.mxu0
  %v9352 = vpop.f32.mrf.mxu0
  %v9353 = vadd.f32 0.0, %v9352
  %v9354 = vpop.f32.mrf.mxu0
  %9355 = vmatprep.mubr.bf16.mxu0 0
  %9356 = vmatmul.mubr.bf16.gmra.mxu0 %v9011
  %v9357 = vpop.f32.mrf.mxu0
  %v9358 = vadd.f32 0.0, %v9357
  %v9359 = vpop.f32.mrf.mxu0
  %v9360 = vpop.f32.mrf.mxu0
  %v9361 = vadd.f32 0.0, %v9360
  %v9362 = vpop.f32.mrf.mxu0
  %9363 = vmatprep.mubr.bf16.mxu0 0
  %9364 = vmatmul.mubr.bf16.gmra.mxu0 %v9270
  %v9365 = vpop.f32.mrf.mxu0
  %v9366 = vadd.f32 0.0, %v9365
  %v9367 = vpop.f32.mrf.mxu0
  %v9368 = vpop.f32.mrf.mxu0
  %v9369 = vadd.f32 0.0, %v9368
  %v9370 = vpop.f32.mrf.mxu0
  %9371 = vdwg.mxu0
  %v9372 = vadd.f32 %v9175, %v9310
  %v9373 = vadd.f32 %v9178, %v9313
  %v9374 = vadd.f32 %v9183, %v9318
  %v9375 = vadd.f32 %v9186, %v9321
  %v9376 = vadd.f32 %v9191, %v9326
  %v9377 = vadd.f32 %v9194, %v9329
  %v9378 = vadd.f32 %v9199, %v9334
  %v9379 = vadd.f32 %v9202, %v9337
  %v9380 = vadd.f32 %v9207, %v9342
  %v9381 = vadd.f32 %v9210, %v9345
  %v9382 = vadd.f32 %v9215, %v9350
  %v9383 = vadd.f32 %v9218, %v9353
  %v9384 = vadd.f32 %v9223, %v9358
  %v9385 = vadd.f32 %v9226, %v9361
  %v9386 = vadd.f32 %v9231, %v9366
  %v9387 = vadd.f32 %v9234, %v9369
  %s9388 = scalar_lea.vmem %s2, 192
  %v9389 = vld [vmem:[%s9388] sm:$0xf]
  %v9390 = vld [vmem:[%s9388 + $0x4] sm:$0xf]
  %v9391 = vld [vmem:[%s9388 + $0x8] sm:$0xf]
  %v9392 = vld [vmem:[%s9388 + $0xc] sm:$0xf]
  %v9393 = vld [vmem:[%s9388 + $0x10] sm:$0xf]
  %v9394 = vld [vmem:[%s9388 + $0x14] sm:$0xf]
  %v9395 = vld [vmem:[%s9388 + $0x18] sm:$0xf]
  %v9396 = vld [vmem:[%s9388 + $0x1c] sm:$0x3]
  %v9405 = vunpack.c.l.b16 %v9389
  %v9406 = vunpack.c.l.b16 %v9390
  %v9407 = vunpack.c.l.b16 %v9391
  %v9408 = vunpack.c.l.b16 %v9392
  %v9409 = vunpack.c.l.b16 %v9393
  %v9410 = vunpack.c.l.b16 %v9394
  %v9411 = vunpack.c.l.b16 %v9395
  %v9412 = vunpack.c.l.b16 %v9396
  %v9413 = vpack.c.b16 %v9406, %v9405
  %v9414 = vpack.c.b16 %v9408, %v9407
  %v9415 = vpack.c.b16 %v9410, %v9409
  %v9416 = vpack.c.b16 %v9412, %v9411
  %v9421 = vsel %vm9013, %v9416, 0
  %9423 = vmatprep.subr.bf16.mxu0 0
  %9424 = vmatpush1.bf16.msra.mxu0 0
  %9425 = vmatprep.subr.bf16.mxu0 0
  %9426 = vmatpush1.bf16.msra.mxu0 0
  %9427 = vmatprep.subr.bf16.mxu0 0
  %9428 = vmatpush1.bf16.msra.mxu0 0
  %9429 = vmatprep.subr.bf16.mxu0 0
  %9430 = vmatpush1.bf16.msra.mxu0 0
  %9431 = vmatprep.subr.bf16.mxu0 0
  %9432 = vmatpush1.bf16.msra.mxu0 %v9421
  %9433 = vmatprep.subr.bf16.mxu0 0
  %9434 = vmatpush1.bf16.msra.mxu0 %v9415
  %9435 = vmatprep.subr.bf16.mxu0 0
  %9436 = vmatpush1.bf16.msra.mxu0 %v9414
  %9437 = vmatprep.subr.bf16.mxu0 0
  %9438 = vmatpush1.bf16.msra.mxu0 %v9413
  %9439 = vmatprep.subr.bf16.mxu0 0
  %9440 = vmatpush2.bf16.msra.mxu0 0
  %9441 = vmatprep.subr.bf16.mxu0 0
  %9442 = vmatpush2.bf16.msra.mxu0 0
  %9443 = vmatprep.subr.bf16.mxu0 0
  %9444 = vmatpush2.bf16.msra.mxu0 0
  %9445 = vmatprep.subr.bf16.mxu0 0
  %9446 = vmatpush2.bf16.msra.mxu0 0
  %9447 = vmatprep.subr.bf16.mxu0 0
  %9448 = vmatpush2.bf16.msra.mxu0 0
  %9449 = vmatprep.subr.bf16.mxu0 0
  %9450 = vmatpush2.bf16.msra.mxu0 0
  %9451 = vmatprep.subr.bf16.mxu0 0
  %9452 = vmatpush2.bf16.msra.mxu0 0
  %9453 = vmatprep.subr.bf16.mxu0 0
  %9454 = vmatpush2.bf16.msra.mxu0 0
  %9455 = vmatprep.mubr.bf16.mxu0 0
  %9456 = vmatmul.mubr.bf16.gmra.mxu0 %v8996
  %v9457 = vpop.f32.mrf.mxu0
  %v9458 = vadd.f32 0.0, %v9457
  %v9459 = vpop.f32.mrf.mxu0
  %v9460 = vpop.f32.mrf.mxu0
  %v9461 = vadd.f32 0.0, %v9460
  %v9462 = vpop.f32.mrf.mxu0
  %9463 = vmatprep.mubr.bf16.mxu0 0
  %9464 = vmatmul.mubr.bf16.gmra.mxu0 %v8999
  %v9465 = vpop.f32.mrf.mxu0
  %v9466 = vadd.f32 0.0, %v9465
  %v9467 = vpop.f32.mrf.mxu0
  %v9468 = vpop.f32.mrf.mxu0
  %v9469 = vadd.f32 0.0, %v9468
  %v9470 = vpop.f32.mrf.mxu0
  %9471 = vmatprep.mubr.bf16.mxu0 0
  %9472 = vmatmul.mubr.bf16.gmra.mxu0 %v9002
  %v9473 = vpop.f32.mrf.mxu0
  %v9474 = vadd.f32 0.0, %v9473
  %v9475 = vpop.f32.mrf.mxu0
  %v9476 = vpop.f32.mrf.mxu0
  %v9477 = vadd.f32 0.0, %v9476
  %v9478 = vpop.f32.mrf.mxu0
  %9479 = vmatprep.mubr.bf16.mxu0 0
  %9480 = vmatmul.mubr.bf16.gmra.mxu0 %v9005
  %v9481 = vpop.f32.mrf.mxu0
  %v9482 = vadd.f32 0.0, %v9481
  %v9483 = vpop.f32.mrf.mxu0
  %v9484 = vpop.f32.mrf.mxu0
  %v9485 = vadd.f32 0.0, %v9484
  %v9486 = vpop.f32.mrf.mxu0
  %9487 = vmatprep.mubr.bf16.mxu0 0
  %9488 = vmatmul.mubr.bf16.gmra.mxu0 %v9008
  %v9489 = vpop.f32.mrf.mxu0
  %v9490 = vadd.f32 0.0, %v9489
  %v9491 = vpop.f32.mrf.mxu0
  %v9492 = vpop.f32.mrf.mxu0
  %v9493 = vadd.f32 0.0, %v9492
  %v9494 = vpop.f32.mrf.mxu0
  %9495 = vmatprep.mubr.bf16.mxu0 0
  %9496 = vmatmul.mubr.bf16.gmra.mxu0 %v9011
  %v9497 = vpop.f32.mrf.mxu0
  %v9498 = vadd.f32 0.0, %v9497
  %v9499 = vpop.f32.mrf.mxu0
  %v9500 = vpop.f32.mrf.mxu0
  %v9501 = vadd.f32 0.0, %v9500
  %v9502 = vpop.f32.mrf.mxu0
  %9503 = vmatprep.mubr.bf16.mxu0 0
  %9504 = vmatmul.mubr.bf16.gmra.mxu0 %v9270
  %v9505 = vpop.f32.mrf.mxu0
  %v9506 = vadd.f32 0.0, %v9505
  %v9507 = vpop.f32.mrf.mxu0
  %v9508 = vpop.f32.mrf.mxu0
  %v9509 = vadd.f32 0.0, %v9508
  %v9510 = vpop.f32.mrf.mxu0
  %9511 = vmatprep.mubr.bf16.mxu0 0
  %9512 = vmatmul.mubr.bf16.gmra.mxu0 %v8990
  %v9513 = vpop.f32.mrf.mxu0
  %v9514 = vadd.f32 0.0, %v9513
  %v9515 = vpop.f32.mrf.mxu0
  %v9516 = vpop.f32.mrf.mxu0
  %v9517 = vadd.f32 0.0, %v9516
  %v9518 = vpop.f32.mrf.mxu0
  %9519 = vdwg.mxu0
  %v9520 = vadd.f32 %v9372, %v9458
  %v9521 = vadd.f32 %v9373, %v9461
  %v9522 = vadd.f32 %v9374, %v9466
  %v9523 = vadd.f32 %v9375, %v9469
  %v9524 = vadd.f32 %v9376, %v9474
  %v9525 = vadd.f32 %v9377, %v9477
  %v9526 = vadd.f32 %v9378, %v9482
  %v9527 = vadd.f32 %v9379, %v9485
  %v9528 = vadd.f32 %v9380, %v9490
  %v9529 = vadd.f32 %v9381, %v9493
  %v9530 = vadd.f32 %v9382, %v9498
  %v9531 = vadd.f32 %v9383, %v9501
  %v9532 = vadd.f32 %v9384, %v9506
  %v9533 = vadd.f32 %v9385, %v9509
  %v9534 = vadd.f32 %v9386, %v9514
  %v9535 = vadd.f32 %v9387, %v9517
  %s9536 = scalar_lea.vmem %s2, 256
  %v9537 = vld [vmem:[%s9536] sm:$0xf]
  %v9538 = vld [vmem:[%s9536 + $0x4] sm:$0xf]
  %v9539 = vld [vmem:[%s9536 + $0x8] sm:$0xf]
  %v9540 = vld [vmem:[%s9536 + $0xc] sm:$0xf]
  %v9541 = vld [vmem:[%s9536 + $0x10] sm:$0xf]
  %v9542 = vld [vmem:[%s9536 + $0x14] sm:$0xf]
  %v9543 = vld [vmem:[%s9536 + $0x18] sm:$0xf]
  %v9544 = vld [vmem:[%s9536 + $0x1c] sm:$0x3]
  %v9553 = vunpack.c.l.b16 %v9537
  %v9554 = vunpack.c.l.b16 %v9538
  %v9555 = vunpack.c.l.b16 %v9539
  %v9556 = vunpack.c.l.b16 %v9540
  %v9557 = vunpack.c.l.b16 %v9541
  %v9558 = vunpack.c.l.b16 %v9542
  %v9559 = vunpack.c.l.b16 %v9543
  %v9560 = vunpack.c.l.b16 %v9544
  %v9561 = vpack.c.b16 %v9554, %v9553
  %v9562 = vpack.c.b16 %v9556, %v9555
  %v9563 = vpack.c.b16 %v9558, %v9557
  %v9564 = vpack.c.b16 %v9560, %v9559
  %v9569 = vsel %vm9013, %v9564, 0
  %9571 = vmatprep.subr.bf16.mxu0 0
  %9572 = vmatpush1.bf16.msra.mxu0 0
  %9573 = vmatprep.subr.bf16.mxu0 0
  %9574 = vmatpush1.bf16.msra.mxu0 0
  %9575 = vmatprep.subr.bf16.mxu0 0
  %9576 = vmatpush1.bf16.msra.mxu0 0
  %9577 = vmatprep.subr.bf16.mxu0 0
  %9578 = vmatpush1.bf16.msra.mxu0 0
  %9579 = vmatprep.subr.bf16.mxu0 0
  %9580 = vmatpush1.bf16.msra.mxu0 %v9569
  %9581 = vmatprep.subr.bf16.mxu0 0
  %9582 = vmatpush1.bf16.msra.mxu0 %v9563
  %9583 = vmatprep.subr.bf16.mxu0 0
  %9584 = vmatpush1.bf16.msra.mxu0 %v9562
  %9585 = vmatprep.subr.bf16.mxu0 0
  %9586 = vmatpush1.bf16.msra.mxu0 %v9561
  %9587 = vmatprep.subr.bf16.mxu0 0
  %9588 = vmatpush2.bf16.msra.mxu0 0
  %9589 = vmatprep.subr.bf16.mxu0 0
  %9590 = vmatpush2.bf16.msra.mxu0 0
  %9591 = vmatprep.subr.bf16.mxu0 0
  %9592 = vmatpush2.bf16.msra.mxu0 0
  %9593 = vmatprep.subr.bf16.mxu0 0
  %9594 = vmatpush2.bf16.msra.mxu0 0
  %9595 = vmatprep.subr.bf16.mxu0 0
  %9596 = vmatpush2.bf16.msra.mxu0 0
  %9597 = vmatprep.subr.bf16.mxu0 0
  %9598 = vmatpush2.bf16.msra.mxu0 0
  %9599 = vmatprep.subr.bf16.mxu0 0
  %9600 = vmatpush2.bf16.msra.mxu0 0
  %9601 = vmatprep.subr.bf16.mxu0 0
  %9602 = vmatpush2.bf16.msra.mxu0 0
  %9603 = vmatprep.mubr.bf16.mxu0 0
  %9604 = vmatmul.mubr.bf16.gmra.mxu0 %v8999
  %v9605 = vpop.f32.mrf.mxu0
  %v9606 = vadd.f32 0.0, %v9605
  %v9607 = vpop.f32.mrf.mxu0
  %v9608 = vpop.f32.mrf.mxu0
  %v9609 = vadd.f32 0.0, %v9608
  %v9610 = vpop.f32.mrf.mxu0
  %9611 = vmatprep.mubr.bf16.mxu0 0
  %9612 = vmatmul.mubr.bf16.gmra.mxu0 %v9002
  %v9613 = vpop.f32.mrf.mxu0
  %v9614 = vadd.f32 0.0, %v9613
  %v9615 = vpop.f32.mrf.mxu0
  %v9616 = vpop.f32.mrf.mxu0
  %v9617 = vadd.f32 0.0, %v9616
  %v9618 = vpop.f32.mrf.mxu0
  %9619 = vmatprep.mubr.bf16.mxu0 0
  %9620 = vmatmul.mubr.bf16.gmra.mxu0 %v9005
  %v9621 = vpop.f32.mrf.mxu0
  %v9622 = vadd.f32 0.0, %v9621
  %v9623 = vpop.f32.mrf.mxu0
  %v9624 = vpop.f32.mrf.mxu0
  %v9625 = vadd.f32 0.0, %v9624
  %v9626 = vpop.f32.mrf.mxu0
  %9627 = vmatprep.mubr.bf16.mxu0 0
  %9628 = vmatmul.mubr.bf16.gmra.mxu0 %v9008
  %v9629 = vpop.f32.mrf.mxu0
  %v9630 = vadd.f32 0.0, %v9629
  %v9631 = vpop.f32.mrf.mxu0
  %v9632 = vpop.f32.mrf.mxu0
  %v9633 = vadd.f32 0.0, %v9632
  %v9634 = vpop.f32.mrf.mxu0
  %9635 = vmatprep.mubr.bf16.mxu0 0
  %9636 = vmatmul.mubr.bf16.gmra.mxu0 %v9011
  %v9637 = vpop.f32.mrf.mxu0
  %v9638 = vadd.f32 0.0, %v9637
  %v9639 = vpop.f32.mrf.mxu0
  %v9640 = vpop.f32.mrf.mxu0
  %v9641 = vadd.f32 0.0, %v9640
  %v9642 = vpop.f32.mrf.mxu0
  %9643 = vmatprep.mubr.bf16.mxu0 0
  %9644 = vmatmul.mubr.bf16.gmra.mxu0 %v9270
  %v9645 = vpop.f32.mrf.mxu0
  %v9646 = vadd.f32 0.0, %v9645
  %v9647 = vpop.f32.mrf.mxu0
  %v9648 = vpop.f32.mrf.mxu0
  %v9649 = vadd.f32 0.0, %v9648
  %v9650 = vpop.f32.mrf.mxu0
  %9651 = vmatprep.mubr.bf16.mxu0 0
  %9652 = vmatmul.mubr.bf16.gmra.mxu0 %v8990
  %v9653 = vpop.f32.mrf.mxu0
  %v9654 = vadd.f32 0.0, %v9653
  %v9655 = vpop.f32.mrf.mxu0
  %v9656 = vpop.f32.mrf.mxu0
  %v9657 = vadd.f32 0.0, %v9656
  %v9658 = vpop.f32.mrf.mxu0
  %9659 = vmatprep.mubr.bf16.mxu0 0
  %9660 = vmatmul.mubr.bf16.gmra.mxu0 %v8990
  %v9661 = vpop.f32.mrf.mxu0
  %v9662 = vadd.f32 0.0, %v9661
  %v9663 = vpop.f32.mrf.mxu0
  %v9664 = vpop.f32.mrf.mxu0
  %v9665 = vadd.f32 0.0, %v9664
  %v9666 = vpop.f32.mrf.mxu0
  %9667 = vdwg.mxu0
  %v9668 = vadd.f32 %v9520, %v9606
  %v9669 = vadd.f32 %v9521, %v9609
  %v9670 = vadd.f32 %v9522, %v9614
  %v9671 = vadd.f32 %v9523, %v9617
  %v9672 = vadd.f32 %v9524, %v9622
  %v9673 = vadd.f32 %v9525, %v9625
  %v9674 = vadd.f32 %v9526, %v9630
  %v9675 = vadd.f32 %v9527, %v9633
  %v9676 = vadd.f32 %v9528, %v9638
  %v9677 = vadd.f32 %v9529, %v9641
  %v9678 = vadd.f32 %v9530, %v9646
  %v9679 = vadd.f32 %v9531, %v9649
  %v9680 = vadd.f32 %v9532, %v9654
  %v9681 = vadd.f32 %v9533, %v9657
  %v9682 = vadd.f32 %v9534, %v9662
  %v9683 = vadd.f32 %v9535, %v9665
  %s9684 = scalar_lea.vmem %s2, 32
  %v9685 = vld [vmem:[%s9684] sm:$0xf]
  %v9686 = vld [vmem:[%s9684 + $0x4] sm:$0xf]
  %v9687 = vld [vmem:[%s9684 + $0x8] sm:$0xf]
  %v9688 = vld [vmem:[%s9684 + $0xc] sm:$0xf]
  %v9689 = vld [vmem:[%s9684 + $0x10] sm:$0xf]
  %v9690 = vld [vmem:[%s9684 + $0x14] sm:$0xf]
  %v9691 = vld [vmem:[%s9684 + $0x18] sm:$0xf]
  %v9692 = vld [vmem:[%s9684 + $0x1c] sm:$0x3]
  %s9693 = scalar_lea.vmem %s2, 96
  %v9694 = vld [vmem:[%s9693] sm:$0xf]
  %v9695 = vld [vmem:[%s9693 + $0x4] sm:$0xf]
  %v9696 = vld [vmem:[%s9693 + $0x8] sm:$0xf]
  %v9697 = vld [vmem:[%s9693 + $0xc] sm:$0xf]
  %v9698 = vld [vmem:[%s9693 + $0x10] sm:$0xf]
  %v9699 = vld [vmem:[%s9693 + $0x14] sm:$0xf]
  %v9700 = vld [vmem:[%s9693 + $0x18] sm:$0xf]
  %v9701 = vld [vmem:[%s9693 + $0x1c] sm:$0x3]
  %v9710 = vunpack.c.l.b16 %v9694
  %v9711 = vunpack.c.l.b16 %v9695
  %v9712 = vunpack.c.l.b16 %v9696
  %v9713 = vunpack.c.l.b16 %v9697
  %v9714 = vunpack.c.l.b16 %v9698
  %v9715 = vunpack.c.l.b16 %v9699
  %v9716 = vunpack.c.l.b16 %v9700
  %v9717 = vunpack.c.l.b16 %v9701
  %v9718 = vpack.c.b16 %v9711, %v9710
  %v9719 = vpack.c.b16 %v9713, %v9712
  %v9720 = vpack.c.b16 %v9715, %v9714
  %v9721 = vpack.c.b16 %v9717, %v9716
  %v9726 = vsel %vm9013, %v9721, 0
  %9728 = vmatprep.subr.bf16.mxu0 0
  %9729 = vmatpush1.bf16.msra.mxu0 0
  %9730 = vmatprep.subr.bf16.mxu0 0
  %9731 = vmatpush1.bf16.msra.mxu0 0
  %9732 = vmatprep.subr.bf16.mxu0 0
  %9733 = vmatpush1.bf16.msra.mxu0 0
  %9734 = vmatprep.subr.bf16.mxu0 0
  %9735 = vmatpush1.bf16.msra.mxu0 0
  %9736 = vmatprep.subr.bf16.mxu0 0
  %9737 = vmatpush1.bf16.msra.mxu0 %v9726
  %9738 = vmatprep.subr.bf16.mxu0 0
  %9739 = vmatpush1.bf16.msra.mxu0 %v9720
  %9740 = vmatprep.subr.bf16.mxu0 0
  %9741 = vmatpush1.bf16.msra.mxu0 %v9719
  %9742 = vmatprep.subr.bf16.mxu0 0
  %9743 = vmatpush1.bf16.msra.mxu0 %v9718
  %9744 = vmatprep.subr.bf16.mxu0 0
  %9745 = vmatpush2.bf16.msra.mxu0 0
  %9746 = vmatprep.subr.bf16.mxu0 0
  %9747 = vmatpush2.bf16.msra.mxu0 0
  %9748 = vmatprep.subr.bf16.mxu0 0
  %9749 = vmatpush2.bf16.msra.mxu0 0
  %9750 = vmatprep.subr.bf16.mxu0 0
  %9751 = vmatpush2.bf16.msra.mxu0 0
  %9752 = vmatprep.subr.bf16.mxu0 0
  %9753 = vmatpush2.bf16.msra.mxu0 0
  %9754 = vmatprep.subr.bf16.mxu0 0
  %9755 = vmatpush2.bf16.msra.mxu0 0
  %9756 = vmatprep.subr.bf16.mxu0 0
  %9757 = vmatpush2.bf16.msra.mxu0 0
  %9758 = vmatprep.subr.bf16.mxu0 0
  %9759 = vmatpush2.bf16.msra.mxu0 0
  %9760 = vmatprep.mubr.bf16.mxu0 0
  %9761 = vmatmul.mubr.bf16.gmra.mxu0 %v8990
  %v9762 = vpop.f32.mrf.mxu0
  %v9763 = vadd.f32 0.0, %v9762
  %v9764 = vpop.f32.mrf.mxu0
  %v9765 = vpop.f32.mrf.mxu0
  %v9766 = vadd.f32 0.0, %v9765
  %v9767 = vpop.f32.mrf.mxu0
  %9768 = vmatprep.mubr.bf16.mxu0 0
  %9769 = vmatmul.mubr.bf16.gmra.mxu0 %v8993
  %v9770 = vpop.f32.mrf.mxu0
  %v9771 = vadd.f32 0.0, %v9770
  %v9772 = vpop.f32.mrf.mxu0
  %v9773 = vpop.f32.mrf.mxu0
  %v9774 = vadd.f32 0.0, %v9773
  %v9775 = vpop.f32.mrf.mxu0
  %9776 = vmatprep.mubr.bf16.mxu0 0
  %9777 = vmatmul.mubr.bf16.gmra.mxu0 %v8996
  %v9778 = vpop.f32.mrf.mxu0
  %v9779 = vadd.f32 0.0, %v9778
  %v9780 = vpop.f32.mrf.mxu0
  %v9781 = vpop.f32.mrf.mxu0
  %v9782 = vadd.f32 0.0, %v9781
  %v9783 = vpop.f32.mrf.mxu0
  %9784 = vmatprep.mubr.bf16.mxu0 0
  %9785 = vmatmul.mubr.bf16.gmra.mxu0 %v8999
  %v9786 = vpop.f32.mrf.mxu0
  %v9787 = vadd.f32 0.0, %v9786
  %v9788 = vpop.f32.mrf.mxu0
  %v9789 = vpop.f32.mrf.mxu0
  %v9790 = vadd.f32 0.0, %v9789
  %v9791 = vpop.f32.mrf.mxu0
  %9792 = vmatprep.mubr.bf16.mxu0 0
  %9793 = vmatmul.mubr.bf16.gmra.mxu0 %v9002
  %v9794 = vpop.f32.mrf.mxu0
  %v9795 = vadd.f32 0.0, %v9794
  %v9796 = vpop.f32.mrf.mxu0
  %v9797 = vpop.f32.mrf.mxu0
  %v9798 = vadd.f32 0.0, %v9797
  %v9799 = vpop.f32.mrf.mxu0
  %9800 = vmatprep.mubr.bf16.mxu0 0
  %9801 = vmatmul.mubr.bf16.gmra.mxu0 %v9005
  %v9802 = vpop.f32.mrf.mxu0
  %v9803 = vadd.f32 0.0, %v9802
  %v9804 = vpop.f32.mrf.mxu0
  %v9805 = vpop.f32.mrf.mxu0
  %v9806 = vadd.f32 0.0, %v9805
  %v9807 = vpop.f32.mrf.mxu0
  %9808 = vmatprep.mubr.bf16.mxu0 0
  %9809 = vmatmul.mubr.bf16.gmra.mxu0 %v9008
  %v9810 = vpop.f32.mrf.mxu0
  %v9811 = vadd.f32 0.0, %v9810
  %v9812 = vpop.f32.mrf.mxu0
  %v9813 = vpop.f32.mrf.mxu0
  %v9814 = vadd.f32 0.0, %v9813
  %v9815 = vpop.f32.mrf.mxu0
  %9816 = vmatprep.mubr.bf16.mxu0 0
  %9817 = vmatmul.mubr.bf16.gmra.mxu0 %v9011
  %v9818 = vpop.f32.mrf.mxu0
  %v9819 = vadd.f32 0.0, %v9818
  %v9820 = vpop.f32.mrf.mxu0
  %v9821 = vpop.f32.mrf.mxu0
  %v9822 = vadd.f32 0.0, %v9821
  %v9823 = vpop.f32.mrf.mxu0
  %9824 = vdwg.mxu0
  %v9833 = vunpack.c.l.b16 %v9685
  %v9834 = vunpack.c.l.b16 %v9686
  %v9835 = vunpack.c.l.b16 %v9687
  %v9836 = vunpack.c.l.b16 %v9688
  %v9837 = vunpack.c.l.b16 %v9689
  %v9838 = vunpack.c.l.b16 %v9690
  %v9839 = vunpack.c.l.b16 %v9691
  %v9840 = vunpack.c.l.b16 %v9692
  %v9841 = vpack.c.b16 %v9834, %v9833
  %v9842 = vpack.c.b16 %v9836, %v9835
  %v9843 = vpack.c.b16 %v9838, %v9837
  %v9844 = vpack.c.b16 %v9840, %v9839
  %v9849 = vsel %vm9013, %v9844, 0
  %9851 = vmatprep.subr.bf16.mxu0 0
  %9852 = vmatpush1.bf16.msra.mxu0 0
  %9853 = vmatprep.subr.bf16.mxu0 0
  %9854 = vmatpush1.bf16.msra.mxu0 0
  %9855 = vmatprep.subr.bf16.mxu0 0
  %9856 = vmatpush1.bf16.msra.mxu0 0
  %9857 = vmatprep.subr.bf16.mxu0 0
  %9858 = vmatpush1.bf16.msra.mxu0 0
  %9859 = vmatprep.subr.bf16.mxu0 0
  %9860 = vmatpush1.bf16.msra.mxu0 %v9849
  %9861 = vmatprep.subr.bf16.mxu0 0
  %9862 = vmatpush1.bf16.msra.mxu0 %v9843
  %9863 = vmatprep.subr.bf16.mxu0 0
  %9864 = vmatpush1.bf16.msra.mxu0 %v9842
  %9865 = vmatprep.subr.bf16.mxu0 0
  %9866 = vmatpush1.bf16.msra.mxu0 %v9841
  %9867 = vmatprep.subr.bf16.mxu0 0
  %9868 = vmatpush2.bf16.msra.mxu0 0
  %9869 = vmatprep.subr.bf16.mxu0 0
  %9870 = vmatpush2.bf16.msra.mxu0 0
  %9871 = vmatprep.subr.bf16.mxu0 0
  %9872 = vmatpush2.bf16.msra.mxu0 0
  %9873 = vmatprep.subr.bf16.mxu0 0
  %9874 = vmatpush2.bf16.msra.mxu0 0
  %9875 = vmatprep.subr.bf16.mxu0 0
  %9876 = vmatpush2.bf16.msra.mxu0 0
  %9877 = vmatprep.subr.bf16.mxu0 0
  %9878 = vmatpush2.bf16.msra.mxu0 0
  %9879 = vmatprep.subr.bf16.mxu0 0
  %9880 = vmatpush2.bf16.msra.mxu0 0
  %9881 = vmatprep.subr.bf16.mxu0 0
  %9882 = vmatpush2.bf16.msra.mxu0 0
  %9883 = vmatprep.mubr.bf16.mxu0 0
  %9884 = vmatmul.mubr.bf16.gmra.mxu0 %v8990
  %v9885 = vpop.f32.mrf.mxu0
  %v9886 = vadd.f32 %v9763, %v9885
  %v9887 = vpop.f32.mrf.mxu0
  %v9888 = vpop.f32.mrf.mxu0
  %v9889 = vadd.f32 %v9766, %v9888
  %v9890 = vpop.f32.mrf.mxu0
  %9891 = vmatprep.mubr.bf16.mxu0 0
  %9892 = vmatmul.mubr.bf16.gmra.mxu0 %v8990
  %v9893 = vpop.f32.mrf.mxu0
  %v9894 = vadd.f32 %v9771, %v9893
  %v9895 = vpop.f32.mrf.mxu0
  %v9896 = vpop.f32.mrf.mxu0
  %v9897 = vadd.f32 %v9774, %v9896
  %v9898 = vpop.f32.mrf.mxu0
  %9899 = vmatprep.mubr.bf16.mxu0 0
  %9900 = vmatmul.mubr.bf16.gmra.mxu0 %v8993
  %v9901 = vpop.f32.mrf.mxu0
  %v9902 = vadd.f32 %v9779, %v9901
  %v9903 = vpop.f32.mrf.mxu0
  %v9904 = vpop.f32.mrf.mxu0
  %v9905 = vadd.f32 %v9782, %v9904
  %v9906 = vpop.f32.mrf.mxu0
  %9907 = vmatprep.mubr.bf16.mxu0 0
  %9908 = vmatmul.mubr.bf16.gmra.mxu0 %v8996
  %v9909 = vpop.f32.mrf.mxu0
  %v9910 = vadd.f32 %v9787, %v9909
  %v9911 = vpop.f32.mrf.mxu0
  %v9912 = vpop.f32.mrf.mxu0
  %v9913 = vadd.f32 %v9790, %v9912
  %v9914 = vpop.f32.mrf.mxu0
  %9915 = vmatprep.mubr.bf16.mxu0 0
  %9916 = vmatmul.mubr.bf16.gmra.mxu0 %v8999
  %v9917 = vpop.f32.mrf.mxu0
  %v9918 = vadd.f32 %v9795, %v9917
  %v9919 = vpop.f32.mrf.mxu0
  %v9920 = vpop.f32.mrf.mxu0
  %v9921 = vadd.f32 %v9798, %v9920
  %v9922 = vpop.f32.mrf.mxu0
  %9923 = vmatprep.mubr.bf16.mxu0 0
  %9924 = vmatmul.mubr.bf16.gmra.mxu0 %v9002
  %v9925 = vpop.f32.mrf.mxu0
  %v9926 = vadd.f32 %v9803, %v9925
  %v9927 = vpop.f32.mrf.mxu0
  %v9928 = vpop.f32.mrf.mxu0
  %v9929 = vadd.f32 %v9806, %v9928
  %v9930 = vpop.f32.mrf.mxu0
  %9931 = vmatprep.mubr.bf16.mxu0 0
  %9932 = vmatmul.mubr.bf16.gmra.mxu0 %v9005
  %v9933 = vpop.f32.mrf.mxu0
  %v9934 = vadd.f32 %v9811, %v9933
  %v9935 = vpop.f32.mrf.mxu0
  %v9936 = vpop.f32.mrf.mxu0
  %v9937 = vadd.f32 %v9814, %v9936
  %v9938 = vpop.f32.mrf.mxu0
  %9939 = vmatprep.mubr.bf16.mxu0 0
  %9940 = vmatmul.mubr.bf16.gmra.mxu0 %v9008
  %v9941 = vpop.f32.mrf.mxu0
  %v9942 = vadd.f32 %v9819, %v9941
  %v9943 = vpop.f32.mrf.mxu0
  %v9944 = vpop.f32.mrf.mxu0
  %v9945 = vadd.f32 %v9822, %v9944
  %v9946 = vpop.f32.mrf.mxu0
  %9947 = vdwg.mxu0
  %s9948 = scalar_lea.vmem %s2, 160
  %v9949 = vld [vmem:[%s9948] sm:$0xf]
  %v9950 = vld [vmem:[%s9948 + $0x4] sm:$0xf]
  %v9951 = vld [vmem:[%s9948 + $0x8] sm:$0xf]
  %v9952 = vld [vmem:[%s9948 + $0xc] sm:$0xf]
  %v9953 = vld [vmem:[%s9948 + $0x10] sm:$0xf]
  %v9954 = vld [vmem:[%s9948 + $0x14] sm:$0xf]
  %v9955 = vld [vmem:[%s9948 + $0x18] sm:$0xf]
  %v9956 = vld [vmem:[%s9948 + $0x1c] sm:$0x3]
  %v9965 = vunpack.c.l.b16 %v9949
  %v9966 = vunpack.c.l.b16 %v9950
  %v9967 = vunpack.c.l.b16 %v9951
  %v9968 = vunpack.c.l.b16 %v9952
  %v9969 = vunpack.c.l.b16 %v9953
  %v9970 = vunpack.c.l.b16 %v9954
  %v9971 = vunpack.c.l.b16 %v9955
  %v9972 = vunpack.c.l.b16 %v9956
  %v9973 = vpack.c.b16 %v9966, %v9965
  %v9974 = vpack.c.b16 %v9968, %v9967
  %v9975 = vpack.c.b16 %v9970, %v9969
  %v9976 = vpack.c.b16 %v9972, %v9971
  %v9981 = vsel %vm9013, %v9976, 0
  %9983 = vmatprep.subr.bf16.mxu0 0
  %9984 = vmatpush1.bf16.msra.mxu0 0
  %9985 = vmatprep.subr.bf16.mxu0 0
  %9986 = vmatpush1.bf16.msra.mxu0 0
  %9987 = vmatprep.subr.bf16.mxu0 0
  %9988 = vmatpush1.bf16.msra.mxu0 0
  %9989 = vmatprep.subr.bf16.mxu0 0
  %9990 = vmatpush1.bf16.msra.mxu0 0
  %9991 = vmatprep.subr.bf16.mxu0 0
  %9992 = vmatpush1.bf16.msra.mxu0 %v9981
  %9993 = vmatprep.subr.bf16.mxu0 0
  %9994 = vmatpush1.bf16.msra.mxu0 %v9975
  %9995 = vmatprep.subr.bf16.mxu0 0
  %9996 = vmatpush1.bf16.msra.mxu0 %v9974
  %9997 = vmatprep.subr.bf16.mxu0 0
  %9998 = vmatpush1.bf16.msra.mxu0 %v9973
  %9999 = vmatprep.subr.bf16.mxu0 0
  %10000 = vmatpush2.bf16.msra.mxu0 0
  %10001 = vmatprep.subr.bf16.mxu0 0
  %10002 = vmatpush2.bf16.msra.mxu0 0
  %10003 = vmatprep.subr.bf16.mxu0 0
  %10004 = vmatpush2.bf16.msra.mxu0 0
  %10005 = vmatprep.subr.bf16.mxu0 0
  %10006 = vmatpush2.bf16.msra.mxu0 0
  %10007 = vmatprep.subr.bf16.mxu0 0
  %10008 = vmatpush2.bf16.msra.mxu0 0
  %10009 = vmatprep.subr.bf16.mxu0 0
  %10010 = vmatpush2.bf16.msra.mxu0 0
  %10011 = vmatprep.subr.bf16.mxu0 0
  %10012 = vmatpush2.bf16.msra.mxu0 0
  %10013 = vmatprep.subr.bf16.mxu0 0
  %10014 = vmatpush2.bf16.msra.mxu0 0
  %10015 = vmatprep.mubr.bf16.mxu0 0
  %10016 = vmatmul.mubr.bf16.gmra.mxu0 %v8993
  %v10017 = vpop.f32.mrf.mxu0
  %v10018 = vadd.f32 0.0, %v10017
  %v10019 = vpop.f32.mrf.mxu0
  %v10020 = vpop.f32.mrf.mxu0
  %v10021 = vadd.f32 0.0, %v10020
  %v10022 = vpop.f32.mrf.mxu0
  %10023 = vmatprep.mubr.bf16.mxu0 0
  %10024 = vmatmul.mubr.bf16.gmra.mxu0 %v8996
  %v10025 = vpop.f32.mrf.mxu0
  %v10026 = vadd.f32 0.0, %v10025
  %v10027 = vpop.f32.mrf.mxu0
  %v10028 = vpop.f32.mrf.mxu0
  %v10029 = vadd.f32 0.0, %v10028
  %v10030 = vpop.f32.mrf.mxu0
  %10031 = vmatprep.mubr.bf16.mxu0 0
  %10032 = vmatmul.mubr.bf16.gmra.mxu0 %v8999
  %v10033 = vpop.f32.mrf.mxu0
  %v10034 = vadd.f32 0.0, %v10033
  %v10035 = vpop.f32.mrf.mxu0
  %v10036 = vpop.f32.mrf.mxu0
  %v10037 = vadd.f32 0.0, %v10036
  %v10038 = vpop.f32.mrf.mxu0
  %10039 = vmatprep.mubr.bf16.mxu0 0
  %10040 = vmatmul.mubr.bf16.gmra.mxu0 %v9002
  %v10041 = vpop.f32.mrf.mxu0
  %v10042 = vadd.f32 0.0, %v10041
  %v10043 = vpop.f32.mrf.mxu0
  %v10044 = vpop.f32.mrf.mxu0
  %v10045 = vadd.f32 0.0, %v10044
  %v10046 = vpop.f32.mrf.mxu0
  %10047 = vmatprep.mubr.bf16.mxu0 0
  %10048 = vmatmul.mubr.bf16.gmra.mxu0 %v9005
  %v10049 = vpop.f32.mrf.mxu0
  %v10050 = vadd.f32 0.0, %v10049
  %v10051 = vpop.f32.mrf.mxu0
  %v10052 = vpop.f32.mrf.mxu0
  %v10053 = vadd.f32 0.0, %v10052
  %v10054 = vpop.f32.mrf.mxu0
  %10055 = vmatprep.mubr.bf16.mxu0 0
  %10056 = vmatmul.mubr.bf16.gmra.mxu0 %v9008
  %v10057 = vpop.f32.mrf.mxu0
  %v10058 = vadd.f32 0.0, %v10057
  %v10059 = vpop.f32.mrf.mxu0
  %v10060 = vpop.f32.mrf.mxu0
  %v10061 = vadd.f32 0.0, %v10060
  %v10062 = vpop.f32.mrf.mxu0
  %10063 = vmatprep.mubr.bf16.mxu0 0
  %10064 = vmatmul.mubr.bf16.gmra.mxu0 %v9011
  %v10065 = vpop.f32.mrf.mxu0
  %v10066 = vadd.f32 0.0, %v10065
  %v10067 = vpop.f32.mrf.mxu0
  %v10068 = vpop.f32.mrf.mxu0
  %v10069 = vadd.f32 0.0, %v10068
  %v10070 = vpop.f32.mrf.mxu0
  %10071 = vmatprep.mubr.bf16.mxu0 0
  %10072 = vmatmul.mubr.bf16.gmra.mxu0 %v9270
  %v10073 = vpop.f32.mrf.mxu0
  %v10074 = vadd.f32 0.0, %v10073
  %v10075 = vpop.f32.mrf.mxu0
  %v10076 = vpop.f32.mrf.mxu0
  %v10077 = vadd.f32 0.0, %v10076
  %v10078 = vpop.f32.mrf.mxu0
  %10079 = vdwg.mxu0
  %v10080 = vadd.f32 %v9886, %v10018
  %v10081 = vadd.f32 %v9889, %v10021
  %v10082 = vadd.f32 %v9894, %v10026
  %v10083 = vadd.f32 %v9897, %v10029
  %v10084 = vadd.f32 %v9902, %v10034
  %v10085 = vadd.f32 %v9905, %v10037
  %v10086 = vadd.f32 %v9910, %v10042
  %v10087 = vadd.f32 %v9913, %v10045
  %v10088 = vadd.f32 %v9918, %v10050
  %v10089 = vadd.f32 %v9921, %v10053
  %v10090 = vadd.f32 %v9926, %v10058
  %v10091 = vadd.f32 %v9929, %v10061
  %v10092 = vadd.f32 %v9934, %v10066
  %v10093 = vadd.f32 %v9937, %v10069
  %v10094 = vadd.f32 %v9942, %v10074
  %v10095 = vadd.f32 %v9945, %v10077
  %s10096 = scalar_lea.vmem %s2, 224
  %v10097 = vld [vmem:[%s10096] sm:$0xf]
  %v10098 = vld [vmem:[%s10096 + $0x4] sm:$0xf]
  %v10099 = vld [vmem:[%s10096 + $0x8] sm:$0xf]
  %v10100 = vld [vmem:[%s10096 + $0xc] sm:$0xf]
  %v10101 = vld [vmem:[%s10096 + $0x10] sm:$0xf]
  %v10102 = vld [vmem:[%s10096 + $0x14] sm:$0xf]
  %v10103 = vld [vmem:[%s10096 + $0x18] sm:$0xf]
  %v10104 = vld [vmem:[%s10096 + $0x1c] sm:$0x3]
  %v10113 = vunpack.c.l.b16 %v10097
  %v10114 = vunpack.c.l.b16 %v10098
  %v10115 = vunpack.c.l.b16 %v10099
  %v10116 = vunpack.c.l.b16 %v10100
  %v10117 = vunpack.c.l.b16 %v10101
  %v10118 = vunpack.c.l.b16 %v10102
  %v10119 = vunpack.c.l.b16 %v10103
  %v10120 = vunpack.c.l.b16 %v10104
  %v10121 = vpack.c.b16 %v10114, %v10113
  %v10122 = vpack.c.b16 %v10116, %v10115
  %v10123 = vpack.c.b16 %v10118, %v10117
  %v10124 = vpack.c.b16 %v10120, %v10119
  %v10129 = vsel %vm9013, %v10124, 0
  %10131 = vmatprep.subr.bf16.mxu0 0
  %10132 = vmatpush1.bf16.msra.mxu0 0
  %10133 = vmatprep.subr.bf16.mxu0 0
  %10134 = vmatpush1.bf16.msra.mxu0 0
  %10135 = vmatprep.subr.bf16.mxu0 0
  %10136 = vmatpush1.bf16.msra.mxu0 0
  %10137 = vmatprep.subr.bf16.mxu0 0
  %10138 = vmatpush1.bf16.msra.mxu0 0
  %10139 = vmatprep.subr.bf16.mxu0 0
  %10140 = vmatpush1.bf16.msra.mxu0 %v10129
  %10141 = vmatprep.subr.bf16.mxu0 0
  %10142 = vmatpush1.bf16.msra.mxu0 %v10123
  %10143 = vmatprep.subr.bf16.mxu0 0
  %10144 = vmatpush1.bf16.msra.mxu0 %v10122
  %10145 = vmatprep.subr.bf16.mxu0 0
  %10146 = vmatpush1.bf16.msra.mxu0 %v10121
  %10147 = vmatprep.subr.bf16.mxu0 0
  %10148 = vmatpush2.bf16.msra.mxu0 0
  %10149 = vmatprep.subr.bf16.mxu0 0
  %10150 = vmatpush2.bf16.msra.mxu0 0
  %10151 = vmatprep.subr.bf16.mxu0 0
  %10152 = vmatpush2.bf16.msra.mxu0 0
  %10153 = vmatprep.subr.bf16.mxu0 0
  %10154 = vmatpush2.bf16.msra.mxu0 0
  %10155 = vmatprep.subr.bf16.mxu0 0
  %10156 = vmatpush2.bf16.msra.mxu0 0
  %10157 = vmatprep.subr.bf16.mxu0 0
  %10158 = vmatpush2.bf16.msra.mxu0 0
  %10159 = vmatprep.subr.bf16.mxu0 0
  %10160 = vmatpush2.bf16.msra.mxu0 0
  %10161 = vmatprep.subr.bf16.mxu0 0
  %10162 = vmatpush2.bf16.msra.mxu0 0
  %10163 = vmatprep.mubr.bf16.mxu0 0
  %10164 = vmatmul.mubr.bf16.gmra.mxu0 %v8996
  %v10165 = vpop.f32.mrf.mxu0
  %v10166 = vadd.f32 0.0, %v10165
  %v10167 = vpop.f32.mrf.mxu0
  %v10168 = vpop.f32.mrf.mxu0
  %v10169 = vadd.f32 0.0, %v10168
  %v10170 = vpop.f32.mrf.mxu0
  %10171 = vmatprep.mubr.bf16.mxu0 0
  %10172 = vmatmul.mubr.bf16.gmra.mxu0 %v8999
  %v10173 = vpop.f32.mrf.mxu0
  %v10174 = vadd.f32 0.0, %v10173
  %v10175 = vpop.f32.mrf.mxu0
  %v10176 = vpop.f32.mrf.mxu0
  %v10177 = vadd.f32 0.0, %v10176
  %v10178 = vpop.f32.mrf.mxu0
  %10179 = vmatprep.mubr.bf16.mxu0 0
  %10180 = vmatmul.mubr.bf16.gmra.mxu0 %v9002
  %v10181 = vpop.f32.mrf.mxu0
  %v10182 = vadd.f32 0.0, %v10181
  %v10183 = vpop.f32.mrf.mxu0
  %v10184 = vpop.f32.mrf.mxu0
  %v10185 = vadd.f32 0.0, %v10184
  %v10186 = vpop.f32.mrf.mxu0
  %10187 = vmatprep.mubr.bf16.mxu0 0
  %10188 = vmatmul.mubr.bf16.gmra.mxu0 %v9005
  %v10189 = vpop.f32.mrf.mxu0
  %v10190 = vadd.f32 0.0, %v10189
  %v10191 = vpop.f32.mrf.mxu0
  %v10192 = vpop.f32.mrf.mxu0
  %v10193 = vadd.f32 0.0, %v10192
  %v10194 = vpop.f32.mrf.mxu0
  %10195 = vmatprep.mubr.bf16.mxu0 0
  %10196 = vmatmul.mubr.bf16.gmra.mxu0 %v9008
  %v10197 = vpop.f32.mrf.mxu0
  %v10198 = vadd.f32 0.0, %v10197
  %v10199 = vpop.f32.mrf.mxu0
  %v10200 = vpop.f32.mrf.mxu0
  %v10201 = vadd.f32 0.0, %v10200
  %v10202 = vpop.f32.mrf.mxu0
  %10203 = vmatprep.mubr.bf16.mxu0 0
  %10204 = vmatmul.mubr.bf16.gmra.mxu0 %v9011
  %v10205 = vpop.f32.mrf.mxu0
  %v10206 = vadd.f32 0.0, %v10205
  %v10207 = vpop.f32.mrf.mxu0
  %v10208 = vpop.f32.mrf.mxu0
  %v10209 = vadd.f32 0.0, %v10208
  %v10210 = vpop.f32.mrf.mxu0
  %10211 = vmatprep.mubr.bf16.mxu0 0
  %10212 = vmatmul.mubr.bf16.gmra.mxu0 %v9270
  %v10213 = vpop.f32.mrf.mxu0
  %v10214 = vadd.f32 0.0, %v10213
  %v10215 = vpop.f32.mrf.mxu0
  %v10216 = vpop.f32.mrf.mxu0
  %v10217 = vadd.f32 0.0, %v10216
  %v10218 = vpop.f32.mrf.mxu0
  %10219 = vmatprep.mubr.bf16.mxu0 0
  %10220 = vmatmul.mubr.bf16.gmra.mxu0 %v8990
  %v10221 = vpop.f32.mrf.mxu0
  %v10222 = vadd.f32 0.0, %v10221
  %v10223 = vpop.f32.mrf.mxu0
  %v10224 = vpop.f32.mrf.mxu0
  %v10225 = vadd.f32 0.0, %v10224
  %v10226 = vpop.f32.mrf.mxu0
  %10227 = vdwg.mxu0
  %v10228 = vadd.f32 %v10080, %v10166
  %v10229 = vadd.f32 %v10081, %v10169
  %v10230 = vadd.f32 %v10082, %v10174
  %v10231 = vadd.f32 %v10083, %v10177
  %v10232 = vadd.f32 %v10084, %v10182
  %v10233 = vadd.f32 %v10085, %v10185
  %v10234 = vadd.f32 %v10086, %v10190
  %v10235 = vadd.f32 %v10087, %v10193
  %v10236 = vadd.f32 %v10088, %v10198
  %v10237 = vadd.f32 %v10089, %v10201
  %v10238 = vadd.f32 %v10090, %v10206
  %v10239 = vadd.f32 %v10091, %v10209
  %v10240 = vadd.f32 %v10092, %v10214
  %v10241 = vadd.f32 %v10093, %v10217
  %v10242 = vadd.f32 %v10094, %v10222
  %v10243 = vadd.f32 %v10095, %v10225
  %s10244 = scalar_lea.vmem %s2, 288
  %v10245 = vld [vmem:[%s10244] sm:$0xf]
  %v10246 = vld [vmem:[%s10244 + $0x4] sm:$0xf]
  %v10247 = vld [vmem:[%s10244 + $0x8] sm:$0xf]
  %v10248 = vld [vmem:[%s10244 + $0xc] sm:$0xf]
  %v10249 = vld [vmem:[%s10244 + $0x10] sm:$0xf]
  %v10250 = vld [vmem:[%s10244 + $0x14] sm:$0xf]
  %v10251 = vld [vmem:[%s10244 + $0x18] sm:$0xf]
  %v10252 = vld [vmem:[%s10244 + $0x1c] sm:$0x3]
  %v10261 = vunpack.c.l.b16 %v10245
  %v10262 = vunpack.c.l.b16 %v10246
  %v10263 = vunpack.c.l.b16 %v10247
  %v10264 = vunpack.c.l.b16 %v10248
  %v10265 = vunpack.c.l.b16 %v10249
  %v10266 = vunpack.c.l.b16 %v10250
  %v10267 = vunpack.c.l.b16 %v10251
  %v10268 = vunpack.c.l.b16 %v10252
  %v10269 = vpack.c.b16 %v10262, %v10261
  %v10270 = vpack.c.b16 %v10264, %v10263
  %v10271 = vpack.c.b16 %v10266, %v10265
  %v10272 = vpack.c.b16 %v10268, %v10267
  %v10277 = vsel %vm9013, %v10272, 0
  %10279 = vmatprep.subr.bf16.mxu0 0
  %10280 = vmatpush1.bf16.msra.mxu0 0
  %10281 = vmatprep.subr.bf16.mxu0 0
  %10282 = vmatpush1.bf16.msra.mxu0 0
  %10283 = vmatprep.subr.bf16.mxu0 0
  %10284 = vmatpush1.bf16.msra.mxu0 0
  %10285 = vmatprep.subr.bf16.mxu0 0
  %10286 = vmatpush1.bf16.msra.mxu0 0
  %10287 = vmatprep.subr.bf16.mxu0 0
  %10288 = vmatpush1.bf16.msra.mxu0 %v10277
  %10289 = vmatprep.subr.bf16.mxu0 0
  %10290 = vmatpush1.bf16.msra.mxu0 %v10271
  %10291 = vmatprep.subr.bf16.mxu0 0
  %10292 = vmatpush1.bf16.msra.mxu0 %v10270
  %10293 = vmatprep.subr.bf16.mxu0 0
  %10294 = vmatpush1.bf16.msra.mxu0 %v10269
  %10295 = vmatprep.subr.bf16.mxu0 0
  %10296 = vmatpush2.bf16.msra.mxu0 0
  %10297 = vmatprep.subr.bf16.mxu0 0
  %10298 = vmatpush2.bf16.msra.mxu0 0
  %10299 = vmatprep.subr.bf16.mxu0 0
  %10300 = vmatpush2.bf16.msra.mxu0 0
  %10301 = vmatprep.subr.bf16.mxu0 0
  %10302 = vmatpush2.bf16.msra.mxu0 0
  %10303 = vmatprep.subr.bf16.mxu0 0
  %10304 = vmatpush2.bf16.msra.mxu0 0
  %10305 = vmatprep.subr.bf16.mxu0 0
  %10306 = vmatpush2.bf16.msra.mxu0 0
  %10307 = vmatprep.subr.bf16.mxu0 0
  %10308 = vmatpush2.bf16.msra.mxu0 0
  %10309 = vmatprep.subr.bf16.mxu0 0
  %10310 = vmatpush2.bf16.msra.mxu0 0
  %10311 = vmatprep.mubr.bf16.mxu0 0
  %10312 = vmatmul.mubr.bf16.gmra.mxu0 %v8999
  %v10313 = vpop.f32.mrf.mxu0
  %v10314 = vadd.f32 0.0, %v10313
  %v10315 = vpop.f32.mrf.mxu0
  %v10316 = vpop.f32.mrf.mxu0
  %v10317 = vadd.f32 0.0, %v10316
  %v10318 = vpop.f32.mrf.mxu0
  %10319 = vmatprep.mubr.bf16.mxu0 0
  %10320 = vmatmul.mubr.bf16.gmra.mxu0 %v9002
  %v10321 = vpop.f32.mrf.mxu0
  %v10322 = vadd.f32 0.0, %v10321
  %v10323 = vpop.f32.mrf.mxu0
  %v10324 = vpop.f32.mrf.mxu0
  %v10325 = vadd.f32 0.0, %v10324
  %v10326 = vpop.f32.mrf.mxu0
  %10327 = vmatprep.mubr.bf16.mxu0 0
  %10328 = vmatmul.mubr.bf16.gmra.mxu0 %v9005
  %v10329 = vpop.f32.mrf.mxu0
  %v10330 = vadd.f32 0.0, %v10329
  %v10331 = vpop.f32.mrf.mxu0
  %v10332 = vpop.f32.mrf.mxu0
  %v10333 = vadd.f32 0.0, %v10332
  %v10334 = vpop.f32.mrf.mxu0
  %10335 = vmatprep.mubr.bf16.mxu0 0
  %10336 = vmatmul.mubr.bf16.gmra.mxu0 %v9008
  %v10337 = vpop.f32.mrf.mxu0
  %v10338 = vadd.f32 0.0, %v10337
  %v10339 = vpop.f32.mrf.mxu0
  %v10340 = vpop.f32.mrf.mxu0
  %v10341 = vadd.f32 0.0, %v10340
  %v10342 = vpop.f32.mrf.mxu0
  %10343 = vmatprep.mubr.bf16.mxu0 0
  %10344 = vmatmul.mubr.bf16.gmra.mxu0 %v9011
  %v10345 = vpop.f32.mrf.mxu0
  %v10346 = vadd.f32 0.0, %v10345
  %v10347 = vpop.f32.mrf.mxu0
  %v10348 = vpop.f32.mrf.mxu0
  %v10349 = vadd.f32 0.0, %v10348
  %v10350 = vpop.f32.mrf.mxu0
  %10351 = vmatprep.mubr.bf16.mxu0 0
  %10352 = vmatmul.mubr.bf16.gmra.mxu0 %v9270
  %v10353 = vpop.f32.mrf.mxu0
  %v10354 = vadd.f32 0.0, %v10353
  %v10355 = vpop.f32.mrf.mxu0
  %v10356 = vpop.f32.mrf.mxu0
  %v10357 = vadd.f32 0.0, %v10356
  %v10358 = vpop.f32.mrf.mxu0
  %10359 = vmatprep.mubr.bf16.mxu0 0
  %10360 = vmatmul.mubr.bf16.gmra.mxu0 %v8990
  %v10361 = vpop.f32.mrf.mxu0
  %v10362 = vadd.f32 0.0, %v10361
  %v10363 = vpop.f32.mrf.mxu0
  %v10364 = vpop.f32.mrf.mxu0
  %v10365 = vadd.f32 0.0, %v10364
  %v10366 = vpop.f32.mrf.mxu0
  %10367 = vmatprep.mubr.bf16.mxu0 0
  %10368 = vmatmul.mubr.bf16.gmra.mxu0 %v8990
  %v10369 = vpop.f32.mrf.mxu0
  %v10370 = vadd.f32 0.0, %v10369
  %v10371 = vpop.f32.mrf.mxu0
  %v10372 = vpop.f32.mrf.mxu0
  %v10373 = vadd.f32 0.0, %v10372
  %v10374 = vpop.f32.mrf.mxu0
  %10375 = vdwg.mxu0
  %v10376 = vadd.f32 %v10228, %v10314
  %v10377 = vadd.f32 %v10229, %v10317
  %v10378 = vadd.f32 %v10230, %v10322
  %v10379 = vadd.f32 %v10231, %v10325
  %v10380 = vadd.f32 %v10232, %v10330
  %v10381 = vadd.f32 %v10233, %v10333
  %v10382 = vadd.f32 %v10234, %v10338
  %v10383 = vadd.f32 %v10235, %v10341
  %v10384 = vadd.f32 %v10236, %v10346
  %v10385 = vadd.f32 %v10237, %v10349
  %v10386 = vadd.f32 %v10238, %v10354
  %v10387 = vadd.f32 %v10239, %v10357
  %v10388 = vadd.f32 %v10240, %v10362
  %v10389 = vadd.f32 %v10241, %v10365
  %v10390 = vadd.f32 %v10242, %v10370
  %v10391 = vadd.f32 %v10243, %v10373
  %v10392 = vmax.f32 %v9668, %v10376
  %v10393 = vmax.f32 %v9669, %v10377
  %v10394 = vmax.f32 %v9670, %v10378
  %v10395 = vmax.f32 %v9671, %v10379
  %v10396 = vmax.f32 %v9672, %v10380
  %v10397 = vmax.f32 %v9673, %v10381
  %v10398 = vmax.f32 %v9674, %v10382
  %v10399 = vmax.f32 %v9675, %v10383
  %v10400 = vmax.f32 %v9676, %v10384
  %v10401 = vmax.f32 %v9677, %v10385
  %v10402 = vmax.f32 %v9678, %v10386
  %v10403 = vmax.f32 %v9679, %v10387
  %v10404 = vmax.f32 %v9680, %v10388
  %v10405 = vmax.f32 %v9681, %v10389
  %v10406 = vmax.f32 %v9682, %v10390
  %v10407 = vmax.f32 %v9683, %v10391
  %v10408 = vmax.f32 %v10392, %v10394
  %v10409 = vmax.f32 %v10393, %v10395
  %v10410 = vmax.f32 %v10396, %v10398
  %v10411 = vmax.f32 %v10397, %v10399
  %v10412 = vmax.f32 %v10400, %v10402
  %v10413 = vmax.f32 %v10401, %v10403
  %v10414 = vmax.f32 %v10404, %v10406
  %v10415 = vmax.f32 %v10405, %v10407
  %v10416 = vld [vmem:[%s5] sm:$0x1]
  %v10418 = vlaneseq
  %v10419 = vshrl.u32 %v10418, 7
  %v10420 = vsub.s32 0, %v10419
  %v10421 = vrot.slane %v10416, %v10420
  %v10423 = vadd.f32 %v10408, %v10421
  %v10424 = vadd.f32 %v10409, %v10421
  %v10425 = vadd.f32 %v10410, %v10421
  %v10426 = vadd.f32 %v10411, %v10421
  %v10427 = vadd.f32 %v10412, %v10421
  %v10428 = vadd.f32 %v10413, %v10421
  %v10429 = vadd.f32 %v10414, %v10421
  %v10430 = vadd.f32 %v10415, %v10421
  %v10431 = vmax.f32 %v10423, 0.0
  %v10432 = vmax.f32 %v10424, 0.0
  %v10433 = vmax.f32 %v10425, 0.0
  %v10434 = vmax.f32 %v10426, 0.0
  %v10435 = vmax.f32 %v10427, 0.0
  %v10436 = vmax.f32 %v10428, 0.0
  %v10437 = vmax.f32 %v10429, 0.0
  %v10438 = vmax.f32 %v10430, 0.0
  %v10439 = vadd.f32 %v10431, %v10433
  %v10440 = vadd.f32 %v10432, %v10434
  %v10441 = vadd.f32 %v10439, %v10435
  %v10442 = vadd.f32 %v10440, %v10436
  %v10443 = vadd.f32 %v10441, %v10437
  %v10444 = vadd.f32 %v10442, %v10438
  %v10445 = vsub.f32 %v10443, %v10437
  %v10446 = vsub.f32 %v10444, %v10438
  %v10447 = vpack.c.bf16 %v10446, %v10445
  %v10448 = vpack.c.bf16 %v10444, %v10443
  %v10449 = vsub.f32 %v10443, %v10431
  %v10450 = vsub.f32 %v10444, %v10432
  %v10451 = vpack.c.bf16 %v10450, %v10449
  %v10452 = vld [vmem:[%s3] sm:$0xf]
  %v10453 = vld [vmem:[%s3 + $0x4] sm:$0xf]
  %v10454 = vld [vmem:[%s3 + $0x8] sm:$0xf]
  %v10455 = vld [vmem:[%s3 + $0xc] sm:$0xf]
  %v10456 = vld [vmem:[%s3 + $0x10] sm:$0xf]
  %v10457 = vld [vmem:[%s3 + $0x14] sm:$0xf]
  %v10458 = vld [vmem:[%s3 + $0x18] sm:$0xf]
  %v10459 = vld [vmem:[%s3 + $0x1c] sm:$0x3]
  %s10460 = scalar_lea.vmem %s3, 32
  %v10461 = vld [vmem:[%s10460] sm:$0xf]
  %v10462 = vld [vmem:[%s10460 + $0x4] sm:$0xf]
  %v10463 = vld [vmem:[%s10460 + $0x8] sm:$0xf]
  %v10464 = vld [vmem:[%s10460 + $0xc] sm:$0xf]
  %v10465 = vld [vmem:[%s10460 + $0x10] sm:$0xf]
  %v10466 = vld [vmem:[%s10460 + $0x14] sm:$0xf]
  %v10467 = vld [vmem:[%s10460 + $0x18] sm:$0xf]
  %v10468 = vld [vmem:[%s10460 + $0x1c] sm:$0x3]
  %v10477 = vunpack.c.l.b16 %v10461
  %v10478 = vunpack.c.l.b16 %v10462
  %v10479 = vunpack.c.l.b16 %v10463
  %v10480 = vunpack.c.l.b16 %v10464
  %v10481 = vunpack.c.l.b16 %v10465
  %v10482 = vunpack.c.l.b16 %v10466
  %v10483 = vunpack.c.l.b16 %v10467
  %v10484 = vunpack.c.l.b16 %v10468
  %v10485 = vpack.c.b16 %v10478, %v10477
  %v10486 = vpack.c.b16 %v10480, %v10479
  %v10487 = vpack.c.b16 %v10482, %v10481
  %v10488 = vpack.c.b16 %v10484, %v10483
  %v10493 = vsel %vm8988, %v10448, 0
  %v10496 = vsel %vm9013, %v10488, 0
  %10498 = vmatprep.subr.bf16.mxu0 0
  %10499 = vmatpush1.bf16.msra.mxu0 0
  %10500 = vmatprep.subr.bf16.mxu0 0
  %10501 = vmatpush1.bf16.msra.mxu0 0
  %10502 = vmatprep.subr.bf16.mxu0 0
  %10503 = vmatpush1.bf16.msra.mxu0 0
  %10504 = vmatprep.subr.bf16.mxu0 0
  %10505 = vmatpush1.bf16.msra.mxu0 0
  %10506 = vmatprep.subr.bf16.mxu0 0
  %10507 = vmatpush1.bf16.msra.mxu0 %v10496
  %10508 = vmatprep.subr.bf16.mxu0 0
  %10509 = vmatpush1.bf16.msra.mxu0 %v10487
  %10510 = vmatprep.subr.bf16.mxu0 0
  %10511 = vmatpush1.bf16.msra.mxu0 %v10486
  %10512 = vmatprep.subr.bf16.mxu0 0
  %10513 = vmatpush1.bf16.msra.mxu0 %v10485
  %10514 = vmatprep.subr.bf16.mxu0 0
  %10515 = vmatpush2.bf16.msra.mxu0 0
  %10516 = vmatprep.subr.bf16.mxu0 0
  %10517 = vmatpush2.bf16.msra.mxu0 0
  %10518 = vmatprep.subr.bf16.mxu0 0
  %10519 = vmatpush2.bf16.msra.mxu0 0
  %10520 = vmatprep.subr.bf16.mxu0 0
  %10521 = vmatpush2.bf16.msra.mxu0 0
  %10522 = vmatprep.subr.bf16.mxu0 0
  %10523 = vmatpush2.bf16.msra.mxu0 0
  %10524 = vmatprep.subr.bf16.mxu0 0
  %10525 = vmatpush2.bf16.msra.mxu0 0
  %10526 = vmatprep.subr.bf16.mxu0 0
  %10527 = vmatpush2.bf16.msra.mxu0 0
  %10528 = vmatprep.subr.bf16.mxu0 0
  %10529 = vmatpush2.bf16.msra.mxu0 0
  %10530 = vmatprep.mubr.bf16.mxu0 0
  %10531 = vmatmul.mubr.bf16.gmra.mxu0 %v10493
  %v10532 = vpop.f32.mrf.mxu0
  %v10533 = vadd.f32 0.0, %v10532
  %v10534 = vpop.f32.mrf.mxu0
  %v10535 = vpop.f32.mrf.mxu0
  %v10536 = vadd.f32 0.0, %v10535
  %v10537 = vpop.f32.mrf.mxu0
  %10538 = vdwg.mxu0
  %v10547 = vunpack.c.l.b16 %v10452
  %v10548 = vunpack.c.l.b16 %v10453
  %v10549 = vunpack.c.l.b16 %v10454
  %v10550 = vunpack.c.l.b16 %v10455
  %v10551 = vunpack.c.l.b16 %v10456
  %v10552 = vunpack.c.l.b16 %v10457
  %v10553 = vunpack.c.l.b16 %v10458
  %v10554 = vunpack.c.l.b16 %v10459
  %v10555 = vpack.c.b16 %v10548, %v10547
  %v10556 = vpack.c.b16 %v10550, %v10549
  %v10557 = vpack.c.b16 %v10552, %v10551
  %v10558 = vpack.c.b16 %v10554, %v10553
  %v10563 = vsel %vm8988, %v10447, 0
  %v10566 = vsel %vm9013, %v10558, 0
  %10568 = vmatprep.subr.bf16.mxu0 0
  %10569 = vmatpush1.bf16.msra.mxu0 0
  %10570 = vmatprep.subr.bf16.mxu0 0
  %10571 = vmatpush1.bf16.msra.mxu0 0
  %10572 = vmatprep.subr.bf16.mxu0 0
  %10573 = vmatpush1.bf16.msra.mxu0 0
  %10574 = vmatprep.subr.bf16.mxu0 0
  %10575 = vmatpush1.bf16.msra.mxu0 0
  %10576 = vmatprep.subr.bf16.mxu0 0
  %10577 = vmatpush1.bf16.msra.mxu0 %v10566
  %10578 = vmatprep.subr.bf16.mxu0 0
  %10579 = vmatpush1.bf16.msra.mxu0 %v10557
  %10580 = vmatprep.subr.bf16.mxu0 0
  %10581 = vmatpush1.bf16.msra.mxu0 %v10556
  %10582 = vmatprep.subr.bf16.mxu0 0
  %10583 = vmatpush1.bf16.msra.mxu0 %v10555
  %10584 = vmatprep.subr.bf16.mxu0 0
  %10585 = vmatpush2.bf16.msra.mxu0 0
  %10586 = vmatprep.subr.bf16.mxu0 0
  %10587 = vmatpush2.bf16.msra.mxu0 0
  %10588 = vmatprep.subr.bf16.mxu0 0
  %10589 = vmatpush2.bf16.msra.mxu0 0
  %10590 = vmatprep.subr.bf16.mxu0 0
  %10591 = vmatpush2.bf16.msra.mxu0 0
  %10592 = vmatprep.subr.bf16.mxu0 0
  %10593 = vmatpush2.bf16.msra.mxu0 0
  %10594 = vmatprep.subr.bf16.mxu0 0
  %10595 = vmatpush2.bf16.msra.mxu0 0
  %10596 = vmatprep.subr.bf16.mxu0 0
  %10597 = vmatpush2.bf16.msra.mxu0 0
  %10598 = vmatprep.subr.bf16.mxu0 0
  %10599 = vmatpush2.bf16.msra.mxu0 0
  %10600 = vmatprep.mubr.bf16.mxu0 0
  %10601 = vmatmul.mubr.bf16.gmra.mxu0 %v10563
  %v10602 = vpop.f32.mrf.mxu0
  %v10603 = vadd.f32 %v10533, %v10602
  %v10604 = vpop.f32.mrf.mxu0
  %v10605 = vpop.f32.mrf.mxu0
  %v10606 = vadd.f32 %v10536, %v10605
  %v10607 = vpop.f32.mrf.mxu0
  %10608 = vdwg.mxu0
  %s10609 = scalar_lea.vmem %s3, 64
  %v10610 = vld [vmem:[%s10609] sm:$0xf]
  %v10611 = vld [vmem:[%s10609 + $0x4] sm:$0xf]
  %v10612 = vld [vmem:[%s10609 + $0x8] sm:$0xf]
  %v10613 = vld [vmem:[%s10609 + $0xc] sm:$0xf]
  %v10614 = vld [vmem:[%s10609 + $0x10] sm:$0xf]
  %v10615 = vld [vmem:[%s10609 + $0x14] sm:$0xf]
  %v10616 = vld [vmem:[%s10609 + $0x18] sm:$0xf]
  %v10617 = vld [vmem:[%s10609 + $0x1c] sm:$0x3]
  %v10626 = vunpack.c.l.b16 %v10610
  %v10627 = vunpack.c.l.b16 %v10611
  %v10628 = vunpack.c.l.b16 %v10612
  %v10629 = vunpack.c.l.b16 %v10613
  %v10630 = vunpack.c.l.b16 %v10614
  %v10631 = vunpack.c.l.b16 %v10615
  %v10632 = vunpack.c.l.b16 %v10616
  %v10633 = vunpack.c.l.b16 %v10617
  %v10634 = vpack.c.b16 %v10627, %v10626
  %v10635 = vpack.c.b16 %v10629, %v10628
  %v10636 = vpack.c.b16 %v10631, %v10630
  %v10637 = vpack.c.b16 %v10633, %v10632
  %v10642 = vsel %vm8988, %v10451, 0
  %v10645 = vsel %vm9013, %v10637, 0
  %10647 = vmatprep.subr.bf16.mxu0 0
  %10648 = vmatpush1.bf16.msra.mxu0 0
  %10649 = vmatprep.subr.bf16.mxu0 0
  %10650 = vmatpush1.bf16.msra.mxu0 0
  %10651 = vmatprep.subr.bf16.mxu0 0
  %10652 = vmatpush1.bf16.msra.mxu0 0
  %10653 = vmatprep.subr.bf16.mxu0 0
  %10654 = vmatpush1.bf16.msra.mxu0 0
  %10655 = vmatprep.subr.bf16.mxu0 0
  %10656 = vmatpush1.bf16.msra.mxu0 %v10645
  %10657 = vmatprep.subr.bf16.mxu0 0
  %10658 = vmatpush1.bf16.msra.mxu0 %v10636
  %10659 = vmatprep.subr.bf16.mxu0 0
  %10660 = vmatpush1.bf16.msra.mxu0 %v10635
  %10661 = vmatprep.subr.bf16.mxu0 0
  %10662 = vmatpush1.bf16.msra.mxu0 %v10634
  %10663 = vmatprep.subr.bf16.mxu0 0
  %10664 = vmatpush2.bf16.msra.mxu0 0
  %10665 = vmatprep.subr.bf16.mxu0 0
  %10666 = vmatpush2.bf16.msra.mxu0 0
  %10667 = vmatprep.subr.bf16.mxu0 0
  %10668 = vmatpush2.bf16.msra.mxu0 0
  %10669 = vmatprep.subr.bf16.mxu0 0
  %10670 = vmatpush2.bf16.msra.mxu0 0
  %10671 = vmatprep.subr.bf16.mxu0 0
  %10672 = vmatpush2.bf16.msra.mxu0 0
  %10673 = vmatprep.subr.bf16.mxu0 0
  %10674 = vmatpush2.bf16.msra.mxu0 0
  %10675 = vmatprep.subr.bf16.mxu0 0
  %10676 = vmatpush2.bf16.msra.mxu0 0
  %10677 = vmatprep.subr.bf16.mxu0 0
  %10678 = vmatpush2.bf16.msra.mxu0 0
  %10679 = vmatprep.mubr.bf16.mxu0 0
  %10680 = vmatmul.mubr.bf16.gmra.mxu0 %v10642
  %v10681 = vpop.f32.mrf.mxu0
  %v10682 = vadd.f32 0.0, %v10681
  %v10683 = vpop.f32.mrf.mxu0
  %v10684 = vpop.f32.mrf.mxu0
  %v10685 = vadd.f32 0.0, %v10684
  %v10686 = vpop.f32.mrf.mxu0
  %10687 = vdwg.mxu0
  %v10688 = vadd.f32 %v10603, %v10682
  %v10689 = vadd.f32 %v10606, %v10685
  %v10690 = vmul.f32 %v10688, 0.0625
  %v10691 = vmul.f32 %v10689, 0.0625
  %v10692 = vld [vmem:[%s6] sm:$0x1]
  %v10694 = vlaneseq
  %v10695 = vshrl.u32 %v10694, 7
  %v10696 = vsub.s32 0, %v10695
  %v10697 = vrot.slane %v10692, %v10696
  %v10699 = vadd.f32 %v10690, %v10697
  %v10700 = vadd.f32 %v10691, %v10697
  %vm10701 = vcmask 97280
  %10702 = vst.msk [vmem:[%s7] sm:$0xff] %vm10701, %v10699
  %10703 = vst.msk [vmem:[%s7 + $0x8] sm:$0xff] %vm10701, %v10700
  // Predicated region
  $region30: #{cnn_forward.1} parent=0 // pred_check
    _
  $region31: #{cnn_forward.1} parent=0 // pred_check_branch
    %10705 = sbr.rel (0) target = $region33
  $region32: #{cnn_forward.1} parent=0 // pred_region
    _
  $region33: #{cnn_forward.1} parent=0 // pred_fallthru
    _
  // Predicated region
  $region34: #{cnn_forward.1} parent=0 // pred_check
    _
  $region35: #{cnn_forward.1} parent=0 // pred_check_branch
    %10707 = sbr.rel (0) target = $region37
  $region36: #{cnn_forward.1} parent=0 // pred_region
    _
  $region37: #{cnn_forward.1} parent=0 // pred_fallthru
    _

</llo_original>
